<compile_context>
chip_gen: v7x
topology: tpu7x:2x2x1
jax: 0.10.0
libtpu: 0.0.40
codegen_flags: <defaults>
</compile_context>

<pallas_src>
import functools

import jax
import jax.numpy as jnp
from jax.experimental import pallas as pl
from jax.experimental.pallas import tpu as pltpu

THRESHOLD_1 = 15.0   # conv1 firing threshold (eval branch)
THRESHOLD_2 = 10.0   # training branch only (unused in eval forward)

LANES = 128          # lane-dense channel padding


# ------------------------------ Pallas kernel ------------------------------ #

def _ctnn_kernel(x_ref, w1_ref, w2_ref, spk_ref, pot_ref, *,
                 tb, kh, kw, ho1, wo1, ho2, wo2, threshold):
    """Fused conv1 + fire + 2x2 pool + pad + conv2 for `tb` timesteps, all in VMEM.

    x_ref  : (tb, ho1*wo1, K1pad)   bf16  im2col'd padded input (K zero-padded)
    w1_ref : (K1pad, 128)           bf16  conv1 weights, out-channels on lanes
    w2_ref : (kh*kw*128, 128)       bf16  conv2 weights, offsets folded into K
    spk_ref: (tb, ho1*wo1, 128)     bf16  conv1 spikes (0/1)
    pot_ref: (tb, ho2*wo2, 128)     f32   conv2 potentials
    """
    hpool, wpool = ho1 // 2, wo1 // 2
    hp2, wp2 = hpool + 2, wpool + 2

    w1 = w1_ref[...]
    padded_ts = []
    for t in range(tb):                                     # static, tb in {1, 2}
        # ---- conv1: single im2col matmul (M=ho1*wo1, K=K1pad, N=128) ----
        pot1 = jnp.dot(x_ref[t], w1, preferred_element_type=jnp.float32)
        spk = (pot1 > threshold).astype(jnp.float32)        # (ho1*wo1, 128) f32
        spk_ref[t] = spk.astype(jnp.bfloat16)               # lane-dense 0/1 store

        # ---- 2x2 / stride-2 max pool (channels on lanes -> VPU max, f32) ----
        s = spk.reshape(ho1 * wpool, 2, LANES)
        s = jnp.maximum(s[:, 0, :], s[:, 1, :])             # pool along W
        s = s.reshape(hpool, 2, wpool, LANES)
        pooled = jnp.maximum(s[:, 0], s[:, 1])              # (hpool, wpool, 128)

        # ---- pad(1,1,1,1) as a value (no VMEM scratch / zero-fill store) ----
        pooled = pooled.astype(jnp.bfloat16)                # 0/1 exact in bf16
        zr = jnp.zeros((1, wpool, LANES), jnp.bfloat16)
        zc = jnp.zeros((hp2, 1, LANES), jnp.bfloat16)
        p = jnp.concatenate([zr, pooled, zr], axis=0)       # (hp2, wpool, 128)
        p = jnp.concatenate([zc, p, zc], axis=1)            # (hp2, wp2, 128)
        padded_ts.append(p)

    padded = jnp.stack(padded_ts, axis=0)                   # (tb, hp2, wp2, 128)

    # ---- conv2: fold the kh*kw offsets into K -> one matmul for all timesteps ----
    cols = []
    for i in range(kh):
        for j in range(kw):
            win = padded[:, i:i + ho2, j:j + wo2, :]        # (tb, ho2, wo2, 128)
            cols.append(win.reshape(tb * ho2 * wo2, LANES))
    lhs = jnp.concatenate(cols, axis=-1)                    # (tb*ho2*wo2, kh*kw*128)
    pot2 = jnp.dot(lhs, w2_ref[...], preferred_element_type=jnp.float32)
    pot_ref[...] = pot2.reshape(tb, ho2 * wo2, LANES)


# ------------------------------ wrapper ------------------------------ #

def _timesteps_per_block(n):
    """v7x (2 TensorCores/chip): 1 timestep per core via the parallel grid.
    Single-TC v5e/v6e: stack all timesteps into one grid step so conv2's 49
    weight tiles are pushed once and grid-step overhead is paid once."""
    try:
        kind = jax.devices()[0].device_kind.lower()
    except Exception:
        kind = ""
    return 1 if "v7" in kind else n


def ctnn_forward(params, x):
    """CTNN.forward (eval branch). x: (T, 4, H, W) spike wave, NCHW float.
    Returns (spk, pot) in NCHW layout like the PyTorch module."""
    n, cin, h, w = x.shape
    c1, _, kh, kw = params["conv1_w"].shape
    c2 = params["conv2_w"].shape[0]
    assert cin <= LANES and c1 <= LANES and c2 <= LANES

    hp, wp = h + 4, w + 4                      # sf.pad(input, (2,2,2,2))
    ho1, wo1 = hp - kh + 1, wp - kw + 1        # conv1 output
    assert ho1 % 2 == 0 and wo1 % 2 == 0
    hpool, wpool = ho1 // 2, wo1 // 2          # sf.pooling(spk, 2, 2)
    hp2, wp2 = hpool + 2, wpool + 2            # sf.pad(..., (1,1,1,1))
    ho2, wo2 = hp2 - kh + 1, wp2 - kw + 1      # conv2 output

    k1 = kh * kw * cin                         # folded conv1 K (196)
    k1p = -(-k1 // 256) * 256                  # zero-pad K -> lane-dense operand,
                                               # one K pass on v6e/v7x (two on v5e)
    k2 = kh * kw * LANES                       # folded conv2 K (6272)

    # ---- conv1 im2col in the wrapper: (T, ho1*wo1, kh*kw*cin), offset-major ----
    x_pad = jnp.pad(jnp.transpose(x, (0, 2, 3, 1)),
                    ((0, 0), (2, 2), (2, 2), (0, 0)))       # (T, hp, wp, cin)
    patches = [x_pad[:, i:i + ho1, j:j + wo1, :]
               for i in range(kh) for j in range(kw)]
    x_col = jnp.concatenate(patches, axis=-1)               # (T, ho1, wo1, kh*kw*cin)
    x_col = x_col.reshape(n, ho1 * wo1, k1)
    x_col = jnp.pad(x_col, ((0, 0), (0, 0), (0, k1p - k1))).astype(jnp.bfloat16)

    # ---- conv1 weights: (Cout, Cin, kh, kw) -> (K1pad, 128), out-channels on lanes ----
    w1 = jnp.transpose(params["conv1_w"], (2, 3, 1, 0)).reshape(k1, c1)
    w1 = jnp.pad(w1, ((0, k1p - k1), (0, LANES - c1))).astype(jnp.bfloat16)

    # ---- conv2 weights: offsets folded into K -> (kh*kw*128, 128) ----
    w2 = jnp.transpose(params["conv2_w"], (2, 3, 1, 0))     # (kh, kw, Cin, Cout)
    w2 = jnp.pad(w2, ((0, 0), (0, 0), (0, LANES - c1), (0, LANES - c2)))
    w2 = w2.reshape(k2, LANES).astype(jnp.bfloat16)

    tb = _timesteps_per_block(n)
    kernel = functools.partial(_ctnn_kernel, tb=tb, kh=kh, kw=kw,
                               ho1=ho1, wo1=wo1, ho2=ho2, wo2=wo2,
                               threshold=THRESHOLD_1)

    spk_flat, pot_flat = pl.pallas_call(
        kernel,
        grid=(n // tb,),
        in_specs=[
            pl.BlockSpec((tb, ho1 * wo1, k1p), lambda g: (g, 0, 0)),
            # weights: constant block index -> fetched once, VMEM-resident across steps
            # (footprint is tiny, so default double-buffering of them is harmless)
            pl.BlockSpec((k1p, LANES), lambda g: (0, 0)),
            pl.BlockSpec((k2, LANES), lambda g: (0, 0)),
        ],
        out_specs=[
            pl.BlockSpec((tb, ho1 * wo1, LANES), lambda g: (g, 0, 0)),
            pl.BlockSpec((tb, ho2 * wo2, LANES), lambda g: (g, 0, 0)),
        ],
        out_shape=[
            jax.ShapeDtypeStruct((n, ho1 * wo1, LANES), jnp.bfloat16),
            jax.ShapeDtypeStruct((n, ho2 * wo2, LANES), jnp.float32),
        ],
        compiler_params=pltpu.CompilerParams(
            dimension_semantics=("parallel",)),   # v7x: one timestep per TensorCore
    )(x_col, w1, w2)

    # strip lane padding, restore NCHW float32 like the PyTorch module
    spk = jnp.transpose(
        spk_flat[..., :c1].astype(jnp.float32).reshape(n, ho1, wo1, c1),
        (0, 3, 1, 2))
    pot = jnp.transpose(
        pot_flat[..., :c2].reshape(n, ho2, wo2, c2), (0, 3, 1, 2))
    return spk, pot


# ------------------------------ demo / smoke test ------------------------------ #

if __name__ == "__main__":
    key = jax.random.PRNGKey(0)
    k_in, k_w1, k_w2 = jax.random.split(key, 3)

    # spike-wave input: (timesteps=2, channels=4, 16, 16), binary {0,1}
    x = (jax.random.uniform(k_in, (2, 4, 16, 16)) < 0.1).astype(jnp.float32)

    # snn.Convolution(in, out, k, mean=0.8, std=0.02), no bias
    params = {
        "conv1_w": 0.8 + 0.02 * jax.random.normal(k_w1, (30, 4, 7, 7), jnp.float32),
        "conv2_w": 0.8 + 0.02 * jax.random.normal(k_w2, (100, 30, 7, 7), jnp.float32),
    }

    spk, pot = jax.jit(ctnn_forward)(params, x)
    jax.block_until_ready((spk, pot))

    assert spk.shape == (2, 30, 14, 14), spk.shape
    assert pot.shape == (2, 100, 3, 3), pot.shape
    assert bool(jnp.all((spk == 0.0) | (spk == 1.0)))
    assert bool(jnp.all(jnp.isfinite(pot)))

    # Reference: plain-JAX convs using the same bf16-rounded weights the MXU consumes
    # (bf16 x bf16 products are exact in f32, so only accumulation order differs).
    dn = ("NCHW", "OIHW", "NCHW")
    w1b = params["conv1_w"].astype(jnp.bfloat16).astype(jnp.float32)
    w2b = params["conv2_w"].astype(jnp.bfloat16).astype(jnp.float32)

    xp = jnp.pad(x, ((0, 0), (0, 0), (2, 2), (2, 2)))
    ref_pot1 = jax.lax.conv_general_dilated(
        xp, w1b, (1, 1), "VALID", dimension_numbers=dn,
        precision=jax.lax.Precision.HIGHEST)
    ref_spk = (ref_pot1 > THRESHOLD_1).astype(jnp.float32)
    # allow (at most) a vanishing number of exact-threshold-boundary flips from summation order
    assert float(jnp.mean(jnp.abs(spk - ref_spk))) <= 1e-3

    # check pool + pad + conv2 path given the kernel's own spikes
    ref_pooled = jax.lax.reduce_window(spk, -jnp.inf, jax.lax.max,
                                       (1, 1, 2, 2), (1, 1, 2, 2), "VALID")
    ref_pooled = jnp.pad(ref_pooled, ((0, 0), (0, 0), (1, 1), (1, 1)))
    ref_pot2 = jax.lax.conv_general_dilated(
        ref_pooled, w2b, (1, 1), "VALID", dimension_numbers=dn,
        precision=jax.lax.Precision.HIGHEST)
    assert bool(jnp.allclose(pot, ref_pot2, rtol=1e-3, atol=0.1))

    print("KERNEL_OK")
</pallas_src>

<mosaic_0001>
module attributes {stable_mosaic.version = 11 : i64} {
  func.func @_ctnn_kernel(%arg0: i32, %arg1: memref<2x196x256xbf16, #tpu.memory_space<vmem>>, %arg2: memref<256x128xbf16, #tpu.memory_space<vmem>>, %arg3: memref<6272x128xbf16, #tpu.memory_space<vmem>>, %arg4: memref<2x196x128xbf16, #tpu.memory_space<vmem>>, %arg5: memref<2x9x128xf32, #tpu.memory_space<vmem>>) attributes {dimension_semantics = [#tpu.dimension_semantics<parallel>], iteration_bounds = array<i64: 1>, scalar_prefetch = 0 : i64, scratch_operands = 0 : i64, tpu.core_type = #tpu.core_type<tc>, window_params = [{transform_indices = @transform_0, window_bounds = array<i64: 2, 196, 256>}, {pipeline_mode = #tpu.pipeline_mode<synchronous>, transform_indices = @transform_1, window_bounds = array<i64: 256, 128>}, {pipeline_mode = #tpu.pipeline_mode<synchronous>, transform_indices = @transform_2, window_bounds = array<i64: 6272, 128>}, {transform_indices = @transform_3, window_bounds = array<i64: 2, 196, 128>}, {transform_indices = @transform_4, window_bounds = array<i64: 2, 9, 128>}]} {
    %c0 = arith.constant 0 : index
    %c0_0 = arith.constant 0 : index
    %0 = vector.load %arg2[%c0, %c0_0] : memref<256x128xbf16, #tpu.memory_space<vmem>>, vector<256x128xbf16>
    %c0_1 = arith.constant 0 : index
    %c0_2 = arith.constant 0 : index
    %c0_3 = arith.constant 0 : index
    %1 = vector.load %arg1[%c0_1, %c0_2, %c0_3] : memref<2x196x256xbf16, #tpu.memory_space<vmem>>, vector<1x196x256xbf16>
    %2 = vector.shape_cast %1 : vector<1x196x256xbf16> to vector<196x256xbf16>
    %cst = arith.constant dense<0.000000e+00> : vector<196x128xf32>
    %3 = tpu.matmul %2, %0, %cst {dimension_numbers = #tpu.dot_dimension_numbers<[1], [0], [0], [1], [0, 0, 1, 1], [], []>} : vector<196x256xbf16>, vector<256x128xbf16>, vector<196x128xf32> -> vector<196x128xf32>
    %cst_4 = arith.constant 1.500000e+01 : f32
    %4 = vector.broadcast %cst_4 : f32 to vector<196x128xf32>
    %5 = arith.cmpf ogt, %3, %4 : vector<196x128xf32>
    %6 = arith.extui %5 : vector<196x128xi1> to vector<196x128xi32>
    %7 = arith.sitofp %6 : vector<196x128xi32> to vector<196x128xf32>
    %8 = arith.truncf %7 : vector<196x128xf32> to vector<196x128xbf16>
    %c0_5 = arith.constant 0 : index
    %c0_6 = arith.constant 0 : index
    %c0_7 = arith.constant 0 : index
    %9 = vector.load %arg4[%c0_5, %c0_6, %c0_7] : memref<2x196x128xbf16, #tpu.memory_space<vmem>>, vector<1x196x128xbf16>
    %10 = vector.shape_cast %9 : vector<1x196x128xbf16> to vector<196x128xbf16>
    %11 = vector.shape_cast %8 : vector<196x128xbf16> to vector<1x196x128xbf16>
    tpu.vector_store %arg4[%c0_5, %c0_6, %c0_7], %11 {strides = array<i32>} : memref<2x196x128xbf16, #tpu.memory_space<vmem>>, vector<1x196x128xbf16>,
    %12 = vector.shape_cast %7 : vector<196x128xf32> to vector<98x2x128xf32>
    %13 = vector.extract_strided_slice %12 {offsets = [0, 0, 0], sizes = [98, 1, 128], strides = [1, 1, 1]} : vector<98x2x128xf32> to vector<98x1x128xf32>
    %14 = vector.shape_cast %13 : vector<98x1x128xf32> to vector<98x128xf32>
    %15 = vector.extract_strided_slice %12 {offsets = [0, 1, 0], sizes = [98, 1, 128], strides = [1, 1, 1]} : vector<98x2x128xf32> to vector<98x1x128xf32>
    %16 = vector.shape_cast %15 : vector<98x1x128xf32> to vector<98x128xf32>
    %17 = arith.maximumf %14, %16 : vector<98x128xf32>
    %18 = vector.shape_cast %17 : vector<98x128xf32> to vector<7x2x7x128xf32>
    %19 = vector.extract_strided_slice %18 {offsets = [0, 0, 0, 0], sizes = [7, 1, 7, 128], strides = [1, 1, 1, 1]} : vector<7x2x7x128xf32> to vector<7x1x7x128xf32>
    %20 = vector.shape_cast %19 : vector<7x1x7x128xf32> to vector<7x7x128xf32>
    %21 = vector.extract_strided_slice %18 {offsets = [0, 1, 0, 0], sizes = [7, 1, 7, 128], strides = [1, 1, 1, 1]} : vector<7x2x7x128xf32> to vector<7x1x7x128xf32>
    %22 = vector.shape_cast %21 : vector<7x1x7x128xf32> to vector<7x7x128xf32>
    %23 = arith.maximumf %20, %22 : vector<7x7x128xf32>
    %24 = arith.truncf %23 : vector<7x7x128xf32> to vector<7x7x128xbf16>
    %cst_8 = arith.constant 0.000000e+00 : bf16
    %25 = vector.broadcast %cst_8 : bf16 to vector<1x7x128xbf16>
    %cst_9 = arith.constant 0.000000e+00 : bf16
    %26 = vector.broadcast %cst_9 : bf16 to vector<9x1x128xbf16>
    %27 = tpu.concatenate %25, %24, %25 in 0 : vector<1x7x128xbf16>, vector<7x7x128xbf16>, vector<1x7x128xbf16> -> vector<9x7x128xbf16>
    %28 = tpu.concatenate %26, %27, %26 in 1 : vector<9x1x128xbf16>, vector<9x7x128xbf16>, vector<9x1x128xbf16> -> vector<9x9x128xbf16>
    %c1 = arith.constant 1 : index
    %c0_10 = arith.constant 0 : index
    %c0_11 = arith.constant 0 : index
    %29 = vector.load %arg1[%c1, %c0_10, %c0_11] : memref<2x196x256xbf16, #tpu.memory_space<vmem>>, vector<1x196x256xbf16>
    %30 = vector.shape_cast %29 : vector<1x196x256xbf16> to vector<196x256xbf16>
    %cst_12 = arith.constant dense<0.000000e+00> : vector<196x128xf32>
    %31 = tpu.matmul %30, %0, %cst_12 {dimension_numbers = #tpu.dot_dimension_numbers<[1], [0], [0], [1], [0, 0, 1, 1], [], []>} : vector<196x256xbf16>, vector<256x128xbf16>, vector<196x128xf32> -> vector<196x128xf32>
    %cst_13 = arith.constant 1.500000e+01 : f32
    %32 = vector.broadcast %cst_13 : f32 to vector<196x128xf32>
    %33 = arith.cmpf ogt, %31, %32 : vector<196x128xf32>
    %34 = arith.extui %33 : vector<196x128xi1> to vector<196x128xi32>
    %35 = arith.sitofp %34 : vector<196x128xi32> to vector<196x128xf32>
    %36 = arith.truncf %35 : vector<196x128xf32> to vector<196x128xbf16>
    %c1_14 = arith.constant 1 : index
    %c0_15 = arith.constant 0 : index
    %c0_16 = arith.constant 0 : index
    %37 = vector.load %arg4[%c1_14, %c0_15, %c0_16] : memref<2x196x128xbf16, #tpu.memory_space<vmem>>, vector<1x196x128xbf16>
    %38 = vector.shape_cast %37 : vector<1x196x128xbf16> to vector<196x128xbf16>
    %39 = vector.shape_cast %36 : vector<196x128xbf16> to vector<1x196x128xbf16>
    tpu.vector_store %arg4[%c1_14, %c0_15, %c0_16], %39 {strides = array<i32>} : memref<2x196x128xbf16, #tpu.memory_space<vmem>>, vector<1x196x128xbf16>,
    %40 = vector.shape_cast %35 : vector<196x128xf32> to vector<98x2x128xf32>
    %41 = vector.extract_strided_slice %40 {offsets = [0, 0, 0], sizes = [98, 1, 128], strides = [1, 1, 1]} : vector<98x2x128xf32> to vector<98x1x128xf32>
    %42 = vector.shape_cast %41 : vector<98x1x128xf32> to vector<98x128xf32>
    %43 = vector.extract_strided_slice %40 {offsets = [0, 1, 0], sizes = [98, 1, 128], strides = [1, 1, 1]} : vector<98x2x128xf32> to vector<98x1x128xf32>
    %44 = vector.shape_cast %43 : vector<98x1x128xf32> to vector<98x128xf32>
    %45 = arith.maximumf %42, %44 : vector<98x128xf32>
    %46 = vector.shape_cast %45 : vector<98x128xf32> to vector<7x2x7x128xf32>
    %47 = vector.extract_strided_slice %46 {offsets = [0, 0, 0, 0], sizes = [7, 1, 7, 128], strides = [1, 1, 1, 1]} : vector<7x2x7x128xf32> to vector<7x1x7x128xf32>
    %48 = vector.shape_cast %47 : vector<7x1x7x128xf32> to vector<7x7x128xf32>
    %49 = vector.extract_strided_slice %46 {offsets = [0, 1, 0, 0], sizes = [7, 1, 7, 128], strides = [1, 1, 1, 1]} : vector<7x2x7x128xf32> to vector<7x1x7x128xf32>
    %50 = vector.shape_cast %49 : vector<7x1x7x128xf32> to vector<7x7x128xf32>
    %51 = arith.maximumf %48, %50 : vector<7x7x128xf32>
    %52 = arith.truncf %51 : vector<7x7x128xf32> to vector<7x7x128xbf16>
    %cst_17 = arith.constant 0.000000e+00 : bf16
    %53 = vector.broadcast %cst_17 : bf16 to vector<1x7x128xbf16>
    %cst_18 = arith.constant 0.000000e+00 : bf16
    %54 = vector.broadcast %cst_18 : bf16 to vector<9x1x128xbf16>
    %55 = tpu.concatenate %53, %52, %53 in 0 : vector<1x7x128xbf16>, vector<7x7x128xbf16>, vector<1x7x128xbf16> -> vector<9x7x128xbf16>
    %56 = tpu.concatenate %54, %55, %54 in 1 : vector<9x1x128xbf16>, vector<9x7x128xbf16>, vector<9x1x128xbf16> -> vector<9x9x128xbf16>
    %57 = vector.shape_cast %28 : vector<9x9x128xbf16> to vector<1x9x9x128xbf16>
    %58 = vector.shape_cast %56 : vector<9x9x128xbf16> to vector<1x9x9x128xbf16>
    %59 = tpu.concatenate %57, %58 in 0 : vector<1x9x9x128xbf16>, vector<1x9x9x128xbf16> -> vector<2x9x9x128xbf16>
    %60 = vector.extract_strided_slice %59 {offsets = [0, 0, 0, 0], sizes = [2, 3, 3, 128], strides = [1, 1, 1, 1]} : vector<2x9x9x128xbf16> to vector<2x3x3x128xbf16>
    %61 = vector.shape_cast %60 : vector<2x3x3x128xbf16> to vector<18x128xbf16>
    %62 = vector.extract_strided_slice %59 {offsets = [0, 0, 1, 0], sizes = [2, 3, 3, 128], strides = [1, 1, 1, 1]} : vector<2x9x9x128xbf16> to vector<2x3x3x128xbf16>
    %63 = vector.shape_cast %62 : vector<2x3x3x128xbf16> to vector<18x128xbf16>
    %64 = vector.extract_strided_slice %59 {offsets = [0, 0, 2, 0], sizes = [2, 3, 3, 128], strides = [1, 1, 1, 1]} : vector<2x9x9x128xbf16> to vector<2x3x3x128xbf16>
    %65 = vector.shape_cast %64 : vector<2x3x3x128xbf16> to vector<18x128xbf16>
    %66 = vector.extract_strided_slice %59 {offsets = [0, 0, 3, 0], sizes = [2, 3, 3, 128], strides = [1, 1, 1, 1]} : vector<2x9x9x128xbf16> to vector<2x3x3x128xbf16>
    %67 = vector.shape_cast %66 : vector<2x3x3x128xbf16> to vector<18x128xbf16>
    %68 = vector.extract_strided_slice %59 {offsets = [0, 0, 4, 0], sizes = [2, 3, 3, 128], strides = [1, 1, 1, 1]} : vector<2x9x9x128xbf16> to vector<2x3x3x128xbf16>
    %69 = vector.shape_cast %68 : vector<2x3x3x128xbf16> to vector<18x128xbf16>
    %70 = vector.extract_strided_slice %59 {offsets = [0, 0, 5, 0], sizes = [2, 3, 3, 128], strides = [1, 1, 1, 1]} : vector<2x9x9x128xbf16> to vector<2x3x3x128xbf16>
    %71 = vector.shape_cast %70 : vector<2x3x3x128xbf16> to vector<18x128xbf16>
    %72 = vector.extract_strided_slice %59 {offsets = [0, 0, 6, 0], sizes = [2, 3, 3, 128], strides = [1, 1, 1, 1]} : vector<2x9x9x128xbf16> to vector<2x3x3x128xbf16>
    %73 = vector.shape_cast %72 : vector<2x3x3x128xbf16> to vector<18x128xbf16>
    %74 = vector.extract_strided_slice %59 {offsets = [0, 1, 0, 0], sizes = [2, 3, 3, 128], strides = [1, 1, 1, 1]} : vector<2x9x9x128xbf16> to vector<2x3x3x128xbf16>
    %75 = vector.shape_cast %74 : vector<2x3x3x128xbf16> to vector<18x128xbf16>
    %76 = vector.extract_strided_slice %59 {offsets = [0, 1, 1, 0], sizes = [2, 3, 3, 128], strides = [1, 1, 1, 1]} : vector<2x9x9x128xbf16> to vector<2x3x3x128xbf16>
    %77 = vector.shape_cast %76 : vector<2x3x3x128xbf16> to vector<18x128xbf16>
    %78 = vector.extract_strided_slice %59 {offsets = [0, 1, 2, 0], sizes = [2, 3, 3, 128], strides = [1, 1, 1, 1]} : vector<2x9x9x128xbf16> to vector<2x3x3x128xbf16>
    %79 = vector.shape_cast %78 : vector<2x3x3x128xbf16> to vector<18x128xbf16>
    %80 = vector.extract_strided_slice %59 {offsets = [0, 1, 3, 0], sizes = [2, 3, 3, 128], strides = [1, 1, 1, 1]} : vector<2x9x9x128xbf16> to vector<2x3x3x128xbf16>
    %81 = vector.shape_cast %80 : vector<2x3x3x128xbf16> to vector<18x128xbf16>
    %82 = vector.extract_strided_slice %59 {offsets = [0, 1, 4, 0], sizes = [2, 3, 3, 128], strides = [1, 1, 1, 1]} : vector<2x9x9x128xbf16> to vector<2x3x3x128xbf16>
    %83 = vector.shape_cast %82 : vector<2x3x3x128xbf16> to vector<18x128xbf16>
    %84 = vector.extract_strided_slice %59 {offsets = [0, 1, 5, 0], sizes = [2, 3, 3, 128], strides = [1, 1, 1, 1]} : vector<2x9x9x128xbf16> to vector<2x3x3x128xbf16>
    %85 = vector.shape_cast %84 : vector<2x3x3x128xbf16> to vector<18x128xbf16>
    %86 = vector.extract_strided_slice %59 {offsets = [0, 1, 6, 0], sizes = [2, 3, 3, 128], strides = [1, 1, 1, 1]} : vector<2x9x9x128xbf16> to vector<2x3x3x128xbf16>
    %87 = vector.shape_cast %86 : vector<2x3x3x128xbf16> to vector<18x128xbf16>
    %88 = vector.extract_strided_slice %59 {offsets = [0, 2, 0, 0], sizes = [2, 3, 3, 128], strides = [1, 1, 1, 1]} : vector<2x9x9x128xbf16> to vector<2x3x3x128xbf16>
    %89 = vector.shape_cast %88 : vector<2x3x3x128xbf16> to vector<18x128xbf16>
    %90 = vector.extract_strided_slice %59 {offsets = [0, 2, 1, 0], sizes = [2, 3, 3, 128], strides = [1, 1, 1, 1]} : vector<2x9x9x128xbf16> to vector<2x3x3x128xbf16>
    %91 = vector.shape_cast %90 : vector<2x3x3x128xbf16> to vector<18x128xbf16>
    %92 = vector.extract_strided_slice %59 {offsets = [0, 2, 2, 0], sizes = [2, 3, 3, 128], strides = [1, 1, 1, 1]} : vector<2x9x9x128xbf16> to vector<2x3x3x128xbf16>
    %93 = vector.shape_cast %92 : vector<2x3x3x128xbf16> to vector<18x128xbf16>
    %94 = vector.extract_strided_slice %59 {offsets = [0, 2, 3, 0], sizes = [2, 3, 3, 128], strides = [1, 1, 1, 1]} : vector<2x9x9x128xbf16> to vector<2x3x3x128xbf16>
    %95 = vector.shape_cast %94 : vector<2x3x3x128xbf16> to vector<18x128xbf16>
    %96 = vector.extract_strided_slice %59 {offsets = [0, 2, 4, 0], sizes = [2, 3, 3, 128], strides = [1, 1, 1, 1]} : vector<2x9x9x128xbf16> to vector<2x3x3x128xbf16>
    %97 = vector.shape_cast %96 : vector<2x3x3x128xbf16> to vector<18x128xbf16>
    %98 = vector.extract_strided_slice %59 {offsets = [0, 2, 5, 0], sizes = [2, 3, 3, 128], strides = [1, 1, 1, 1]} : vector<2x9x9x128xbf16> to vector<2x3x3x128xbf16>
    %99 = vector.shape_cast %98 : vector<2x3x3x128xbf16> to vector<18x128xbf16>
    %100 = vector.extract_strided_slice %59 {offsets = [0, 2, 6, 0], sizes = [2, 3, 3, 128], strides = [1, 1, 1, 1]} : vector<2x9x9x128xbf16> to vector<2x3x3x128xbf16>
    %101 = vector.shape_cast %100 : vector<2x3x3x128xbf16> to vector<18x128xbf16>
    %102 = vector.extract_strided_slice %59 {offsets = [0, 3, 0, 0], sizes = [2, 3, 3, 128], strides = [1, 1, 1, 1]} : vector<2x9x9x128xbf16> to vector<2x3x3x128xbf16>
    %103 = vector.shape_cast %102 : vector<2x3x3x128xbf16> to vector<18x128xbf16>
    %104 = vector.extract_strided_slice %59 {offsets = [0, 3, 1, 0], sizes = [2, 3, 3, 128], strides = [1, 1, 1, 1]} : vector<2x9x9x128xbf16> to vector<2x3x3x128xbf16>
    %105 = vector.shape_cast %104 : vector<2x3x3x128xbf16> to vector<18x128xbf16>
    %106 = vector.extract_strided_slice %59 {offsets = [0, 3, 2, 0], sizes = [2, 3, 3, 128], strides = [1, 1, 1, 1]} : vector<2x9x9x128xbf16> to vector<2x3x3x128xbf16>
    %107 = vector.shape_cast %106 : vector<2x3x3x128xbf16> to vector<18x128xbf16>
    %108 = vector.extract_strided_slice %59 {offsets = [0, 3, 3, 0], sizes = [2, 3, 3, 128], strides = [1, 1, 1, 1]} : vector<2x9x9x128xbf16> to vector<2x3x3x128xbf16>
    %109 = vector.shape_cast %108 : vector<2x3x3x128xbf16> to vector<18x128xbf16>
    %110 = vector.extract_strided_slice %59 {offsets = [0, 3, 4, 0], sizes = [2, 3, 3, 128], strides = [1, 1, 1, 1]} : vector<2x9x9x128xbf16> to vector<2x3x3x128xbf16>
    %111 = vector.shape_cast %110 : vector<2x3x3x128xbf16> to vector<18x128xbf16>
    %112 = vector.extract_strided_slice %59 {offsets = [0, 3, 5, 0], sizes = [2, 3, 3, 128], strides = [1, 1, 1, 1]} : vector<2x9x9x128xbf16> to vector<2x3x3x128xbf16>
    %113 = vector.shape_cast %112 : vector<2x3x3x128xbf16> to vector<18x128xbf16>
    %114 = vector.extract_strided_slice %59 {offsets = [0, 3, 6, 0], sizes = [2, 3, 3, 128], strides = [1, 1, 1, 1]} : vector<2x9x9x128xbf16> to vector<2x3x3x128xbf16>
    %115 = vector.shape_cast %114 : vector<2x3x3x128xbf16> to vector<18x128xbf16>
    %116 = vector.extract_strided_slice %59 {offsets = [0, 4, 0, 0], sizes = [2, 3, 3, 128], strides = [1, 1, 1, 1]} : vector<2x9x9x128xbf16> to vector<2x3x3x128xbf16>
    %117 = vector.shape_cast %116 : vector<2x3x3x128xbf16> to vector<18x128xbf16>
    %118 = vector.extract_strided_slice %59 {offsets = [0, 4, 1, 0], sizes = [2, 3, 3, 128], strides = [1, 1, 1, 1]} : vector<2x9x9x128xbf16> to vector<2x3x3x128xbf16>
    %119 = vector.shape_cast %118 : vector<2x3x3x128xbf16> to vector<18x128xbf16>
    %120 = vector.extract_strided_slice %59 {offsets = [0, 4, 2, 0], sizes = [2, 3, 3, 128], strides = [1, 1, 1, 1]} : vector<2x9x9x128xbf16> to vector<2x3x3x128xbf16>
    %121 = vector.shape_cast %120 : vector<2x3x3x128xbf16> to vector<18x128xbf16>
    %122 = vector.extract_strided_slice %59 {offsets = [0, 4, 3, 0], sizes = [2, 3, 3, 128], strides = [1, 1, 1, 1]} : vector<2x9x9x128xbf16> to vector<2x3x3x128xbf16>
    %123 = vector.shape_cast %122 : vector<2x3x3x128xbf16> to vector<18x128xbf16>
    %124 = vector.extract_strided_slice %59 {offsets = [0, 4, 4, 0], sizes = [2, 3, 3, 128], strides = [1, 1, 1, 1]} : vector<2x9x9x128xbf16> to vector<2x3x3x128xbf16>
    %125 = vector.shape_cast %124 : vector<2x3x3x128xbf16> to vector<18x128xbf16>
    %126 = vector.extract_strided_slice %59 {offsets = [0, 4, 5, 0], sizes = [2, 3, 3, 128], strides = [1, 1, 1, 1]} : vector<2x9x9x128xbf16> to vector<2x3x3x128xbf16>
    %127 = vector.shape_cast %126 : vector<2x3x3x128xbf16> to vector<18x128xbf16>
    %128 = vector.extract_strided_slice %59 {offsets = [0, 4, 6, 0], sizes = [2, 3, 3, 128], strides = [1, 1, 1, 1]} : vector<2x9x9x128xbf16> to vector<2x3x3x128xbf16>
    %129 = vector.shape_cast %128 : vector<2x3x3x128xbf16> to vector<18x128xbf16>
    %130 = vector.extract_strided_slice %59 {offsets = [0, 5, 0, 0], sizes = [2, 3, 3, 128], strides = [1, 1, 1, 1]} : vector<2x9x9x128xbf16> to vector<2x3x3x128xbf16>
    %131 = vector.shape_cast %130 : vector<2x3x3x128xbf16> to vector<18x128xbf16>
    %132 = vector.extract_strided_slice %59 {offsets = [0, 5, 1, 0], sizes = [2, 3, 3, 128], strides = [1, 1, 1, 1]} : vector<2x9x9x128xbf16> to vector<2x3x3x128xbf16>
    %133 = vector.shape_cast %132 : vector<2x3x3x128xbf16> to vector<18x128xbf16>
    %134 = vector.extract_strided_slice %59 {offsets = [0, 5, 2, 0], sizes = [2, 3, 3, 128], strides = [1, 1, 1, 1]} : vector<2x9x9x128xbf16> to vector<2x3x3x128xbf16>
    %135 = vector.shape_cast %134 : vector<2x3x3x128xbf16> to vector<18x128xbf16>
    %136 = vector.extract_strided_slice %59 {offsets = [0, 5, 3, 0], sizes = [2, 3, 3, 128], strides = [1, 1, 1, 1]} : vector<2x9x9x128xbf16> to vector<2x3x3x128xbf16>
    %137 = vector.shape_cast %136 : vector<2x3x3x128xbf16> to vector<18x128xbf16>
    %138 = vector.extract_strided_slice %59 {offsets = [0, 5, 4, 0], sizes = [2, 3, 3, 128], strides = [1, 1, 1, 1]} : vector<2x9x9x128xbf16> to vector<2x3x3x128xbf16>
    %139 = vector.shape_cast %138 : vector<2x3x3x128xbf16> to vector<18x128xbf16>
    %140 = vector.extract_strided_slice %59 {offsets = [0, 5, 5, 0], sizes = [2, 3, 3, 128], strides = [1, 1, 1, 1]} : vector<2x9x9x128xbf16> to vector<2x3x3x128xbf16>
    %141 = vector.shape_cast %140 : vector<2x3x3x128xbf16> to vector<18x128xbf16>
    %142 = vector.extract_strided_slice %59 {offsets = [0, 5, 6, 0], sizes = [2, 3, 3, 128], strides = [1, 1, 1, 1]} : vector<2x9x9x128xbf16> to vector<2x3x3x128xbf16>
    %143 = vector.shape_cast %142 : vector<2x3x3x128xbf16> to vector<18x128xbf16>
    %144 = vector.extract_strided_slice %59 {offsets = [0, 6, 0, 0], sizes = [2, 3, 3, 128], strides = [1, 1, 1, 1]} : vector<2x9x9x128xbf16> to vector<2x3x3x128xbf16>
    %145 = vector.shape_cast %144 : vector<2x3x3x128xbf16> to vector<18x128xbf16>
    %146 = vector.extract_strided_slice %59 {offsets = [0, 6, 1, 0], sizes = [2, 3, 3, 128], strides = [1, 1, 1, 1]} : vector<2x9x9x128xbf16> to vector<2x3x3x128xbf16>
    %147 = vector.shape_cast %146 : vector<2x3x3x128xbf16> to vector<18x128xbf16>
    %148 = vector.extract_strided_slice %59 {offsets = [0, 6, 2, 0], sizes = [2, 3, 3, 128], strides = [1, 1, 1, 1]} : vector<2x9x9x128xbf16> to vector<2x3x3x128xbf16>
    %149 = vector.shape_cast %148 : vector<2x3x3x128xbf16> to vector<18x128xbf16>
    %150 = vector.extract_strided_slice %59 {offsets = [0, 6, 3, 0], sizes = [2, 3, 3, 128], strides = [1, 1, 1, 1]} : vector<2x9x9x128xbf16> to vector<2x3x3x128xbf16>
    %151 = vector.shape_cast %150 : vector<2x3x3x128xbf16> to vector<18x128xbf16>
    %152 = vector.extract_strided_slice %59 {offsets = [0, 6, 4, 0], sizes = [2, 3, 3, 128], strides = [1, 1, 1, 1]} : vector<2x9x9x128xbf16> to vector<2x3x3x128xbf16>
    %153 = vector.shape_cast %152 : vector<2x3x3x128xbf16> to vector<18x128xbf16>
    %154 = vector.extract_strided_slice %59 {offsets = [0, 6, 5, 0], sizes = [2, 3, 3, 128], strides = [1, 1, 1, 1]} : vector<2x9x9x128xbf16> to vector<2x3x3x128xbf16>
    %155 = vector.shape_cast %154 : vector<2x3x3x128xbf16> to vector<18x128xbf16>
    %156 = vector.extract_strided_slice %59 {offsets = [0, 6, 6, 0], sizes = [2, 3, 3, 128], strides = [1, 1, 1, 1]} : vector<2x9x9x128xbf16> to vector<2x3x3x128xbf16>
    %157 = vector.shape_cast %156 : vector<2x3x3x128xbf16> to vector<18x128xbf16>
    %158 = tpu.concatenate %61, %63, %65, %67, %69, %71, %73, %75, %77, %79, %81, %83, %85, %87, %89, %91 in 1 : vector<18x128xbf16>, vector<18x128xbf16>, vector<18x128xbf16>, vector<18x128xbf16>, vector<18x128xbf16>, vector<18x128xbf16>, vector<18x128xbf16>, vector<18x128xbf16>, vector<18x128xbf16>, vector<18x128xbf16>, vector<18x128xbf16>, vector<18x128xbf16>, vector<18x128xbf16>, vector<18x128xbf16>, vector<18x128xbf16>, vector<18x128xbf16> -> vector<18x2048xbf16>
    %159 = tpu.concatenate %93, %95, %97, %99, %101, %103, %105, %107, %109, %111, %113, %115, %117, %119, %121, %123 in 1 : vector<18x128xbf16>, vector<18x128xbf16>, vector<18x128xbf16>, vector<18x128xbf16>, vector<18x128xbf16>, vector<18x128xbf16>, vector<18x128xbf16>, vector<18x128xbf16>, vector<18x128xbf16>, vector<18x128xbf16>, vector<18x128xbf16>, vector<18x128xbf16>, vector<18x128xbf16>, vector<18x128xbf16>, vector<18x128xbf16>, vector<18x128xbf16> -> vector<18x2048xbf16>
    %160 = tpu.concatenate %125, %127, %129, %131, %133, %135, %137, %139, %141, %143, %145, %147, %149, %151, %153, %155 in 1 : vector<18x128xbf16>, vector<18x128xbf16>, vector<18x128xbf16>, vector<18x128xbf16>, vector<18x128xbf16>, vector<18x128xbf16>, vector<18x128xbf16>, vector<18x128xbf16>, vector<18x128xbf16>, vector<18x128xbf16>, vector<18x128xbf16>, vector<18x128xbf16>, vector<18x128xbf16>, vector<18x128xbf16>, vector<18x128xbf16>, vector<18x128xbf16> -> vector<18x2048xbf16>
    %161 = tpu.concatenate %158, %159, %160, %157 in 1 : vector<18x2048xbf16>, vector<18x2048xbf16>, vector<18x2048xbf16>, vector<18x128xbf16> -> vector<18x6272xbf16>
    %c0_19 = arith.constant 0 : index
    %c0_20 = arith.constant 0 : index
    %162 = vector.load %arg3[%c0_19, %c0_20] : memref<6272x128xbf16, #tpu.memory_space<vmem>>, vector<6272x128xbf16>
    %cst_21 = arith.constant dense<0.000000e+00> : vector<18x128xf32>
    %163 = tpu.matmul %161, %162, %cst_21 {dimension_numbers = #tpu.dot_dimension_numbers<[1], [0], [0], [1], [0, 0, 1, 1], [], []>} : vector<18x6272xbf16>, vector<6272x128xbf16>, vector<18x128xf32> -> vector<18x128xf32>
    %164 = vector.shape_cast %163 : vector<18x128xf32> to vector<2x9x128xf32>
    %c0_22 = arith.constant 0 : index
    %c0_23 = arith.constant 0 : index
    %c0_24 = arith.constant 0 : index
    %165 = vector.load %arg5[%c0_22, %c0_23, %c0_24] : memref<2x9x128xf32, #tpu.memory_space<vmem>>, vector<2x9x128xf32>
    tpu.vector_store %arg5[%c0_22, %c0_23, %c0_24], %164 {strides = array<i32>} : memref<2x9x128xf32, #tpu.memory_space<vmem>>, vector<2x9x128xf32>,
    return
  }
  func.func @transform_0(%arg0: i32) -> (i32, i32, i32) {
    %c0_i32 = arith.constant 0 : i32
    %c0_i32_0 = arith.constant 0 : i32
    %c0_i32_1 = arith.constant 0 : i32
    return %arg0, %c0_i32, %c0_i32_0 : i32, i32, i32
  }
  func.func @transform_1(%arg0: i32) -> (i32, i32) {
    %c0_i32 = arith.constant 0 : i32
    %c0_i32_0 = arith.constant 0 : i32
    %c0_i32_1 = arith.constant 0 : i32
    return %c0_i32, %c0_i32_0 : i32, i32
  }
  func.func @transform_2(%arg0: i32) -> (i32, i32) {
    %c0_i32 = arith.constant 0 : i32
    %c0_i32_0 = arith.constant 0 : i32
    %c0_i32_1 = arith.constant 0 : i32
    return %c0_i32, %c0_i32_0 : i32, i32
  }
  func.func @transform_3(%arg0: i32) -> (i32, i32, i32) {
    %c0_i32 = arith.constant 0 : i32
    %c0_i32_0 = arith.constant 0 : i32
    %c0_i32_1 = arith.constant 0 : i32
    return %arg0, %c0_i32, %c0_i32_0 : i32, i32, i32
  }
  func.func @transform_4(%arg0: i32) -> (i32, i32, i32) {
    %c0_i32 = arith.constant 0 : i32
    %c0_i32_0 = arith.constant 0 : i32
    %c0_i32_1 = arith.constant 0 : i32
    return %arg0, %c0_i32, %c0_i32_0 : i32, i32, i32
  }
}

</mosaic_0001>

<llo_original>
// kernel: ctnn_forward.1
$region0: #{ctnn_forward.1}
  #allocation0 [shape = 'u32[]', space=smem, size = 0x4, offset = 0x4, fixed_abs, tag = 'smem constant byte address 0x4 - core index']
  #allocation1 [shape = 'u32[144,128]{1,0:T(1,128)}', space=vmem, size = 0x12000, scoped, tag = 'internal scratch']
  %s0 = inlined_call_operand.vmem [shape: bf16[2,196,256], index: 0, kind: input, shape index: {}]
  %s1 = inlined_call_operand.vmem [shape: bf16[256,128], index: 1, kind: input, shape index: {}]
  %s2 = inlined_call_operand.vmem [shape: bf16[6272,128], index: 2, kind: input, shape index: {}]
  %s3 = inlined_call_operand.vmem [shape: bf16[2,196,128], index: 3, kind: output, shape index: {0}]
  %s4 = inlined_call_operand.vmem [shape: f32[2,9,128], index: 4, kind: output, shape index: {1}]
  %5 = xla_tuple %s3, %s4
  %s6 = sld [smem:[#allocation0]]
  $region30: #{ctnn_forward.1} parent=0
    _
  %s8 = ssub.s32 1, %s6
  %s9 = scalar_select 0, %s8, %s6
  // Predicated region
  $region2: #{ctnn_forward.1} parent=0 // pred_check
    _
  $region3: #{ctnn_forward.1} parent=0 // pred_check_branch
    %11 = sbr.rel (0) target = $region5
  $region4: #{ctnn_forward.1} parent=0 // pred_region
    _
  $region5: #{ctnn_forward.1} parent=0 // pred_fallthru
    _
  // Predicated region
  $region6: #{ctnn_forward.1} parent=0 // pred_check
    _
  $region7: #{ctnn_forward.1} parent=0 // pred_check_branch
    %13 = sbr.rel (0) target = $region9
  $region8: #{ctnn_forward.1} parent=0 // pred_region
    _
  $region9: #{ctnn_forward.1} parent=0 // pred_fallthru
    _
  // Predicated region
  $region10: #{ctnn_forward.1} parent=0 // pred_check
    _
  $region11: #{ctnn_forward.1} parent=0 // pred_check_branch
    %15 = sbr.rel (0) target = $region13
  $region12: #{ctnn_forward.1} parent=0 // pred_region
    _
  $region13: #{ctnn_forward.1} parent=0 // pred_fallthru
    _
  %v17 = vld [vmem:[%s1] sm:$0xf]
  %v18 = vld [vmem:[%s1 + $0x4] sm:$0xf]
  %v19 = vld [vmem:[%s1 + $0x8] sm:$0xf]
  %v20 = vld [vmem:[%s1 + $0xc] sm:$0xf]
  %v21 = vld [vmem:[%s1 + $0x10] sm:$0xf]
  %v22 = vld [vmem:[%s1 + $0x14] sm:$0xf]
  %v23 = vld [vmem:[%s1 + $0x18] sm:$0xf]
  %v24 = vld [vmem:[%s1 + $0x1c] sm:$0xf]
  %v25 = vld [vmem:[%s1 + $0x20] sm:$0xf]
  %v26 = vld [vmem:[%s1 + $0x24] sm:$0xf]
  %v27 = vld [vmem:[%s1 + $0x28] sm:$0xf]
  %v28 = vld [vmem:[%s1 + $0x2c] sm:$0xf]
  %v29 = vld [vmem:[%s1 + $0x30] sm:$0xf]
  %v30 = vld [vmem:[%s1 + $0x34] sm:$0xf]
  %v31 = vld [vmem:[%s1 + $0x38] sm:$0xf]
  %v32 = vld [vmem:[%s1 + $0x3c] sm:$0xf]
  %v33 = vld [vmem:[%s1 + $0x40] sm:$0xf]
  %v34 = vld [vmem:[%s1 + $0x44] sm:$0xf]
  %v35 = vld [vmem:[%s1 + $0x48] sm:$0xf]
  %v36 = vld [vmem:[%s1 + $0x4c] sm:$0xf]
  %v37 = vld [vmem:[%s1 + $0x50] sm:$0xf]
  %v38 = vld [vmem:[%s1 + $0x54] sm:$0xf]
  %v39 = vld [vmem:[%s1 + $0x58] sm:$0xf]
  %v40 = vld [vmem:[%s1 + $0x5c] sm:$0xf]
  %v41 = vld [vmem:[%s1 + $0x60] sm:$0xf]
  %v42 = vld [vmem:[%s1 + $0x64] sm:$0xf]
  %v43 = vld [vmem:[%s1 + $0x68] sm:$0xf]
  %v44 = vld [vmem:[%s1 + $0x6c] sm:$0xf]
  %v45 = vld [vmem:[%s1 + $0x70] sm:$0xf]
  %v46 = vld [vmem:[%s1 + $0x74] sm:$0xf]
  %v47 = vld [vmem:[%s1 + $0x78] sm:$0xf]
  %v48 = vld [vmem:[%s1 + $0x7c] sm:$0xf]
  %v49 = vld [vmem:[%s0] sm:$0xff]
  %v50 = vld [vmem:[%s0 + $0x8] sm:$0xff]
  %v51 = vld [vmem:[%s0 + $0x10] sm:$0xff]
  %v52 = vld [vmem:[%s0 + $0x18] sm:$0xff]
  %v53 = vld [vmem:[%s0 + $0x20] sm:$0xff]
  %v54 = vld [vmem:[%s0 + $0x28] sm:$0xff]
  %v55 = vld [vmem:[%s0 + $0x30] sm:$0xff]
  %v56 = vld [vmem:[%s0 + $0x38] sm:$0xff]
  %v57 = vld [vmem:[%s0 + $0x40] sm:$0xff]
  %v58 = vld [vmem:[%s0 + $0x48] sm:$0xff]
  %v59 = vld [vmem:[%s0 + $0x50] sm:$0xff]
  %v60 = vld [vmem:[%s0 + $0x58] sm:$0xff]
  %v61 = vld [vmem:[%s0 + $0x60] sm:$0xff]
  %v62 = vld [vmem:[%s0 + $0x68] sm:$0xff]
  %v63 = vld [vmem:[%s0 + $0x70] sm:$0xff]
  %v64 = vld [vmem:[%s0 + $0x78] sm:$0xff]
  %v65 = vld [vmem:[%s0 + $0x80] sm:$0xff]
  %v66 = vld [vmem:[%s0 + $0x88] sm:$0xff]
  %v67 = vld [vmem:[%s0 + $0x90] sm:$0xff]
  %v68 = vld [vmem:[%s0 + $0x98] sm:$0xff]
  %v69 = vld [vmem:[%s0 + $0xa0] sm:$0xff]
  %v70 = vld [vmem:[%s0 + $0xa8] sm:$0xff]
  %v71 = vld [vmem:[%s0 + $0xb0] sm:$0xff]
  %v72 = vld [vmem:[%s0 + $0xb8] sm:$0xff]
  %v73 = vld [vmem:[%s0 + $0xc0] sm:$0x33]
  %v99 = vunpack.c.l.b16 %v49
  %v100 = vunpack.c.h.b16 %v49
  %v101 = vunpack.c.l.b16 %v50
  %v102 = vunpack.c.h.b16 %v50
  %v103 = vunpack.c.l.b16 %v51
  %v104 = vunpack.c.h.b16 %v51
  %v105 = vunpack.c.l.b16 %v52
  %v106 = vunpack.c.h.b16 %v52
  %v107 = vunpack.c.l.b16 %v53
  %v108 = vunpack.c.h.b16 %v53
  %v109 = vunpack.c.l.b16 %v54
  %v110 = vunpack.c.h.b16 %v54
  %v111 = vunpack.c.l.b16 %v55
  %v112 = vunpack.c.h.b16 %v55
  %v113 = vunpack.c.l.b16 %v56
  %v114 = vunpack.c.h.b16 %v56
  %v115 = vunpack.c.l.b16 %v57
  %v116 = vunpack.c.h.b16 %v57
  %v117 = vunpack.c.l.b16 %v58
  %v118 = vunpack.c.h.b16 %v58
  %v119 = vunpack.c.l.b16 %v59
  %v120 = vunpack.c.h.b16 %v59
  %v121 = vunpack.c.l.b16 %v60
  %v122 = vunpack.c.h.b16 %v60
  %v123 = vunpack.c.l.b16 %v61
  %v124 = vunpack.c.h.b16 %v61
  %v125 = vunpack.c.l.b16 %v62
  %v126 = vunpack.c.h.b16 %v62
  %v127 = vunpack.c.l.b16 %v63
  %v128 = vunpack.c.h.b16 %v63
  %v129 = vunpack.c.l.b16 %v64
  %v130 = vunpack.c.h.b16 %v64
  %v131 = vunpack.c.l.b16 %v65
  %v132 = vunpack.c.h.b16 %v65
  %v133 = vunpack.c.l.b16 %v66
  %v134 = vunpack.c.h.b16 %v66
  %v135 = vunpack.c.l.b16 %v67
  %v136 = vunpack.c.h.b16 %v67
  %v137 = vunpack.c.l.b16 %v68
  %v138 = vunpack.c.h.b16 %v68
  %v139 = vunpack.c.l.b16 %v69
  %v140 = vunpack.c.h.b16 %v69
  %v141 = vunpack.c.l.b16 %v70
  %v142 = vunpack.c.h.b16 %v70
  %v143 = vunpack.c.l.b16 %v71
  %v144 = vunpack.c.h.b16 %v71
  %v145 = vunpack.c.l.b16 %v72
  %v146 = vunpack.c.h.b16 %v72
  %v147 = vunpack.c.l.b16 %v73
  %v148 = vunpack.c.h.b16 %v73
  %v149 = vpack.c.b16 %v101, %v99
  %v150 = vpack.c.b16 %v102, %v100
  %v151 = vpack.c.b16 %v105, %v103
  %v152 = vpack.c.b16 %v106, %v104
  %v153 = vpack.c.b16 %v109, %v107
  %v154 = vpack.c.b16 %v110, %v108
  %v155 = vpack.c.b16 %v113, %v111
  %v156 = vpack.c.b16 %v114, %v112
  %v157 = vpack.c.b16 %v117, %v115
  %v158 = vpack.c.b16 %v118, %v116
  %v159 = vpack.c.b16 %v121, %v119
  %v160 = vpack.c.b16 %v122, %v120
  %v161 = vpack.c.b16 %v125, %v123
  %v162 = vpack.c.b16 %v126, %v124
  %v163 = vpack.c.b16 %v129, %v127
  %v164 = vpack.c.b16 %v130, %v128
  %v165 = vpack.c.b16 %v133, %v131
  %v166 = vpack.c.b16 %v134, %v132
  %v167 = vpack.c.b16 %v137, %v135
  %v168 = vpack.c.b16 %v138, %v136
  %v169 = vpack.c.b16 %v141, %v139
  %v170 = vpack.c.b16 %v142, %v140
  %v171 = vpack.c.b16 %v145, %v143
  %v172 = vpack.c.b16 %v146, %v144
  %v173 = vpack.c.b16 %v147, %v147
  %v174 = vpack.c.b16 %v148, %v148
  %v233 = vunpack.c.l.b16 %v17
  %v234 = vunpack.c.l.b16 %v18
  %v235 = vunpack.c.l.b16 %v19
  %v236 = vunpack.c.l.b16 %v20
  %v237 = vunpack.c.l.b16 %v21
  %v238 = vunpack.c.l.b16 %v22
  %v239 = vunpack.c.l.b16 %v23
  %v240 = vunpack.c.l.b16 %v24
  %v241 = vunpack.c.l.b16 %v25
  %v242 = vunpack.c.l.b16 %v26
  %v243 = vunpack.c.l.b16 %v27
  %v244 = vunpack.c.l.b16 %v28
  %v245 = vunpack.c.l.b16 %v29
  %v246 = vunpack.c.l.b16 %v30
  %v247 = vunpack.c.l.b16 %v31
  %v248 = vunpack.c.l.b16 %v32
  %v249 = vunpack.c.l.b16 %v33
  %v250 = vunpack.c.l.b16 %v34
  %v251 = vunpack.c.l.b16 %v35
  %v252 = vunpack.c.l.b16 %v36
  %v253 = vunpack.c.l.b16 %v37
  %v254 = vunpack.c.l.b16 %v38
  %v255 = vunpack.c.l.b16 %v39
  %v256 = vunpack.c.l.b16 %v40
  %v257 = vunpack.c.l.b16 %v41
  %v258 = vunpack.c.l.b16 %v42
  %v259 = vunpack.c.l.b16 %v43
  %v260 = vunpack.c.l.b16 %v44
  %v261 = vunpack.c.l.b16 %v45
  %v262 = vunpack.c.l.b16 %v46
  %v263 = vunpack.c.l.b16 %v47
  %v264 = vunpack.c.l.b16 %v48
  %v265 = vpack.c.b16 %v234, %v233
  %v266 = vpack.c.b16 %v236, %v235
  %v267 = vpack.c.b16 %v238, %v237
  %v268 = vpack.c.b16 %v240, %v239
  %v269 = vpack.c.b16 %v242, %v241
  %v270 = vpack.c.b16 %v244, %v243
  %v271 = vpack.c.b16 %v246, %v245
  %v272 = vpack.c.b16 %v248, %v247
  %v273 = vpack.c.b16 %v250, %v249
  %v274 = vpack.c.b16 %v252, %v251
  %v275 = vpack.c.b16 %v254, %v253
  %v276 = vpack.c.b16 %v256, %v255
  %v277 = vpack.c.b16 %v258, %v257
  %v278 = vpack.c.b16 %v260, %v259
  %v279 = vpack.c.b16 %v262, %v261
  %v280 = vpack.c.b16 %v264, %v263
  %297 = vmatprep.subr.bf16.mxu0 0
  %298 = vmatpush1.bf16.msra.mxu0 %v265
  %299 = vmatprep.subr.bf16.mxu0 0
  %300 = vmatpush1.bf16.msra.mxu0 %v266
  %301 = vmatprep.subr.bf16.mxu0 0
  %302 = vmatpush1.bf16.msra.mxu0 %v267
  %303 = vmatprep.subr.bf16.mxu0 0
  %304 = vmatpush1.bf16.msra.mxu0 %v268
  %305 = vmatprep.subr.bf16.mxu0 0
  %306 = vmatpush1.bf16.msra.mxu0 %v269
  %307 = vmatprep.subr.bf16.mxu0 0
  %308 = vmatpush1.bf16.msra.mxu0 %v270
  %309 = vmatprep.subr.bf16.mxu0 0
  %310 = vmatpush1.bf16.msra.mxu0 %v271
  %311 = vmatprep.subr.bf16.mxu0 0
  %312 = vmatpush1.bf16.msra.mxu0 %v272
  %313 = vmatprep.subr.bf16.mxu0 0
  %314 = vmatpush1.bf16.msra.mxu0 %v273
  %315 = vmatprep.subr.bf16.mxu0 0
  %316 = vmatpush1.bf16.msra.mxu0 %v274
  %317 = vmatprep.subr.bf16.mxu0 0
  %318 = vmatpush1.bf16.msra.mxu0 %v275
  %319 = vmatprep.subr.bf16.mxu0 0
  %320 = vmatpush1.bf16.msra.mxu0 %v276
  %321 = vmatprep.subr.bf16.mxu0 0
  %322 = vmatpush1.bf16.msra.mxu0 %v277
  %323 = vmatprep.subr.bf16.mxu0 0
  %324 = vmatpush1.bf16.msra.mxu0 %v278
  %325 = vmatprep.subr.bf16.mxu0 0
  %326 = vmatpush1.bf16.msra.mxu0 %v279
  %327 = vmatprep.subr.bf16.mxu0 0
  %328 = vmatpush1.bf16.msra.mxu0 %v280
  %329 = vmatprep.mubr.bf16.mxu0 %v150
  %330 = vmatmul.mubr.bf16.gmra.mrb[0].mxu0 %v149
  %v331 = vpop.f32.mrb[0].mxu0
  %v332 = vadd.f32 0.0, %v331
  %v333 = vpop.f32.mrb[0].mxu0
  %v334 = vpop.f32.mrb[0].mxu0
  %v335 = vadd.f32 0.0, %v334
  %v336 = vpop.f32.mrb[0].mxu0
  %337 = vmatprep.mubr.bf16.mxu0 %v152
  %338 = vmatmul.mubr.bf16.gmra.mrb[0].mxu0 %v151
  %v339 = vpop.f32.mrb[0].mxu0
  %v340 = vadd.f32 0.0, %v339
  %v341 = vpop.f32.mrb[0].mxu0
  %v342 = vpop.f32.mrb[0].mxu0
  %v343 = vadd.f32 0.0, %v342
  %v344 = vpop.f32.mrb[0].mxu0
  %345 = vmatprep.mubr.bf16.mxu0 %v154
  %346 = vmatmul.mubr.bf16.gmra.mrb[0].mxu0 %v153
  %v347 = vpop.f32.mrb[0].mxu0
  %v348 = vadd.f32 0.0, %v347
  %v349 = vpop.f32.mrb[0].mxu0
  %v350 = vpop.f32.mrb[0].mxu0
  %v351 = vadd.f32 0.0, %v350
  %v352 = vpop.f32.mrb[0].mxu0
  %353 = vmatprep.mubr.bf16.mxu0 %v156
  %354 = vmatmul.mubr.bf16.gmra.mrb[0].mxu0 %v155
  %v355 = vpop.f32.mrb[0].mxu0
  %v356 = vadd.f32 0.0, %v355
  %v357 = vpop.f32.mrb[0].mxu0
  %v358 = vpop.f32.mrb[0].mxu0
  %v359 = vadd.f32 0.0, %v358
  %v360 = vpop.f32.mrb[0].mxu0
  %361 = vmatprep.mubr.bf16.mxu0 %v158
  %362 = vmatmul.mubr.bf16.gmra.mrb[0].mxu0 %v157
  %v363 = vpop.f32.mrb[0].mxu0
  %v364 = vadd.f32 0.0, %v363
  %v365 = vpop.f32.mrb[0].mxu0
  %v366 = vpop.f32.mrb[0].mxu0
  %v367 = vadd.f32 0.0, %v366
  %v368 = vpop.f32.mrb[0].mxu0
  %369 = vmatprep.mubr.bf16.mxu0 %v160
  %370 = vmatmul.mubr.bf16.gmra.mrb[0].mxu0 %v159
  %v371 = vpop.f32.mrb[0].mxu0
  %v372 = vadd.f32 0.0, %v371
  %v373 = vpop.f32.mrb[0].mxu0
  %v374 = vpop.f32.mrb[0].mxu0
  %v375 = vadd.f32 0.0, %v374
  %v376 = vpop.f32.mrb[0].mxu0
  %377 = vmatprep.mubr.bf16.mxu0 %v162
  %378 = vmatmul.mubr.bf16.gmra.mrb[0].mxu0 %v161
  %v379 = vpop.f32.mrb[0].mxu0
  %v380 = vadd.f32 0.0, %v379
  %v381 = vpop.f32.mrb[0].mxu0
  %v382 = vpop.f32.mrb[0].mxu0
  %v383 = vadd.f32 0.0, %v382
  %v384 = vpop.f32.mrb[0].mxu0
  %385 = vmatprep.mubr.bf16.mxu0 %v164
  %386 = vmatmul.mubr.bf16.gmra.mrb[0].mxu0 %v163
  %v387 = vpop.f32.mrb[0].mxu0
  %v388 = vadd.f32 0.0, %v387
  %v389 = vpop.f32.mrb[0].mxu0
  %v390 = vpop.f32.mrb[0].mxu0
  %v391 = vadd.f32 0.0, %v390
  %v392 = vpop.f32.mrb[0].mxu0
  %393 = vmatprep.mubr.bf16.mxu0 %v166
  %394 = vmatmul.mubr.bf16.gmra.mrb[0].mxu0 %v165
  %v395 = vpop.f32.mrb[0].mxu0
  %v396 = vadd.f32 0.0, %v395
  %v397 = vpop.f32.mrb[0].mxu0
  %v398 = vpop.f32.mrb[0].mxu0
  %v399 = vadd.f32 0.0, %v398
  %v400 = vpop.f32.mrb[0].mxu0
  %401 = vmatprep.mubr.bf16.mxu0 %v168
  %402 = vmatmul.mubr.bf16.gmra.mrb[0].mxu0 %v167
  %v403 = vpop.f32.mrb[0].mxu0
  %v404 = vadd.f32 0.0, %v403
  %v405 = vpop.f32.mrb[0].mxu0
  %v406 = vpop.f32.mrb[0].mxu0
  %v407 = vadd.f32 0.0, %v406
  %v408 = vpop.f32.mrb[0].mxu0
  %409 = vmatprep.mubr.bf16.mxu0 %v170
  %410 = vmatmul.mubr.bf16.gmra.mrb[0].mxu0 %v169
  %v411 = vpop.f32.mrb[0].mxu0
  %v412 = vadd.f32 0.0, %v411
  %v413 = vpop.f32.mrb[0].mxu0
  %v414 = vpop.f32.mrb[0].mxu0
  %v415 = vadd.f32 0.0, %v414
  %v416 = vpop.f32.mrb[0].mxu0
  %417 = vmatprep.mubr.bf16.mxu0 %v172
  %418 = vmatmul.mubr.bf16.gmra.mrb[0].mxu0 %v171
  %v419 = vpop.f32.mrb[0].mxu0
  %v420 = vadd.f32 0.0, %v419
  %v421 = vpop.f32.mrb[0].mxu0
  %v422 = vpop.f32.mrb[0].mxu0
  %v423 = vadd.f32 0.0, %v422
  %v424 = vpop.f32.mrb[0].mxu0
  %425 = vmatprep.mubr.bf16.mxu0 %v174
  %426 = vmatmul.mubr.bf16.gmra.mrb[0].mxu0 %v173
  %v427 = vpop.f32.mrb[0].mxu0
  %v428 = vadd.f32 0.0, %v427
  %v429 = vpop.f32.mrb[0].mxu0
  %v430 = vpop.f32.mrb[0].mxu0
  %v431 = vpop.f32.mrb[0].mxu0
  %432 = vdwg.mxu0
  %vm433 = vcmp.gt.f32.partialorder %v332, 15.0
  %vm434 = vcmp.gt.f32.partialorder %v335, 15.0
  %vm435 = vcmp.gt.f32.partialorder %v340, 15.0
  %vm436 = vcmp.gt.f32.partialorder %v343, 15.0
  %vm437 = vcmp.gt.f32.partialorder %v348, 15.0
  %vm438 = vcmp.gt.f32.partialorder %v351, 15.0
  %vm439 = vcmp.gt.f32.partialorder %v356, 15.0
  %vm440 = vcmp.gt.f32.partialorder %v359, 15.0
  %vm441 = vcmp.gt.f32.partialorder %v364, 15.0
  %vm442 = vcmp.gt.f32.partialorder %v367, 15.0
  %vm443 = vcmp.gt.f32.partialorder %v372, 15.0
  %vm444 = vcmp.gt.f32.partialorder %v375, 15.0
  %vm445 = vcmp.gt.f32.partialorder %v380, 15.0
  %vm446 = vcmp.gt.f32.partialorder %v383, 15.0
  %vm447 = vcmp.gt.f32.partialorder %v388, 15.0
  %vm448 = vcmp.gt.f32.partialorder %v391, 15.0
  %vm449 = vcmp.gt.f32.partialorder %v396, 15.0
  %vm450 = vcmp.gt.f32.partialorder %v399, 15.0
  %vm451 = vcmp.gt.f32.partialorder %v404, 15.0
  %vm452 = vcmp.gt.f32.partialorder %v407, 15.0
  %vm453 = vcmp.gt.f32.partialorder %v412, 15.0
  %vm454 = vcmp.gt.f32.partialorder %v415, 15.0
  %vm455 = vcmp.gt.f32.partialorder %v420, 15.0
  %vm456 = vcmp.gt.f32.partialorder %v423, 15.0
  %vm457 = vcmp.gt.f32.partialorder %v428, 15.0
  %v458 = vsel %vm433, 1, 0
  %v459 = vsel %vm434, 1, 0
  %v460 = vsel %vm435, 1, 0
  %v461 = vsel %vm436, 1, 0
  %v462 = vsel %vm437, 1, 0
  %v463 = vsel %vm438, 1, 0
  %v464 = vsel %vm439, 1, 0
  %v465 = vsel %vm440, 1, 0
  %v466 = vsel %vm441, 1, 0
  %v467 = vsel %vm442, 1, 0
  %v468 = vsel %vm443, 1, 0
  %v469 = vsel %vm444, 1, 0
  %v470 = vsel %vm445, 1, 0
  %v471 = vsel %vm446, 1, 0
  %v472 = vsel %vm447, 1, 0
  %v473 = vsel %vm448, 1, 0
  %v474 = vsel %vm449, 1, 0
  %v475 = vsel %vm450, 1, 0
  %v476 = vsel %vm451, 1, 0
  %v477 = vsel %vm452, 1, 0
  %v478 = vsel %vm453, 1, 0
  %v479 = vsel %vm454, 1, 0
  %v480 = vsel %vm455, 1, 0
  %v481 = vsel %vm456, 1, 0
  %v482 = vsel %vm457, 1, 0
  %v483 = vcvt.s32.f32 %v458
  %v484 = vcvt.s32.f32 %v459
  %v485 = vcvt.s32.f32 %v460
  %v486 = vcvt.s32.f32 %v461
  %v487 = vcvt.s32.f32 %v462
  %v488 = vcvt.s32.f32 %v463
  %v489 = vcvt.s32.f32 %v464
  %v490 = vcvt.s32.f32 %v465
  %v491 = vcvt.s32.f32 %v466
  %v492 = vcvt.s32.f32 %v467
  %v493 = vcvt.s32.f32 %v468
  %v494 = vcvt.s32.f32 %v469
  %v495 = vcvt.s32.f32 %v470
  %v496 = vcvt.s32.f32 %v471
  %v497 = vcvt.s32.f32 %v472
  %v498 = vcvt.s32.f32 %v473
  %v499 = vcvt.s32.f32 %v474
  %v500 = vcvt.s32.f32 %v475
  %v501 = vcvt.s32.f32 %v476
  %v502 = vcvt.s32.f32 %v477
  %v503 = vcvt.s32.f32 %v478
  %v504 = vcvt.s32.f32 %v479
  %v505 = vcvt.s32.f32 %v480
  %v506 = vcvt.s32.f32 %v481
  %v507 = vcvt.s32.f32 %v482
  %v508 = vpack.c.bf16 %v484, %v483
  %v509 = vpack.c.bf16 %v486, %v485
  %v510 = vpack.c.bf16 %v488, %v487
  %v511 = vpack.c.bf16 %v490, %v489
  %v512 = vpack.c.bf16 %v492, %v491
  %v513 = vpack.c.bf16 %v494, %v493
  %v514 = vpack.c.bf16 %v496, %v495
  %v515 = vpack.c.bf16 %v498, %v497
  %v516 = vpack.c.bf16 %v500, %v499
  %v517 = vpack.c.bf16 %v502, %v501
  %v518 = vpack.c.bf16 %v504, %v503
  %v519 = vpack.c.bf16 %v506, %v505
  %v520 = vpack.c.bf16 %v507, %v507
  %v534 = vunpack.c.l.b16 %v508
  %v535 = vunpack.c.h.b16 %v508
  %v536 = vunpack.c.l.b16 %v509
  %v537 = vunpack.c.h.b16 %v509
  %v538 = vunpack.c.l.b16 %v510
  %v539 = vunpack.c.h.b16 %v510
  %v540 = vunpack.c.l.b16 %v511
  %v541 = vunpack.c.h.b16 %v511
  %v542 = vunpack.c.l.b16 %v512
  %v543 = vunpack.c.h.b16 %v512
  %v544 = vunpack.c.l.b16 %v513
  %v545 = vunpack.c.h.b16 %v513
  %v546 = vunpack.c.l.b16 %v514
  %v547 = vunpack.c.h.b16 %v514
  %v548 = vunpack.c.l.b16 %v515
  %v549 = vunpack.c.h.b16 %v515
  %v550 = vunpack.c.l.b16 %v516
  %v551 = vunpack.c.h.b16 %v516
  %v552 = vunpack.c.l.b16 %v517
  %v553 = vunpack.c.h.b16 %v517
  %v554 = vunpack.c.l.b16 %v518
  %v555 = vunpack.c.h.b16 %v518
  %v556 = vunpack.c.l.b16 %v519
  %v557 = vunpack.c.h.b16 %v519
  %v558 = vunpack.c.l.b16 %v520
  %v559 = vpack.c.b16 %v534, %v534
  %v560 = vpack.c.b16 %v535, %v535
  %v561 = vpack.c.b16 %v536, %v536
  %v562 = vpack.c.b16 %v537, %v537
  %v563 = vpack.c.b16 %v538, %v538
  %v564 = vpack.c.b16 %v539, %v539
  %v565 = vpack.c.b16 %v540, %v540
  %v566 = vpack.c.b16 %v541, %v541
  %v567 = vpack.c.b16 %v542, %v542
  %v568 = vpack.c.b16 %v543, %v543
  %v569 = vpack.c.b16 %v544, %v544
  %v570 = vpack.c.b16 %v545, %v545
  %v571 = vpack.c.b16 %v546, %v546
  %v572 = vpack.c.b16 %v547, %v547
  %v573 = vpack.c.b16 %v548, %v548
  %v574 = vpack.c.b16 %v549, %v549
  %v575 = vpack.c.b16 %v550, %v550
  %v576 = vpack.c.b16 %v551, %v551
  %v577 = vpack.c.b16 %v552, %v552
  %v578 = vpack.c.b16 %v553, %v553
  %v579 = vpack.c.b16 %v554, %v554
  %v580 = vpack.c.b16 %v555, %v555
  %v581 = vpack.c.b16 %v556, %v556
  %v582 = vpack.c.b16 %v557, %v557
  %v583 = vpack.c.b16 %v558, %v558
  %609 = vst [vmem:[%s3] sm:$0xf] %v559
  %610 = vst [vmem:[%s3 + $0x4] sm:$0xf] %v560
  %611 = vst [vmem:[%s3 + $0x8] sm:$0xf] %v561
  %612 = vst [vmem:[%s3 + $0xc] sm:$0xf] %v562
  %613 = vst [vmem:[%s3 + $0x10] sm:$0xf] %v563
  %614 = vst [vmem:[%s3 + $0x14] sm:$0xf] %v564
  %615 = vst [vmem:[%s3 + $0x18] sm:$0xf] %v565
  %616 = vst [vmem:[%s3 + $0x1c] sm:$0xf] %v566
  %617 = vst [vmem:[%s3 + $0x20] sm:$0xf] %v567
  %618 = vst [vmem:[%s3 + $0x24] sm:$0xf] %v568
  %619 = vst [vmem:[%s3 + $0x28] sm:$0xf] %v569
  %620 = vst [vmem:[%s3 + $0x2c] sm:$0xf] %v570
  %621 = vst [vmem:[%s3 + $0x30] sm:$0xf] %v571
  %622 = vst [vmem:[%s3 + $0x34] sm:$0xf] %v572
  %623 = vst [vmem:[%s3 + $0x38] sm:$0xf] %v573
  %624 = vst [vmem:[%s3 + $0x3c] sm:$0xf] %v574
  %625 = vst [vmem:[%s3 + $0x40] sm:$0xf] %v575
  %626 = vst [vmem:[%s3 + $0x44] sm:$0xf] %v576
  %627 = vst [vmem:[%s3 + $0x48] sm:$0xf] %v577
  %628 = vst [vmem:[%s3 + $0x4c] sm:$0xf] %v578
  %629 = vst [vmem:[%s3 + $0x50] sm:$0xf] %v579
  %630 = vst [vmem:[%s3 + $0x54] sm:$0xf] %v580
  %631 = vst [vmem:[%s3 + $0x58] sm:$0xf] %v581
  %632 = vst [vmem:[%s3 + $0x5c] sm:$0xf] %v582
  %633 = vst [vmem:[%s3 + $0x60] sm:$0x3] %v583
  %v659 = vcombine.high %v483, %v483
  %v661 = vunpack.c.l.s4 1983009808
  %v662 = vunpack.c.0.s8 %v661
  %v663 = vlaneseq
  %v664 = vshrl.u32 %v663, 7
  %v665 = vsub.s32 %v662, %v664
  %v666 = vrot.slane %v483, %v665
  %v668 = vunpack.c.l.s4 1983009808
  %v669 = vunpack.c.0.s8 %v668
  %v670 = vlaneseq
  %v671 = vshrl.u32 %v670, 7
  %v672 = vsub.s32 %v669, %v671
  %v673 = vrot.slane %v659, %v672
  %v674 = vcombine.high %v666, %v666
  %v675 = vcombine.high %v673, %v673
  %v676 = vcombine.high %v484, %v484
  %v678 = vunpack.c.l.s4 1983009808
  %v679 = vunpack.c.0.s8 %v678
  %v680 = vlaneseq
  %v681 = vshrl.u32 %v680, 7
  %v682 = vsub.s32 %v679, %v681
  %v683 = vrot.slane %v484, %v682
  %v685 = vunpack.c.l.s4 1983009808
  %v686 = vunpack.c.0.s8 %v685
  %v687 = vlaneseq
  %v688 = vshrl.u32 %v687, 7
  %v689 = vsub.s32 %v686, %v688
  %v690 = vrot.slane %v676, %v689
  %v691 = vcombine.high %v683, %v683
  %v692 = vcombine.high %v690, %v690
  %v693 = vcombine.high %v485, %v485
  %v695 = vunpack.c.l.s4 1983009808
  %v696 = vunpack.c.0.s8 %v695
  %v697 = vlaneseq
  %v698 = vshrl.u32 %v697, 7
  %v699 = vsub.s32 %v696, %v698
  %v700 = vrot.slane %v485, %v699
  %v702 = vunpack.c.l.s4 1983009808
  %v703 = vunpack.c.0.s8 %v702
  %v704 = vlaneseq
  %v705 = vshrl.u32 %v704, 7
  %v706 = vsub.s32 %v703, %v705
  %v707 = vrot.slane %v693, %v706
  %v708 = vcombine.high %v700, %v700
  %v709 = vcombine.high %v707, %v707
  %v710 = vcombine.high %v486, %v486
  %v712 = vunpack.c.l.s4 1983009808
  %v713 = vunpack.c.0.s8 %v712
  %v714 = vlaneseq
  %v715 = vshrl.u32 %v714, 7
  %v716 = vsub.s32 %v713, %v715
  %v717 = vrot.slane %v486, %v716
  %v719 = vunpack.c.l.s4 1983009808
  %v720 = vunpack.c.0.s8 %v719
  %v721 = vlaneseq
  %v722 = vshrl.u32 %v721, 7
  %v723 = vsub.s32 %v720, %v722
  %v724 = vrot.slane %v710, %v723
  %v725 = vcombine.high %v717, %v717
  %v726 = vcombine.high %v724, %v724
  %v727 = vcombine.high %v487, %v487
  %v729 = vunpack.c.l.s4 1983009808
  %v730 = vunpack.c.0.s8 %v729
  %v731 = vlaneseq
  %v732 = vshrl.u32 %v731, 7
  %v733 = vsub.s32 %v730, %v732
  %v734 = vrot.slane %v487, %v733
  %v736 = vunpack.c.l.s4 1983009808
  %v737 = vunpack.c.0.s8 %v736
  %v738 = vlaneseq
  %v739 = vshrl.u32 %v738, 7
  %v740 = vsub.s32 %v737, %v739
  %v741 = vrot.slane %v727, %v740
  %v742 = vcombine.high %v734, %v734
  %v743 = vcombine.high %v741, %v741
  %v744 = vcombine.high %v488, %v488
  %v746 = vunpack.c.l.s4 1983009808
  %v747 = vunpack.c.0.s8 %v746
  %v748 = vlaneseq
  %v749 = vshrl.u32 %v748, 7
  %v750 = vsub.s32 %v747, %v749
  %v751 = vrot.slane %v488, %v750
  %v753 = vunpack.c.l.s4 1983009808
  %v754 = vunpack.c.0.s8 %v753
  %v755 = vlaneseq
  %v756 = vshrl.u32 %v755, 7
  %v757 = vsub.s32 %v754, %v756
  %v758 = vrot.slane %v744, %v757
  %v759 = vcombine.high %v751, %v751
  %v760 = vcombine.high %v758, %v758
  %v761 = vcombine.high %v489, %v489
  %v763 = vunpack.c.l.s4 1983009808
  %v764 = vunpack.c.0.s8 %v763
  %v765 = vlaneseq
  %v766 = vshrl.u32 %v765, 7
  %v767 = vsub.s32 %v764, %v766
  %v768 = vrot.slane %v489, %v767
  %v770 = vunpack.c.l.s4 1983009808
  %v771 = vunpack.c.0.s8 %v770
  %v772 = vlaneseq
  %v773 = vshrl.u32 %v772, 7
  %v774 = vsub.s32 %v771, %v773
  %v775 = vrot.slane %v761, %v774
  %v776 = vcombine.high %v768, %v768
  %v777 = vcombine.high %v775, %v775
  %v778 = vcombine.high %v490, %v490
  %v780 = vunpack.c.l.s4 1983009808
  %v781 = vunpack.c.0.s8 %v780
  %v782 = vlaneseq
  %v783 = vshrl.u32 %v782, 7
  %v784 = vsub.s32 %v781, %v783
  %v785 = vrot.slane %v490, %v784
  %v787 = vunpack.c.l.s4 1983009808
  %v788 = vunpack.c.0.s8 %v787
  %v789 = vlaneseq
  %v790 = vshrl.u32 %v789, 7
  %v791 = vsub.s32 %v788, %v790
  %v792 = vrot.slane %v778, %v791
  %v793 = vcombine.high %v785, %v785
  %v794 = vcombine.high %v792, %v792
  %v795 = vcombine.high %v491, %v491
  %v797 = vunpack.c.l.s4 1983009808
  %v798 = vunpack.c.0.s8 %v797
  %v799 = vlaneseq
  %v800 = vshrl.u32 %v799, 7
  %v801 = vsub.s32 %v798, %v800
  %v802 = vrot.slane %v491, %v801
  %v804 = vunpack.c.l.s4 1983009808
  %v805 = vunpack.c.0.s8 %v804
  %v806 = vlaneseq
  %v807 = vshrl.u32 %v806, 7
  %v808 = vsub.s32 %v805, %v807
  %v809 = vrot.slane %v795, %v808
  %v810 = vcombine.high %v802, %v802
  %v811 = vcombine.high %v809, %v809
  %v812 = vcombine.high %v492, %v492
  %v814 = vunpack.c.l.s4 1983009808
  %v815 = vunpack.c.0.s8 %v814
  %v816 = vlaneseq
  %v817 = vshrl.u32 %v816, 7
  %v818 = vsub.s32 %v815, %v817
  %v819 = vrot.slane %v492, %v818
  %v821 = vunpack.c.l.s4 1983009808
  %v822 = vunpack.c.0.s8 %v821
  %v823 = vlaneseq
  %v824 = vshrl.u32 %v823, 7
  %v825 = vsub.s32 %v822, %v824
  %v826 = vrot.slane %v812, %v825
  %v827 = vcombine.high %v819, %v819
  %v828 = vcombine.high %v826, %v826
  %v829 = vcombine.high %v493, %v493
  %v831 = vunpack.c.l.s4 1983009808
  %v832 = vunpack.c.0.s8 %v831
  %v833 = vlaneseq
  %v834 = vshrl.u32 %v833, 7
  %v835 = vsub.s32 %v832, %v834
  %v836 = vrot.slane %v493, %v835
  %v838 = vunpack.c.l.s4 1983009808
  %v839 = vunpack.c.0.s8 %v838
  %v840 = vlaneseq
  %v841 = vshrl.u32 %v840, 7
  %v842 = vsub.s32 %v839, %v841
  %v843 = vrot.slane %v829, %v842
  %v844 = vcombine.high %v836, %v836
  %v845 = vcombine.high %v843, %v843
  %v846 = vcombine.high %v494, %v494
  %v848 = vunpack.c.l.s4 1983009808
  %v849 = vunpack.c.0.s8 %v848
  %v850 = vlaneseq
  %v851 = vshrl.u32 %v850, 7
  %v852 = vsub.s32 %v849, %v851
  %v853 = vrot.slane %v494, %v852
  %v855 = vunpack.c.l.s4 1983009808
  %v856 = vunpack.c.0.s8 %v855
  %v857 = vlaneseq
  %v858 = vshrl.u32 %v857, 7
  %v859 = vsub.s32 %v856, %v858
  %v860 = vrot.slane %v846, %v859
  %v861 = vcombine.high %v853, %v853
  %v862 = vcombine.high %v860, %v860
  %v863 = vcombine.high %v495, %v495
  %v865 = vunpack.c.l.s4 1983009808
  %v866 = vunpack.c.0.s8 %v865
  %v867 = vlaneseq
  %v868 = vshrl.u32 %v867, 7
  %v869 = vsub.s32 %v866, %v868
  %v870 = vrot.slane %v495, %v869
  %v872 = vunpack.c.l.s4 1983009808
  %v873 = vunpack.c.0.s8 %v872
  %v874 = vlaneseq
  %v875 = vshrl.u32 %v874, 7
  %v876 = vsub.s32 %v873, %v875
  %v877 = vrot.slane %v863, %v876
  %v878 = vcombine.high %v870, %v870
  %v879 = vcombine.high %v877, %v877
  %v880 = vcombine.high %v496, %v496
  %v882 = vunpack.c.l.s4 1983009808
  %v883 = vunpack.c.0.s8 %v882
  %v884 = vlaneseq
  %v885 = vshrl.u32 %v884, 7
  %v886 = vsub.s32 %v883, %v885
  %v887 = vrot.slane %v496, %v886
  %v889 = vunpack.c.l.s4 1983009808
  %v890 = vunpack.c.0.s8 %v889
  %v891 = vlaneseq
  %v892 = vshrl.u32 %v891, 7
  %v893 = vsub.s32 %v890, %v892
  %v894 = vrot.slane %v880, %v893
  %v895 = vcombine.high %v887, %v887
  %v896 = vcombine.high %v894, %v894
  %v897 = vcombine.high %v497, %v497
  %v899 = vunpack.c.l.s4 1983009808
  %v900 = vunpack.c.0.s8 %v899
  %v901 = vlaneseq
  %v902 = vshrl.u32 %v901, 7
  %v903 = vsub.s32 %v900, %v902
  %v904 = vrot.slane %v497, %v903
  %v906 = vunpack.c.l.s4 1983009808
  %v907 = vunpack.c.0.s8 %v906
  %v908 = vlaneseq
  %v909 = vshrl.u32 %v908, 7
  %v910 = vsub.s32 %v907, %v909
  %v911 = vrot.slane %v897, %v910
  %v912 = vcombine.high %v904, %v904
  %v913 = vcombine.high %v911, %v911
  %v914 = vcombine.high %v498, %v498
  %v916 = vunpack.c.l.s4 1983009808
  %v917 = vunpack.c.0.s8 %v916
  %v918 = vlaneseq
  %v919 = vshrl.u32 %v918, 7
  %v920 = vsub.s32 %v917, %v919
  %v921 = vrot.slane %v498, %v920
  %v923 = vunpack.c.l.s4 1983009808
  %v924 = vunpack.c.0.s8 %v923
  %v925 = vlaneseq
  %v926 = vshrl.u32 %v925, 7
  %v927 = vsub.s32 %v924, %v926
  %v928 = vrot.slane %v914, %v927
  %v929 = vcombine.high %v921, %v921
  %v930 = vcombine.high %v928, %v928
  %v931 = vcombine.high %v499, %v499
  %v933 = vunpack.c.l.s4 1983009808
  %v934 = vunpack.c.0.s8 %v933
  %v935 = vlaneseq
  %v936 = vshrl.u32 %v935, 7
  %v937 = vsub.s32 %v934, %v936
  %v938 = vrot.slane %v499, %v937
  %v940 = vunpack.c.l.s4 1983009808
  %v941 = vunpack.c.0.s8 %v940
  %v942 = vlaneseq
  %v943 = vshrl.u32 %v942, 7
  %v944 = vsub.s32 %v941, %v943
  %v945 = vrot.slane %v931, %v944
  %v946 = vcombine.high %v938, %v938
  %v947 = vcombine.high %v945, %v945
  %v948 = vcombine.high %v500, %v500
  %v950 = vunpack.c.l.s4 1983009808
  %v951 = vunpack.c.0.s8 %v950
  %v952 = vlaneseq
  %v953 = vshrl.u32 %v952, 7
  %v954 = vsub.s32 %v951, %v953
  %v955 = vrot.slane %v500, %v954
  %v957 = vunpack.c.l.s4 1983009808
  %v958 = vunpack.c.0.s8 %v957
  %v959 = vlaneseq
  %v960 = vshrl.u32 %v959, 7
  %v961 = vsub.s32 %v958, %v960
  %v962 = vrot.slane %v948, %v961
  %v963 = vcombine.high %v955, %v955
  %v964 = vcombine.high %v962, %v962
  %v965 = vcombine.high %v501, %v501
  %v967 = vunpack.c.l.s4 1983009808
  %v968 = vunpack.c.0.s8 %v967
  %v969 = vlaneseq
  %v970 = vshrl.u32 %v969, 7
  %v971 = vsub.s32 %v968, %v970
  %v972 = vrot.slane %v501, %v971
  %v974 = vunpack.c.l.s4 1983009808
  %v975 = vunpack.c.0.s8 %v974
  %v976 = vlaneseq
  %v977 = vshrl.u32 %v976, 7
  %v978 = vsub.s32 %v975, %v977
  %v979 = vrot.slane %v965, %v978
  %v980 = vcombine.high %v972, %v972
  %v981 = vcombine.high %v979, %v979
  %v982 = vcombine.high %v502, %v502
  %v984 = vunpack.c.l.s4 1983009808
  %v985 = vunpack.c.0.s8 %v984
  %v986 = vlaneseq
  %v987 = vshrl.u32 %v986, 7
  %v988 = vsub.s32 %v985, %v987
  %v989 = vrot.slane %v502, %v988
  %v991 = vunpack.c.l.s4 1983009808
  %v992 = vunpack.c.0.s8 %v991
  %v993 = vlaneseq
  %v994 = vshrl.u32 %v993, 7
  %v995 = vsub.s32 %v992, %v994
  %v996 = vrot.slane %v982, %v995
  %v997 = vcombine.high %v989, %v989
  %v998 = vcombine.high %v996, %v996
  %v999 = vcombine.high %v503, %v503
  %v1001 = vunpack.c.l.s4 1983009808
  %v1002 = vunpack.c.0.s8 %v1001
  %v1003 = vlaneseq
  %v1004 = vshrl.u32 %v1003, 7
  %v1005 = vsub.s32 %v1002, %v1004
  %v1006 = vrot.slane %v503, %v1005
  %v1008 = vunpack.c.l.s4 1983009808
  %v1009 = vunpack.c.0.s8 %v1008
  %v1010 = vlaneseq
  %v1011 = vshrl.u32 %v1010, 7
  %v1012 = vsub.s32 %v1009, %v1011
  %v1013 = vrot.slane %v999, %v1012
  %v1014 = vcombine.high %v1006, %v1006
  %v1015 = vcombine.high %v1013, %v1013
  %v1016 = vcombine.high %v504, %v504
  %v1018 = vunpack.c.l.s4 1983009808
  %v1019 = vunpack.c.0.s8 %v1018
  %v1020 = vlaneseq
  %v1021 = vshrl.u32 %v1020, 7
  %v1022 = vsub.s32 %v1019, %v1021
  %v1023 = vrot.slane %v504, %v1022
  %v1025 = vunpack.c.l.s4 1983009808
  %v1026 = vunpack.c.0.s8 %v1025
  %v1027 = vlaneseq
  %v1028 = vshrl.u32 %v1027, 7
  %v1029 = vsub.s32 %v1026, %v1028
  %v1030 = vrot.slane %v1016, %v1029
  %v1031 = vcombine.high %v1023, %v1023
  %v1032 = vcombine.high %v1030, %v1030
  %v1033 = vcombine.high %v505, %v505
  %v1035 = vunpack.c.l.s4 1983009808
  %v1036 = vunpack.c.0.s8 %v1035
  %v1037 = vlaneseq
  %v1038 = vshrl.u32 %v1037, 7
  %v1039 = vsub.s32 %v1036, %v1038
  %v1040 = vrot.slane %v505, %v1039
  %v1042 = vunpack.c.l.s4 1983009808
  %v1043 = vunpack.c.0.s8 %v1042
  %v1044 = vlaneseq
  %v1045 = vshrl.u32 %v1044, 7
  %v1046 = vsub.s32 %v1043, %v1045
  %v1047 = vrot.slane %v1033, %v1046
  %v1048 = vcombine.high %v1040, %v1040
  %v1049 = vcombine.high %v1047, %v1047
  %v1050 = vcombine.high %v506, %v506
  %v1052 = vunpack.c.l.s4 1983009808
  %v1053 = vunpack.c.0.s8 %v1052
  %v1054 = vlaneseq
  %v1055 = vshrl.u32 %v1054, 7
  %v1056 = vsub.s32 %v1053, %v1055
  %v1057 = vrot.slane %v506, %v1056
  %v1059 = vunpack.c.l.s4 1983009808
  %v1060 = vunpack.c.0.s8 %v1059
  %v1061 = vlaneseq
  %v1062 = vshrl.u32 %v1061, 7
  %v1063 = vsub.s32 %v1060, %v1062
  %v1064 = vrot.slane %v1050, %v1063
  %v1065 = vcombine.high %v1057, %v1057
  %v1066 = vcombine.high %v1064, %v1064
  %v1068 = vunpack.c.l.s4 1983009808
  %v1069 = vunpack.c.0.s8 %v1068
  %v1070 = vlaneseq
  %v1071 = vshrl.u32 %v1070, 7
  %v1072 = vsub.s32 %v1069, %v1071
  %v1073 = vrot.slane %v507, %v1072
  %v1074 = vcombine.high %v1073, %v1073
  %v1173 = vrot.slane %v666, 7
  %v1174 = vrot.slane %v1173, 2
  %v1175 = vrot.slane %v674, 7
  %v1176 = vrot.slane %v1175, 2
  %v1177 = vrot.slane %v673, 7
  %v1178 = vrot.slane %v1177, 2
  %v1179 = vrot.slane %v675, 7
  %v1180 = vrot.slane %v1179, 2
  %v1181 = vrot.slane %v683, 7
  %v1182 = vrot.slane %v1181, 2
  %v1183 = vrot.slane %v691, 7
  %v1184 = vrot.slane %v1183, 2
  %v1185 = vrot.slane %v690, 7
  %v1186 = vrot.slane %v1185, 2
  %v1187 = vrot.slane %v692, 7
  %v1188 = vrot.slane %v1187, 2
  %v1189 = vrot.slane %v700, 7
  %v1190 = vrot.slane %v1189, 2
  %v1191 = vrot.slane %v708, 7
  %v1192 = vrot.slane %v1191, 2
  %v1193 = vrot.slane %v707, 7
  %v1194 = vrot.slane %v1193, 2
  %v1195 = vrot.slane %v709, 7
  %v1196 = vrot.slane %v1195, 2
  %v1197 = vrot.slane %v717, 7
  %v1198 = vrot.slane %v1197, 2
  %v1199 = vrot.slane %v725, 7
  %v1200 = vrot.slane %v1199, 2
  %v1201 = vrot.slane %v724, 7
  %v1202 = vrot.slane %v1201, 2
  %v1203 = vrot.slane %v726, 7
  %v1204 = vrot.slane %v1203, 2
  %v1205 = vrot.slane %v734, 7
  %v1206 = vrot.slane %v1205, 2
  %v1207 = vrot.slane %v742, 7
  %v1208 = vrot.slane %v1207, 2
  %v1209 = vrot.slane %v741, 7
  %v1210 = vrot.slane %v1209, 2
  %v1211 = vrot.slane %v743, 7
  %v1212 = vrot.slane %v1211, 2
  %v1213 = vrot.slane %v751, 7
  %v1214 = vrot.slane %v1213, 2
  %v1215 = vrot.slane %v759, 7
  %v1216 = vrot.slane %v1215, 2
  %v1217 = vrot.slane %v758, 7
  %v1218 = vrot.slane %v1217, 2
  %v1219 = vrot.slane %v760, 7
  %v1220 = vrot.slane %v1219, 2
  %v1221 = vrot.slane %v768, 7
  %v1222 = vrot.slane %v1221, 2
  %v1223 = vrot.slane %v776, 7
  %v1224 = vrot.slane %v1223, 2
  %v1225 = vrot.slane %v775, 7
  %v1226 = vrot.slane %v1225, 2
  %v1227 = vrot.slane %v777, 7
  %v1228 = vrot.slane %v1227, 2
  %v1229 = vrot.slane %v785, 7
  %v1230 = vrot.slane %v1229, 2
  %v1231 = vrot.slane %v793, 7
  %v1232 = vrot.slane %v1231, 2
  %v1233 = vrot.slane %v792, 7
  %v1234 = vrot.slane %v1233, 2
  %v1235 = vrot.slane %v794, 7
  %v1236 = vrot.slane %v1235, 2
  %v1237 = vrot.slane %v802, 7
  %v1238 = vrot.slane %v1237, 2
  %v1239 = vrot.slane %v810, 7
  %v1240 = vrot.slane %v1239, 2
  %v1241 = vrot.slane %v809, 7
  %v1242 = vrot.slane %v1241, 2
  %v1243 = vrot.slane %v811, 7
  %v1244 = vrot.slane %v1243, 2
  %v1245 = vrot.slane %v819, 7
  %v1246 = vrot.slane %v1245, 2
  %v1247 = vrot.slane %v827, 7
  %v1248 = vrot.slane %v1247, 2
  %v1249 = vrot.slane %v826, 7
  %v1250 = vrot.slane %v1249, 2
  %v1251 = vrot.slane %v828, 7
  %v1252 = vrot.slane %v1251, 2
  %v1253 = vrot.slane %v836, 7
  %v1254 = vrot.slane %v1253, 2
  %v1255 = vrot.slane %v844, 7
  %v1256 = vrot.slane %v1255, 2
  %v1257 = vrot.slane %v843, 7
  %v1258 = vrot.slane %v1257, 2
  %v1259 = vrot.slane %v845, 7
  %v1260 = vrot.slane %v1259, 2
  %v1261 = vrot.slane %v853, 7
  %v1262 = vrot.slane %v1261, 2
  %v1263 = vrot.slane %v861, 7
  %v1264 = vrot.slane %v1263, 2
  %v1265 = vrot.slane %v860, 7
  %v1266 = vrot.slane %v1265, 2
  %v1267 = vrot.slane %v862, 7
  %v1268 = vrot.slane %v1267, 2
  %v1269 = vrot.slane %v870, 7
  %v1270 = vrot.slane %v1269, 2
  %v1271 = vrot.slane %v878, 7
  %v1272 = vrot.slane %v1271, 2
  %v1273 = vrot.slane %v877, 7
  %v1274 = vrot.slane %v1273, 2
  %v1275 = vrot.slane %v879, 7
  %v1276 = vrot.slane %v1275, 2
  %v1277 = vrot.slane %v887, 7
  %v1278 = vrot.slane %v1277, 2
  %v1279 = vrot.slane %v895, 7
  %v1280 = vrot.slane %v1279, 2
  %v1281 = vrot.slane %v894, 7
  %v1282 = vrot.slane %v1281, 2
  %v1283 = vrot.slane %v896, 7
  %v1284 = vrot.slane %v1283, 2
  %v1285 = vrot.slane %v904, 7
  %v1286 = vrot.slane %v1285, 2
  %v1287 = vrot.slane %v912, 7
  %v1288 = vrot.slane %v1287, 2
  %v1289 = vrot.slane %v911, 7
  %v1290 = vrot.slane %v1289, 2
  %v1291 = vrot.slane %v913, 7
  %v1292 = vrot.slane %v1291, 2
  %v1293 = vrot.slane %v921, 7
  %v1294 = vrot.slane %v1293, 2
  %v1295 = vrot.slane %v929, 7
  %v1296 = vrot.slane %v1295, 2
  %v1297 = vrot.slane %v928, 7
  %v1298 = vrot.slane %v1297, 2
  %v1299 = vrot.slane %v930, 7
  %v1300 = vrot.slane %v1299, 2
  %v1301 = vrot.slane %v938, 7
  %v1302 = vrot.slane %v1301, 2
  %v1303 = vrot.slane %v946, 7
  %v1304 = vrot.slane %v1303, 2
  %v1305 = vrot.slane %v945, 7
  %v1306 = vrot.slane %v1305, 2
  %v1307 = vrot.slane %v947, 7
  %v1308 = vrot.slane %v1307, 2
  %v1309 = vrot.slane %v955, 7
  %v1310 = vrot.slane %v1309, 2
  %v1311 = vrot.slane %v963, 7
  %v1312 = vrot.slane %v1311, 2
  %v1313 = vrot.slane %v962, 7
  %v1314 = vrot.slane %v1313, 2
  %v1315 = vrot.slane %v964, 7
  %v1316 = vrot.slane %v1315, 2
  %v1317 = vrot.slane %v972, 7
  %v1318 = vrot.slane %v1317, 2
  %v1319 = vrot.slane %v980, 7
  %v1320 = vrot.slane %v1319, 2
  %v1321 = vrot.slane %v979, 7
  %v1322 = vrot.slane %v1321, 2
  %v1323 = vrot.slane %v981, 7
  %v1324 = vrot.slane %v1323, 2
  %v1325 = vrot.slane %v989, 7
  %v1326 = vrot.slane %v1325, 2
  %v1327 = vrot.slane %v997, 7
  %v1328 = vrot.slane %v1327, 2
  %v1329 = vrot.slane %v996, 7
  %v1330 = vrot.slane %v1329, 2
  %v1331 = vrot.slane %v998, 7
  %v1332 = vrot.slane %v1331, 2
  %v1333 = vrot.slane %v1006, 7
  %v1334 = vrot.slane %v1333, 2
  %v1335 = vrot.slane %v1014, 7
  %v1336 = vrot.slane %v1335, 2
  %v1337 = vrot.slane %v1013, 7
  %v1338 = vrot.slane %v1337, 2
  %v1339 = vrot.slane %v1015, 7
  %v1340 = vrot.slane %v1339, 2
  %v1341 = vrot.slane %v1023, 7
  %v1342 = vrot.slane %v1341, 2
  %v1343 = vrot.slane %v1031, 7
  %v1344 = vrot.slane %v1343, 2
  %v1345 = vrot.slane %v1030, 7
  %v1346 = vrot.slane %v1345, 2
  %v1347 = vrot.slane %v1032, 7
  %v1348 = vrot.slane %v1347, 2
  %v1349 = vrot.slane %v1040, 7
  %v1350 = vrot.slane %v1349, 2
  %v1351 = vrot.slane %v1048, 7
  %v1352 = vrot.slane %v1351, 2
  %v1353 = vrot.slane %v1047, 7
  %v1354 = vrot.slane %v1353, 2
  %v1355 = vrot.slane %v1049, 7
  %v1356 = vrot.slane %v1355, 2
  %v1357 = vrot.slane %v1057, 7
  %v1358 = vrot.slane %v1357, 2
  %v1359 = vrot.slane %v1065, 7
  %v1360 = vrot.slane %v1359, 2
  %v1361 = vrot.slane %v1064, 7
  %v1362 = vrot.slane %v1361, 2
  %v1363 = vrot.slane %v1066, 7
  %v1364 = vrot.slane %v1363, 2
  %v1365 = vrot.slane %v1073, 7
  %v1366 = vrot.slane %v1365, 2
  %v1367 = vrot.slane %v1074, 7
  %v1368 = vrot.slane %v1367, 2
  %v1467 = vmax.f32 %v666, %v1174
  %v1468 = vmax.f32 %v674, %v1176
  %v1469 = vmax.f32 %v673, %v1178
  %v1470 = vmax.f32 %v675, %v1180
  %v1471 = vmax.f32 %v683, %v1182
  %v1472 = vmax.f32 %v691, %v1184
  %v1473 = vmax.f32 %v690, %v1186
  %v1474 = vmax.f32 %v692, %v1188
  %v1475 = vmax.f32 %v700, %v1190
  %v1476 = vmax.f32 %v708, %v1192
  %v1477 = vmax.f32 %v707, %v1194
  %v1478 = vmax.f32 %v709, %v1196
  %v1479 = vmax.f32 %v717, %v1198
  %v1480 = vmax.f32 %v725, %v1200
  %v1481 = vmax.f32 %v724, %v1202
  %v1482 = vmax.f32 %v726, %v1204
  %v1483 = vmax.f32 %v734, %v1206
  %v1484 = vmax.f32 %v742, %v1208
  %v1485 = vmax.f32 %v741, %v1210
  %v1486 = vmax.f32 %v743, %v1212
  %v1487 = vmax.f32 %v751, %v1214
  %v1488 = vmax.f32 %v759, %v1216
  %v1489 = vmax.f32 %v758, %v1218
  %v1490 = vmax.f32 %v760, %v1220
  %v1491 = vmax.f32 %v768, %v1222
  %v1492 = vmax.f32 %v776, %v1224
  %v1493 = vmax.f32 %v775, %v1226
  %v1494 = vmax.f32 %v777, %v1228
  %v1495 = vmax.f32 %v785, %v1230
  %v1496 = vmax.f32 %v793, %v1232
  %v1497 = vmax.f32 %v792, %v1234
  %v1498 = vmax.f32 %v794, %v1236
  %v1499 = vmax.f32 %v802, %v1238
  %v1500 = vmax.f32 %v810, %v1240
  %v1501 = vmax.f32 %v809, %v1242
  %v1502 = vmax.f32 %v811, %v1244
  %v1503 = vmax.f32 %v819, %v1246
  %v1504 = vmax.f32 %v827, %v1248
  %v1505 = vmax.f32 %v826, %v1250
  %v1506 = vmax.f32 %v828, %v1252
  %v1507 = vmax.f32 %v836, %v1254
  %v1508 = vmax.f32 %v844, %v1256
  %v1509 = vmax.f32 %v843, %v1258
  %v1510 = vmax.f32 %v845, %v1260
  %v1511 = vmax.f32 %v853, %v1262
  %v1512 = vmax.f32 %v861, %v1264
  %v1513 = vmax.f32 %v860, %v1266
  %v1514 = vmax.f32 %v862, %v1268
  %v1515 = vmax.f32 %v870, %v1270
  %v1516 = vmax.f32 %v878, %v1272
  %v1517 = vmax.f32 %v877, %v1274
  %v1518 = vmax.f32 %v879, %v1276
  %v1519 = vmax.f32 %v887, %v1278
  %v1520 = vmax.f32 %v895, %v1280
  %v1521 = vmax.f32 %v894, %v1282
  %v1522 = vmax.f32 %v896, %v1284
  %v1523 = vmax.f32 %v904, %v1286
  %v1524 = vmax.f32 %v912, %v1288
  %v1525 = vmax.f32 %v911, %v1290
  %v1526 = vmax.f32 %v913, %v1292
  %v1527 = vmax.f32 %v921, %v1294
  %v1528 = vmax.f32 %v929, %v1296
  %v1529 = vmax.f32 %v928, %v1298
  %v1530 = vmax.f32 %v930, %v1300
  %v1531 = vmax.f32 %v938, %v1302
  %v1532 = vmax.f32 %v946, %v1304
  %v1533 = vmax.f32 %v945, %v1306
  %v1534 = vmax.f32 %v947, %v1308
  %v1535 = vmax.f32 %v955, %v1310
  %v1536 = vmax.f32 %v963, %v1312
  %v1537 = vmax.f32 %v962, %v1314
  %v1538 = vmax.f32 %v964, %v1316
  %v1539 = vmax.f32 %v972, %v1318
  %v1540 = vmax.f32 %v980, %v1320
  %v1541 = vmax.f32 %v979, %v1322
  %v1542 = vmax.f32 %v981, %v1324
  %v1543 = vmax.f32 %v989, %v1326
  %v1544 = vmax.f32 %v997, %v1328
  %v1545 = vmax.f32 %v996, %v1330
  %v1546 = vmax.f32 %v998, %v1332
  %v1547 = vmax.f32 %v1006, %v1334
  %v1548 = vmax.f32 %v1014, %v1336
  %v1549 = vmax.f32 %v1013, %v1338
  %v1550 = vmax.f32 %v1015, %v1340
  %v1551 = vmax.f32 %v1023, %v1342
  %v1552 = vmax.f32 %v1031, %v1344
  %v1553 = vmax.f32 %v1030, %v1346
  %v1554 = vmax.f32 %v1032, %v1348
  %v1555 = vmax.f32 %v1040, %v1350
  %v1556 = vmax.f32 %v1048, %v1352
  %v1557 = vmax.f32 %v1047, %v1354
  %v1558 = vmax.f32 %v1049, %v1356
  %v1559 = vmax.f32 %v1057, %v1358
  %v1560 = vmax.f32 %v1065, %v1360
  %v1561 = vmax.f32 %v1064, %v1362
  %v1562 = vmax.f32 %v1066, %v1364
  %v1563 = vmax.f32 %v1073, %v1366
  %v1564 = vmax.f32 %v1074, %v1368
  %v1565 = vmax.f32 %v1467, %v1474
  %v1566 = vmax.f32 %v1468, %v1475
  %v1567 = vmax.f32 %v1469, %v1476
  %v1568 = vmax.f32 %v1470, %v1477
  %v1569 = vmax.f32 %v1471, %v1478
  %v1570 = vmax.f32 %v1472, %v1479
  %v1571 = vmax.f32 %v1473, %v1480
  %v1572 = vmax.f32 %v1481, %v1488
  %v1573 = vmax.f32 %v1482, %v1489
  %v1574 = vmax.f32 %v1483, %v1490
  %v1575 = vmax.f32 %v1484, %v1491
  %v1576 = vmax.f32 %v1485, %v1492
  %v1577 = vmax.f32 %v1486, %v1493
  %v1578 = vmax.f32 %v1487, %v1494
  %v1579 = vmax.f32 %v1495, %v1502
  %v1580 = vmax.f32 %v1496, %v1503
  %v1581 = vmax.f32 %v1497, %v1504
  %v1582 = vmax.f32 %v1498, %v1505
  %v1583 = vmax.f32 %v1499, %v1506
  %v1584 = vmax.f32 %v1500, %v1507
  %v1585 = vmax.f32 %v1501, %v1508
  %v1586 = vmax.f32 %v1509, %v1516
  %v1587 = vmax.f32 %v1510, %v1517
  %v1588 = vmax.f32 %v1511, %v1518
  %v1589 = vmax.f32 %v1512, %v1519
  %v1590 = vmax.f32 %v1513, %v1520
  %v1591 = vmax.f32 %v1514, %v1521
  %v1592 = vmax.f32 %v1515, %v1522
  %v1593 = vmax.f32 %v1523, %v1530
  %v1594 = vmax.f32 %v1524, %v1531
  %v1595 = vmax.f32 %v1525, %v1532
  %v1596 = vmax.f32 %v1526, %v1533
  %v1597 = vmax.f32 %v1527, %v1534
  %v1598 = vmax.f32 %v1528, %v1535
  %v1599 = vmax.f32 %v1529, %v1536
  %v1600 = vmax.f32 %v1537, %v1544
  %v1601 = vmax.f32 %v1538, %v1545
  %v1602 = vmax.f32 %v1539, %v1546
  %v1603 = vmax.f32 %v1540, %v1547
  %v1604 = vmax.f32 %v1541, %v1548
  %v1605 = vmax.f32 %v1542, %v1549
  %v1606 = vmax.f32 %v1543, %v1550
  %v1607 = vmax.f32 %v1551, %v1558
  %v1608 = vmax.f32 %v1552, %v1559
  %v1609 = vmax.f32 %v1553, %v1560
  %v1610 = vmax.f32 %v1554, %v1561
  %v1611 = vmax.f32 %v1555, %v1562
  %v1612 = vmax.f32 %v1556, %v1563
  %v1613 = vmax.f32 %v1557, %v1564
  %v1614 = vpack.c.bf16 %v1565, %v1565
  %v1615 = vpack.c.bf16 %v1566, %v1566
  %v1616 = vpack.c.bf16 %v1567, %v1567
  %v1617 = vpack.c.bf16 %v1568, %v1568
  %v1618 = vpack.c.bf16 %v1569, %v1569
  %v1619 = vpack.c.bf16 %v1570, %v1570
  %v1620 = vpack.c.bf16 %v1571, %v1571
  %v1621 = vpack.c.bf16 %v1572, %v1572
  %v1622 = vpack.c.bf16 %v1573, %v1573
  %v1623 = vpack.c.bf16 %v1574, %v1574
  %v1624 = vpack.c.bf16 %v1575, %v1575
  %v1625 = vpack.c.bf16 %v1576, %v1576
  %v1626 = vpack.c.bf16 %v1577, %v1577
  %v1627 = vpack.c.bf16 %v1578, %v1578
  %v1628 = vpack.c.bf16 %v1579, %v1579
  %v1629 = vpack.c.bf16 %v1580, %v1580
  %v1630 = vpack.c.bf16 %v1581, %v1581
  %v1631 = vpack.c.bf16 %v1582, %v1582
  %v1632 = vpack.c.bf16 %v1583, %v1583
  %v1633 = vpack.c.bf16 %v1584, %v1584
  %v1634 = vpack.c.bf16 %v1585, %v1585
  %v1635 = vpack.c.bf16 %v1586, %v1586
  %v1636 = vpack.c.bf16 %v1587, %v1587
  %v1637 = vpack.c.bf16 %v1588, %v1588
  %v1638 = vpack.c.bf16 %v1589, %v1589
  %v1639 = vpack.c.bf16 %v1590, %v1590
  %v1640 = vpack.c.bf16 %v1591, %v1591
  %v1641 = vpack.c.bf16 %v1592, %v1592
  %v1642 = vpack.c.bf16 %v1593, %v1593
  %v1643 = vpack.c.bf16 %v1594, %v1594
  %v1644 = vpack.c.bf16 %v1595, %v1595
  %v1645 = vpack.c.bf16 %v1596, %v1596
  %v1646 = vpack.c.bf16 %v1597, %v1597
  %v1647 = vpack.c.bf16 %v1598, %v1598
  %v1648 = vpack.c.bf16 %v1599, %v1599
  %v1649 = vpack.c.bf16 %v1600, %v1600
  %v1650 = vpack.c.bf16 %v1601, %v1601
  %v1651 = vpack.c.bf16 %v1602, %v1602
  %v1652 = vpack.c.bf16 %v1603, %v1603
  %v1653 = vpack.c.bf16 %v1604, %v1604
  %v1654 = vpack.c.bf16 %v1605, %v1605
  %v1655 = vpack.c.bf16 %v1606, %v1606
  %v1656 = vpack.c.bf16 %v1607, %v1607
  %v1657 = vpack.c.bf16 %v1608, %v1608
  %v1658 = vpack.c.bf16 %v1609, %v1609
  %v1659 = vpack.c.bf16 %v1610, %v1610
  %v1660 = vpack.c.bf16 %v1611, %v1611
  %v1661 = vpack.c.bf16 %v1612, %v1612
  %v1662 = vpack.c.bf16 %v1613, %v1613
  %v1712 = vunpack.c.l.b16 %v1614
  %v1713 = vunpack.c.l.b16 %v1615
  %v1714 = vunpack.c.l.b16 %v1616
  %v1715 = vunpack.c.l.b16 %v1617
  %v1716 = vunpack.c.l.b16 %v1618
  %v1717 = vunpack.c.l.b16 %v1619
  %v1718 = vunpack.c.l.b16 %v1620
  %v1719 = vunpack.c.l.b16 %v1621
  %v1720 = vunpack.c.l.b16 %v1622
  %v1721 = vunpack.c.l.b16 %v1623
  %v1722 = vunpack.c.l.b16 %v1624
  %v1723 = vunpack.c.l.b16 %v1625
  %v1724 = vunpack.c.l.b16 %v1626
  %v1725 = vunpack.c.l.b16 %v1627
  %v1726 = vunpack.c.l.b16 %v1628
  %v1727 = vunpack.c.l.b16 %v1629
  %v1728 = vunpack.c.l.b16 %v1630
  %v1729 = vunpack.c.l.b16 %v1631
  %v1730 = vunpack.c.l.b16 %v1632
  %v1731 = vunpack.c.l.b16 %v1633
  %v1732 = vunpack.c.l.b16 %v1634
  %v1733 = vunpack.c.l.b16 %v1635
  %v1734 = vunpack.c.l.b16 %v1636
  %v1735 = vunpack.c.l.b16 %v1637
  %v1736 = vunpack.c.l.b16 %v1638
  %v1737 = vunpack.c.l.b16 %v1639
  %v1738 = vunpack.c.l.b16 %v1640
  %v1739 = vunpack.c.l.b16 %v1641
  %v1740 = vunpack.c.l.b16 %v1642
  %v1741 = vunpack.c.l.b16 %v1643
  %v1742 = vunpack.c.l.b16 %v1644
  %v1743 = vunpack.c.l.b16 %v1645
  %v1744 = vunpack.c.l.b16 %v1646
  %v1745 = vunpack.c.l.b16 %v1647
  %v1746 = vunpack.c.l.b16 %v1648
  %v1747 = vunpack.c.l.b16 %v1649
  %v1748 = vunpack.c.l.b16 %v1650
  %v1749 = vunpack.c.l.b16 %v1651
  %v1750 = vunpack.c.l.b16 %v1652
  %v1751 = vunpack.c.l.b16 %v1653
  %v1752 = vunpack.c.l.b16 %v1654
  %v1753 = vunpack.c.l.b16 %v1655
  %v1754 = vunpack.c.l.b16 %v1656
  %v1755 = vunpack.c.l.b16 %v1657
  %v1756 = vunpack.c.l.b16 %v1658
  %v1757 = vunpack.c.l.b16 %v1659
  %v1758 = vunpack.c.l.b16 %v1660
  %v1759 = vunpack.c.l.b16 %v1661
  %v1760 = vunpack.c.l.b16 %v1662
  %v1761 = vrot.slane %v1713, 7
  %vm1762 = vcmask 1041409
  %v1763 = vsel %vm1762, %v1761, %v1712
  %v1764 = vrot.slane %v1714, 6
  %vm1765 = vcmask 1042434
  %v1766 = vsel %vm1765, %v1764, %v1763
  %v1767 = vrot.slane %v1715, 5
  %vm1768 = vcmask 1043459
  %v1769 = vsel %vm1768, %v1767, %v1766
  %v1770 = vrot.slane %v1716, 4
  %vm1771 = vcmask 1044484
  %v1772 = vsel %vm1771, %v1770, %v1769
  %v1773 = vrot.slane %v1717, 3
  %vm1774 = vcmask 1045509
  %v1775 = vsel %vm1774, %v1773, %v1772
  %v1776 = vrot.slane %v1718, 2
  %vm1777 = vcmask 1046534
  %v1778 = vsel %vm1777, %v1776, %v1775
  %v1779 = vrot.slane %v1720, 7
  %v1780 = vsel %vm1762, %v1779, %v1719
  %v1781 = vrot.slane %v1721, 6
  %v1782 = vsel %vm1765, %v1781, %v1780
  %v1783 = vrot.slane %v1722, 5
  %v1784 = vsel %vm1768, %v1783, %v1782
  %v1785 = vrot.slane %v1723, 4
  %v1786 = vsel %vm1771, %v1785, %v1784
  %v1787 = vrot.slane %v1724, 3
  %v1788 = vsel %vm1774, %v1787, %v1786
  %v1789 = vrot.slane %v1725, 2
  %v1790 = vsel %vm1777, %v1789, %v1788
  %v1791 = vrot.slane %v1727, 7
  %v1792 = vsel %vm1762, %v1791, %v1726
  %v1793 = vrot.slane %v1728, 6
  %v1794 = vsel %vm1765, %v1793, %v1792
  %v1795 = vrot.slane %v1729, 5
  %v1796 = vsel %vm1768, %v1795, %v1794
  %v1797 = vrot.slane %v1730, 4
  %v1798 = vsel %vm1771, %v1797, %v1796
  %v1799 = vrot.slane %v1731, 3
  %v1800 = vsel %vm1774, %v1799, %v1798
  %v1801 = vrot.slane %v1732, 2
  %v1802 = vsel %vm1777, %v1801, %v1800
  %v1803 = vrot.slane %v1734, 7
  %v1804 = vsel %vm1762, %v1803, %v1733
  %v1805 = vrot.slane %v1735, 6
  %v1806 = vsel %vm1765, %v1805, %v1804
  %v1807 = vrot.slane %v1736, 5
  %v1808 = vsel %vm1768, %v1807, %v1806
  %v1809 = vrot.slane %v1737, 4
  %v1810 = vsel %vm1771, %v1809, %v1808
  %v1811 = vrot.slane %v1738, 3
  %v1812 = vsel %vm1774, %v1811, %v1810
  %v1813 = vrot.slane %v1739, 2
  %v1814 = vsel %vm1777, %v1813, %v1812
  %v1815 = vrot.slane %v1741, 7
  %v1816 = vsel %vm1762, %v1815, %v1740
  %v1817 = vrot.slane %v1742, 6
  %v1818 = vsel %vm1765, %v1817, %v1816
  %v1819 = vrot.slane %v1743, 5
  %v1820 = vsel %vm1768, %v1819, %v1818
  %v1821 = vrot.slane %v1744, 4
  %v1822 = vsel %vm1771, %v1821, %v1820
  %v1823 = vrot.slane %v1745, 3
  %v1824 = vsel %vm1774, %v1823, %v1822
  %v1825 = vrot.slane %v1746, 2
  %v1826 = vsel %vm1777, %v1825, %v1824
  %v1827 = vrot.slane %v1748, 7
  %v1828 = vsel %vm1762, %v1827, %v1747
  %v1829 = vrot.slane %v1749, 6
  %v1830 = vsel %vm1765, %v1829, %v1828
  %v1831 = vrot.slane %v1750, 5
  %v1832 = vsel %vm1768, %v1831, %v1830
  %v1833 = vrot.slane %v1751, 4
  %v1834 = vsel %vm1771, %v1833, %v1832
  %v1835 = vrot.slane %v1752, 3
  %v1836 = vsel %vm1774, %v1835, %v1834
  %v1837 = vrot.slane %v1753, 2
  %v1838 = vsel %vm1777, %v1837, %v1836
  %v1839 = vrot.slane %v1755, 7
  %v1840 = vsel %vm1762, %v1839, %v1754
  %v1841 = vrot.slane %v1756, 6
  %v1842 = vsel %vm1765, %v1841, %v1840
  %v1843 = vrot.slane %v1757, 5
  %v1844 = vsel %vm1768, %v1843, %v1842
  %v1845 = vrot.slane %v1758, 4
  %v1846 = vsel %vm1771, %v1845, %v1844
  %v1847 = vrot.slane %v1759, 3
  %v1848 = vsel %vm1774, %v1847, %v1846
  %v1849 = vrot.slane %v1760, 2
  %v1850 = vsel %vm1777, %v1849, %v1848
  %v1851 = vpack.c.b16 %v1778, %v1778
  %v1852 = vpack.c.b16 %v1790, %v1790
  %v1853 = vpack.c.b16 %v1802, %v1802
  %v1854 = vpack.c.b16 %v1814, %v1814
  %v1855 = vpack.c.b16 %v1826, %v1826
  %v1856 = vpack.c.b16 %v1838, %v1838
  %v1857 = vpack.c.b16 %v1850, %v1850
  %v1859 = vshrl.u32 0, 16
  %v1861 = vrot.slane %v1859, 7
  %v1862 = vshll.u32 0, 16
  %v1864 = vor.u32 %v1861, %v1862
  %v1866 = vshrl.u32 %v1851, 16
  %v1868 = vrot.slane %v1866, 7
  %v1869 = vshll.u32 %v1851, 16
  %v1871 = vor.u32 %v1868, %v1869
  %v1873 = vshrl.u32 %v1852, 16
  %v1875 = vrot.slane %v1873, 7
  %v1876 = vshll.u32 %v1852, 16
  %v1878 = vor.u32 %v1875, %v1876
  %v1880 = vshrl.u32 %v1853, 16
  %v1882 = vrot.slane %v1880, 7
  %v1883 = vshll.u32 %v1853, 16
  %v1885 = vor.u32 %v1882, %v1883
  %v1887 = vshrl.u32 %v1854, 16
  %v1889 = vrot.slane %v1887, 7
  %v1890 = vshll.u32 %v1854, 16
  %v1892 = vor.u32 %v1889, %v1890
  %v1894 = vshrl.u32 %v1855, 16
  %v1896 = vrot.slane %v1894, 7
  %v1897 = vshll.u32 %v1855, 16
  %v1899 = vor.u32 %v1896, %v1897
  %v1901 = vshrl.u32 %v1856, 16
  %v1903 = vrot.slane %v1901, 7
  %v1904 = vshll.u32 %v1856, 16
  %v1906 = vor.u32 %v1903, %v1904
  %v1908 = vshrl.u32 %v1857, 16
  %v1910 = vrot.slane %v1908, 7
  %v1911 = vshll.u32 %v1857, 16
  %v1913 = vor.u32 %v1910, %v1911
  %vm1922 = vcmask 1040384
  %vm1923 = vsmask.f32 256
  %vm1924 = vmand %vm1922, %vm1923
  %v1925 = vsel %vm1924, 0, %v1864
  %v1926 = vsel %vm1924, 0, %v1871
  %v1927 = vsel %vm1924, 0, %v1878
  %v1928 = vsel %vm1924, 0, %v1885
  %v1929 = vsel %vm1924, 0, %v1892
  %v1930 = vsel %vm1924, 0, %v1899
  %v1931 = vsel %vm1924, 0, %v1906
  %v1932 = vsel %vm1924, 0, %v1913
  %vm1933 = vcmask 1043456
  %v1935 = vsel %vm1933, %v1925, 0
  %v1937 = vsel %vm1933, %v1926, 0
  %v1939 = vsel %vm1933, %v1927, 0
  %v1941 = vsel %vm1933, %v1928, 0
  %v1943 = vsel %vm1933, %v1929, 0
  %v1945 = vsel %vm1933, %v1930, 0
  %v1947 = vsel %vm1933, %v1931, 0
  %v1949 = vsel %vm1933, %v1932, 0
  %s1950 = scalar_lea.vmem %s0, 200
  %v1951 = vld [vmem:[%s1950] sm:$0xff]
  %v1952 = vld [vmem:[%s1950 + $0x8] sm:$0xff]
  %v1953 = vld [vmem:[%s1950 + $0x10] sm:$0xff]
  %v1954 = vld [vmem:[%s1950 + $0x18] sm:$0xff]
  %v1955 = vld [vmem:[%s1950 + $0x20] sm:$0xff]
  %v1956 = vld [vmem:[%s1950 + $0x28] sm:$0xff]
  %v1957 = vld [vmem:[%s1950 + $0x30] sm:$0xff]
  %v1958 = vld [vmem:[%s1950 + $0x38] sm:$0xff]
  %v1959 = vld [vmem:[%s1950 + $0x40] sm:$0xff]
  %v1960 = vld [vmem:[%s1950 + $0x48] sm:$0xff]
  %v1961 = vld [vmem:[%s1950 + $0x50] sm:$0xff]
  %v1962 = vld [vmem:[%s1950 + $0x58] sm:$0xff]
  %v1963 = vld [vmem:[%s1950 + $0x60] sm:$0xff]
  %v1964 = vld [vmem:[%s1950 + $0x68] sm:$0xff]
  %v1965 = vld [vmem:[%s1950 + $0x70] sm:$0xff]
  %v1966 = vld [vmem:[%s1950 + $0x78] sm:$0xff]
  %v1967 = vld [vmem:[%s1950 + $0x80] sm:$0xff]
  %v1968 = vld [vmem:[%s1950 + $0x88] sm:$0xff]
  %v1969 = vld [vmem:[%s1950 + $0x90] sm:$0xff]
  %v1970 = vld [vmem:[%s1950 + $0x98] sm:$0xff]
  %v1971 = vld [vmem:[%s1950 + $0xa0] sm:$0xff]
  %v1972 = vld [vmem:[%s1950 + $0xa8] sm:$0xff]
  %v1973 = vld [vmem:[%s1950 + $0xb0] sm:$0xff]
  %v1974 = vld [vmem:[%s1950 + $0xb8] sm:$0xff]
  %v1975 = vld [vmem:[%s1950 + $0xc0] sm:$0x33]
  %v2001 = vunpack.c.l.b16 %v1951
  %v2002 = vunpack.c.h.b16 %v1951
  %v2003 = vunpack.c.l.b16 %v1952
  %v2004 = vunpack.c.h.b16 %v1952
  %v2005 = vunpack.c.l.b16 %v1953
  %v2006 = vunpack.c.h.b16 %v1953
  %v2007 = vunpack.c.l.b16 %v1954
  %v2008 = vunpack.c.h.b16 %v1954
  %v2009 = vunpack.c.l.b16 %v1955
  %v2010 = vunpack.c.h.b16 %v1955
  %v2011 = vunpack.c.l.b16 %v1956
  %v2012 = vunpack.c.h.b16 %v1956
  %v2013 = vunpack.c.l.b16 %v1957
  %v2014 = vunpack.c.h.b16 %v1957
  %v2015 = vunpack.c.l.b16 %v1958
  %v2016 = vunpack.c.h.b16 %v1958
  %v2017 = vunpack.c.l.b16 %v1959
  %v2018 = vunpack.c.h.b16 %v1959
  %v2019 = vunpack.c.l.b16 %v1960
  %v2020 = vunpack.c.h.b16 %v1960
  %v2021 = vunpack.c.l.b16 %v1961
  %v2022 = vunpack.c.h.b16 %v1961
  %v2023 = vunpack.c.l.b16 %v1962
  %v2024 = vunpack.c.h.b16 %v1962
  %v2025 = vunpack.c.l.b16 %v1963
  %v2026 = vunpack.c.h.b16 %v1963
  %v2027 = vunpack.c.l.b16 %v1964
  %v2028 = vunpack.c.h.b16 %v1964
  %v2029 = vunpack.c.l.b16 %v1965
  %v2030 = vunpack.c.h.b16 %v1965
  %v2031 = vunpack.c.l.b16 %v1966
  %v2032 = vunpack.c.h.b16 %v1966
  %v2033 = vunpack.c.l.b16 %v1967
  %v2034 = vunpack.c.h.b16 %v1967
  %v2035 = vunpack.c.l.b16 %v1968
  %v2036 = vunpack.c.h.b16 %v1968
  %v2037 = vunpack.c.l.b16 %v1969
  %v2038 = vunpack.c.h.b16 %v1969
  %v2039 = vunpack.c.l.b16 %v1970
  %v2040 = vunpack.c.h.b16 %v1970
  %v2041 = vunpack.c.l.b16 %v1971
  %v2042 = vunpack.c.h.b16 %v1971
  %v2043 = vunpack.c.l.b16 %v1972
  %v2044 = vunpack.c.h.b16 %v1972
  %v2045 = vunpack.c.l.b16 %v1973
  %v2046 = vunpack.c.h.b16 %v1973
  %v2047 = vunpack.c.l.b16 %v1974
  %v2048 = vunpack.c.h.b16 %v1974
  %v2049 = vunpack.c.l.b16 %v1975
  %v2050 = vunpack.c.h.b16 %v1975
  %v2051 = vpack.c.b16 %v2003, %v2001
  %v2052 = vpack.c.b16 %v2004, %v2002
  %v2053 = vpack.c.b16 %v2007, %v2005
  %v2054 = vpack.c.b16 %v2008, %v2006
  %v2055 = vpack.c.b16 %v2011, %v2009
  %v2056 = vpack.c.b16 %v2012, %v2010
  %v2057 = vpack.c.b16 %v2015, %v2013
  %v2058 = vpack.c.b16 %v2016, %v2014
  %v2059 = vpack.c.b16 %v2019, %v2017
  %v2060 = vpack.c.b16 %v2020, %v2018
  %v2061 = vpack.c.b16 %v2023, %v2021
  %v2062 = vpack.c.b16 %v2024, %v2022
  %v2063 = vpack.c.b16 %v2027, %v2025
  %v2064 = vpack.c.b16 %v2028, %v2026
  %v2065 = vpack.c.b16 %v2031, %v2029
  %v2066 = vpack.c.b16 %v2032, %v2030
  %v2067 = vpack.c.b16 %v2035, %v2033
  %v2068 = vpack.c.b16 %v2036, %v2034
  %v2069 = vpack.c.b16 %v2039, %v2037
  %v2070 = vpack.c.b16 %v2040, %v2038
  %v2071 = vpack.c.b16 %v2043, %v2041
  %v2072 = vpack.c.b16 %v2044, %v2042
  %v2073 = vpack.c.b16 %v2047, %v2045
  %v2074 = vpack.c.b16 %v2048, %v2046
  %v2075 = vpack.c.b16 %v2049, %v2049
  %v2076 = vpack.c.b16 %v2050, %v2050
  %2103 = vmatprep.subr.bf16.mxu0 0
  %2104 = vmatpush1.bf16.msra.mxu0 %v265
  %2105 = vmatprep.subr.bf16.mxu0 0
  %2106 = vmatpush1.bf16.msra.mxu0 %v266
  %2107 = vmatprep.subr.bf16.mxu0 0
  %2108 = vmatpush1.bf16.msra.mxu0 %v267
  %2109 = vmatprep.subr.bf16.mxu0 0
  %2110 = vmatpush1.bf16.msra.mxu0 %v268
  %2111 = vmatprep.subr.bf16.mxu0 0
  %2112 = vmatpush1.bf16.msra.mxu0 %v269
  %2113 = vmatprep.subr.bf16.mxu0 0
  %2114 = vmatpush1.bf16.msra.mxu0 %v270
  %2115 = vmatprep.subr.bf16.mxu0 0
  %2116 = vmatpush1.bf16.msra.mxu0 %v271
  %2117 = vmatprep.subr.bf16.mxu0 0
  %2118 = vmatpush1.bf16.msra.mxu0 %v272
  %2119 = vmatprep.subr.bf16.mxu0 0
  %2120 = vmatpush1.bf16.msra.mxu0 %v273
  %2121 = vmatprep.subr.bf16.mxu0 0
  %2122 = vmatpush1.bf16.msra.mxu0 %v274
  %2123 = vmatprep.subr.bf16.mxu0 0
  %2124 = vmatpush1.bf16.msra.mxu0 %v275
  %2125 = vmatprep.subr.bf16.mxu0 0
  %2126 = vmatpush1.bf16.msra.mxu0 %v276
  %2127 = vmatprep.subr.bf16.mxu0 0
  %2128 = vmatpush1.bf16.msra.mxu0 %v277
  %2129 = vmatprep.subr.bf16.mxu0 0
  %2130 = vmatpush1.bf16.msra.mxu0 %v278
  %2131 = vmatprep.subr.bf16.mxu0 0
  %2132 = vmatpush1.bf16.msra.mxu0 %v279
  %2133 = vmatprep.subr.bf16.mxu0 0
  %2134 = vmatpush1.bf16.msra.mxu0 %v280
  %2135 = vmatprep.mubr.bf16.mxu0 %v2052
  %2136 = vmatmul.mubr.bf16.gmra.mrb[0].mxu0 %v2051
  %v2137 = vpop.f32.mrb[0].mxu0
  %v2138 = vadd.f32 0.0, %v2137
  %v2139 = vpop.f32.mrb[0].mxu0
  %v2140 = vpop.f32.mrb[0].mxu0
  %v2141 = vadd.f32 0.0, %v2140
  %v2142 = vpop.f32.mrb[0].mxu0
  %2143 = vmatprep.mubr.bf16.mxu0 %v2054
  %2144 = vmatmul.mubr.bf16.gmra.mrb[0].mxu0 %v2053
  %v2145 = vpop.f32.mrb[0].mxu0
  %v2146 = vadd.f32 0.0, %v2145
  %v2147 = vpop.f32.mrb[0].mxu0
  %v2148 = vpop.f32.mrb[0].mxu0
  %v2149 = vadd.f32 0.0, %v2148
  %v2150 = vpop.f32.mrb[0].mxu0
  %2151 = vmatprep.mubr.bf16.mxu0 %v2056
  %2152 = vmatmul.mubr.bf16.gmra.mrb[0].mxu0 %v2055
  %v2153 = vpop.f32.mrb[0].mxu0
  %v2154 = vadd.f32 0.0, %v2153
  %v2155 = vpop.f32.mrb[0].mxu0
  %v2156 = vpop.f32.mrb[0].mxu0
  %v2157 = vadd.f32 0.0, %v2156
  %v2158 = vpop.f32.mrb[0].mxu0
  %2159 = vmatprep.mubr.bf16.mxu0 %v2058
  %2160 = vmatmul.mubr.bf16.gmra.mrb[0].mxu0 %v2057
  %v2161 = vpop.f32.mrb[0].mxu0
  %v2162 = vadd.f32 0.0, %v2161
  %v2163 = vpop.f32.mrb[0].mxu0
  %v2164 = vpop.f32.mrb[0].mxu0
  %v2165 = vadd.f32 0.0, %v2164
  %v2166 = vpop.f32.mrb[0].mxu0
  %2167 = vmatprep.mubr.bf16.mxu0 %v2060
  %2168 = vmatmul.mubr.bf16.gmra.mrb[0].mxu0 %v2059
  %v2169 = vpop.f32.mrb[0].mxu0
  %v2170 = vadd.f32 0.0, %v2169
  %v2171 = vpop.f32.mrb[0].mxu0
  %v2172 = vpop.f32.mrb[0].mxu0
  %v2173 = vadd.f32 0.0, %v2172
  %v2174 = vpop.f32.mrb[0].mxu0
  %2175 = vmatprep.mubr.bf16.mxu0 %v2062
  %2176 = vmatmul.mubr.bf16.gmra.mrb[0].mxu0 %v2061
  %v2177 = vpop.f32.mrb[0].mxu0
  %v2178 = vadd.f32 0.0, %v2177
  %v2179 = vpop.f32.mrb[0].mxu0
  %v2180 = vpop.f32.mrb[0].mxu0
  %v2181 = vadd.f32 0.0, %v2180
  %v2182 = vpop.f32.mrb[0].mxu0
  %2183 = vmatprep.mubr.bf16.mxu0 %v2064
  %2184 = vmatmul.mubr.bf16.gmra.mrb[0].mxu0 %v2063
  %v2185 = vpop.f32.mrb[0].mxu0
  %v2186 = vadd.f32 0.0, %v2185
  %v2187 = vpop.f32.mrb[0].mxu0
  %v2188 = vpop.f32.mrb[0].mxu0
  %v2189 = vadd.f32 0.0, %v2188
  %v2190 = vpop.f32.mrb[0].mxu0
  %2191 = vmatprep.mubr.bf16.mxu0 %v2066
  %2192 = vmatmul.mubr.bf16.gmra.mrb[0].mxu0 %v2065
  %v2193 = vpop.f32.mrb[0].mxu0
  %v2194 = vadd.f32 0.0, %v2193
  %v2195 = vpop.f32.mrb[0].mxu0
  %v2196 = vpop.f32.mrb[0].mxu0
  %v2197 = vadd.f32 0.0, %v2196
  %v2198 = vpop.f32.mrb[0].mxu0
  %2199 = vmatprep.mubr.bf16.mxu0 %v2068
  %2200 = vmatmul.mubr.bf16.gmra.mrb[0].mxu0 %v2067
  %v2201 = vpop.f32.mrb[0].mxu0
  %v2202 = vadd.f32 0.0, %v2201
  %v2203 = vpop.f32.mrb[0].mxu0
  %v2204 = vpop.f32.mrb[0].mxu0
  %v2205 = vadd.f32 0.0, %v2204
  %v2206 = vpop.f32.mrb[0].mxu0
  %2207 = vmatprep.mubr.bf16.mxu0 %v2070
  %2208 = vmatmul.mubr.bf16.gmra.mrb[0].mxu0 %v2069
  %v2209 = vpop.f32.mrb[0].mxu0
  %v2210 = vadd.f32 0.0, %v2209
  %v2211 = vpop.f32.mrb[0].mxu0
  %v2212 = vpop.f32.mrb[0].mxu0
  %v2213 = vadd.f32 0.0, %v2212
  %v2214 = vpop.f32.mrb[0].mxu0
  %2215 = vmatprep.mubr.bf16.mxu0 %v2072
  %2216 = vmatmul.mubr.bf16.gmra.mrb[0].mxu0 %v2071
  %v2217 = vpop.f32.mrb[0].mxu0
  %v2218 = vadd.f32 0.0, %v2217
  %v2219 = vpop.f32.mrb[0].mxu0
  %v2220 = vpop.f32.mrb[0].mxu0
  %v2221 = vadd.f32 0.0, %v2220
  %v2222 = vpop.f32.mrb[0].mxu0
  %2223 = vmatprep.mubr.bf16.mxu0 %v2074
  %2224 = vmatmul.mubr.bf16.gmra.mrb[0].mxu0 %v2073
  %v2225 = vpop.f32.mrb[0].mxu0
  %v2226 = vadd.f32 0.0, %v2225
  %v2227 = vpop.f32.mrb[0].mxu0
  %v2228 = vpop.f32.mrb[0].mxu0
  %v2229 = vadd.f32 0.0, %v2228
  %v2230 = vpop.f32.mrb[0].mxu0
  %2231 = vmatprep.mubr.bf16.mxu0 %v2076
  %2232 = vmatmul.mubr.bf16.gmra.mrb[0].mxu0 %v2075
  %v2233 = vpop.f32.mrb[0].mxu0
  %v2234 = vadd.f32 0.0, %v2233
  %v2235 = vpop.f32.mrb[0].mxu0
  %v2236 = vpop.f32.mrb[0].mxu0
  %v2237 = vpop.f32.mrb[0].mxu0
  %2238 = vdwg.mxu0
  %vm2239 = vcmp.gt.f32.partialorder %v2138, 15.0
  %vm2240 = vcmp.gt.f32.partialorder %v2141, 15.0
  %vm2241 = vcmp.gt.f32.partialorder %v2146, 15.0
  %vm2242 = vcmp.gt.f32.partialorder %v2149, 15.0
  %vm2243 = vcmp.gt.f32.partialorder %v2154, 15.0
  %vm2244 = vcmp.gt.f32.partialorder %v2157, 15.0
  %vm2245 = vcmp.gt.f32.partialorder %v2162, 15.0
  %vm2246 = vcmp.gt.f32.partialorder %v2165, 15.0
  %vm2247 = vcmp.gt.f32.partialorder %v2170, 15.0
  %vm2248 = vcmp.gt.f32.partialorder %v2173, 15.0
  %vm2249 = vcmp.gt.f32.partialorder %v2178, 15.0
  %vm2250 = vcmp.gt.f32.partialorder %v2181, 15.0
  %vm2251 = vcmp.gt.f32.partialorder %v2186, 15.0
  %vm2252 = vcmp.gt.f32.partialorder %v2189, 15.0
  %vm2253 = vcmp.gt.f32.partialorder %v2194, 15.0
  %vm2254 = vcmp.gt.f32.partialorder %v2197, 15.0
  %vm2255 = vcmp.gt.f32.partialorder %v2202, 15.0
  %vm2256 = vcmp.gt.f32.partialorder %v2205, 15.0
  %vm2257 = vcmp.gt.f32.partialorder %v2210, 15.0
  %vm2258 = vcmp.gt.f32.partialorder %v2213, 15.0
  %vm2259 = vcmp.gt.f32.partialorder %v2218, 15.0
  %vm2260 = vcmp.gt.f32.partialorder %v2221, 15.0
  %vm2261 = vcmp.gt.f32.partialorder %v2226, 15.0
  %vm2262 = vcmp.gt.f32.partialorder %v2229, 15.0
  %vm2263 = vcmp.gt.f32.partialorder %v2234, 15.0
  %v2264 = vsel %vm2239, 1, 0
  %v2265 = vsel %vm2240, 1, 0
  %v2266 = vsel %vm2241, 1, 0
  %v2267 = vsel %vm2242, 1, 0
  %v2268 = vsel %vm2243, 1, 0
  %v2269 = vsel %vm2244, 1, 0
  %v2270 = vsel %vm2245, 1, 0
  %v2271 = vsel %vm2246, 1, 0
  %v2272 = vsel %vm2247, 1, 0
  %v2273 = vsel %vm2248, 1, 0
  %v2274 = vsel %vm2249, 1, 0
  %v2275 = vsel %vm2250, 1, 0
  %v2276 = vsel %vm2251, 1, 0
  %v2277 = vsel %vm2252, 1, 0
  %v2278 = vsel %vm2253, 1, 0
  %v2279 = vsel %vm2254, 1, 0
  %v2280 = vsel %vm2255, 1, 0
  %v2281 = vsel %vm2256, 1, 0
  %v2282 = vsel %vm2257, 1, 0
  %v2283 = vsel %vm2258, 1, 0
  %v2284 = vsel %vm2259, 1, 0
  %v2285 = vsel %vm2260, 1, 0
  %v2286 = vsel %vm2261, 1, 0
  %v2287 = vsel %vm2262, 1, 0
  %v2288 = vsel %vm2263, 1, 0
  %v2289 = vcvt.s32.f32 %v2264
  %v2290 = vcvt.s32.f32 %v2265
  %v2291 = vcvt.s32.f32 %v2266
  %v2292 = vcvt.s32.f32 %v2267
  %v2293 = vcvt.s32.f32 %v2268
  %v2294 = vcvt.s32.f32 %v2269
  %v2295 = vcvt.s32.f32 %v2270
  %v2296 = vcvt.s32.f32 %v2271
  %v2297 = vcvt.s32.f32 %v2272
  %v2298 = vcvt.s32.f32 %v2273
  %v2299 = vcvt.s32.f32 %v2274
  %v2300 = vcvt.s32.f32 %v2275
  %v2301 = vcvt.s32.f32 %v2276
  %v2302 = vcvt.s32.f32 %v2277
  %v2303 = vcvt.s32.f32 %v2278
  %v2304 = vcvt.s32.f32 %v2279
  %v2305 = vcvt.s32.f32 %v2280
  %v2306 = vcvt.s32.f32 %v2281
  %v2307 = vcvt.s32.f32 %v2282
  %v2308 = vcvt.s32.f32 %v2283
  %v2309 = vcvt.s32.f32 %v2284
  %v2310 = vcvt.s32.f32 %v2285
  %v2311 = vcvt.s32.f32 %v2286
  %v2312 = vcvt.s32.f32 %v2287
  %v2313 = vcvt.s32.f32 %v2288
  %v2314 = vpack.c.bf16 %v2290, %v2289
  %v2315 = vpack.c.bf16 %v2292, %v2291
  %v2316 = vpack.c.bf16 %v2294, %v2293
  %v2317 = vpack.c.bf16 %v2296, %v2295
  %v2318 = vpack.c.bf16 %v2298, %v2297
  %v2319 = vpack.c.bf16 %v2300, %v2299
  %v2320 = vpack.c.bf16 %v2302, %v2301
  %v2321 = vpack.c.bf16 %v2304, %v2303
  %v2322 = vpack.c.bf16 %v2306, %v2305
  %v2323 = vpack.c.bf16 %v2308, %v2307
  %v2324 = vpack.c.bf16 %v2310, %v2309
  %v2325 = vpack.c.bf16 %v2312, %v2311
  %v2326 = vpack.c.bf16 %v2313, %v2313
  %v2340 = vunpack.c.l.b16 %v2314
  %v2341 = vunpack.c.h.b16 %v2314
  %v2342 = vunpack.c.l.b16 %v2315
  %v2343 = vunpack.c.h.b16 %v2315
  %v2344 = vunpack.c.l.b16 %v2316
  %v2345 = vunpack.c.h.b16 %v2316
  %v2346 = vunpack.c.l.b16 %v2317
  %v2347 = vunpack.c.h.b16 %v2317
  %v2348 = vunpack.c.l.b16 %v2318
  %v2349 = vunpack.c.h.b16 %v2318
  %v2350 = vunpack.c.l.b16 %v2319
  %v2351 = vunpack.c.h.b16 %v2319
  %v2352 = vunpack.c.l.b16 %v2320
  %v2353 = vunpack.c.h.b16 %v2320
  %v2354 = vunpack.c.l.b16 %v2321
  %v2355 = vunpack.c.h.b16 %v2321
  %v2356 = vunpack.c.l.b16 %v2322
  %v2357 = vunpack.c.h.b16 %v2322
  %v2358 = vunpack.c.l.b16 %v2323
  %v2359 = vunpack.c.h.b16 %v2323
  %v2360 = vunpack.c.l.b16 %v2324
  %v2361 = vunpack.c.h.b16 %v2324
  %v2362 = vunpack.c.l.b16 %v2325
  %v2363 = vunpack.c.h.b16 %v2325
  %v2364 = vunpack.c.l.b16 %v2326
  %v2365 = vpack.c.b16 %v2340, %v2340
  %v2366 = vpack.c.b16 %v2341, %v2341
  %v2367 = vpack.c.b16 %v2342, %v2342
  %v2368 = vpack.c.b16 %v2343, %v2343
  %v2369 = vpack.c.b16 %v2344, %v2344
  %v2370 = vpack.c.b16 %v2345, %v2345
  %v2371 = vpack.c.b16 %v2346, %v2346
  %v2372 = vpack.c.b16 %v2347, %v2347
  %v2373 = vpack.c.b16 %v2348, %v2348
  %v2374 = vpack.c.b16 %v2349, %v2349
  %v2375 = vpack.c.b16 %v2350, %v2350
  %v2376 = vpack.c.b16 %v2351, %v2351
  %v2377 = vpack.c.b16 %v2352, %v2352
  %v2378 = vpack.c.b16 %v2353, %v2353
  %v2379 = vpack.c.b16 %v2354, %v2354
  %v2380 = vpack.c.b16 %v2355, %v2355
  %v2381 = vpack.c.b16 %v2356, %v2356
  %v2382 = vpack.c.b16 %v2357, %v2357
  %v2383 = vpack.c.b16 %v2358, %v2358
  %v2384 = vpack.c.b16 %v2359, %v2359
  %v2385 = vpack.c.b16 %v2360, %v2360
  %v2386 = vpack.c.b16 %v2361, %v2361
  %v2387 = vpack.c.b16 %v2362, %v2362
  %v2388 = vpack.c.b16 %v2363, %v2363
  %v2389 = vpack.c.b16 %v2364, %v2364
  %s2415 = scalar_lea.vmem %s3, 100
  %2416 = vst [vmem:[%s2415] sm:$0xf] %v2365
  %2417 = vst [vmem:[%s2415 + $0x4] sm:$0xf] %v2366
  %2418 = vst [vmem:[%s2415 + $0x8] sm:$0xf] %v2367
  %2419 = vst [vmem:[%s2415 + $0xc] sm:$0xf] %v2368
  %2420 = vst [vmem:[%s2415 + $0x10] sm:$0xf] %v2369
  %2421 = vst [vmem:[%s2415 + $0x14] sm:$0xf] %v2370
  %2422 = vst [vmem:[%s2415 + $0x18] sm:$0xf] %v2371
  %2423 = vst [vmem:[%s2415 + $0x1c] sm:$0xf] %v2372
  %2424 = vst [vmem:[%s2415 + $0x20] sm:$0xf] %v2373
  %2425 = vst [vmem:[%s2415 + $0x24] sm:$0xf] %v2374
  %2426 = vst [vmem:[%s2415 + $0x28] sm:$0xf] %v2375
  %2427 = vst [vmem:[%s2415 + $0x2c] sm:$0xf] %v2376
  %2428 = vst [vmem:[%s2415 + $0x30] sm:$0xf] %v2377
  %2429 = vst [vmem:[%s2415 + $0x34] sm:$0xf] %v2378
  %2430 = vst [vmem:[%s2415 + $0x38] sm:$0xf] %v2379
  %2431 = vst [vmem:[%s2415 + $0x3c] sm:$0xf] %v2380
  %2432 = vst [vmem:[%s2415 + $0x40] sm:$0xf] %v2381
  %2433 = vst [vmem:[%s2415 + $0x44] sm:$0xf] %v2382
  %2434 = vst [vmem:[%s2415 + $0x48] sm:$0xf] %v2383
  %2435 = vst [vmem:[%s2415 + $0x4c] sm:$0xf] %v2384
  %2436 = vst [vmem:[%s2415 + $0x50] sm:$0xf] %v2385
  %2437 = vst [vmem:[%s2415 + $0x54] sm:$0xf] %v2386
  %2438 = vst [vmem:[%s2415 + $0x58] sm:$0xf] %v2387
  %2439 = vst [vmem:[%s2415 + $0x5c] sm:$0xf] %v2388
  %2440 = vst [vmem:[%s2415 + $0x60] sm:$0x3] %v2389
  %v2466 = vcombine.high %v2289, %v2289
  %v2468 = vunpack.c.l.s4 1983009808
  %v2469 = vunpack.c.0.s8 %v2468
  %v2470 = vlaneseq
  %v2471 = vshrl.u32 %v2470, 7
  %v2472 = vsub.s32 %v2469, %v2471
  %v2473 = vrot.slane %v2289, %v2472
  %v2475 = vunpack.c.l.s4 1983009808
  %v2476 = vunpack.c.0.s8 %v2475
  %v2477 = vlaneseq
  %v2478 = vshrl.u32 %v2477, 7
  %v2479 = vsub.s32 %v2476, %v2478
  %v2480 = vrot.slane %v2466, %v2479
  %v2481 = vcombine.high %v2473, %v2473
  %v2482 = vcombine.high %v2480, %v2480
  %v2483 = vcombine.high %v2290, %v2290
  %v2485 = vunpack.c.l.s4 1983009808
  %v2486 = vunpack.c.0.s8 %v2485
  %v2487 = vlaneseq
  %v2488 = vshrl.u32 %v2487, 7
  %v2489 = vsub.s32 %v2486, %v2488
  %v2490 = vrot.slane %v2290, %v2489
  %v2492 = vunpack.c.l.s4 1983009808
  %v2493 = vunpack.c.0.s8 %v2492
  %v2494 = vlaneseq
  %v2495 = vshrl.u32 %v2494, 7
  %v2496 = vsub.s32 %v2493, %v2495
  %v2497 = vrot.slane %v2483, %v2496
  %v2498 = vcombine.high %v2490, %v2490
  %v2499 = vcombine.high %v2497, %v2497
  %v2500 = vcombine.high %v2291, %v2291
  %v2502 = vunpack.c.l.s4 1983009808
  %v2503 = vunpack.c.0.s8 %v2502
  %v2504 = vlaneseq
  %v2505 = vshrl.u32 %v2504, 7
  %v2506 = vsub.s32 %v2503, %v2505
  %v2507 = vrot.slane %v2291, %v2506
  %v2509 = vunpack.c.l.s4 1983009808
  %v2510 = vunpack.c.0.s8 %v2509
  %v2511 = vlaneseq
  %v2512 = vshrl.u32 %v2511, 7
  %v2513 = vsub.s32 %v2510, %v2512
  %v2514 = vrot.slane %v2500, %v2513
  %v2515 = vcombine.high %v2507, %v2507
  %v2516 = vcombine.high %v2514, %v2514
  %v2517 = vcombine.high %v2292, %v2292
  %v2519 = vunpack.c.l.s4 1983009808
  %v2520 = vunpack.c.0.s8 %v2519
  %v2521 = vlaneseq
  %v2522 = vshrl.u32 %v2521, 7
  %v2523 = vsub.s32 %v2520, %v2522
  %v2524 = vrot.slane %v2292, %v2523
  %v2526 = vunpack.c.l.s4 1983009808
  %v2527 = vunpack.c.0.s8 %v2526
  %v2528 = vlaneseq
  %v2529 = vshrl.u32 %v2528, 7
  %v2530 = vsub.s32 %v2527, %v2529
  %v2531 = vrot.slane %v2517, %v2530
  %v2532 = vcombine.high %v2524, %v2524
  %v2533 = vcombine.high %v2531, %v2531
  %v2534 = vcombine.high %v2293, %v2293
  %v2536 = vunpack.c.l.s4 1983009808
  %v2537 = vunpack.c.0.s8 %v2536
  %v2538 = vlaneseq
  %v2539 = vshrl.u32 %v2538, 7
  %v2540 = vsub.s32 %v2537, %v2539
  %v2541 = vrot.slane %v2293, %v2540
  %v2543 = vunpack.c.l.s4 1983009808
  %v2544 = vunpack.c.0.s8 %v2543
  %v2545 = vlaneseq
  %v2546 = vshrl.u32 %v2545, 7
  %v2547 = vsub.s32 %v2544, %v2546
  %v2548 = vrot.slane %v2534, %v2547
  %v2549 = vcombine.high %v2541, %v2541
  %v2550 = vcombine.high %v2548, %v2548
  %v2551 = vcombine.high %v2294, %v2294
  %v2553 = vunpack.c.l.s4 1983009808
  %v2554 = vunpack.c.0.s8 %v2553
  %v2555 = vlaneseq
  %v2556 = vshrl.u32 %v2555, 7
  %v2557 = vsub.s32 %v2554, %v2556
  %v2558 = vrot.slane %v2294, %v2557
  %v2560 = vunpack.c.l.s4 1983009808
  %v2561 = vunpack.c.0.s8 %v2560
  %v2562 = vlaneseq
  %v2563 = vshrl.u32 %v2562, 7
  %v2564 = vsub.s32 %v2561, %v2563
  %v2565 = vrot.slane %v2551, %v2564
  %v2566 = vcombine.high %v2558, %v2558
  %v2567 = vcombine.high %v2565, %v2565
  %v2568 = vcombine.high %v2295, %v2295
  %v2570 = vunpack.c.l.s4 1983009808
  %v2571 = vunpack.c.0.s8 %v2570
  %v2572 = vlaneseq
  %v2573 = vshrl.u32 %v2572, 7
  %v2574 = vsub.s32 %v2571, %v2573
  %v2575 = vrot.slane %v2295, %v2574
  %v2577 = vunpack.c.l.s4 1983009808
  %v2578 = vunpack.c.0.s8 %v2577
  %v2579 = vlaneseq
  %v2580 = vshrl.u32 %v2579, 7
  %v2581 = vsub.s32 %v2578, %v2580
  %v2582 = vrot.slane %v2568, %v2581
  %v2583 = vcombine.high %v2575, %v2575
  %v2584 = vcombine.high %v2582, %v2582
  %v2585 = vcombine.high %v2296, %v2296
  %v2587 = vunpack.c.l.s4 1983009808
  %v2588 = vunpack.c.0.s8 %v2587
  %v2589 = vlaneseq
  %v2590 = vshrl.u32 %v2589, 7
  %v2591 = vsub.s32 %v2588, %v2590
  %v2592 = vrot.slane %v2296, %v2591
  %v2594 = vunpack.c.l.s4 1983009808
  %v2595 = vunpack.c.0.s8 %v2594
  %v2596 = vlaneseq
  %v2597 = vshrl.u32 %v2596, 7
  %v2598 = vsub.s32 %v2595, %v2597
  %v2599 = vrot.slane %v2585, %v2598
  %v2600 = vcombine.high %v2592, %v2592
  %v2601 = vcombine.high %v2599, %v2599
  %v2602 = vcombine.high %v2297, %v2297
  %v2604 = vunpack.c.l.s4 1983009808
  %v2605 = vunpack.c.0.s8 %v2604
  %v2606 = vlaneseq
  %v2607 = vshrl.u32 %v2606, 7
  %v2608 = vsub.s32 %v2605, %v2607
  %v2609 = vrot.slane %v2297, %v2608
  %v2611 = vunpack.c.l.s4 1983009808
  %v2612 = vunpack.c.0.s8 %v2611
  %v2613 = vlaneseq
  %v2614 = vshrl.u32 %v2613, 7
  %v2615 = vsub.s32 %v2612, %v2614
  %v2616 = vrot.slane %v2602, %v2615
  %v2617 = vcombine.high %v2609, %v2609
  %v2618 = vcombine.high %v2616, %v2616
  %v2619 = vcombine.high %v2298, %v2298
  %v2621 = vunpack.c.l.s4 1983009808
  %v2622 = vunpack.c.0.s8 %v2621
  %v2623 = vlaneseq
  %v2624 = vshrl.u32 %v2623, 7
  %v2625 = vsub.s32 %v2622, %v2624
  %v2626 = vrot.slane %v2298, %v2625
  %v2628 = vunpack.c.l.s4 1983009808
  %v2629 = vunpack.c.0.s8 %v2628
  %v2630 = vlaneseq
  %v2631 = vshrl.u32 %v2630, 7
  %v2632 = vsub.s32 %v2629, %v2631
  %v2633 = vrot.slane %v2619, %v2632
  %v2634 = vcombine.high %v2626, %v2626
  %v2635 = vcombine.high %v2633, %v2633
  %v2636 = vcombine.high %v2299, %v2299
  %v2638 = vunpack.c.l.s4 1983009808
  %v2639 = vunpack.c.0.s8 %v2638
  %v2640 = vlaneseq
  %v2641 = vshrl.u32 %v2640, 7
  %v2642 = vsub.s32 %v2639, %v2641
  %v2643 = vrot.slane %v2299, %v2642
  %v2645 = vunpack.c.l.s4 1983009808
  %v2646 = vunpack.c.0.s8 %v2645
  %v2647 = vlaneseq
  %v2648 = vshrl.u32 %v2647, 7
  %v2649 = vsub.s32 %v2646, %v2648
  %v2650 = vrot.slane %v2636, %v2649
  %v2651 = vcombine.high %v2643, %v2643
  %v2652 = vcombine.high %v2650, %v2650
  %v2653 = vcombine.high %v2300, %v2300
  %v2655 = vunpack.c.l.s4 1983009808
  %v2656 = vunpack.c.0.s8 %v2655
  %v2657 = vlaneseq
  %v2658 = vshrl.u32 %v2657, 7
  %v2659 = vsub.s32 %v2656, %v2658
  %v2660 = vrot.slane %v2300, %v2659
  %v2662 = vunpack.c.l.s4 1983009808
  %v2663 = vunpack.c.0.s8 %v2662
  %v2664 = vlaneseq
  %v2665 = vshrl.u32 %v2664, 7
  %v2666 = vsub.s32 %v2663, %v2665
  %v2667 = vrot.slane %v2653, %v2666
  %v2668 = vcombine.high %v2660, %v2660
  %v2669 = vcombine.high %v2667, %v2667
  %v2670 = vcombine.high %v2301, %v2301
  %v2672 = vunpack.c.l.s4 1983009808
  %v2673 = vunpack.c.0.s8 %v2672
  %v2674 = vlaneseq
  %v2675 = vshrl.u32 %v2674, 7
  %v2676 = vsub.s32 %v2673, %v2675
  %v2677 = vrot.slane %v2301, %v2676
  %v2679 = vunpack.c.l.s4 1983009808
  %v2680 = vunpack.c.0.s8 %v2679
  %v2681 = vlaneseq
  %v2682 = vshrl.u32 %v2681, 7
  %v2683 = vsub.s32 %v2680, %v2682
  %v2684 = vrot.slane %v2670, %v2683
  %v2685 = vcombine.high %v2677, %v2677
  %v2686 = vcombine.high %v2684, %v2684
  %v2687 = vcombine.high %v2302, %v2302
  %v2689 = vunpack.c.l.s4 1983009808
  %v2690 = vunpack.c.0.s8 %v2689
  %v2691 = vlaneseq
  %v2692 = vshrl.u32 %v2691, 7
  %v2693 = vsub.s32 %v2690, %v2692
  %v2694 = vrot.slane %v2302, %v2693
  %v2696 = vunpack.c.l.s4 1983009808
  %v2697 = vunpack.c.0.s8 %v2696
  %v2698 = vlaneseq
  %v2699 = vshrl.u32 %v2698, 7
  %v2700 = vsub.s32 %v2697, %v2699
  %v2701 = vrot.slane %v2687, %v2700
  %v2702 = vcombine.high %v2694, %v2694
  %v2703 = vcombine.high %v2701, %v2701
  %v2704 = vcombine.high %v2303, %v2303
  %v2706 = vunpack.c.l.s4 1983009808
  %v2707 = vunpack.c.0.s8 %v2706
  %v2708 = vlaneseq
  %v2709 = vshrl.u32 %v2708, 7
  %v2710 = vsub.s32 %v2707, %v2709
  %v2711 = vrot.slane %v2303, %v2710
  %v2713 = vunpack.c.l.s4 1983009808
  %v2714 = vunpack.c.0.s8 %v2713
  %v2715 = vlaneseq
  %v2716 = vshrl.u32 %v2715, 7
  %v2717 = vsub.s32 %v2714, %v2716
  %v2718 = vrot.slane %v2704, %v2717
  %v2719 = vcombine.high %v2711, %v2711
  %v2720 = vcombine.high %v2718, %v2718
  %v2721 = vcombine.high %v2304, %v2304
  %v2723 = vunpack.c.l.s4 1983009808
  %v2724 = vunpack.c.0.s8 %v2723
  %v2725 = vlaneseq
  %v2726 = vshrl.u32 %v2725, 7
  %v2727 = vsub.s32 %v2724, %v2726
  %v2728 = vrot.slane %v2304, %v2727
  %v2730 = vunpack.c.l.s4 1983009808
  %v2731 = vunpack.c.0.s8 %v2730
  %v2732 = vlaneseq
  %v2733 = vshrl.u32 %v2732, 7
  %v2734 = vsub.s32 %v2731, %v2733
  %v2735 = vrot.slane %v2721, %v2734
  %v2736 = vcombine.high %v2728, %v2728
  %v2737 = vcombine.high %v2735, %v2735
  %v2738 = vcombine.high %v2305, %v2305
  %v2740 = vunpack.c.l.s4 1983009808
  %v2741 = vunpack.c.0.s8 %v2740
  %v2742 = vlaneseq
  %v2743 = vshrl.u32 %v2742, 7
  %v2744 = vsub.s32 %v2741, %v2743
  %v2745 = vrot.slane %v2305, %v2744
  %v2747 = vunpack.c.l.s4 1983009808
  %v2748 = vunpack.c.0.s8 %v2747
  %v2749 = vlaneseq
  %v2750 = vshrl.u32 %v2749, 7
  %v2751 = vsub.s32 %v2748, %v2750
  %v2752 = vrot.slane %v2738, %v2751
  %v2753 = vcombine.high %v2745, %v2745
  %v2754 = vcombine.high %v2752, %v2752
  %v2755 = vcombine.high %v2306, %v2306
  %v2757 = vunpack.c.l.s4 1983009808
  %v2758 = vunpack.c.0.s8 %v2757
  %v2759 = vlaneseq
  %v2760 = vshrl.u32 %v2759, 7
  %v2761 = vsub.s32 %v2758, %v2760
  %v2762 = vrot.slane %v2306, %v2761
  %v2764 = vunpack.c.l.s4 1983009808
  %v2765 = vunpack.c.0.s8 %v2764
  %v2766 = vlaneseq
  %v2767 = vshrl.u32 %v2766, 7
  %v2768 = vsub.s32 %v2765, %v2767
  %v2769 = vrot.slane %v2755, %v2768
  %v2770 = vcombine.high %v2762, %v2762
  %v2771 = vcombine.high %v2769, %v2769
  %v2772 = vcombine.high %v2307, %v2307
  %v2774 = vunpack.c.l.s4 1983009808
  %v2775 = vunpack.c.0.s8 %v2774
  %v2776 = vlaneseq
  %v2777 = vshrl.u32 %v2776, 7
  %v2778 = vsub.s32 %v2775, %v2777
  %v2779 = vrot.slane %v2307, %v2778
  %v2781 = vunpack.c.l.s4 1983009808
  %v2782 = vunpack.c.0.s8 %v2781
  %v2783 = vlaneseq
  %v2784 = vshrl.u32 %v2783, 7
  %v2785 = vsub.s32 %v2782, %v2784
  %v2786 = vrot.slane %v2772, %v2785
  %v2787 = vcombine.high %v2779, %v2779
  %v2788 = vcombine.high %v2786, %v2786
  %v2789 = vcombine.high %v2308, %v2308
  %v2791 = vunpack.c.l.s4 1983009808
  %v2792 = vunpack.c.0.s8 %v2791
  %v2793 = vlaneseq
  %v2794 = vshrl.u32 %v2793, 7
  %v2795 = vsub.s32 %v2792, %v2794
  %v2796 = vrot.slane %v2308, %v2795
  %v2798 = vunpack.c.l.s4 1983009808
  %v2799 = vunpack.c.0.s8 %v2798
  %v2800 = vlaneseq
  %v2801 = vshrl.u32 %v2800, 7
  %v2802 = vsub.s32 %v2799, %v2801
  %v2803 = vrot.slane %v2789, %v2802
  %v2804 = vcombine.high %v2796, %v2796
  %v2805 = vcombine.high %v2803, %v2803
  %v2806 = vcombine.high %v2309, %v2309
  %v2808 = vunpack.c.l.s4 1983009808
  %v2809 = vunpack.c.0.s8 %v2808
  %v2810 = vlaneseq
  %v2811 = vshrl.u32 %v2810, 7
  %v2812 = vsub.s32 %v2809, %v2811
  %v2813 = vrot.slane %v2309, %v2812
  %v2815 = vunpack.c.l.s4 1983009808
  %v2816 = vunpack.c.0.s8 %v2815
  %v2817 = vlaneseq
  %v2818 = vshrl.u32 %v2817, 7
  %v2819 = vsub.s32 %v2816, %v2818
  %v2820 = vrot.slane %v2806, %v2819
  %v2821 = vcombine.high %v2813, %v2813
  %v2822 = vcombine.high %v2820, %v2820
  %v2823 = vcombine.high %v2310, %v2310
  %v2825 = vunpack.c.l.s4 1983009808
  %v2826 = vunpack.c.0.s8 %v2825
  %v2827 = vlaneseq
  %v2828 = vshrl.u32 %v2827, 7
  %v2829 = vsub.s32 %v2826, %v2828
  %v2830 = vrot.slane %v2310, %v2829
  %v2832 = vunpack.c.l.s4 1983009808
  %v2833 = vunpack.c.0.s8 %v2832
  %v2834 = vlaneseq
  %v2835 = vshrl.u32 %v2834, 7
  %v2836 = vsub.s32 %v2833, %v2835
  %v2837 = vrot.slane %v2823, %v2836
  %v2838 = vcombine.high %v2830, %v2830
  %v2839 = vcombine.high %v2837, %v2837
  %v2840 = vcombine.high %v2311, %v2311
  %v2842 = vunpack.c.l.s4 1983009808
  %v2843 = vunpack.c.0.s8 %v2842
  %v2844 = vlaneseq
  %v2845 = vshrl.u32 %v2844, 7
  %v2846 = vsub.s32 %v2843, %v2845
  %v2847 = vrot.slane %v2311, %v2846
  %v2849 = vunpack.c.l.s4 1983009808
  %v2850 = vunpack.c.0.s8 %v2849
  %v2851 = vlaneseq
  %v2852 = vshrl.u32 %v2851, 7
  %v2853 = vsub.s32 %v2850, %v2852
  %v2854 = vrot.slane %v2840, %v2853
  %v2855 = vcombine.high %v2847, %v2847
  %v2856 = vcombine.high %v2854, %v2854
  %v2857 = vcombine.high %v2312, %v2312
  %v2859 = vunpack.c.l.s4 1983009808
  %v2860 = vunpack.c.0.s8 %v2859
  %v2861 = vlaneseq
  %v2862 = vshrl.u32 %v2861, 7
  %v2863 = vsub.s32 %v2860, %v2862
  %v2864 = vrot.slane %v2312, %v2863
  %v2866 = vunpack.c.l.s4 1983009808
  %v2867 = vunpack.c.0.s8 %v2866
  %v2868 = vlaneseq
  %v2869 = vshrl.u32 %v2868, 7
  %v2870 = vsub.s32 %v2867, %v2869
  %v2871 = vrot.slane %v2857, %v2870
  %v2872 = vcombine.high %v2864, %v2864
  %v2873 = vcombine.high %v2871, %v2871
  %v2875 = vunpack.c.l.s4 1983009808
  %v2876 = vunpack.c.0.s8 %v2875
  %v2877 = vlaneseq
  %v2878 = vshrl.u32 %v2877, 7
  %v2879 = vsub.s32 %v2876, %v2878
  %v2880 = vrot.slane %v2313, %v2879
  %v2881 = vcombine.high %v2880, %v2880
  %v2980 = vrot.slane %v2473, 7
  %v2981 = vrot.slane %v2980, 2
  %v2982 = vrot.slane %v2481, 7
  %v2983 = vrot.slane %v2982, 2
  %v2984 = vrot.slane %v2480, 7
  %v2985 = vrot.slane %v2984, 2
  %v2986 = vrot.slane %v2482, 7
  %v2987 = vrot.slane %v2986, 2
  %v2988 = vrot.slane %v2490, 7
  %v2989 = vrot.slane %v2988, 2
  %v2990 = vrot.slane %v2498, 7
  %v2991 = vrot.slane %v2990, 2
  %v2992 = vrot.slane %v2497, 7
  %v2993 = vrot.slane %v2992, 2
  %v2994 = vrot.slane %v2499, 7
  %v2995 = vrot.slane %v2994, 2
  %v2996 = vrot.slane %v2507, 7
  %v2997 = vrot.slane %v2996, 2
  %v2998 = vrot.slane %v2515, 7
  %v2999 = vrot.slane %v2998, 2
  %v3000 = vrot.slane %v2514, 7
  %v3001 = vrot.slane %v3000, 2
  %v3002 = vrot.slane %v2516, 7
  %v3003 = vrot.slane %v3002, 2
  %v3004 = vrot.slane %v2524, 7
  %v3005 = vrot.slane %v3004, 2
  %v3006 = vrot.slane %v2532, 7
  %v3007 = vrot.slane %v3006, 2
  %v3008 = vrot.slane %v2531, 7
  %v3009 = vrot.slane %v3008, 2
  %v3010 = vrot.slane %v2533, 7
  %v3011 = vrot.slane %v3010, 2
  %v3012 = vrot.slane %v2541, 7
  %v3013 = vrot.slane %v3012, 2
  %v3014 = vrot.slane %v2549, 7
  %v3015 = vrot.slane %v3014, 2
  %v3016 = vrot.slane %v2548, 7
  %v3017 = vrot.slane %v3016, 2
  %v3018 = vrot.slane %v2550, 7
  %v3019 = vrot.slane %v3018, 2
  %v3020 = vrot.slane %v2558, 7
  %v3021 = vrot.slane %v3020, 2
  %v3022 = vrot.slane %v2566, 7
  %v3023 = vrot.slane %v3022, 2
  %v3024 = vrot.slane %v2565, 7
  %v3025 = vrot.slane %v3024, 2
  %v3026 = vrot.slane %v2567, 7
  %v3027 = vrot.slane %v3026, 2
  %v3028 = vrot.slane %v2575, 7
  %v3029 = vrot.slane %v3028, 2
  %v3030 = vrot.slane %v2583, 7
  %v3031 = vrot.slane %v3030, 2
  %v3032 = vrot.slane %v2582, 7
  %v3033 = vrot.slane %v3032, 2
  %v3034 = vrot.slane %v2584, 7
  %v3035 = vrot.slane %v3034, 2
  %v3036 = vrot.slane %v2592, 7
  %v3037 = vrot.slane %v3036, 2
  %v3038 = vrot.slane %v2600, 7
  %v3039 = vrot.slane %v3038, 2
  %v3040 = vrot.slane %v2599, 7
  %v3041 = vrot.slane %v3040, 2
  %v3042 = vrot.slane %v2601, 7
  %v3043 = vrot.slane %v3042, 2
  %v3044 = vrot.slane %v2609, 7
  %v3045 = vrot.slane %v3044, 2
  %v3046 = vrot.slane %v2617, 7
  %v3047 = vrot.slane %v3046, 2
  %v3048 = vrot.slane %v2616, 7
  %v3049 = vrot.slane %v3048, 2
  %v3050 = vrot.slane %v2618, 7
  %v3051 = vrot.slane %v3050, 2
  %v3052 = vrot.slane %v2626, 7
  %v3053 = vrot.slane %v3052, 2
  %v3054 = vrot.slane %v2634, 7
  %v3055 = vrot.slane %v3054, 2
  %v3056 = vrot.slane %v2633, 7
  %v3057 = vrot.slane %v3056, 2
  %v3058 = vrot.slane %v2635, 7
  %v3059 = vrot.slane %v3058, 2
  %v3060 = vrot.slane %v2643, 7
  %v3061 = vrot.slane %v3060, 2
  %v3062 = vrot.slane %v2651, 7
  %v3063 = vrot.slane %v3062, 2
  %v3064 = vrot.slane %v2650, 7
  %v3065 = vrot.slane %v3064, 2
  %v3066 = vrot.slane %v2652, 7
  %v3067 = vrot.slane %v3066, 2
  %v3068 = vrot.slane %v2660, 7
  %v3069 = vrot.slane %v3068, 2
  %v3070 = vrot.slane %v2668, 7
  %v3071 = vrot.slane %v3070, 2
  %v3072 = vrot.slane %v2667, 7
  %v3073 = vrot.slane %v3072, 2
  %v3074 = vrot.slane %v2669, 7
  %v3075 = vrot.slane %v3074, 2
  %v3076 = vrot.slane %v2677, 7
  %v3077 = vrot.slane %v3076, 2
  %v3078 = vrot.slane %v2685, 7
  %v3079 = vrot.slane %v3078, 2
  %v3080 = vrot.slane %v2684, 7
  %v3081 = vrot.slane %v3080, 2
  %v3082 = vrot.slane %v2686, 7
  %v3083 = vrot.slane %v3082, 2
  %v3084 = vrot.slane %v2694, 7
  %v3085 = vrot.slane %v3084, 2
  %v3086 = vrot.slane %v2702, 7
  %v3087 = vrot.slane %v3086, 2
  %v3088 = vrot.slane %v2701, 7
  %v3089 = vrot.slane %v3088, 2
  %v3090 = vrot.slane %v2703, 7
  %v3091 = vrot.slane %v3090, 2
  %v3092 = vrot.slane %v2711, 7
  %v3093 = vrot.slane %v3092, 2
  %v3094 = vrot.slane %v2719, 7
  %v3095 = vrot.slane %v3094, 2
  %v3096 = vrot.slane %v2718, 7
  %v3097 = vrot.slane %v3096, 2
  %v3098 = vrot.slane %v2720, 7
  %v3099 = vrot.slane %v3098, 2
  %v3100 = vrot.slane %v2728, 7
  %v3101 = vrot.slane %v3100, 2
  %v3102 = vrot.slane %v2736, 7
  %v3103 = vrot.slane %v3102, 2
  %v3104 = vrot.slane %v2735, 7
  %v3105 = vrot.slane %v3104, 2
  %v3106 = vrot.slane %v2737, 7
  %v3107 = vrot.slane %v3106, 2
  %v3108 = vrot.slane %v2745, 7
  %v3109 = vrot.slane %v3108, 2
  %v3110 = vrot.slane %v2753, 7
  %v3111 = vrot.slane %v3110, 2
  %v3112 = vrot.slane %v2752, 7
  %v3113 = vrot.slane %v3112, 2
  %v3114 = vrot.slane %v2754, 7
  %v3115 = vrot.slane %v3114, 2
  %v3116 = vrot.slane %v2762, 7
  %v3117 = vrot.slane %v3116, 2
  %v3118 = vrot.slane %v2770, 7
  %v3119 = vrot.slane %v3118, 2
  %v3120 = vrot.slane %v2769, 7
  %v3121 = vrot.slane %v3120, 2
  %v3122 = vrot.slane %v2771, 7
  %v3123 = vrot.slane %v3122, 2
  %v3124 = vrot.slane %v2779, 7
  %v3125 = vrot.slane %v3124, 2
  %v3126 = vrot.slane %v2787, 7
  %v3127 = vrot.slane %v3126, 2
  %v3128 = vrot.slane %v2786, 7
  %v3129 = vrot.slane %v3128, 2
  %v3130 = vrot.slane %v2788, 7
  %v3131 = vrot.slane %v3130, 2
  %v3132 = vrot.slane %v2796, 7
  %v3133 = vrot.slane %v3132, 2
  %v3134 = vrot.slane %v2804, 7
  %v3135 = vrot.slane %v3134, 2
  %v3136 = vrot.slane %v2803, 7
  %v3137 = vrot.slane %v3136, 2
  %v3138 = vrot.slane %v2805, 7
  %v3139 = vrot.slane %v3138, 2
  %v3140 = vrot.slane %v2813, 7
  %v3141 = vrot.slane %v3140, 2
  %v3142 = vrot.slane %v2821, 7
  %v3143 = vrot.slane %v3142, 2
  %v3144 = vrot.slane %v2820, 7
  %v3145 = vrot.slane %v3144, 2
  %v3146 = vrot.slane %v2822, 7
  %v3147 = vrot.slane %v3146, 2
  %v3148 = vrot.slane %v2830, 7
  %v3149 = vrot.slane %v3148, 2
  %v3150 = vrot.slane %v2838, 7
  %v3151 = vrot.slane %v3150, 2
  %v3152 = vrot.slane %v2837, 7
  %v3153 = vrot.slane %v3152, 2
  %v3154 = vrot.slane %v2839, 7
  %v3155 = vrot.slane %v3154, 2
  %v3156 = vrot.slane %v2847, 7
  %v3157 = vrot.slane %v3156, 2
  %v3158 = vrot.slane %v2855, 7
  %v3159 = vrot.slane %v3158, 2
  %v3160 = vrot.slane %v2854, 7
  %v3161 = vrot.slane %v3160, 2
  %v3162 = vrot.slane %v2856, 7
  %v3163 = vrot.slane %v3162, 2
  %v3164 = vrot.slane %v2864, 7
  %v3165 = vrot.slane %v3164, 2
  %v3166 = vrot.slane %v2872, 7
  %v3167 = vrot.slane %v3166, 2
  %v3168 = vrot.slane %v2871, 7
  %v3169 = vrot.slane %v3168, 2
  %v3170 = vrot.slane %v2873, 7
  %v3171 = vrot.slane %v3170, 2
  %v3172 = vrot.slane %v2880, 7
  %v3173 = vrot.slane %v3172, 2
  %v3174 = vrot.slane %v2881, 7
  %v3175 = vrot.slane %v3174, 2
  %v3274 = vmax.f32 %v2473, %v2981
  %v3275 = vmax.f32 %v2481, %v2983
  %v3276 = vmax.f32 %v2480, %v2985
  %v3277 = vmax.f32 %v2482, %v2987
  %v3278 = vmax.f32 %v2490, %v2989
  %v3279 = vmax.f32 %v2498, %v2991
  %v3280 = vmax.f32 %v2497, %v2993
  %v3281 = vmax.f32 %v2499, %v2995
  %v3282 = vmax.f32 %v2507, %v2997
  %v3283 = vmax.f32 %v2515, %v2999
  %v3284 = vmax.f32 %v2514, %v3001
  %v3285 = vmax.f32 %v2516, %v3003
  %v3286 = vmax.f32 %v2524, %v3005
  %v3287 = vmax.f32 %v2532, %v3007
  %v3288 = vmax.f32 %v2531, %v3009
  %v3289 = vmax.f32 %v2533, %v3011
  %v3290 = vmax.f32 %v2541, %v3013
  %v3291 = vmax.f32 %v2549, %v3015
  %v3292 = vmax.f32 %v2548, %v3017
  %v3293 = vmax.f32 %v2550, %v3019
  %v3294 = vmax.f32 %v2558, %v3021
  %v3295 = vmax.f32 %v2566, %v3023
  %v3296 = vmax.f32 %v2565, %v3025
  %v3297 = vmax.f32 %v2567, %v3027
  %v3298 = vmax.f32 %v2575, %v3029
  %v3299 = vmax.f32 %v2583, %v3031
  %v3300 = vmax.f32 %v2582, %v3033
  %v3301 = vmax.f32 %v2584, %v3035
  %v3302 = vmax.f32 %v2592, %v3037
  %v3303 = vmax.f32 %v2600, %v3039
  %v3304 = vmax.f32 %v2599, %v3041
  %v3305 = vmax.f32 %v2601, %v3043
  %v3306 = vmax.f32 %v2609, %v3045
  %v3307 = vmax.f32 %v2617, %v3047
  %v3308 = vmax.f32 %v2616, %v3049
  %v3309 = vmax.f32 %v2618, %v3051
  %v3310 = vmax.f32 %v2626, %v3053
  %v3311 = vmax.f32 %v2634, %v3055
  %v3312 = vmax.f32 %v2633, %v3057
  %v3313 = vmax.f32 %v2635, %v3059
  %v3314 = vmax.f32 %v2643, %v3061
  %v3315 = vmax.f32 %v2651, %v3063
  %v3316 = vmax.f32 %v2650, %v3065
  %v3317 = vmax.f32 %v2652, %v3067
  %v3318 = vmax.f32 %v2660, %v3069
  %v3319 = vmax.f32 %v2668, %v3071
  %v3320 = vmax.f32 %v2667, %v3073
  %v3321 = vmax.f32 %v2669, %v3075
  %v3322 = vmax.f32 %v2677, %v3077
  %v3323 = vmax.f32 %v2685, %v3079
  %v3324 = vmax.f32 %v2684, %v3081
  %v3325 = vmax.f32 %v2686, %v3083
  %v3326 = vmax.f32 %v2694, %v3085
  %v3327 = vmax.f32 %v2702, %v3087
  %v3328 = vmax.f32 %v2701, %v3089
  %v3329 = vmax.f32 %v2703, %v3091
  %v3330 = vmax.f32 %v2711, %v3093
  %v3331 = vmax.f32 %v2719, %v3095
  %v3332 = vmax.f32 %v2718, %v3097
  %v3333 = vmax.f32 %v2720, %v3099
  %v3334 = vmax.f32 %v2728, %v3101
  %v3335 = vmax.f32 %v2736, %v3103
  %v3336 = vmax.f32 %v2735, %v3105
  %v3337 = vmax.f32 %v2737, %v3107
  %v3338 = vmax.f32 %v2745, %v3109
  %v3339 = vmax.f32 %v2753, %v3111
  %v3340 = vmax.f32 %v2752, %v3113
  %v3341 = vmax.f32 %v2754, %v3115
  %v3342 = vmax.f32 %v2762, %v3117
  %v3343 = vmax.f32 %v2770, %v3119
  %v3344 = vmax.f32 %v2769, %v3121
  %v3345 = vmax.f32 %v2771, %v3123
  %v3346 = vmax.f32 %v2779, %v3125
  %v3347 = vmax.f32 %v2787, %v3127
  %v3348 = vmax.f32 %v2786, %v3129
  %v3349 = vmax.f32 %v2788, %v3131
  %v3350 = vmax.f32 %v2796, %v3133
  %v3351 = vmax.f32 %v2804, %v3135
  %v3352 = vmax.f32 %v2803, %v3137
  %v3353 = vmax.f32 %v2805, %v3139
  %v3354 = vmax.f32 %v2813, %v3141
  %v3355 = vmax.f32 %v2821, %v3143
  %v3356 = vmax.f32 %v2820, %v3145
  %v3357 = vmax.f32 %v2822, %v3147
  %v3358 = vmax.f32 %v2830, %v3149
  %v3359 = vmax.f32 %v2838, %v3151
  %v3360 = vmax.f32 %v2837, %v3153
  %v3361 = vmax.f32 %v2839, %v3155
  %v3362 = vmax.f32 %v2847, %v3157
  %v3363 = vmax.f32 %v2855, %v3159
  %v3364 = vmax.f32 %v2854, %v3161
  %v3365 = vmax.f32 %v2856, %v3163
  %v3366 = vmax.f32 %v2864, %v3165
  %v3367 = vmax.f32 %v2872, %v3167
  %v3368 = vmax.f32 %v2871, %v3169
  %v3369 = vmax.f32 %v2873, %v3171
  %v3370 = vmax.f32 %v2880, %v3173
  %v3371 = vmax.f32 %v2881, %v3175
  %v3372 = vmax.f32 %v3274, %v3281
  %v3373 = vmax.f32 %v3275, %v3282
  %v3374 = vmax.f32 %v3276, %v3283
  %v3375 = vmax.f32 %v3277, %v3284
  %v3376 = vmax.f32 %v3278, %v3285
  %v3377 = vmax.f32 %v3279, %v3286
  %v3378 = vmax.f32 %v3280, %v3287
  %v3379 = vmax.f32 %v3288, %v3295
  %v3380 = vmax.f32 %v3289, %v3296
  %v3381 = vmax.f32 %v3290, %v3297
  %v3382 = vmax.f32 %v3291, %v3298
  %v3383 = vmax.f32 %v3292, %v3299
  %v3384 = vmax.f32 %v3293, %v3300
  %v3385 = vmax.f32 %v3294, %v3301
  %v3386 = vmax.f32 %v3302, %v3309
  %v3387 = vmax.f32 %v3303, %v3310
  %v3388 = vmax.f32 %v3304, %v3311
  %v3389 = vmax.f32 %v3305, %v3312
  %v3390 = vmax.f32 %v3306, %v3313
  %v3391 = vmax.f32 %v3307, %v3314
  %v3392 = vmax.f32 %v3308, %v3315
  %v3393 = vmax.f32 %v3316, %v3323
  %v3394 = vmax.f32 %v3317, %v3324
  %v3395 = vmax.f32 %v3318, %v3325
  %v3396 = vmax.f32 %v3319, %v3326
  %v3397 = vmax.f32 %v3320, %v3327
  %v3398 = vmax.f32 %v3321, %v3328
  %v3399 = vmax.f32 %v3322, %v3329
  %v3400 = vmax.f32 %v3330, %v3337
  %v3401 = vmax.f32 %v3331, %v3338
  %v3402 = vmax.f32 %v3332, %v3339
  %v3403 = vmax.f32 %v3333, %v3340
  %v3404 = vmax.f32 %v3334, %v3341
  %v3405 = vmax.f32 %v3335, %v3342
  %v3406 = vmax.f32 %v3336, %v3343
  %v3407 = vmax.f32 %v3344, %v3351
  %v3408 = vmax.f32 %v3345, %v3352
  %v3409 = vmax.f32 %v3346, %v3353
  %v3410 = vmax.f32 %v3347, %v3354
  %v3411 = vmax.f32 %v3348, %v3355
  %v3412 = vmax.f32 %v3349, %v3356
  %v3413 = vmax.f32 %v3350, %v3357
  %v3414 = vmax.f32 %v3358, %v3365
  %v3415 = vmax.f32 %v3359, %v3366
  %v3416 = vmax.f32 %v3360, %v3367
  %v3417 = vmax.f32 %v3361, %v3368
  %v3418 = vmax.f32 %v3362, %v3369
  %v3419 = vmax.f32 %v3363, %v3370
  %v3420 = vmax.f32 %v3364, %v3371
  %v3421 = vpack.c.bf16 %v3372, %v3372
  %v3422 = vpack.c.bf16 %v3373, %v3373
  %v3423 = vpack.c.bf16 %v3374, %v3374
  %v3424 = vpack.c.bf16 %v3375, %v3375
  %v3425 = vpack.c.bf16 %v3376, %v3376
  %v3426 = vpack.c.bf16 %v3377, %v3377
  %v3427 = vpack.c.bf16 %v3378, %v3378
  %v3428 = vpack.c.bf16 %v3379, %v3379
  %v3429 = vpack.c.bf16 %v3380, %v3380
  %v3430 = vpack.c.bf16 %v3381, %v3381
  %v3431 = vpack.c.bf16 %v3382, %v3382
  %v3432 = vpack.c.bf16 %v3383, %v3383
  %v3433 = vpack.c.bf16 %v3384, %v3384
  %v3434 = vpack.c.bf16 %v3385, %v3385
  %v3435 = vpack.c.bf16 %v3386, %v3386
  %v3436 = vpack.c.bf16 %v3387, %v3387
  %v3437 = vpack.c.bf16 %v3388, %v3388
  %v3438 = vpack.c.bf16 %v3389, %v3389
  %v3439 = vpack.c.bf16 %v3390, %v3390
  %v3440 = vpack.c.bf16 %v3391, %v3391
  %v3441 = vpack.c.bf16 %v3392, %v3392
  %v3442 = vpack.c.bf16 %v3393, %v3393
  %v3443 = vpack.c.bf16 %v3394, %v3394
  %v3444 = vpack.c.bf16 %v3395, %v3395
  %v3445 = vpack.c.bf16 %v3396, %v3396
  %v3446 = vpack.c.bf16 %v3397, %v3397
  %v3447 = vpack.c.bf16 %v3398, %v3398
  %v3448 = vpack.c.bf16 %v3399, %v3399
  %v3449 = vpack.c.bf16 %v3400, %v3400
  %v3450 = vpack.c.bf16 %v3401, %v3401
  %v3451 = vpack.c.bf16 %v3402, %v3402
  %v3452 = vpack.c.bf16 %v3403, %v3403
  %v3453 = vpack.c.bf16 %v3404, %v3404
  %v3454 = vpack.c.bf16 %v3405, %v3405
  %v3455 = vpack.c.bf16 %v3406, %v3406
  %v3456 = vpack.c.bf16 %v3407, %v3407
  %v3457 = vpack.c.bf16 %v3408, %v3408
  %v3458 = vpack.c.bf16 %v3409, %v3409
  %v3459 = vpack.c.bf16 %v3410, %v3410
  %v3460 = vpack.c.bf16 %v3411, %v3411
  %v3461 = vpack.c.bf16 %v3412, %v3412
  %v3462 = vpack.c.bf16 %v3413, %v3413
  %v3463 = vpack.c.bf16 %v3414, %v3414
  %v3464 = vpack.c.bf16 %v3415, %v3415
  %v3465 = vpack.c.bf16 %v3416, %v3416
  %v3466 = vpack.c.bf16 %v3417, %v3417
  %v3467 = vpack.c.bf16 %v3418, %v3418
  %v3468 = vpack.c.bf16 %v3419, %v3419
  %v3469 = vpack.c.bf16 %v3420, %v3420
  %v3519 = vunpack.c.l.b16 %v3421
  %v3520 = vunpack.c.l.b16 %v3422
  %v3521 = vunpack.c.l.b16 %v3423
  %v3522 = vunpack.c.l.b16 %v3424
  %v3523 = vunpack.c.l.b16 %v3425
  %v3524 = vunpack.c.l.b16 %v3426
  %v3525 = vunpack.c.l.b16 %v3427
  %v3526 = vunpack.c.l.b16 %v3428
  %v3527 = vunpack.c.l.b16 %v3429
  %v3528 = vunpack.c.l.b16 %v3430
  %v3529 = vunpack.c.l.b16 %v3431
  %v3530 = vunpack.c.l.b16 %v3432
  %v3531 = vunpack.c.l.b16 %v3433
  %v3532 = vunpack.c.l.b16 %v3434
  %v3533 = vunpack.c.l.b16 %v3435
  %v3534 = vunpack.c.l.b16 %v3436
  %v3535 = vunpack.c.l.b16 %v3437
  %v3536 = vunpack.c.l.b16 %v3438
  %v3537 = vunpack.c.l.b16 %v3439
  %v3538 = vunpack.c.l.b16 %v3440
  %v3539 = vunpack.c.l.b16 %v3441
  %v3540 = vunpack.c.l.b16 %v3442
  %v3541 = vunpack.c.l.b16 %v3443
  %v3542 = vunpack.c.l.b16 %v3444
  %v3543 = vunpack.c.l.b16 %v3445
  %v3544 = vunpack.c.l.b16 %v3446
  %v3545 = vunpack.c.l.b16 %v3447
  %v3546 = vunpack.c.l.b16 %v3448
  %v3547 = vunpack.c.l.b16 %v3449
  %v3548 = vunpack.c.l.b16 %v3450
  %v3549 = vunpack.c.l.b16 %v3451
  %v3550 = vunpack.c.l.b16 %v3452
  %v3551 = vunpack.c.l.b16 %v3453
  %v3552 = vunpack.c.l.b16 %v3454
  %v3553 = vunpack.c.l.b16 %v3455
  %v3554 = vunpack.c.l.b16 %v3456
  %v3555 = vunpack.c.l.b16 %v3457
  %v3556 = vunpack.c.l.b16 %v3458
  %v3557 = vunpack.c.l.b16 %v3459
  %v3558 = vunpack.c.l.b16 %v3460
  %v3559 = vunpack.c.l.b16 %v3461
  %v3560 = vunpack.c.l.b16 %v3462
  %v3561 = vunpack.c.l.b16 %v3463
  %v3562 = vunpack.c.l.b16 %v3464
  %v3563 = vunpack.c.l.b16 %v3465
  %v3564 = vunpack.c.l.b16 %v3466
  %v3565 = vunpack.c.l.b16 %v3467
  %v3566 = vunpack.c.l.b16 %v3468
  %v3567 = vunpack.c.l.b16 %v3469
  %v3568 = vrot.slane %v3520, 7
  %v3569 = vsel %vm1762, %v3568, %v3519
  %v3570 = vrot.slane %v3521, 6
  %v3571 = vsel %vm1765, %v3570, %v3569
  %v3572 = vrot.slane %v3522, 5
  %v3573 = vsel %vm1768, %v3572, %v3571
  %v3574 = vrot.slane %v3523, 4
  %v3575 = vsel %vm1771, %v3574, %v3573
  %v3576 = vrot.slane %v3524, 3
  %v3577 = vsel %vm1774, %v3576, %v3575
  %v3578 = vrot.slane %v3525, 2
  %v3579 = vsel %vm1777, %v3578, %v3577
  %v3580 = vrot.slane %v3527, 7
  %v3581 = vsel %vm1762, %v3580, %v3526
  %v3582 = vrot.slane %v3528, 6
  %v3583 = vsel %vm1765, %v3582, %v3581
  %v3584 = vrot.slane %v3529, 5
  %v3585 = vsel %vm1768, %v3584, %v3583
  %v3586 = vrot.slane %v3530, 4
  %v3587 = vsel %vm1771, %v3586, %v3585
  %v3588 = vrot.slane %v3531, 3
  %v3589 = vsel %vm1774, %v3588, %v3587
  %v3590 = vrot.slane %v3532, 2
  %v3591 = vsel %vm1777, %v3590, %v3589
  %v3592 = vrot.slane %v3534, 7
  %v3593 = vsel %vm1762, %v3592, %v3533
  %v3594 = vrot.slane %v3535, 6
  %v3595 = vsel %vm1765, %v3594, %v3593
  %v3596 = vrot.slane %v3536, 5
  %v3597 = vsel %vm1768, %v3596, %v3595
  %v3598 = vrot.slane %v3537, 4
  %v3599 = vsel %vm1771, %v3598, %v3597
  %v3600 = vrot.slane %v3538, 3
  %v3601 = vsel %vm1774, %v3600, %v3599
  %v3602 = vrot.slane %v3539, 2
  %v3603 = vsel %vm1777, %v3602, %v3601
  %v3604 = vrot.slane %v3541, 7
  %v3605 = vsel %vm1762, %v3604, %v3540
  %v3606 = vrot.slane %v3542, 6
  %v3607 = vsel %vm1765, %v3606, %v3605
  %v3608 = vrot.slane %v3543, 5
  %v3609 = vsel %vm1768, %v3608, %v3607
  %v3610 = vrot.slane %v3544, 4
  %v3611 = vsel %vm1771, %v3610, %v3609
  %v3612 = vrot.slane %v3545, 3
  %v3613 = vsel %vm1774, %v3612, %v3611
  %v3614 = vrot.slane %v3546, 2
  %v3615 = vsel %vm1777, %v3614, %v3613
  %v3616 = vrot.slane %v3548, 7
  %v3617 = vsel %vm1762, %v3616, %v3547
  %v3618 = vrot.slane %v3549, 6
  %v3619 = vsel %vm1765, %v3618, %v3617
  %v3620 = vrot.slane %v3550, 5
  %v3621 = vsel %vm1768, %v3620, %v3619
  %v3622 = vrot.slane %v3551, 4
  %v3623 = vsel %vm1771, %v3622, %v3621
  %v3624 = vrot.slane %v3552, 3
  %v3625 = vsel %vm1774, %v3624, %v3623
  %v3626 = vrot.slane %v3553, 2
  %v3627 = vsel %vm1777, %v3626, %v3625
  %v3628 = vrot.slane %v3555, 7
  %v3629 = vsel %vm1762, %v3628, %v3554
  %v3630 = vrot.slane %v3556, 6
  %v3631 = vsel %vm1765, %v3630, %v3629
  %v3632 = vrot.slane %v3557, 5
  %v3633 = vsel %vm1768, %v3632, %v3631
  %v3634 = vrot.slane %v3558, 4
  %v3635 = vsel %vm1771, %v3634, %v3633
  %v3636 = vrot.slane %v3559, 3
  %v3637 = vsel %vm1774, %v3636, %v3635
  %v3638 = vrot.slane %v3560, 2
  %v3639 = vsel %vm1777, %v3638, %v3637
  %v3640 = vrot.slane %v3562, 7
  %v3641 = vsel %vm1762, %v3640, %v3561
  %v3642 = vrot.slane %v3563, 6
  %v3643 = vsel %vm1765, %v3642, %v3641
  %v3644 = vrot.slane %v3564, 5
  %v3645 = vsel %vm1768, %v3644, %v3643
  %v3646 = vrot.slane %v3565, 4
  %v3647 = vsel %vm1771, %v3646, %v3645
  %v3648 = vrot.slane %v3566, 3
  %v3649 = vsel %vm1774, %v3648, %v3647
  %v3650 = vrot.slane %v3567, 2
  %v3651 = vsel %vm1777, %v3650, %v3649
  %v3652 = vpack.c.b16 %v3579, %v3579
  %v3653 = vpack.c.b16 %v3591, %v3591
  %v3654 = vpack.c.b16 %v3603, %v3603
  %v3655 = vpack.c.b16 %v3615, %v3615
  %v3656 = vpack.c.b16 %v3627, %v3627
  %v3657 = vpack.c.b16 %v3639, %v3639
  %v3658 = vpack.c.b16 %v3651, %v3651
  %v3660 = vshrl.u32 %v3652, 16
  %v3662 = vrot.slane %v3660, 7
  %v3663 = vshll.u32 %v3652, 16
  %v3665 = vor.u32 %v3662, %v3663
  %v3667 = vshrl.u32 %v3653, 16
  %v3669 = vrot.slane %v3667, 7
  %v3670 = vshll.u32 %v3653, 16
  %v3672 = vor.u32 %v3669, %v3670
  %v3674 = vshrl.u32 %v3654, 16
  %v3676 = vrot.slane %v3674, 7
  %v3677 = vshll.u32 %v3654, 16
  %v3679 = vor.u32 %v3676, %v3677
  %v3681 = vshrl.u32 %v3655, 16
  %v3683 = vrot.slane %v3681, 7
  %v3684 = vshll.u32 %v3655, 16
  %v3686 = vor.u32 %v3683, %v3684
  %v3688 = vshrl.u32 %v3656, 16
  %v3690 = vrot.slane %v3688, 7
  %v3691 = vshll.u32 %v3656, 16
  %v3693 = vor.u32 %v3690, %v3691
  %v3695 = vshrl.u32 %v3657, 16
  %v3697 = vrot.slane %v3695, 7
  %v3698 = vshll.u32 %v3657, 16
  %v3700 = vor.u32 %v3697, %v3698
  %v3702 = vshrl.u32 %v3658, 16
  %v3704 = vrot.slane %v3702, 7
  %v3705 = vshll.u32 %v3658, 16
  %v3707 = vor.u32 %v3704, %v3705
  %v3715 = vsel %vm1924, 0, %v3665
  %v3716 = vsel %vm1924, 0, %v3672
  %v3717 = vsel %vm1924, 0, %v3679
  %v3718 = vsel %vm1924, 0, %v3686
  %v3719 = vsel %vm1924, 0, %v3693
  %v3720 = vsel %vm1924, 0, %v3700
  %v3721 = vsel %vm1924, 0, %v3707
  %v3723 = vsel %vm1933, %v3715, 0
  %v3725 = vsel %vm1933, %v3716, 0
  %v3727 = vsel %vm1933, %v3717, 0
  %v3729 = vsel %vm1933, %v3718, 0
  %v3731 = vsel %vm1933, %v3719, 0
  %v3733 = vsel %vm1933, %v3720, 0
  %v3735 = vsel %vm1933, %v3721, 0
  %v3742 = vunpack.c.l.s4 1966171168
  %v3743 = vunpack.c.0.s8 %v3742
  %v3744 = vlaneseq
  %v3745 = vshrl.u32 %v3744, 7
  %v3746 = vsub.s32 %v3743, %v3745
  %v3747 = vrot.slane %v1935, %v3746
  %v3748 = vcombine.high %v3747, %v3747
  %v3750 = vunpack.c.l.s4 1966171168
  %v3751 = vunpack.c.0.s8 %v3750
  %v3752 = vlaneseq
  %v3753 = vshrl.u32 %v3752, 7
  %v3754 = vsub.s32 %v3751, %v3753
  %v3755 = vrot.slane %v3747, %v3754
  %v3757 = vunpack.c.l.s4 1966171168
  %v3758 = vunpack.c.0.s8 %v3757
  %v3759 = vlaneseq
  %v3760 = vshrl.u32 %v3759, 7
  %v3761 = vsub.s32 %v3758, %v3760
  %v3762 = vrot.slane %v3748, %v3761
  %v3764 = vunpack.c.l.s4 1966171168
  %v3765 = vunpack.c.0.s8 %v3764
  %v3766 = vlaneseq
  %v3767 = vshrl.u32 %v3766, 7
  %v3768 = vsub.s32 %v3765, %v3767
  %v3769 = vrot.slane %v1937, %v3768
  %v3770 = vcombine.high %v3769, %v3769
  %v3772 = vunpack.c.l.s4 1966171168
  %v3773 = vunpack.c.0.s8 %v3772
  %v3774 = vlaneseq
  %v3775 = vshrl.u32 %v3774, 7
  %v3776 = vsub.s32 %v3773, %v3775
  %v3777 = vrot.slane %v3769, %v3776
  %v3779 = vunpack.c.l.s4 1966171168
  %v3780 = vunpack.c.0.s8 %v3779
  %v3781 = vlaneseq
  %v3782 = vshrl.u32 %v3781, 7
  %v3783 = vsub.s32 %v3780, %v3782
  %v3784 = vrot.slane %v3770, %v3783
  %v3786 = vunpack.c.l.s4 1966171168
  %v3787 = vunpack.c.0.s8 %v3786
  %v3788 = vlaneseq
  %v3789 = vshrl.u32 %v3788, 7
  %v3790 = vsub.s32 %v3787, %v3789
  %v3791 = vrot.slane %v1939, %v3790
  %v3792 = vcombine.high %v3791, %v3791
  %v3794 = vunpack.c.l.s4 1966171168
  %v3795 = vunpack.c.0.s8 %v3794
  %v3796 = vlaneseq
  %v3797 = vshrl.u32 %v3796, 7
  %v3798 = vsub.s32 %v3795, %v3797
  %v3799 = vrot.slane %v3791, %v3798
  %v3801 = vunpack.c.l.s4 1966171168
  %v3802 = vunpack.c.0.s8 %v3801
  %v3803 = vlaneseq
  %v3804 = vshrl.u32 %v3803, 7
  %v3805 = vsub.s32 %v3802, %v3804
  %v3806 = vrot.slane %v3792, %v3805
  %v3808 = vunpack.c.l.s4 1966171168
  %v3809 = vunpack.c.0.s8 %v3808
  %v3810 = vlaneseq
  %v3811 = vshrl.u32 %v3810, 7
  %v3812 = vsub.s32 %v3809, %v3811
  %v3813 = vrot.slane %v3723, %v3812
  %v3814 = vcombine.high %v3813, %v3813
  %v3816 = vunpack.c.l.s4 1966171168
  %v3817 = vunpack.c.0.s8 %v3816
  %v3818 = vlaneseq
  %v3819 = vshrl.u32 %v3818, 7
  %v3820 = vsub.s32 %v3817, %v3819
  %v3821 = vrot.slane %v3813, %v3820
  %v3823 = vunpack.c.l.s4 1966171168
  %v3824 = vunpack.c.0.s8 %v3823
  %v3825 = vlaneseq
  %v3826 = vshrl.u32 %v3825, 7
  %v3827 = vsub.s32 %v3824, %v3826
  %v3828 = vrot.slane %v3814, %v3827
  %v3830 = vunpack.c.l.s4 1966171168
  %v3831 = vunpack.c.0.s8 %v3830
  %v3832 = vlaneseq
  %v3833 = vshrl.u32 %v3832, 7
  %v3834 = vsub.s32 %v3831, %v3833
  %v3835 = vrot.slane %v3725, %v3834
  %v3836 = vcombine.high %v3835, %v3835
  %v3838 = vunpack.c.l.s4 1966171168
  %v3839 = vunpack.c.0.s8 %v3838
  %v3840 = vlaneseq
  %v3841 = vshrl.u32 %v3840, 7
  %v3842 = vsub.s32 %v3839, %v3841
  %v3843 = vrot.slane %v3835, %v3842
  %v3845 = vunpack.c.l.s4 1966171168
  %v3846 = vunpack.c.0.s8 %v3845
  %v3847 = vlaneseq
  %v3848 = vshrl.u32 %v3847, 7
  %v3849 = vsub.s32 %v3846, %v3848
  %v3850 = vrot.slane %v3836, %v3849
  %v3851 = vunpack.i.l.s16 %v3755
  %v3852 = vunpack.i.h.s16 %v3755
  %v3853 = vunpack.i.l.s16 %v3762
  %v3854 = vunpack.i.l.s16 %v3777
  %v3855 = vunpack.i.h.s16 %v3777
  %v3856 = vunpack.i.l.s16 %v3784
  %v3857 = vunpack.i.l.s16 %v3799
  %v3858 = vunpack.i.h.s16 %v3799
  %v3859 = vunpack.i.l.s16 %v3806
  %v3860 = vunpack.i.l.s16 %v3821
  %v3861 = vunpack.i.h.s16 %v3821
  %v3862 = vunpack.i.l.s16 %v3828
  %v3863 = vunpack.i.l.s16 %v3843
  %v3864 = vunpack.i.h.s16 %v3843
  %v3865 = vunpack.i.l.s16 %v3850
  %v3866 = vunpack.i.h.s16 %v3762
  %v3867 = vunpack.i.h.s16 %v3784
  %v3868 = vunpack.i.h.s16 %v3806
  %v3869 = vunpack.i.h.s16 %v3828
  %v3870 = vunpack.i.h.s16 %v3850
  %v3871 = vcombine.high %v3755, %v3755
  %v3872 = vcombine.high %v3777, %v3777
  %v3873 = vcombine.high %v3799, %v3799
  %v3874 = vcombine.high %v3821, %v3821
  %v3875 = vcombine.high %v3843, %v3843
  %v3876 = vunpack.i.l.s16 %v3871
  %v3877 = vunpack.i.l.s16 %v3872
  %v3878 = vunpack.i.l.s16 %v3873
  %v3879 = vunpack.i.l.s16 %v3874
  %v3880 = vunpack.i.l.s16 %v3875
  %v3881 = vunpack.i.h.s16 %v3871
  %v3882 = vunpack.i.h.s16 %v3872
  %v3883 = vunpack.i.h.s16 %v3873
  %v3884 = vunpack.i.h.s16 %v3874
  %v3885 = vunpack.i.h.s16 %v3875
  %v3886 = vcombine.high %v3762, %v3762
  %v3887 = vcombine.high %v3784, %v3784
  %v3888 = vcombine.high %v3806, %v3806
  %v3889 = vcombine.high %v3828, %v3828
  %v3890 = vcombine.high %v3850, %v3850
  %v3891 = vunpack.i.l.s16 %v3886
  %v3892 = vunpack.i.l.s16 %v3887
  %v3893 = vunpack.i.l.s16 %v3888
  %v3894 = vunpack.i.l.s16 %v3889
  %v3895 = vunpack.i.l.s16 %v3890
  %v3896 = vunpack.i.h.s16 %v3886
  %v3897 = vunpack.i.h.s16 %v3887
  %v3898 = vunpack.i.h.s16 %v3888
  %v3899 = vunpack.i.h.s16 %v3889
  %v3900 = vunpack.i.h.s16 %v3890
  %v3901 = vcombine.high %v1935, %v1935
  %v3903 = vunpack.c.l.s4 1966171168
  %v3904 = vunpack.c.0.s8 %v3903
  %v3905 = vlaneseq
  %v3906 = vshrl.u32 %v3905, 7
  %v3907 = vsub.s32 %v3904, %v3906
  %v3908 = vrot.slane %v3901, %v3907
  %v3910 = vunpack.c.l.s4 1966171168
  %v3911 = vunpack.c.0.s8 %v3910
  %v3912 = vlaneseq
  %v3913 = vshrl.u32 %v3912, 7
  %v3914 = vsub.s32 %v3911, %v3913
  %v3915 = vrot.slane %v3908, %v3914
  %v3916 = vcombine.high %v1937, %v1937
  %v3918 = vunpack.c.l.s4 1966171168
  %v3919 = vunpack.c.0.s8 %v3918
  %v3920 = vlaneseq
  %v3921 = vshrl.u32 %v3920, 7
  %v3922 = vsub.s32 %v3919, %v3921
  %v3923 = vrot.slane %v3916, %v3922
  %v3925 = vunpack.c.l.s4 1966171168
  %v3926 = vunpack.c.0.s8 %v3925
  %v3927 = vlaneseq
  %v3928 = vshrl.u32 %v3927, 7
  %v3929 = vsub.s32 %v3926, %v3928
  %v3930 = vrot.slane %v3923, %v3929
  %v3931 = vcombine.high %v1939, %v1939
  %v3933 = vunpack.c.l.s4 1966171168
  %v3934 = vunpack.c.0.s8 %v3933
  %v3935 = vlaneseq
  %v3936 = vshrl.u32 %v3935, 7
  %v3937 = vsub.s32 %v3934, %v3936
  %v3938 = vrot.slane %v3931, %v3937
  %v3940 = vunpack.c.l.s4 1966171168
  %v3941 = vunpack.c.0.s8 %v3940
  %v3942 = vlaneseq
  %v3943 = vshrl.u32 %v3942, 7
  %v3944 = vsub.s32 %v3941, %v3943
  %v3945 = vrot.slane %v3938, %v3944
  %v3946 = vcombine.high %v3723, %v3723
  %v3948 = vunpack.c.l.s4 1966171168
  %v3949 = vunpack.c.0.s8 %v3948
  %v3950 = vlaneseq
  %v3951 = vshrl.u32 %v3950, 7
  %v3952 = vsub.s32 %v3949, %v3951
  %v3953 = vrot.slane %v3946, %v3952
  %v3955 = vunpack.c.l.s4 1966171168
  %v3956 = vunpack.c.0.s8 %v3955
  %v3957 = vlaneseq
  %v3958 = vshrl.u32 %v3957, 7
  %v3959 = vsub.s32 %v3956, %v3958
  %v3960 = vrot.slane %v3953, %v3959
  %v3961 = vcombine.high %v3725, %v3725
  %v3963 = vunpack.c.l.s4 1966171168
  %v3964 = vunpack.c.0.s8 %v3963
  %v3965 = vlaneseq
  %v3966 = vshrl.u32 %v3965, 7
  %v3967 = vsub.s32 %v3964, %v3966
  %v3968 = vrot.slane %v3961, %v3967
  %v3970 = vunpack.c.l.s4 1966171168
  %v3971 = vunpack.c.0.s8 %v3970
  %v3972 = vlaneseq
  %v3973 = vshrl.u32 %v3972, 7
  %v3974 = vsub.s32 %v3971, %v3973
  %v3975 = vrot.slane %v3968, %v3974
  %v3976 = vunpack.i.l.s16 %v3915
  %v3977 = vunpack.i.l.s16 %v3930
  %v3978 = vunpack.i.l.s16 %v3945
  %v3979 = vunpack.i.l.s16 %v3960
  %v3980 = vunpack.i.l.s16 %v3975
  %v3984 = vunpack.c.l.s4 1966171168
  %v3985 = vunpack.c.0.s8 %v3984
  %v3986 = vlaneseq
  %v3987 = vshrl.u32 %v3986, 7
  %v3988 = vsub.s32 %v3985, %v3987
  %v3989 = vrot.slane %v1941, %v3988
  %v3990 = vcombine.high %v3989, %v3989
  %v3992 = vunpack.c.l.s4 1966171168
  %v3993 = vunpack.c.0.s8 %v3992
  %v3994 = vlaneseq
  %v3995 = vshrl.u32 %v3994, 7
  %v3996 = vsub.s32 %v3993, %v3995
  %v3997 = vrot.slane %v3989, %v3996
  %v3999 = vunpack.c.l.s4 1966171168
  %v4000 = vunpack.c.0.s8 %v3999
  %v4001 = vlaneseq
  %v4002 = vshrl.u32 %v4001, 7
  %v4003 = vsub.s32 %v4000, %v4002
  %v4004 = vrot.slane %v3990, %v4003
  %v4006 = vunpack.c.l.s4 1966171168
  %v4007 = vunpack.c.0.s8 %v4006
  %v4008 = vlaneseq
  %v4009 = vshrl.u32 %v4008, 7
  %v4010 = vsub.s32 %v4007, %v4009
  %v4011 = vrot.slane %v3727, %v4010
  %v4012 = vcombine.high %v4011, %v4011
  %v4014 = vunpack.c.l.s4 1966171168
  %v4015 = vunpack.c.0.s8 %v4014
  %v4016 = vlaneseq
  %v4017 = vshrl.u32 %v4016, 7
  %v4018 = vsub.s32 %v4015, %v4017
  %v4019 = vrot.slane %v4011, %v4018
  %v4021 = vunpack.c.l.s4 1966171168
  %v4022 = vunpack.c.0.s8 %v4021
  %v4023 = vlaneseq
  %v4024 = vshrl.u32 %v4023, 7
  %v4025 = vsub.s32 %v4022, %v4024
  %v4026 = vrot.slane %v4012, %v4025
  %v4027 = vunpack.i.l.s16 %v3997
  %v4028 = vunpack.i.h.s16 %v3997
  %v4029 = vunpack.i.l.s16 %v4004
  %v4030 = vunpack.i.l.s16 %v4019
  %v4031 = vunpack.i.h.s16 %v4019
  %v4032 = vunpack.i.l.s16 %v4026
  %v4033 = vunpack.i.h.s16 %v4004
  %v4034 = vunpack.i.h.s16 %v4026
  %v4035 = vcombine.high %v3997, %v3997
  %v4036 = vcombine.high %v4019, %v4019
  %v4037 = vunpack.i.l.s16 %v4035
  %v4038 = vunpack.i.l.s16 %v4036
  %v4039 = vunpack.i.h.s16 %v4035
  %v4040 = vunpack.i.h.s16 %v4036
  %v4041 = vcombine.high %v4004, %v4004
  %v4042 = vcombine.high %v4026, %v4026
  %v4043 = vunpack.i.l.s16 %v4041
  %v4044 = vunpack.i.l.s16 %v4042
  %v4045 = vunpack.i.h.s16 %v4041
  %v4046 = vunpack.i.h.s16 %v4042
  %v4047 = vcombine.high %v1941, %v1941
  %v4049 = vunpack.c.l.s4 1966171168
  %v4050 = vunpack.c.0.s8 %v4049
  %v4051 = vlaneseq
  %v4052 = vshrl.u32 %v4051, 7
  %v4053 = vsub.s32 %v4050, %v4052
  %v4054 = vrot.slane %v4047, %v4053
  %v4056 = vunpack.c.l.s4 1966171168
  %v4057 = vunpack.c.0.s8 %v4056
  %v4058 = vlaneseq
  %v4059 = vshrl.u32 %v4058, 7
  %v4060 = vsub.s32 %v4057, %v4059
  %v4061 = vrot.slane %v4054, %v4060
  %v4062 = vcombine.high %v3727, %v3727
  %v4064 = vunpack.c.l.s4 1966171168
  %v4065 = vunpack.c.0.s8 %v4064
  %v4066 = vlaneseq
  %v4067 = vshrl.u32 %v4066, 7
  %v4068 = vsub.s32 %v4065, %v4067
  %v4069 = vrot.slane %v4062, %v4068
  %v4071 = vunpack.c.l.s4 1966171168
  %v4072 = vunpack.c.0.s8 %v4071
  %v4073 = vlaneseq
  %v4074 = vshrl.u32 %v4073, 7
  %v4075 = vsub.s32 %v4072, %v4074
  %v4076 = vrot.slane %v4069, %v4075
  %v4077 = vunpack.i.l.s16 %v4061
  %v4078 = vunpack.i.l.s16 %v4076
  %v4082 = vunpack.c.l.s4 1966171168
  %v4083 = vunpack.c.0.s8 %v4082
  %v4084 = vlaneseq
  %v4085 = vshrl.u32 %v4084, 7
  %v4086 = vsub.s32 %v4083, %v4085
  %v4087 = vrot.slane %v1943, %v4086
  %v4088 = vcombine.high %v4087, %v4087
  %v4090 = vunpack.c.l.s4 1966171168
  %v4091 = vunpack.c.0.s8 %v4090
  %v4092 = vlaneseq
  %v4093 = vshrl.u32 %v4092, 7
  %v4094 = vsub.s32 %v4091, %v4093
  %v4095 = vrot.slane %v4087, %v4094
  %v4097 = vunpack.c.l.s4 1966171168
  %v4098 = vunpack.c.0.s8 %v4097
  %v4099 = vlaneseq
  %v4100 = vshrl.u32 %v4099, 7
  %v4101 = vsub.s32 %v4098, %v4100
  %v4102 = vrot.slane %v4088, %v4101
  %v4104 = vunpack.c.l.s4 1966171168
  %v4105 = vunpack.c.0.s8 %v4104
  %v4106 = vlaneseq
  %v4107 = vshrl.u32 %v4106, 7
  %v4108 = vsub.s32 %v4105, %v4107
  %v4109 = vrot.slane %v3729, %v4108
  %v4110 = vcombine.high %v4109, %v4109
  %v4112 = vunpack.c.l.s4 1966171168
  %v4113 = vunpack.c.0.s8 %v4112
  %v4114 = vlaneseq
  %v4115 = vshrl.u32 %v4114, 7
  %v4116 = vsub.s32 %v4113, %v4115
  %v4117 = vrot.slane %v4109, %v4116
  %v4119 = vunpack.c.l.s4 1966171168
  %v4120 = vunpack.c.0.s8 %v4119
  %v4121 = vlaneseq
  %v4122 = vshrl.u32 %v4121, 7
  %v4123 = vsub.s32 %v4120, %v4122
  %v4124 = vrot.slane %v4110, %v4123
  %v4125 = vunpack.i.l.s16 %v4095
  %v4126 = vunpack.i.h.s16 %v4095
  %v4127 = vunpack.i.l.s16 %v4102
  %v4128 = vunpack.i.l.s16 %v4117
  %v4129 = vunpack.i.h.s16 %v4117
  %v4130 = vunpack.i.l.s16 %v4124
  %v4131 = vunpack.i.h.s16 %v4102
  %v4132 = vunpack.i.h.s16 %v4124
  %v4133 = vcombine.high %v4095, %v4095
  %v4134 = vcombine.high %v4117, %v4117
  %v4135 = vunpack.i.l.s16 %v4133
  %v4136 = vunpack.i.l.s16 %v4134
  %v4137 = vunpack.i.h.s16 %v4133
  %v4138 = vunpack.i.h.s16 %v4134
  %v4139 = vcombine.high %v4102, %v4102
  %v4140 = vcombine.high %v4124, %v4124
  %v4141 = vunpack.i.l.s16 %v4139
  %v4142 = vunpack.i.l.s16 %v4140
  %v4143 = vunpack.i.h.s16 %v4139
  %v4144 = vunpack.i.h.s16 %v4140
  %v4145 = vcombine.high %v1943, %v1943
  %v4147 = vunpack.c.l.s4 1966171168
  %v4148 = vunpack.c.0.s8 %v4147
  %v4149 = vlaneseq
  %v4150 = vshrl.u32 %v4149, 7
  %v4151 = vsub.s32 %v4148, %v4150
  %v4152 = vrot.slane %v4145, %v4151
  %v4154 = vunpack.c.l.s4 1966171168
  %v4155 = vunpack.c.0.s8 %v4154
  %v4156 = vlaneseq
  %v4157 = vshrl.u32 %v4156, 7
  %v4158 = vsub.s32 %v4155, %v4157
  %v4159 = vrot.slane %v4152, %v4158
  %v4160 = vcombine.high %v3729, %v3729
  %v4162 = vunpack.c.l.s4 1966171168
  %v4163 = vunpack.c.0.s8 %v4162
  %v4164 = vlaneseq
  %v4165 = vshrl.u32 %v4164, 7
  %v4166 = vsub.s32 %v4163, %v4165
  %v4167 = vrot.slane %v4160, %v4166
  %v4169 = vunpack.c.l.s4 1966171168
  %v4170 = vunpack.c.0.s8 %v4169
  %v4171 = vlaneseq
  %v4172 = vshrl.u32 %v4171, 7
  %v4173 = vsub.s32 %v4170, %v4172
  %v4174 = vrot.slane %v4167, %v4173
  %v4175 = vunpack.i.l.s16 %v4159
  %v4176 = vunpack.i.l.s16 %v4174
  %v4180 = vunpack.c.l.s4 1966171168
  %v4181 = vunpack.c.0.s8 %v4180
  %v4182 = vlaneseq
  %v4183 = vshrl.u32 %v4182, 7
  %v4184 = vsub.s32 %v4181, %v4183
  %v4185 = vrot.slane %v1945, %v4184
  %v4186 = vcombine.high %v4185, %v4185
  %v4188 = vunpack.c.l.s4 1966171168
  %v4189 = vunpack.c.0.s8 %v4188
  %v4190 = vlaneseq
  %v4191 = vshrl.u32 %v4190, 7
  %v4192 = vsub.s32 %v4189, %v4191
  %v4193 = vrot.slane %v4185, %v4192
  %v4195 = vunpack.c.l.s4 1966171168
  %v4196 = vunpack.c.0.s8 %v4195
  %v4197 = vlaneseq
  %v4198 = vshrl.u32 %v4197, 7
  %v4199 = vsub.s32 %v4196, %v4198
  %v4200 = vrot.slane %v4186, %v4199
  %v4202 = vunpack.c.l.s4 1966171168
  %v4203 = vunpack.c.0.s8 %v4202
  %v4204 = vlaneseq
  %v4205 = vshrl.u32 %v4204, 7
  %v4206 = vsub.s32 %v4203, %v4205
  %v4207 = vrot.slane %v3731, %v4206
  %v4208 = vcombine.high %v4207, %v4207
  %v4210 = vunpack.c.l.s4 1966171168
  %v4211 = vunpack.c.0.s8 %v4210
  %v4212 = vlaneseq
  %v4213 = vshrl.u32 %v4212, 7
  %v4214 = vsub.s32 %v4211, %v4213
  %v4215 = vrot.slane %v4207, %v4214
  %v4217 = vunpack.c.l.s4 1966171168
  %v4218 = vunpack.c.0.s8 %v4217
  %v4219 = vlaneseq
  %v4220 = vshrl.u32 %v4219, 7
  %v4221 = vsub.s32 %v4218, %v4220
  %v4222 = vrot.slane %v4208, %v4221
  %v4223 = vunpack.i.l.s16 %v4193
  %v4224 = vunpack.i.h.s16 %v4193
  %v4225 = vunpack.i.l.s16 %v4200
  %v4226 = vunpack.i.l.s16 %v4215
  %v4227 = vunpack.i.h.s16 %v4215
  %v4228 = vunpack.i.l.s16 %v4222
  %v4229 = vunpack.i.h.s16 %v4200
  %v4230 = vunpack.i.h.s16 %v4222
  %v4231 = vcombine.high %v4193, %v4193
  %v4232 = vcombine.high %v4215, %v4215
  %v4233 = vunpack.i.l.s16 %v4231
  %v4234 = vunpack.i.l.s16 %v4232
  %v4235 = vunpack.i.h.s16 %v4231
  %v4236 = vunpack.i.h.s16 %v4232
  %v4237 = vcombine.high %v4200, %v4200
  %v4238 = vcombine.high %v4222, %v4222
  %v4239 = vunpack.i.l.s16 %v4237
  %v4240 = vunpack.i.l.s16 %v4238
  %v4241 = vunpack.i.h.s16 %v4237
  %v4242 = vunpack.i.h.s16 %v4238
  %v4243 = vcombine.high %v1945, %v1945
  %v4245 = vunpack.c.l.s4 1966171168
  %v4246 = vunpack.c.0.s8 %v4245
  %v4247 = vlaneseq
  %v4248 = vshrl.u32 %v4247, 7
  %v4249 = vsub.s32 %v4246, %v4248
  %v4250 = vrot.slane %v4243, %v4249
  %v4252 = vunpack.c.l.s4 1966171168
  %v4253 = vunpack.c.0.s8 %v4252
  %v4254 = vlaneseq
  %v4255 = vshrl.u32 %v4254, 7
  %v4256 = vsub.s32 %v4253, %v4255
  %v4257 = vrot.slane %v4250, %v4256
  %v4258 = vcombine.high %v3731, %v3731
  %v4260 = vunpack.c.l.s4 1966171168
  %v4261 = vunpack.c.0.s8 %v4260
  %v4262 = vlaneseq
  %v4263 = vshrl.u32 %v4262, 7
  %v4264 = vsub.s32 %v4261, %v4263
  %v4265 = vrot.slane %v4258, %v4264
  %v4267 = vunpack.c.l.s4 1966171168
  %v4268 = vunpack.c.0.s8 %v4267
  %v4269 = vlaneseq
  %v4270 = vshrl.u32 %v4269, 7
  %v4271 = vsub.s32 %v4268, %v4270
  %v4272 = vrot.slane %v4265, %v4271
  %v4273 = vunpack.i.l.s16 %v4257
  %v4274 = vunpack.i.l.s16 %v4272
  %v4278 = vunpack.c.l.s4 1966171168
  %v4279 = vunpack.c.0.s8 %v4278
  %v4280 = vlaneseq
  %v4281 = vshrl.u32 %v4280, 7
  %v4282 = vsub.s32 %v4279, %v4281
  %v4283 = vrot.slane %v1947, %v4282
  %v4284 = vcombine.high %v4283, %v4283
  %v4286 = vunpack.c.l.s4 1966171168
  %v4287 = vunpack.c.0.s8 %v4286
  %v4288 = vlaneseq
  %v4289 = vshrl.u32 %v4288, 7
  %v4290 = vsub.s32 %v4287, %v4289
  %v4291 = vrot.slane %v4283, %v4290
  %v4293 = vunpack.c.l.s4 1966171168
  %v4294 = vunpack.c.0.s8 %v4293
  %v4295 = vlaneseq
  %v4296 = vshrl.u32 %v4295, 7
  %v4297 = vsub.s32 %v4294, %v4296
  %v4298 = vrot.slane %v4284, %v4297
  %v4300 = vunpack.c.l.s4 1966171168
  %v4301 = vunpack.c.0.s8 %v4300
  %v4302 = vlaneseq
  %v4303 = vshrl.u32 %v4302, 7
  %v4304 = vsub.s32 %v4301, %v4303
  %v4305 = vrot.slane %v3733, %v4304
  %v4306 = vcombine.high %v4305, %v4305
  %v4308 = vunpack.c.l.s4 1966171168
  %v4309 = vunpack.c.0.s8 %v4308
  %v4310 = vlaneseq
  %v4311 = vshrl.u32 %v4310, 7
  %v4312 = vsub.s32 %v4309, %v4311
  %v4313 = vrot.slane %v4305, %v4312
  %v4315 = vunpack.c.l.s4 1966171168
  %v4316 = vunpack.c.0.s8 %v4315
  %v4317 = vlaneseq
  %v4318 = vshrl.u32 %v4317, 7
  %v4319 = vsub.s32 %v4316, %v4318
  %v4320 = vrot.slane %v4306, %v4319
  %v4321 = vunpack.i.l.s16 %v4291
  %v4322 = vunpack.i.h.s16 %v4291
  %v4323 = vunpack.i.l.s16 %v4298
  %v4324 = vunpack.i.l.s16 %v4313
  %v4325 = vunpack.i.h.s16 %v4313
  %v4326 = vunpack.i.l.s16 %v4320
  %v4327 = vunpack.i.h.s16 %v4298
  %v4328 = vunpack.i.h.s16 %v4320
  %v4329 = vcombine.high %v4291, %v4291
  %v4330 = vcombine.high %v4313, %v4313
  %v4331 = vunpack.i.l.s16 %v4329
  %v4332 = vunpack.i.l.s16 %v4330
  %v4333 = vunpack.i.h.s16 %v4329
  %v4334 = vunpack.i.h.s16 %v4330
  %v4335 = vcombine.high %v4298, %v4298
  %v4336 = vcombine.high %v4320, %v4320
  %v4337 = vunpack.i.l.s16 %v4335
  %v4338 = vunpack.i.l.s16 %v4336
  %v4339 = vunpack.i.h.s16 %v4335
  %v4340 = vunpack.i.h.s16 %v4336
  %v4341 = vcombine.high %v1947, %v1947
  %v4343 = vunpack.c.l.s4 1966171168
  %v4344 = vunpack.c.0.s8 %v4343
  %v4345 = vlaneseq
  %v4346 = vshrl.u32 %v4345, 7
  %v4347 = vsub.s32 %v4344, %v4346
  %v4348 = vrot.slane %v4341, %v4347
  %v4350 = vunpack.c.l.s4 1966171168
  %v4351 = vunpack.c.0.s8 %v4350
  %v4352 = vlaneseq
  %v4353 = vshrl.u32 %v4352, 7
  %v4354 = vsub.s32 %v4351, %v4353
  %v4355 = vrot.slane %v4348, %v4354
  %v4356 = vcombine.high %v3733, %v3733
  %v4358 = vunpack.c.l.s4 1966171168
  %v4359 = vunpack.c.0.s8 %v4358
  %v4360 = vlaneseq
  %v4361 = vshrl.u32 %v4360, 7
  %v4362 = vsub.s32 %v4359, %v4361
  %v4363 = vrot.slane %v4356, %v4362
  %v4365 = vunpack.c.l.s4 1966171168
  %v4366 = vunpack.c.0.s8 %v4365
  %v4367 = vlaneseq
  %v4368 = vshrl.u32 %v4367, 7
  %v4369 = vsub.s32 %v4366, %v4368
  %v4370 = vrot.slane %v4363, %v4369
  %v4371 = vunpack.i.l.s16 %v4355
  %v4372 = vunpack.i.l.s16 %v4370
  %v4376 = vunpack.c.l.s4 1966171168
  %v4377 = vunpack.c.0.s8 %v4376
  %v4378 = vlaneseq
  %v4379 = vshrl.u32 %v4378, 7
  %v4380 = vsub.s32 %v4377, %v4379
  %v4381 = vrot.slane %v1949, %v4380
  %v4382 = vcombine.high %v4381, %v4381
  %v4384 = vunpack.c.l.s4 1966171168
  %v4385 = vunpack.c.0.s8 %v4384
  %v4386 = vlaneseq
  %v4387 = vshrl.u32 %v4386, 7
  %v4388 = vsub.s32 %v4385, %v4387
  %v4389 = vrot.slane %v4381, %v4388
  %v4391 = vunpack.c.l.s4 1966171168
  %v4392 = vunpack.c.0.s8 %v4391
  %v4393 = vlaneseq
  %v4394 = vshrl.u32 %v4393, 7
  %v4395 = vsub.s32 %v4392, %v4394
  %v4396 = vrot.slane %v4382, %v4395
  %v4398 = vunpack.c.l.s4 1966171168
  %v4399 = vunpack.c.0.s8 %v4398
  %v4400 = vlaneseq
  %v4401 = vshrl.u32 %v4400, 7
  %v4402 = vsub.s32 %v4399, %v4401
  %v4403 = vrot.slane %v3735, %v4402
  %v4404 = vcombine.high %v4403, %v4403
  %v4406 = vunpack.c.l.s4 1966171168
  %v4407 = vunpack.c.0.s8 %v4406
  %v4408 = vlaneseq
  %v4409 = vshrl.u32 %v4408, 7
  %v4410 = vsub.s32 %v4407, %v4409
  %v4411 = vrot.slane %v4403, %v4410
  %v4413 = vunpack.c.l.s4 1966171168
  %v4414 = vunpack.c.0.s8 %v4413
  %v4415 = vlaneseq
  %v4416 = vshrl.u32 %v4415, 7
  %v4417 = vsub.s32 %v4414, %v4416
  %v4418 = vrot.slane %v4404, %v4417
  %v4419 = vunpack.i.l.s16 %v4389
  %v4420 = vunpack.i.h.s16 %v4389
  %v4421 = vunpack.i.l.s16 %v4396
  %v4422 = vunpack.i.l.s16 %v4411
  %v4423 = vunpack.i.h.s16 %v4411
  %v4424 = vunpack.i.l.s16 %v4418
  %v4425 = vunpack.i.h.s16 %v4396
  %v4426 = vunpack.i.h.s16 %v4418
  %v4427 = vcombine.high %v4389, %v4389
  %v4428 = vcombine.high %v4411, %v4411
  %v4429 = vunpack.i.l.s16 %v4427
  %v4430 = vunpack.i.l.s16 %v4428
  %v4431 = vunpack.i.h.s16 %v4427
  %v4432 = vunpack.i.h.s16 %v4428
  %v4433 = vcombine.high %v4396, %v4396
  %v4434 = vcombine.high %v4418, %v4418
  %v4435 = vunpack.i.l.s16 %v4433
  %v4436 = vunpack.i.l.s16 %v4434
  %v4437 = vunpack.i.h.s16 %v4433
  %v4438 = vunpack.i.h.s16 %v4434
  %v4439 = vcombine.high %v1949, %v1949
  %v4441 = vunpack.c.l.s4 1966171168
  %v4442 = vunpack.c.0.s8 %v4441
  %v4443 = vlaneseq
  %v4444 = vshrl.u32 %v4443, 7
  %v4445 = vsub.s32 %v4442, %v4444
  %v4446 = vrot.slane %v4439, %v4445
  %v4448 = vunpack.c.l.s4 1966171168
  %v4449 = vunpack.c.0.s8 %v4448
  %v4450 = vlaneseq
  %v4451 = vshrl.u32 %v4450, 7
  %v4452 = vsub.s32 %v4449, %v4451
  %v4453 = vrot.slane %v4446, %v4452
  %v4454 = vcombine.high %v3735, %v3735
  %v4456 = vunpack.c.l.s4 1966171168
  %v4457 = vunpack.c.0.s8 %v4456
  %v4458 = vlaneseq
  %v4459 = vshrl.u32 %v4458, 7
  %v4460 = vsub.s32 %v4457, %v4459
  %v4461 = vrot.slane %v4454, %v4460
  %v4463 = vunpack.c.l.s4 1966171168
  %v4464 = vunpack.c.0.s8 %v4463
  %v4465 = vlaneseq
  %v4466 = vshrl.u32 %v4465, 7
  %v4467 = vsub.s32 %v4464, %v4466
  %v4468 = vrot.slane %v4461, %v4467
  %v4469 = vunpack.i.l.s16 %v4453
  %v4470 = vunpack.i.l.s16 %v4468
  %v4471 = vpack.i.b16 %v3852, %v3851
  %v4472 = vpack.i.b16 %v3854, %v3853
  %v4473 = vpack.i.b16 %v3856, %v3855
  %v4474 = vpack.i.b16 %v3858, %v3857
  %v4475 = vpack.i.b16 %v3851, %v3859
  %v4476 = vpack.i.b16 %v3853, %v3852
  %v4477 = vpack.i.b16 %v3861, %v3860
  %v4478 = vpack.i.b16 %v3863, %v3862
  %v4479 = vpack.i.b16 %v3865, %v3864
  %v4480 = vcombine.low %v4471, %v4472
  %v4481 = vcombine.low %v4473, %v4474
  %v4482 = vcombine.low %v4475, %v4476
  %v4483 = vcombine.low %v4477, %v4478
  %v4485 = vunpack.c.l.s4 1966171168
  %v4486 = vunpack.c.0.s8 %v4485
  %v4487 = vlaneseq
  %v4488 = vshrl.u32 %v4487, 7
  %v4489 = vsub.s32 %v4486, %v4488
  %v4490 = vrot.slane %v4480, %v4489
  %v4492 = vunpack.c.l.s4 1966171168
  %v4493 = vunpack.c.0.s8 %v4492
  %v4494 = vlaneseq
  %v4495 = vshrl.u32 %v4494, 7
  %v4496 = vsub.s32 %v4493, %v4495
  %v4497 = vrot.slane %v4481, %v4496
  %v4499 = vunpack.c.l.s4 1966171168
  %v4500 = vunpack.c.0.s8 %v4499
  %v4501 = vlaneseq
  %v4502 = vshrl.u32 %v4501, 7
  %v4503 = vsub.s32 %v4500, %v4502
  %v4504 = vrot.slane %v4482, %v4503
  %v4506 = vunpack.c.l.s4 1966171168
  %v4507 = vunpack.c.0.s8 %v4506
  %v4508 = vlaneseq
  %v4509 = vshrl.u32 %v4508, 7
  %v4510 = vsub.s32 %v4507, %v4509
  %v4511 = vrot.slane %v4483, %v4510
  %v4512 = vcombine.low %v4490, %v4497
  %v4513 = vcombine.low %v4504, %v4511
  %v4515 = vunpack.c.l.s4 1966171168
  %v4516 = vunpack.c.0.s8 %v4515
  %v4517 = vlaneseq
  %v4518 = vshrl.u32 %v4517, 7
  %v4519 = vsub.s32 %v4516, %v4518
  %v4520 = vrot.slane %v4512, %v4519
  %v4522 = vunpack.c.l.s4 1966171168
  %v4523 = vunpack.c.0.s8 %v4522
  %v4524 = vlaneseq
  %v4525 = vshrl.u32 %v4524, 7
  %v4526 = vsub.s32 %v4523, %v4525
  %v4527 = vrot.slane %v4513, %v4526
  %v4528 = vcombine.low %v4520, %v4527
  %v4530 = vunpack.c.l.s4 1966171168
  %v4531 = vunpack.c.0.s8 %v4530
  %v4532 = vlaneseq
  %v4533 = vshrl.u32 %v4532, 7
  %v4534 = vsub.s32 %v4531, %v4533
  %v4535 = vrot.slane %v4479, %v4534
  %v4537 = vunpack.c.l.s4 1966171168
  %v4538 = vunpack.c.0.s8 %v4537
  %v4539 = vlaneseq
  %v4540 = vshrl.u32 %v4539, 7
  %v4541 = vsub.s32 %v4538, %v4540
  %v4542 = vrot.slane %v4535, %v4541
  %v4545 = vpack.i.b16 %v3855, %v3866
  %v4546 = vpack.i.b16 %v3867, %v3856
  %v4547 = vpack.i.b16 %v3859, %v3858
  %v4548 = vpack.i.b16 %v3852, %v3868
  %v4549 = vpack.i.b16 %v3866, %v3853
  %v4550 = vpack.i.b16 %v3862, %v3861
  %v4551 = vpack.i.b16 %v3864, %v3869
  %v4552 = vpack.i.b16 %v3870, %v3865
  %v4553 = vcombine.low %v4476, %v4545
  %v4554 = vcombine.low %v4546, %v4547
  %v4555 = vcombine.low %v4548, %v4549
  %v4556 = vcombine.low %v4550, %v4551
  %v4558 = vunpack.c.l.s4 1966171168
  %v4559 = vunpack.c.0.s8 %v4558
  %v4560 = vlaneseq
  %v4561 = vshrl.u32 %v4560, 7
  %v4562 = vsub.s32 %v4559, %v4561
  %v4563 = vrot.slane %v4553, %v4562
  %v4565 = vunpack.c.l.s4 1966171168
  %v4566 = vunpack.c.0.s8 %v4565
  %v4567 = vlaneseq
  %v4568 = vshrl.u32 %v4567, 7
  %v4569 = vsub.s32 %v4566, %v4568
  %v4570 = vrot.slane %v4554, %v4569
  %v4572 = vunpack.c.l.s4 1966171168
  %v4573 = vunpack.c.0.s8 %v4572
  %v4574 = vlaneseq
  %v4575 = vshrl.u32 %v4574, 7
  %v4576 = vsub.s32 %v4573, %v4575
  %v4577 = vrot.slane %v4555, %v4576
  %v4579 = vunpack.c.l.s4 1966171168
  %v4580 = vunpack.c.0.s8 %v4579
  %v4581 = vlaneseq
  %v4582 = vshrl.u32 %v4581, 7
  %v4583 = vsub.s32 %v4580, %v4582
  %v4584 = vrot.slane %v4556, %v4583
  %v4585 = vcombine.low %v4563, %v4570
  %v4586 = vcombine.low %v4577, %v4584
  %v4588 = vunpack.c.l.s4 1966171168
  %v4589 = vunpack.c.0.s8 %v4588
  %v4590 = vlaneseq
  %v4591 = vshrl.u32 %v4590, 7
  %v4592 = vsub.s32 %v4589, %v4591
  %v4593 = vrot.slane %v4585, %v4592
  %v4595 = vunpack.c.l.s4 1966171168
  %v4596 = vunpack.c.0.s8 %v4595
  %v4597 = vlaneseq
  %v4598 = vshrl.u32 %v4597, 7
  %v4599 = vsub.s32 %v4596, %v4598
  %v4600 = vrot.slane %v4586, %v4599
  %v4601 = vcombine.low %v4593, %v4600
  %v4603 = vunpack.c.l.s4 1966171168
  %v4604 = vunpack.c.0.s8 %v4603
  %v4605 = vlaneseq
  %v4606 = vshrl.u32 %v4605, 7
  %v4607 = vsub.s32 %v4604, %v4606
  %v4608 = vrot.slane %v4552, %v4607
  %v4610 = vunpack.c.l.s4 1966171168
  %v4611 = vunpack.c.0.s8 %v4610
  %v4612 = vlaneseq
  %v4613 = vshrl.u32 %v4612, 7
  %v4614 = vsub.s32 %v4611, %v4613
  %v4615 = vrot.slane %v4608, %v4614
  %v4618 = vpack.i.b16 %v3856, %v3876
  %v4619 = vpack.i.b16 %v3877, %v3867
  %v4620 = vpack.i.b16 %v3868, %v3859
  %v4621 = vpack.i.b16 %v3853, %v3878
  %v4622 = vpack.i.b16 %v3876, %v3866
  %v4623 = vpack.i.b16 %v3869, %v3862
  %v4624 = vpack.i.b16 %v3865, %v3879
  %v4625 = vpack.i.b16 %v3880, %v3870
  %v4626 = vcombine.low %v4549, %v4618
  %v4627 = vcombine.low %v4619, %v4620
  %v4628 = vcombine.low %v4621, %v4622
  %v4629 = vcombine.low %v4623, %v4624
  %v4631 = vunpack.c.l.s4 1966171168
  %v4632 = vunpack.c.0.s8 %v4631
  %v4633 = vlaneseq
  %v4634 = vshrl.u32 %v4633, 7
  %v4635 = vsub.s32 %v4632, %v4634
  %v4636 = vrot.slane %v4626, %v4635
  %v4638 = vunpack.c.l.s4 1966171168
  %v4639 = vunpack.c.0.s8 %v4638
  %v4640 = vlaneseq
  %v4641 = vshrl.u32 %v4640, 7
  %v4642 = vsub.s32 %v4639, %v4641
  %v4643 = vrot.slane %v4627, %v4642
  %v4645 = vunpack.c.l.s4 1966171168
  %v4646 = vunpack.c.0.s8 %v4645
  %v4647 = vlaneseq
  %v4648 = vshrl.u32 %v4647, 7
  %v4649 = vsub.s32 %v4646, %v4648
  %v4650 = vrot.slane %v4628, %v4649
  %v4652 = vunpack.c.l.s4 1966171168
  %v4653 = vunpack.c.0.s8 %v4652
  %v4654 = vlaneseq
  %v4655 = vshrl.u32 %v4654, 7
  %v4656 = vsub.s32 %v4653, %v4655
  %v4657 = vrot.slane %v4629, %v4656
  %v4658 = vcombine.low %v4636, %v4643
  %v4659 = vcombine.low %v4650, %v4657
  %v4661 = vunpack.c.l.s4 1966171168
  %v4662 = vunpack.c.0.s8 %v4661
  %v4663 = vlaneseq
  %v4664 = vshrl.u32 %v4663, 7
  %v4665 = vsub.s32 %v4662, %v4664
  %v4666 = vrot.slane %v4658, %v4665
  %v4668 = vunpack.c.l.s4 1966171168
  %v4669 = vunpack.c.0.s8 %v4668
  %v4670 = vlaneseq
  %v4671 = vshrl.u32 %v4670, 7
  %v4672 = vsub.s32 %v4669, %v4671
  %v4673 = vrot.slane %v4659, %v4672
  %v4674 = vcombine.low %v4666, %v4673
  %v4676 = vunpack.c.l.s4 1966171168
  %v4677 = vunpack.c.0.s8 %v4676
  %v4678 = vlaneseq
  %v4679 = vshrl.u32 %v4678, 7
  %v4680 = vsub.s32 %v4677, %v4679
  %v4681 = vrot.slane %v4625, %v4680
  %v4683 = vunpack.c.l.s4 1966171168
  %v4684 = vunpack.c.0.s8 %v4683
  %v4685 = vlaneseq
  %v4686 = vshrl.u32 %v4685, 7
  %v4687 = vsub.s32 %v4684, %v4686
  %v4688 = vrot.slane %v4681, %v4687
  %v4691 = vpack.i.b16 %v3867, %v3881
  %v4692 = vpack.i.b16 %v3882, %v3877
  %v4693 = vpack.i.b16 %v3878, %v3868
  %v4694 = vpack.i.b16 %v3866, %v3883
  %v4695 = vpack.i.b16 %v3881, %v3876
  %v4696 = vpack.i.b16 %v3879, %v3869
  %v4697 = vpack.i.b16 %v3870, %v3884
  %v4698 = vpack.i.b16 %v3885, %v3880
  %v4699 = vcombine.low %v4622, %v4691
  %v4700 = vcombine.low %v4692, %v4693
  %v4701 = vcombine.low %v4694, %v4695
  %v4702 = vcombine.low %v4696, %v4697
  %v4704 = vunpack.c.l.s4 1966171168
  %v4705 = vunpack.c.0.s8 %v4704
  %v4706 = vlaneseq
  %v4707 = vshrl.u32 %v4706, 7
  %v4708 = vsub.s32 %v4705, %v4707
  %v4709 = vrot.slane %v4699, %v4708
  %v4711 = vunpack.c.l.s4 1966171168
  %v4712 = vunpack.c.0.s8 %v4711
  %v4713 = vlaneseq
  %v4714 = vshrl.u32 %v4713, 7
  %v4715 = vsub.s32 %v4712, %v4714
  %v4716 = vrot.slane %v4700, %v4715
  %v4718 = vunpack.c.l.s4 1966171168
  %v4719 = vunpack.c.0.s8 %v4718
  %v4720 = vlaneseq
  %v4721 = vshrl.u32 %v4720, 7
  %v4722 = vsub.s32 %v4719, %v4721
  %v4723 = vrot.slane %v4701, %v4722
  %v4725 = vunpack.c.l.s4 1966171168
  %v4726 = vunpack.c.0.s8 %v4725
  %v4727 = vlaneseq
  %v4728 = vshrl.u32 %v4727, 7
  %v4729 = vsub.s32 %v4726, %v4728
  %v4730 = vrot.slane %v4702, %v4729
  %v4731 = vcombine.low %v4709, %v4716
  %v4732 = vcombine.low %v4723, %v4730
  %v4734 = vunpack.c.l.s4 1966171168
  %v4735 = vunpack.c.0.s8 %v4734
  %v4736 = vlaneseq
  %v4737 = vshrl.u32 %v4736, 7
  %v4738 = vsub.s32 %v4735, %v4737
  %v4739 = vrot.slane %v4731, %v4738
  %v4741 = vunpack.c.l.s4 1966171168
  %v4742 = vunpack.c.0.s8 %v4741
  %v4743 = vlaneseq
  %v4744 = vshrl.u32 %v4743, 7
  %v4745 = vsub.s32 %v4742, %v4744
  %v4746 = vrot.slane %v4732, %v4745
  %v4747 = vcombine.low %v4739, %v4746
  %v4749 = vunpack.c.l.s4 1966171168
  %v4750 = vunpack.c.0.s8 %v4749
  %v4751 = vlaneseq
  %v4752 = vshrl.u32 %v4751, 7
  %v4753 = vsub.s32 %v4750, %v4752
  %v4754 = vrot.slane %v4698, %v4753
  %v4756 = vunpack.c.l.s4 1966171168
  %v4757 = vunpack.c.0.s8 %v4756
  %v4758 = vlaneseq
  %v4759 = vshrl.u32 %v4758, 7
  %v4760 = vsub.s32 %v4757, %v4759
  %v4761 = vrot.slane %v4754, %v4760
  %v4764 = vpack.i.b16 %v3877, %v3891
  %v4765 = vpack.i.b16 %v3892, %v3882
  %v4766 = vpack.i.b16 %v3883, %v3878
  %v4767 = vpack.i.b16 %v3876, %v3893
  %v4768 = vpack.i.b16 %v3891, %v3881
  %v4769 = vpack.i.b16 %v3884, %v3879
  %v4770 = vpack.i.b16 %v3880, %v3894
  %v4771 = vpack.i.b16 %v3895, %v3885
  %v4772 = vcombine.low %v4695, %v4764
  %v4773 = vcombine.low %v4765, %v4766
  %v4774 = vcombine.low %v4767, %v4768
  %v4775 = vcombine.low %v4769, %v4770
  %v4777 = vunpack.c.l.s4 1966171168
  %v4778 = vunpack.c.0.s8 %v4777
  %v4779 = vlaneseq
  %v4780 = vshrl.u32 %v4779, 7
  %v4781 = vsub.s32 %v4778, %v4780
  %v4782 = vrot.slane %v4772, %v4781
  %v4784 = vunpack.c.l.s4 1966171168
  %v4785 = vunpack.c.0.s8 %v4784
  %v4786 = vlaneseq
  %v4787 = vshrl.u32 %v4786, 7
  %v4788 = vsub.s32 %v4785, %v4787
  %v4789 = vrot.slane %v4773, %v4788
  %v4791 = vunpack.c.l.s4 1966171168
  %v4792 = vunpack.c.0.s8 %v4791
  %v4793 = vlaneseq
  %v4794 = vshrl.u32 %v4793, 7
  %v4795 = vsub.s32 %v4792, %v4794
  %v4796 = vrot.slane %v4774, %v4795
  %v4798 = vunpack.c.l.s4 1966171168
  %v4799 = vunpack.c.0.s8 %v4798
  %v4800 = vlaneseq
  %v4801 = vshrl.u32 %v4800, 7
  %v4802 = vsub.s32 %v4799, %v4801
  %v4803 = vrot.slane %v4775, %v4802
  %v4804 = vcombine.low %v4782, %v4789
  %v4805 = vcombine.low %v4796, %v4803
  %v4807 = vunpack.c.l.s4 1966171168
  %v4808 = vunpack.c.0.s8 %v4807
  %v4809 = vlaneseq
  %v4810 = vshrl.u32 %v4809, 7
  %v4811 = vsub.s32 %v4808, %v4810
  %v4812 = vrot.slane %v4804, %v4811
  %v4814 = vunpack.c.l.s4 1966171168
  %v4815 = vunpack.c.0.s8 %v4814
  %v4816 = vlaneseq
  %v4817 = vshrl.u32 %v4816, 7
  %v4818 = vsub.s32 %v4815, %v4817
  %v4819 = vrot.slane %v4805, %v4818
  %v4820 = vcombine.low %v4812, %v4819
  %v4822 = vunpack.c.l.s4 1966171168
  %v4823 = vunpack.c.0.s8 %v4822
  %v4824 = vlaneseq
  %v4825 = vshrl.u32 %v4824, 7
  %v4826 = vsub.s32 %v4823, %v4825
  %v4827 = vrot.slane %v4771, %v4826
  %v4829 = vunpack.c.l.s4 1966171168
  %v4830 = vunpack.c.0.s8 %v4829
  %v4831 = vlaneseq
  %v4832 = vshrl.u32 %v4831, 7
  %v4833 = vsub.s32 %v4830, %v4832
  %v4834 = vrot.slane %v4827, %v4833
  %v4837 = vpack.i.b16 %v3882, %v3896
  %v4838 = vpack.i.b16 %v3897, %v3892
  %v4839 = vpack.i.b16 %v3893, %v3883
  %v4840 = vpack.i.b16 %v3881, %v3898
  %v4841 = vpack.i.b16 %v3896, %v3891
  %v4842 = vpack.i.b16 %v3894, %v3884
  %v4843 = vpack.i.b16 %v3885, %v3899
  %v4844 = vpack.i.b16 %v3900, %v3895
  %v4845 = vcombine.low %v4768, %v4837
  %v4846 = vcombine.low %v4838, %v4839
  %v4847 = vcombine.low %v4840, %v4841
  %v4848 = vcombine.low %v4842, %v4843
  %v4850 = vunpack.c.l.s4 1966171168
  %v4851 = vunpack.c.0.s8 %v4850
  %v4852 = vlaneseq
  %v4853 = vshrl.u32 %v4852, 7
  %v4854 = vsub.s32 %v4851, %v4853
  %v4855 = vrot.slane %v4845, %v4854
  %v4857 = vunpack.c.l.s4 1966171168
  %v4858 = vunpack.c.0.s8 %v4857
  %v4859 = vlaneseq
  %v4860 = vshrl.u32 %v4859, 7
  %v4861 = vsub.s32 %v4858, %v4860
  %v4862 = vrot.slane %v4846, %v4861
  %v4864 = vunpack.c.l.s4 1966171168
  %v4865 = vunpack.c.0.s8 %v4864
  %v4866 = vlaneseq
  %v4867 = vshrl.u32 %v4866, 7
  %v4868 = vsub.s32 %v4865, %v4867
  %v4869 = vrot.slane %v4847, %v4868
  %v4871 = vunpack.c.l.s4 1966171168
  %v4872 = vunpack.c.0.s8 %v4871
  %v4873 = vlaneseq
  %v4874 = vshrl.u32 %v4873, 7
  %v4875 = vsub.s32 %v4872, %v4874
  %v4876 = vrot.slane %v4848, %v4875
  %v4877 = vcombine.low %v4855, %v4862
  %v4878 = vcombine.low %v4869, %v4876
  %v4880 = vunpack.c.l.s4 1966171168
  %v4881 = vunpack.c.0.s8 %v4880
  %v4882 = vlaneseq
  %v4883 = vshrl.u32 %v4882, 7
  %v4884 = vsub.s32 %v4881, %v4883
  %v4885 = vrot.slane %v4877, %v4884
  %v4887 = vunpack.c.l.s4 1966171168
  %v4888 = vunpack.c.0.s8 %v4887
  %v4889 = vlaneseq
  %v4890 = vshrl.u32 %v4889, 7
  %v4891 = vsub.s32 %v4888, %v4890
  %v4892 = vrot.slane %v4878, %v4891
  %v4893 = vcombine.low %v4885, %v4892
  %v4895 = vunpack.c.l.s4 1966171168
  %v4896 = vunpack.c.0.s8 %v4895
  %v4897 = vlaneseq
  %v4898 = vshrl.u32 %v4897, 7
  %v4899 = vsub.s32 %v4896, %v4898
  %v4900 = vrot.slane %v4844, %v4899
  %v4902 = vunpack.c.l.s4 1966171168
  %v4903 = vunpack.c.0.s8 %v4902
  %v4904 = vlaneseq
  %v4905 = vshrl.u32 %v4904, 7
  %v4906 = vsub.s32 %v4903, %v4905
  %v4907 = vrot.slane %v4900, %v4906
  %v4910 = vpack.i.b16 %v3892, %v3976
  %v4911 = vpack.i.b16 %v3977, %v3897
  %v4912 = vpack.i.b16 %v3898, %v3893
  %v4913 = vpack.i.b16 %v3891, %v3978
  %v4914 = vpack.i.b16 %v3976, %v3896
  %v4915 = vpack.i.b16 %v3899, %v3894
  %v4916 = vpack.i.b16 %v3895, %v3979
  %v4917 = vpack.i.b16 %v3980, %v3900
  %v4918 = vcombine.low %v4841, %v4910
  %v4919 = vcombine.low %v4911, %v4912
  %v4920 = vcombine.low %v4913, %v4914
  %v4921 = vcombine.low %v4915, %v4916
  %v4923 = vunpack.c.l.s4 1966171168
  %v4924 = vunpack.c.0.s8 %v4923
  %v4925 = vlaneseq
  %v4926 = vshrl.u32 %v4925, 7
  %v4927 = vsub.s32 %v4924, %v4926
  %v4928 = vrot.slane %v4918, %v4927
  %v4930 = vunpack.c.l.s4 1966171168
  %v4931 = vunpack.c.0.s8 %v4930
  %v4932 = vlaneseq
  %v4933 = vshrl.u32 %v4932, 7
  %v4934 = vsub.s32 %v4931, %v4933
  %v4935 = vrot.slane %v4919, %v4934
  %v4937 = vunpack.c.l.s4 1966171168
  %v4938 = vunpack.c.0.s8 %v4937
  %v4939 = vlaneseq
  %v4940 = vshrl.u32 %v4939, 7
  %v4941 = vsub.s32 %v4938, %v4940
  %v4942 = vrot.slane %v4920, %v4941
  %v4944 = vunpack.c.l.s4 1966171168
  %v4945 = vunpack.c.0.s8 %v4944
  %v4946 = vlaneseq
  %v4947 = vshrl.u32 %v4946, 7
  %v4948 = vsub.s32 %v4945, %v4947
  %v4949 = vrot.slane %v4921, %v4948
  %v4950 = vcombine.low %v4928, %v4935
  %v4951 = vcombine.low %v4942, %v4949
  %v4953 = vunpack.c.l.s4 1966171168
  %v4954 = vunpack.c.0.s8 %v4953
  %v4955 = vlaneseq
  %v4956 = vshrl.u32 %v4955, 7
  %v4957 = vsub.s32 %v4954, %v4956
  %v4958 = vrot.slane %v4950, %v4957
  %v4960 = vunpack.c.l.s4 1966171168
  %v4961 = vunpack.c.0.s8 %v4960
  %v4962 = vlaneseq
  %v4963 = vshrl.u32 %v4962, 7
  %v4964 = vsub.s32 %v4961, %v4963
  %v4965 = vrot.slane %v4951, %v4964
  %v4966 = vcombine.low %v4958, %v4965
  %v4968 = vunpack.c.l.s4 1966171168
  %v4969 = vunpack.c.0.s8 %v4968
  %v4970 = vlaneseq
  %v4971 = vshrl.u32 %v4970, 7
  %v4972 = vsub.s32 %v4969, %v4971
  %v4973 = vrot.slane %v4917, %v4972
  %v4975 = vunpack.c.l.s4 1966171168
  %v4976 = vunpack.c.0.s8 %v4975
  %v4977 = vlaneseq
  %v4978 = vshrl.u32 %v4977, 7
  %v4979 = vsub.s32 %v4976, %v4978
  %v4980 = vrot.slane %v4973, %v4979
  %v4983 = vpack.i.b16 %v3855, %v3854
  %v4984 = vpack.i.b16 %v3857, %v3856
  %v4985 = vpack.i.b16 %v4028, %v4027
  %v4986 = vpack.i.b16 %v3860, %v4029
  %v4987 = vpack.i.b16 %v3864, %v3863
  %v4988 = vpack.i.b16 %v4030, %v3865
  %v4989 = vpack.i.b16 %v4032, %v4031
  %v4990 = vcombine.low %v4983, %v4984
  %v4991 = vcombine.low %v4547, %v4985
  %v4992 = vcombine.low %v4986, %v4550
  %v4993 = vcombine.low %v4987, %v4988
  %v4995 = vunpack.c.l.s4 1966171168
  %v4996 = vunpack.c.0.s8 %v4995
  %v4997 = vlaneseq
  %v4998 = vshrl.u32 %v4997, 7
  %v4999 = vsub.s32 %v4996, %v4998
  %v5000 = vrot.slane %v4990, %v4999
  %v5002 = vunpack.c.l.s4 1966171168
  %v5003 = vunpack.c.0.s8 %v5002
  %v5004 = vlaneseq
  %v5005 = vshrl.u32 %v5004, 7
  %v5006 = vsub.s32 %v5003, %v5005
  %v5007 = vrot.slane %v4991, %v5006
  %v5009 = vunpack.c.l.s4 1966171168
  %v5010 = vunpack.c.0.s8 %v5009
  %v5011 = vlaneseq
  %v5012 = vshrl.u32 %v5011, 7
  %v5013 = vsub.s32 %v5010, %v5012
  %v5014 = vrot.slane %v4992, %v5013
  %v5016 = vunpack.c.l.s4 1966171168
  %v5017 = vunpack.c.0.s8 %v5016
  %v5018 = vlaneseq
  %v5019 = vshrl.u32 %v5018, 7
  %v5020 = vsub.s32 %v5017, %v5019
  %v5021 = vrot.slane %v4993, %v5020
  %v5022 = vcombine.low %v5000, %v5007
  %v5023 = vcombine.low %v5014, %v5021
  %v5025 = vunpack.c.l.s4 1966171168
  %v5026 = vunpack.c.0.s8 %v5025
  %v5027 = vlaneseq
  %v5028 = vshrl.u32 %v5027, 7
  %v5029 = vsub.s32 %v5026, %v5028
  %v5030 = vrot.slane %v5022, %v5029
  %v5032 = vunpack.c.l.s4 1966171168
  %v5033 = vunpack.c.0.s8 %v5032
  %v5034 = vlaneseq
  %v5035 = vshrl.u32 %v5034, 7
  %v5036 = vsub.s32 %v5033, %v5035
  %v5037 = vrot.slane %v5023, %v5036
  %v5038 = vcombine.low %v5030, %v5037
  %v5040 = vunpack.c.l.s4 1966171168
  %v5041 = vunpack.c.0.s8 %v5040
  %v5042 = vlaneseq
  %v5043 = vshrl.u32 %v5042, 7
  %v5044 = vsub.s32 %v5041, %v5043
  %v5045 = vrot.slane %v4989, %v5044
  %v5047 = vunpack.c.l.s4 1966171168
  %v5048 = vunpack.c.0.s8 %v5047
  %v5049 = vlaneseq
  %v5050 = vshrl.u32 %v5049, 7
  %v5051 = vsub.s32 %v5048, %v5050
  %v5052 = vrot.slane %v5045, %v5051
  %v5055 = vpack.i.b16 %v3858, %v3867
  %v5056 = vpack.i.b16 %v4029, %v4028
  %v5057 = vpack.i.b16 %v3861, %v4033
  %v5058 = vpack.i.b16 %v4031, %v3870
  %v5059 = vpack.i.b16 %v4034, %v4032
  %v5060 = vcombine.low %v4473, %v5055
  %v5061 = vcombine.low %v4620, %v5056
  %v5062 = vcombine.low %v5057, %v4623
  %v5063 = vcombine.low %v4479, %v5058
  %v5065 = vunpack.c.l.s4 1966171168
  %v5066 = vunpack.c.0.s8 %v5065
  %v5067 = vlaneseq
  %v5068 = vshrl.u32 %v5067, 7
  %v5069 = vsub.s32 %v5066, %v5068
  %v5070 = vrot.slane %v5060, %v5069
  %v5072 = vunpack.c.l.s4 1966171168
  %v5073 = vunpack.c.0.s8 %v5072
  %v5074 = vlaneseq
  %v5075 = vshrl.u32 %v5074, 7
  %v5076 = vsub.s32 %v5073, %v5075
  %v5077 = vrot.slane %v5061, %v5076
  %v5079 = vunpack.c.l.s4 1966171168
  %v5080 = vunpack.c.0.s8 %v5079
  %v5081 = vlaneseq
  %v5082 = vshrl.u32 %v5081, 7
  %v5083 = vsub.s32 %v5080, %v5082
  %v5084 = vrot.slane %v5062, %v5083
  %v5086 = vunpack.c.l.s4 1966171168
  %v5087 = vunpack.c.0.s8 %v5086
  %v5088 = vlaneseq
  %v5089 = vshrl.u32 %v5088, 7
  %v5090 = vsub.s32 %v5087, %v5089
  %v5091 = vrot.slane %v5063, %v5090
  %v5092 = vcombine.low %v5070, %v5077
  %v5093 = vcombine.low %v5084, %v5091
  %v5095 = vunpack.c.l.s4 1966171168
  %v5096 = vunpack.c.0.s8 %v5095
  %v5097 = vlaneseq
  %v5098 = vshrl.u32 %v5097, 7
  %v5099 = vsub.s32 %v5096, %v5098
  %v5100 = vrot.slane %v5092, %v5099
  %v5102 = vunpack.c.l.s4 1966171168
  %v5103 = vunpack.c.0.s8 %v5102
  %v5104 = vlaneseq
  %v5105 = vshrl.u32 %v5104, 7
  %v5106 = vsub.s32 %v5103, %v5105
  %v5107 = vrot.slane %v5093, %v5106
  %v5108 = vcombine.low %v5100, %v5107
  %v5110 = vunpack.c.l.s4 1966171168
  %v5111 = vunpack.c.0.s8 %v5110
  %v5112 = vlaneseq
  %v5113 = vshrl.u32 %v5112, 7
  %v5114 = vsub.s32 %v5111, %v5113
  %v5115 = vrot.slane %v5059, %v5114
  %v5117 = vunpack.c.l.s4 1966171168
  %v5118 = vunpack.c.0.s8 %v5117
  %v5119 = vlaneseq
  %v5120 = vshrl.u32 %v5119, 7
  %v5121 = vsub.s32 %v5118, %v5120
  %v5122 = vrot.slane %v5115, %v5121
  %v5125 = vpack.i.b16 %v3859, %v3877
  %v5126 = vpack.i.b16 %v4033, %v4029
  %v5127 = vpack.i.b16 %v3862, %v4037
  %v5128 = vpack.i.b16 %v4032, %v3880
  %v5129 = vpack.i.b16 %v4038, %v4034
  %v5130 = vcombine.low %v4546, %v5125
  %v5131 = vcombine.low %v4693, %v5126
  %v5132 = vcombine.low %v5127, %v4696
  %v5133 = vcombine.low %v4552, %v5128
  %v5135 = vunpack.c.l.s4 1966171168
  %v5136 = vunpack.c.0.s8 %v5135
  %v5137 = vlaneseq
  %v5138 = vshrl.u32 %v5137, 7
  %v5139 = vsub.s32 %v5136, %v5138
  %v5140 = vrot.slane %v5130, %v5139
  %v5142 = vunpack.c.l.s4 1966171168
  %v5143 = vunpack.c.0.s8 %v5142
  %v5144 = vlaneseq
  %v5145 = vshrl.u32 %v5144, 7
  %v5146 = vsub.s32 %v5143, %v5145
  %v5147 = vrot.slane %v5131, %v5146
  %v5149 = vunpack.c.l.s4 1966171168
  %v5150 = vunpack.c.0.s8 %v5149
  %v5151 = vlaneseq
  %v5152 = vshrl.u32 %v5151, 7
  %v5153 = vsub.s32 %v5150, %v5152
  %v5154 = vrot.slane %v5132, %v5153
  %v5156 = vunpack.c.l.s4 1966171168
  %v5157 = vunpack.c.0.s8 %v5156
  %v5158 = vlaneseq
  %v5159 = vshrl.u32 %v5158, 7
  %v5160 = vsub.s32 %v5157, %v5159
  %v5161 = vrot.slane %v5133, %v5160
  %v5162 = vcombine.low %v5140, %v5147
  %v5163 = vcombine.low %v5154, %v5161
  %v5165 = vunpack.c.l.s4 1966171168
  %v5166 = vunpack.c.0.s8 %v5165
  %v5167 = vlaneseq
  %v5168 = vshrl.u32 %v5167, 7
  %v5169 = vsub.s32 %v5166, %v5168
  %v5170 = vrot.slane %v5162, %v5169
  %v5172 = vunpack.c.l.s4 1966171168
  %v5173 = vunpack.c.0.s8 %v5172
  %v5174 = vlaneseq
  %v5175 = vshrl.u32 %v5174, 7
  %v5176 = vsub.s32 %v5173, %v5175
  %v5177 = vrot.slane %v5163, %v5176
  %v5178 = vcombine.low %v5170, %v5177
  %v5180 = vunpack.c.l.s4 1966171168
  %v5181 = vunpack.c.0.s8 %v5180
  %v5182 = vlaneseq
  %v5183 = vshrl.u32 %v5182, 7
  %v5184 = vsub.s32 %v5181, %v5183
  %v5185 = vrot.slane %v5129, %v5184
  %v5187 = vunpack.c.l.s4 1966171168
  %v5188 = vunpack.c.0.s8 %v5187
  %v5189 = vlaneseq
  %v5190 = vshrl.u32 %v5189, 7
  %v5191 = vsub.s32 %v5188, %v5190
  %v5192 = vrot.slane %v5185, %v5191
  %v5195 = vpack.i.b16 %v3868, %v3882
  %v5196 = vpack.i.b16 %v4037, %v4033
  %v5197 = vpack.i.b16 %v3869, %v4039
  %v5198 = vpack.i.b16 %v4034, %v3885
  %v5199 = vpack.i.b16 %v4040, %v4038
  %v5200 = vcombine.low %v4619, %v5195
  %v5201 = vcombine.low %v4766, %v5196
  %v5202 = vcombine.low %v5197, %v4769
  %v5203 = vcombine.low %v4625, %v5198
  %v5205 = vunpack.c.l.s4 1966171168
  %v5206 = vunpack.c.0.s8 %v5205
  %v5207 = vlaneseq
  %v5208 = vshrl.u32 %v5207, 7
  %v5209 = vsub.s32 %v5206, %v5208
  %v5210 = vrot.slane %v5200, %v5209
  %v5212 = vunpack.c.l.s4 1966171168
  %v5213 = vunpack.c.0.s8 %v5212
  %v5214 = vlaneseq
  %v5215 = vshrl.u32 %v5214, 7
  %v5216 = vsub.s32 %v5213, %v5215
  %v5217 = vrot.slane %v5201, %v5216
  %v5219 = vunpack.c.l.s4 1966171168
  %v5220 = vunpack.c.0.s8 %v5219
  %v5221 = vlaneseq
  %v5222 = vshrl.u32 %v5221, 7
  %v5223 = vsub.s32 %v5220, %v5222
  %v5224 = vrot.slane %v5202, %v5223
  %v5226 = vunpack.c.l.s4 1966171168
  %v5227 = vunpack.c.0.s8 %v5226
  %v5228 = vlaneseq
  %v5229 = vshrl.u32 %v5228, 7
  %v5230 = vsub.s32 %v5227, %v5229
  %v5231 = vrot.slane %v5203, %v5230
  %v5232 = vcombine.low %v5210, %v5217
  %v5233 = vcombine.low %v5224, %v5231
  %v5235 = vunpack.c.l.s4 1966171168
  %v5236 = vunpack.c.0.s8 %v5235
  %v5237 = vlaneseq
  %v5238 = vshrl.u32 %v5237, 7
  %v5239 = vsub.s32 %v5236, %v5238
  %v5240 = vrot.slane %v5232, %v5239
  %v5242 = vunpack.c.l.s4 1966171168
  %v5243 = vunpack.c.0.s8 %v5242
  %v5244 = vlaneseq
  %v5245 = vshrl.u32 %v5244, 7
  %v5246 = vsub.s32 %v5243, %v5245
  %v5247 = vrot.slane %v5233, %v5246
  %v5248 = vcombine.low %v5240, %v5247
  %v5250 = vunpack.c.l.s4 1966171168
  %v5251 = vunpack.c.0.s8 %v5250
  %v5252 = vlaneseq
  %v5253 = vshrl.u32 %v5252, 7
  %v5254 = vsub.s32 %v5251, %v5253
  %v5255 = vrot.slane %v5199, %v5254
  %v5257 = vunpack.c.l.s4 1966171168
  %v5258 = vunpack.c.0.s8 %v5257
  %v5259 = vlaneseq
  %v5260 = vshrl.u32 %v5259, 7
  %v5261 = vsub.s32 %v5258, %v5260
  %v5262 = vrot.slane %v5255, %v5261
  %v5265 = vpack.i.b16 %v3878, %v3892
  %v5266 = vpack.i.b16 %v4039, %v4037
  %v5267 = vpack.i.b16 %v3879, %v4043
  %v5268 = vpack.i.b16 %v4038, %v3895
  %v5269 = vpack.i.b16 %v4044, %v4040
  %v5270 = vcombine.low %v4692, %v5265
  %v5271 = vcombine.low %v4839, %v5266
  %v5272 = vcombine.low %v5267, %v4842
  %v5273 = vcombine.low %v4698, %v5268
  %v5275 = vunpack.c.l.s4 1966171168
  %v5276 = vunpack.c.0.s8 %v5275
  %v5277 = vlaneseq
  %v5278 = vshrl.u32 %v5277, 7
  %v5279 = vsub.s32 %v5276, %v5278
  %v5280 = vrot.slane %v5270, %v5279
  %v5282 = vunpack.c.l.s4 1966171168
  %v5283 = vunpack.c.0.s8 %v5282
  %v5284 = vlaneseq
  %v5285 = vshrl.u32 %v5284, 7
  %v5286 = vsub.s32 %v5283, %v5285
  %v5287 = vrot.slane %v5271, %v5286
  %v5289 = vunpack.c.l.s4 1966171168
  %v5290 = vunpack.c.0.s8 %v5289
  %v5291 = vlaneseq
  %v5292 = vshrl.u32 %v5291, 7
  %v5293 = vsub.s32 %v5290, %v5292
  %v5294 = vrot.slane %v5272, %v5293
  %v5296 = vunpack.c.l.s4 1966171168
  %v5297 = vunpack.c.0.s8 %v5296
  %v5298 = vlaneseq
  %v5299 = vshrl.u32 %v5298, 7
  %v5300 = vsub.s32 %v5297, %v5299
  %v5301 = vrot.slane %v5273, %v5300
  %v5302 = vcombine.low %v5280, %v5287
  %v5303 = vcombine.low %v5294, %v5301
  %v5305 = vunpack.c.l.s4 1966171168
  %v5306 = vunpack.c.0.s8 %v5305
  %v5307 = vlaneseq
  %v5308 = vshrl.u32 %v5307, 7
  %v5309 = vsub.s32 %v5306, %v5308
  %v5310 = vrot.slane %v5302, %v5309
  %v5312 = vunpack.c.l.s4 1966171168
  %v5313 = vunpack.c.0.s8 %v5312
  %v5314 = vlaneseq
  %v5315 = vshrl.u32 %v5314, 7
  %v5316 = vsub.s32 %v5313, %v5315
  %v5317 = vrot.slane %v5303, %v5316
  %v5318 = vcombine.low %v5310, %v5317
  %v5320 = vunpack.c.l.s4 1966171168
  %v5321 = vunpack.c.0.s8 %v5320
  %v5322 = vlaneseq
  %v5323 = vshrl.u32 %v5322, 7
  %v5324 = vsub.s32 %v5321, %v5323
  %v5325 = vrot.slane %v5269, %v5324
  %v5327 = vunpack.c.l.s4 1966171168
  %v5328 = vunpack.c.0.s8 %v5327
  %v5329 = vlaneseq
  %v5330 = vshrl.u32 %v5329, 7
  %v5331 = vsub.s32 %v5328, %v5330
  %v5332 = vrot.slane %v5325, %v5331
  %v5335 = vpack.i.b16 %v3883, %v3897
  %v5336 = vpack.i.b16 %v4043, %v4039
  %v5337 = vpack.i.b16 %v3884, %v4045
  %v5338 = vpack.i.b16 %v4040, %v3900
  %v5339 = vpack.i.b16 %v4046, %v4044
  %v5340 = vcombine.low %v4765, %v5335
  %v5341 = vcombine.low %v4912, %v5336
  %v5342 = vcombine.low %v5337, %v4915
  %v5343 = vcombine.low %v4771, %v5338
  %v5345 = vunpack.c.l.s4 1966171168
  %v5346 = vunpack.c.0.s8 %v5345
  %v5347 = vlaneseq
  %v5348 = vshrl.u32 %v5347, 7
  %v5349 = vsub.s32 %v5346, %v5348
  %v5350 = vrot.slane %v5340, %v5349
  %v5352 = vunpack.c.l.s4 1966171168
  %v5353 = vunpack.c.0.s8 %v5352
  %v5354 = vlaneseq
  %v5355 = vshrl.u32 %v5354, 7
  %v5356 = vsub.s32 %v5353, %v5355
  %v5357 = vrot.slane %v5341, %v5356
  %v5359 = vunpack.c.l.s4 1966171168
  %v5360 = vunpack.c.0.s8 %v5359
  %v5361 = vlaneseq
  %v5362 = vshrl.u32 %v5361, 7
  %v5363 = vsub.s32 %v5360, %v5362
  %v5364 = vrot.slane %v5342, %v5363
  %v5366 = vunpack.c.l.s4 1966171168
  %v5367 = vunpack.c.0.s8 %v5366
  %v5368 = vlaneseq
  %v5369 = vshrl.u32 %v5368, 7
  %v5370 = vsub.s32 %v5367, %v5369
  %v5371 = vrot.slane %v5343, %v5370
  %v5372 = vcombine.low %v5350, %v5357
  %v5373 = vcombine.low %v5364, %v5371
  %v5375 = vunpack.c.l.s4 1966171168
  %v5376 = vunpack.c.0.s8 %v5375
  %v5377 = vlaneseq
  %v5378 = vshrl.u32 %v5377, 7
  %v5379 = vsub.s32 %v5376, %v5378
  %v5380 = vrot.slane %v5372, %v5379
  %v5382 = vunpack.c.l.s4 1966171168
  %v5383 = vunpack.c.0.s8 %v5382
  %v5384 = vlaneseq
  %v5385 = vshrl.u32 %v5384, 7
  %v5386 = vsub.s32 %v5383, %v5385
  %v5387 = vrot.slane %v5373, %v5386
  %v5388 = vcombine.low %v5380, %v5387
  %v5390 = vunpack.c.l.s4 1966171168
  %v5391 = vunpack.c.0.s8 %v5390
  %v5392 = vlaneseq
  %v5393 = vshrl.u32 %v5392, 7
  %v5394 = vsub.s32 %v5391, %v5393
  %v5395 = vrot.slane %v5339, %v5394
  %v5397 = vunpack.c.l.s4 1966171168
  %v5398 = vunpack.c.0.s8 %v5397
  %v5399 = vlaneseq
  %v5400 = vshrl.u32 %v5399, 7
  %v5401 = vsub.s32 %v5398, %v5400
  %v5402 = vrot.slane %v5395, %v5401
  %v5405 = vpack.i.b16 %v3893, %v3977
  %v5406 = vpack.i.b16 %v3978, %v3898
  %v5407 = vpack.i.b16 %v4045, %v4043
  %v5408 = vpack.i.b16 %v3894, %v4077
  %v5409 = vpack.i.b16 %v3979, %v3899
  %v5410 = vpack.i.b16 %v4044, %v3980
  %v5411 = vpack.i.b16 %v4078, %v4046
  %v5412 = vcombine.low %v4838, %v5405
  %v5413 = vcombine.low %v5406, %v5407
  %v5414 = vcombine.low %v5408, %v5409
  %v5415 = vcombine.low %v4844, %v5410
  %v5417 = vunpack.c.l.s4 1966171168
  %v5418 = vunpack.c.0.s8 %v5417
  %v5419 = vlaneseq
  %v5420 = vshrl.u32 %v5419, 7
  %v5421 = vsub.s32 %v5418, %v5420
  %v5422 = vrot.slane %v5412, %v5421
  %v5424 = vunpack.c.l.s4 1966171168
  %v5425 = vunpack.c.0.s8 %v5424
  %v5426 = vlaneseq
  %v5427 = vshrl.u32 %v5426, 7
  %v5428 = vsub.s32 %v5425, %v5427
  %v5429 = vrot.slane %v5413, %v5428
  %v5431 = vunpack.c.l.s4 1966171168
  %v5432 = vunpack.c.0.s8 %v5431
  %v5433 = vlaneseq
  %v5434 = vshrl.u32 %v5433, 7
  %v5435 = vsub.s32 %v5432, %v5434
  %v5436 = vrot.slane %v5414, %v5435
  %v5438 = vunpack.c.l.s4 1966171168
  %v5439 = vunpack.c.0.s8 %v5438
  %v5440 = vlaneseq
  %v5441 = vshrl.u32 %v5440, 7
  %v5442 = vsub.s32 %v5439, %v5441
  %v5443 = vrot.slane %v5415, %v5442
  %v5444 = vcombine.low %v5422, %v5429
  %v5445 = vcombine.low %v5436, %v5443
  %v5447 = vunpack.c.l.s4 1966171168
  %v5448 = vunpack.c.0.s8 %v5447
  %v5449 = vlaneseq
  %v5450 = vshrl.u32 %v5449, 7
  %v5451 = vsub.s32 %v5448, %v5450
  %v5452 = vrot.slane %v5444, %v5451
  %v5454 = vunpack.c.l.s4 1966171168
  %v5455 = vunpack.c.0.s8 %v5454
  %v5456 = vlaneseq
  %v5457 = vshrl.u32 %v5456, 7
  %v5458 = vsub.s32 %v5455, %v5457
  %v5459 = vrot.slane %v5445, %v5458
  %v5460 = vcombine.low %v5452, %v5459
  %v5462 = vunpack.c.l.s4 1966171168
  %v5463 = vunpack.c.0.s8 %v5462
  %v5464 = vlaneseq
  %v5465 = vshrl.u32 %v5464, 7
  %v5466 = vsub.s32 %v5463, %v5465
  %v5467 = vrot.slane %v5411, %v5466
  %v5469 = vunpack.c.l.s4 1966171168
  %v5470 = vunpack.c.0.s8 %v5469
  %v5471 = vlaneseq
  %v5472 = vshrl.u32 %v5471, 7
  %v5473 = vsub.s32 %v5470, %v5472
  %v5474 = vrot.slane %v5467, %v5473
  %v5477 = vpack.i.b16 %v4027, %v3859
  %v5478 = vpack.i.b16 %v4126, %v4125
  %v5479 = vpack.i.b16 %v3863, %v4127
  %v5480 = vpack.i.b16 %v4031, %v4030
  %v5481 = vpack.i.b16 %v4128, %v4032
  %v5482 = vpack.i.b16 %v4130, %v4129
  %v5483 = vcombine.low %v4474, %v5477
  %v5484 = vcombine.low %v5056, %v5478
  %v5485 = vcombine.low %v5479, %v4479
  %v5486 = vcombine.low %v5480, %v5481
  %v5488 = vunpack.c.l.s4 1966171168
  %v5489 = vunpack.c.0.s8 %v5488
  %v5490 = vlaneseq
  %v5491 = vshrl.u32 %v5490, 7
  %v5492 = vsub.s32 %v5489, %v5491
  %v5493 = vrot.slane %v5483, %v5492
  %v5495 = vunpack.c.l.s4 1966171168
  %v5496 = vunpack.c.0.s8 %v5495
  %v5497 = vlaneseq
  %v5498 = vshrl.u32 %v5497, 7
  %v5499 = vsub.s32 %v5496, %v5498
  %v5500 = vrot.slane %v5484, %v5499
  %v5502 = vunpack.c.l.s4 1966171168
  %v5503 = vunpack.c.0.s8 %v5502
  %v5504 = vlaneseq
  %v5505 = vshrl.u32 %v5504, 7
  %v5506 = vsub.s32 %v5503, %v5505
  %v5507 = vrot.slane %v5485, %v5506
  %v5509 = vunpack.c.l.s4 1966171168
  %v5510 = vunpack.c.0.s8 %v5509
  %v5511 = vlaneseq
  %v5512 = vshrl.u32 %v5511, 7
  %v5513 = vsub.s32 %v5510, %v5512
  %v5514 = vrot.slane %v5486, %v5513
  %v5515 = vcombine.low %v5493, %v5500
  %v5516 = vcombine.low %v5507, %v5514
  %v5518 = vunpack.c.l.s4 1966171168
  %v5519 = vunpack.c.0.s8 %v5518
  %v5520 = vlaneseq
  %v5521 = vshrl.u32 %v5520, 7
  %v5522 = vsub.s32 %v5519, %v5521
  %v5523 = vrot.slane %v5515, %v5522
  %v5525 = vunpack.c.l.s4 1966171168
  %v5526 = vunpack.c.0.s8 %v5525
  %v5527 = vlaneseq
  %v5528 = vshrl.u32 %v5527, 7
  %v5529 = vsub.s32 %v5526, %v5528
  %v5530 = vrot.slane %v5516, %v5529
  %v5531 = vcombine.low %v5523, %v5530
  %v5533 = vunpack.c.l.s4 1966171168
  %v5534 = vunpack.c.0.s8 %v5533
  %v5535 = vlaneseq
  %v5536 = vshrl.u32 %v5535, 7
  %v5537 = vsub.s32 %v5534, %v5536
  %v5538 = vrot.slane %v5482, %v5537
  %v5540 = vunpack.c.l.s4 1966171168
  %v5541 = vunpack.c.0.s8 %v5540
  %v5542 = vlaneseq
  %v5543 = vshrl.u32 %v5542, 7
  %v5544 = vsub.s32 %v5541, %v5543
  %v5545 = vrot.slane %v5538, %v5544
  %v5548 = vpack.i.b16 %v4028, %v3868
  %v5549 = vpack.i.b16 %v4127, %v4126
  %v5550 = vpack.i.b16 %v3864, %v4131
  %v5551 = vpack.i.b16 %v4129, %v4034
  %v5552 = vpack.i.b16 %v4132, %v4130
  %v5553 = vcombine.low %v4547, %v5548
  %v5554 = vcombine.low %v5126, %v5549
  %v5555 = vcombine.low %v5550, %v4552
  %v5556 = vcombine.low %v4989, %v5551
  %v5558 = vunpack.c.l.s4 1966171168
  %v5559 = vunpack.c.0.s8 %v5558
  %v5560 = vlaneseq
  %v5561 = vshrl.u32 %v5560, 7
  %v5562 = vsub.s32 %v5559, %v5561
  %v5563 = vrot.slane %v5553, %v5562
  %v5565 = vunpack.c.l.s4 1966171168
  %v5566 = vunpack.c.0.s8 %v5565
  %v5567 = vlaneseq
  %v5568 = vshrl.u32 %v5567, 7
  %v5569 = vsub.s32 %v5566, %v5568
  %v5570 = vrot.slane %v5554, %v5569
  %v5572 = vunpack.c.l.s4 1966171168
  %v5573 = vunpack.c.0.s8 %v5572
  %v5574 = vlaneseq
  %v5575 = vshrl.u32 %v5574, 7
  %v5576 = vsub.s32 %v5573, %v5575
  %v5577 = vrot.slane %v5555, %v5576
  %v5579 = vunpack.c.l.s4 1966171168
  %v5580 = vunpack.c.0.s8 %v5579
  %v5581 = vlaneseq
  %v5582 = vshrl.u32 %v5581, 7
  %v5583 = vsub.s32 %v5580, %v5582
  %v5584 = vrot.slane %v5556, %v5583
  %v5585 = vcombine.low %v5563, %v5570
  %v5586 = vcombine.low %v5577, %v5584
  %v5588 = vunpack.c.l.s4 1966171168
  %v5589 = vunpack.c.0.s8 %v5588
  %v5590 = vlaneseq
  %v5591 = vshrl.u32 %v5590, 7
  %v5592 = vsub.s32 %v5589, %v5591
  %v5593 = vrot.slane %v5585, %v5592
  %v5595 = vunpack.c.l.s4 1966171168
  %v5596 = vunpack.c.0.s8 %v5595
  %v5597 = vlaneseq
  %v5598 = vshrl.u32 %v5597, 7
  %v5599 = vsub.s32 %v5596, %v5598
  %v5600 = vrot.slane %v5586, %v5599
  %v5601 = vcombine.low %v5593, %v5600
  %v5603 = vunpack.c.l.s4 1966171168
  %v5604 = vunpack.c.0.s8 %v5603
  %v5605 = vlaneseq
  %v5606 = vshrl.u32 %v5605, 7
  %v5607 = vsub.s32 %v5604, %v5606
  %v5608 = vrot.slane %v5552, %v5607
  %v5610 = vunpack.c.l.s4 1966171168
  %v5611 = vunpack.c.0.s8 %v5610
  %v5612 = vlaneseq
  %v5613 = vshrl.u32 %v5612, 7
  %v5614 = vsub.s32 %v5611, %v5613
  %v5615 = vrot.slane %v5608, %v5614
  %v5618 = vpack.i.b16 %v4029, %v3878
  %v5619 = vpack.i.b16 %v4131, %v4127
  %v5620 = vpack.i.b16 %v3865, %v4135
  %v5621 = vpack.i.b16 %v4130, %v4038
  %v5622 = vpack.i.b16 %v4136, %v4132
  %v5623 = vcombine.low %v4620, %v5618
  %v5624 = vcombine.low %v5196, %v5619
  %v5625 = vcombine.low %v5620, %v4625
  %v5626 = vcombine.low %v5059, %v5621
  %v5628 = vunpack.c.l.s4 1966171168
  %v5629 = vunpack.c.0.s8 %v5628
  %v5630 = vlaneseq
  %v5631 = vshrl.u32 %v5630, 7
  %v5632 = vsub.s32 %v5629, %v5631
  %v5633 = vrot.slane %v5623, %v5632
  %v5635 = vunpack.c.l.s4 1966171168
  %v5636 = vunpack.c.0.s8 %v5635
  %v5637 = vlaneseq
  %v5638 = vshrl.u32 %v5637, 7
  %v5639 = vsub.s32 %v5636, %v5638
  %v5640 = vrot.slane %v5624, %v5639
  %v5642 = vunpack.c.l.s4 1966171168
  %v5643 = vunpack.c.0.s8 %v5642
  %v5644 = vlaneseq
  %v5645 = vshrl.u32 %v5644, 7
  %v5646 = vsub.s32 %v5643, %v5645
  %v5647 = vrot.slane %v5625, %v5646
  %v5649 = vunpack.c.l.s4 1966171168
  %v5650 = vunpack.c.0.s8 %v5649
  %v5651 = vlaneseq
  %v5652 = vshrl.u32 %v5651, 7
  %v5653 = vsub.s32 %v5650, %v5652
  %v5654 = vrot.slane %v5626, %v5653
  %v5655 = vcombine.low %v5633, %v5640
  %v5656 = vcombine.low %v5647, %v5654
  %v5658 = vunpack.c.l.s4 1966171168
  %v5659 = vunpack.c.0.s8 %v5658
  %v5660 = vlaneseq
  %v5661 = vshrl.u32 %v5660, 7
  %v5662 = vsub.s32 %v5659, %v5661
  %v5663 = vrot.slane %v5655, %v5662
  %v5665 = vunpack.c.l.s4 1966171168
  %v5666 = vunpack.c.0.s8 %v5665
  %v5667 = vlaneseq
  %v5668 = vshrl.u32 %v5667, 7
  %v5669 = vsub.s32 %v5666, %v5668
  %v5670 = vrot.slane %v5656, %v5669
  %v5671 = vcombine.low %v5663, %v5670
  %v5673 = vunpack.c.l.s4 1966171168
  %v5674 = vunpack.c.0.s8 %v5673
  %v5675 = vlaneseq
  %v5676 = vshrl.u32 %v5675, 7
  %v5677 = vsub.s32 %v5674, %v5676
  %v5678 = vrot.slane %v5622, %v5677
  %v5680 = vunpack.c.l.s4 1966171168
  %v5681 = vunpack.c.0.s8 %v5680
  %v5682 = vlaneseq
  %v5683 = vshrl.u32 %v5682, 7
  %v5684 = vsub.s32 %v5681, %v5683
  %v5685 = vrot.slane %v5678, %v5684
  %v5688 = vpack.i.b16 %v4033, %v3883
  %v5689 = vpack.i.b16 %v4135, %v4131
  %v5690 = vpack.i.b16 %v3870, %v4137
  %v5691 = vpack.i.b16 %v4132, %v4040
  %v5692 = vpack.i.b16 %v4138, %v4136
  %v5693 = vcombine.low %v4693, %v5688
  %v5694 = vcombine.low %v5266, %v5689
  %v5695 = vcombine.low %v5690, %v4698
  %v5696 = vcombine.low %v5129, %v5691
  %v5698 = vunpack.c.l.s4 1966171168
  %v5699 = vunpack.c.0.s8 %v5698
  %v5700 = vlaneseq
  %v5701 = vshrl.u32 %v5700, 7
  %v5702 = vsub.s32 %v5699, %v5701
  %v5703 = vrot.slane %v5693, %v5702
  %v5705 = vunpack.c.l.s4 1966171168
  %v5706 = vunpack.c.0.s8 %v5705
  %v5707 = vlaneseq
  %v5708 = vshrl.u32 %v5707, 7
  %v5709 = vsub.s32 %v5706, %v5708
  %v5710 = vrot.slane %v5694, %v5709
  %v5712 = vunpack.c.l.s4 1966171168
  %v5713 = vunpack.c.0.s8 %v5712
  %v5714 = vlaneseq
  %v5715 = vshrl.u32 %v5714, 7
  %v5716 = vsub.s32 %v5713, %v5715
  %v5717 = vrot.slane %v5695, %v5716
  %v5719 = vunpack.c.l.s4 1966171168
  %v5720 = vunpack.c.0.s8 %v5719
  %v5721 = vlaneseq
  %v5722 = vshrl.u32 %v5721, 7
  %v5723 = vsub.s32 %v5720, %v5722
  %v5724 = vrot.slane %v5696, %v5723
  %v5725 = vcombine.low %v5703, %v5710
  %v5726 = vcombine.low %v5717, %v5724
  %v5728 = vunpack.c.l.s4 1966171168
  %v5729 = vunpack.c.0.s8 %v5728
  %v5730 = vlaneseq
  %v5731 = vshrl.u32 %v5730, 7
  %v5732 = vsub.s32 %v5729, %v5731
  %v5733 = vrot.slane %v5725, %v5732
  %v5735 = vunpack.c.l.s4 1966171168
  %v5736 = vunpack.c.0.s8 %v5735
  %v5737 = vlaneseq
  %v5738 = vshrl.u32 %v5737, 7
  %v5739 = vsub.s32 %v5736, %v5738
  %v5740 = vrot.slane %v5726, %v5739
  %v5741 = vcombine.low %v5733, %v5740
  %v5743 = vunpack.c.l.s4 1966171168
  %v5744 = vunpack.c.0.s8 %v5743
  %v5745 = vlaneseq
  %v5746 = vshrl.u32 %v5745, 7
  %v5747 = vsub.s32 %v5744, %v5746
  %v5748 = vrot.slane %v5692, %v5747
  %v5750 = vunpack.c.l.s4 1966171168
  %v5751 = vunpack.c.0.s8 %v5750
  %v5752 = vlaneseq
  %v5753 = vshrl.u32 %v5752, 7
  %v5754 = vsub.s32 %v5751, %v5753
  %v5755 = vrot.slane %v5748, %v5754
  %v5758 = vpack.i.b16 %v4037, %v3893
  %v5759 = vpack.i.b16 %v4137, %v4135
  %v5760 = vpack.i.b16 %v3880, %v4141
  %v5761 = vpack.i.b16 %v4136, %v4044
  %v5762 = vpack.i.b16 %v4142, %v4138
  %v5763 = vcombine.low %v4766, %v5758
  %v5764 = vcombine.low %v5336, %v5759
  %v5765 = vcombine.low %v5760, %v4771
  %v5766 = vcombine.low %v5199, %v5761
  %v5768 = vunpack.c.l.s4 1966171168
  %v5769 = vunpack.c.0.s8 %v5768
  %v5770 = vlaneseq
  %v5771 = vshrl.u32 %v5770, 7
  %v5772 = vsub.s32 %v5769, %v5771
  %v5773 = vrot.slane %v5763, %v5772
  %v5775 = vunpack.c.l.s4 1966171168
  %v5776 = vunpack.c.0.s8 %v5775
  %v5777 = vlaneseq
  %v5778 = vshrl.u32 %v5777, 7
  %v5779 = vsub.s32 %v5776, %v5778
  %v5780 = vrot.slane %v5764, %v5779
  %v5782 = vunpack.c.l.s4 1966171168
  %v5783 = vunpack.c.0.s8 %v5782
  %v5784 = vlaneseq
  %v5785 = vshrl.u32 %v5784, 7
  %v5786 = vsub.s32 %v5783, %v5785
  %v5787 = vrot.slane %v5765, %v5786
  %v5789 = vunpack.c.l.s4 1966171168
  %v5790 = vunpack.c.0.s8 %v5789
  %v5791 = vlaneseq
  %v5792 = vshrl.u32 %v5791, 7
  %v5793 = vsub.s32 %v5790, %v5792
  %v5794 = vrot.slane %v5766, %v5793
  %v5795 = vcombine.low %v5773, %v5780
  %v5796 = vcombine.low %v5787, %v5794
  %v5798 = vunpack.c.l.s4 1966171168
  %v5799 = vunpack.c.0.s8 %v5798
  %v5800 = vlaneseq
  %v5801 = vshrl.u32 %v5800, 7
  %v5802 = vsub.s32 %v5799, %v5801
  %v5803 = vrot.slane %v5795, %v5802
  %v5805 = vunpack.c.l.s4 1966171168
  %v5806 = vunpack.c.0.s8 %v5805
  %v5807 = vlaneseq
  %v5808 = vshrl.u32 %v5807, 7
  %v5809 = vsub.s32 %v5806, %v5808
  %v5810 = vrot.slane %v5796, %v5809
  %v5811 = vcombine.low %v5803, %v5810
  %v5813 = vunpack.c.l.s4 1966171168
  %v5814 = vunpack.c.0.s8 %v5813
  %v5815 = vlaneseq
  %v5816 = vshrl.u32 %v5815, 7
  %v5817 = vsub.s32 %v5814, %v5816
  %v5818 = vrot.slane %v5762, %v5817
  %v5820 = vunpack.c.l.s4 1966171168
  %v5821 = vunpack.c.0.s8 %v5820
  %v5822 = vlaneseq
  %v5823 = vshrl.u32 %v5822, 7
  %v5824 = vsub.s32 %v5821, %v5823
  %v5825 = vrot.slane %v5818, %v5824
  %v5828 = vpack.i.b16 %v4039, %v3898
  %v5829 = vpack.i.b16 %v4141, %v4137
  %v5830 = vpack.i.b16 %v3885, %v4143
  %v5831 = vpack.i.b16 %v4138, %v4046
  %v5832 = vpack.i.b16 %v4144, %v4142
  %v5833 = vcombine.low %v4839, %v5828
  %v5834 = vcombine.low %v5407, %v5829
  %v5835 = vcombine.low %v5830, %v4844
  %v5836 = vcombine.low %v5269, %v5831
  %v5838 = vunpack.c.l.s4 1966171168
  %v5839 = vunpack.c.0.s8 %v5838
  %v5840 = vlaneseq
  %v5841 = vshrl.u32 %v5840, 7
  %v5842 = vsub.s32 %v5839, %v5841
  %v5843 = vrot.slane %v5833, %v5842
  %v5845 = vunpack.c.l.s4 1966171168
  %v5846 = vunpack.c.0.s8 %v5845
  %v5847 = vlaneseq
  %v5848 = vshrl.u32 %v5847, 7
  %v5849 = vsub.s32 %v5846, %v5848
  %v5850 = vrot.slane %v5834, %v5849
  %v5852 = vunpack.c.l.s4 1966171168
  %v5853 = vunpack.c.0.s8 %v5852
  %v5854 = vlaneseq
  %v5855 = vshrl.u32 %v5854, 7
  %v5856 = vsub.s32 %v5853, %v5855
  %v5857 = vrot.slane %v5835, %v5856
  %v5859 = vunpack.c.l.s4 1966171168
  %v5860 = vunpack.c.0.s8 %v5859
  %v5861 = vlaneseq
  %v5862 = vshrl.u32 %v5861, 7
  %v5863 = vsub.s32 %v5860, %v5862
  %v5864 = vrot.slane %v5836, %v5863
  %v5865 = vcombine.low %v5843, %v5850
  %v5866 = vcombine.low %v5857, %v5864
  %v5868 = vunpack.c.l.s4 1966171168
  %v5869 = vunpack.c.0.s8 %v5868
  %v5870 = vlaneseq
  %v5871 = vshrl.u32 %v5870, 7
  %v5872 = vsub.s32 %v5869, %v5871
  %v5873 = vrot.slane %v5865, %v5872
  %v5875 = vunpack.c.l.s4 1966171168
  %v5876 = vunpack.c.0.s8 %v5875
  %v5877 = vlaneseq
  %v5878 = vshrl.u32 %v5877, 7
  %v5879 = vsub.s32 %v5876, %v5878
  %v5880 = vrot.slane %v5866, %v5879
  %v5881 = vcombine.low %v5873, %v5880
  %v5883 = vunpack.c.l.s4 1966171168
  %v5884 = vunpack.c.0.s8 %v5883
  %v5885 = vlaneseq
  %v5886 = vshrl.u32 %v5885, 7
  %v5887 = vsub.s32 %v5884, %v5886
  %v5888 = vrot.slane %v5832, %v5887
  %v5890 = vunpack.c.l.s4 1966171168
  %v5891 = vunpack.c.0.s8 %v5890
  %v5892 = vlaneseq
  %v5893 = vshrl.u32 %v5892, 7
  %v5894 = vsub.s32 %v5891, %v5893
  %v5895 = vrot.slane %v5888, %v5894
  %v5898 = vpack.i.b16 %v4043, %v3978
  %v5899 = vpack.i.b16 %v4077, %v4045
  %v5900 = vpack.i.b16 %v4143, %v4141
  %v5901 = vpack.i.b16 %v3895, %v4175
  %v5902 = vpack.i.b16 %v4142, %v4078
  %v5903 = vpack.i.b16 %v4176, %v4144
  %v5904 = vcombine.low %v4912, %v5898
  %v5905 = vcombine.low %v5899, %v5900
  %v5906 = vcombine.low %v5901, %v4917
  %v5907 = vcombine.low %v5339, %v5902
  %v5909 = vunpack.c.l.s4 1966171168
  %v5910 = vunpack.c.0.s8 %v5909
  %v5911 = vlaneseq
  %v5912 = vshrl.u32 %v5911, 7
  %v5913 = vsub.s32 %v5910, %v5912
  %v5914 = vrot.slane %v5904, %v5913
  %v5916 = vunpack.c.l.s4 1966171168
  %v5917 = vunpack.c.0.s8 %v5916
  %v5918 = vlaneseq
  %v5919 = vshrl.u32 %v5918, 7
  %v5920 = vsub.s32 %v5917, %v5919
  %v5921 = vrot.slane %v5905, %v5920
  %v5923 = vunpack.c.l.s4 1966171168
  %v5924 = vunpack.c.0.s8 %v5923
  %v5925 = vlaneseq
  %v5926 = vshrl.u32 %v5925, 7
  %v5927 = vsub.s32 %v5924, %v5926
  %v5928 = vrot.slane %v5906, %v5927
  %v5930 = vunpack.c.l.s4 1966171168
  %v5931 = vunpack.c.0.s8 %v5930
  %v5932 = vlaneseq
  %v5933 = vshrl.u32 %v5932, 7
  %v5934 = vsub.s32 %v5931, %v5933
  %v5935 = vrot.slane %v5907, %v5934
  %v5936 = vcombine.low %v5914, %v5921
  %v5937 = vcombine.low %v5928, %v5935
  %v5939 = vunpack.c.l.s4 1966171168
  %v5940 = vunpack.c.0.s8 %v5939
  %v5941 = vlaneseq
  %v5942 = vshrl.u32 %v5941, 7
  %v5943 = vsub.s32 %v5940, %v5942
  %v5944 = vrot.slane %v5936, %v5943
  %v5946 = vunpack.c.l.s4 1966171168
  %v5947 = vunpack.c.0.s8 %v5946
  %v5948 = vlaneseq
  %v5949 = vshrl.u32 %v5948, 7
  %v5950 = vsub.s32 %v5947, %v5949
  %v5951 = vrot.slane %v5937, %v5950
  %v5952 = vcombine.low %v5944, %v5951
  %v5954 = vunpack.c.l.s4 1966171168
  %v5955 = vunpack.c.0.s8 %v5954
  %v5956 = vlaneseq
  %v5957 = vshrl.u32 %v5956, 7
  %v5958 = vsub.s32 %v5955, %v5957
  %v5959 = vrot.slane %v5903, %v5958
  %v5961 = vunpack.c.l.s4 1966171168
  %v5962 = vunpack.c.0.s8 %v5961
  %v5963 = vlaneseq
  %v5964 = vshrl.u32 %v5963, 7
  %v5965 = vsub.s32 %v5962, %v5964
  %v5966 = vrot.slane %v5959, %v5965
  %v5969 = vpack.i.b16 %v4125, %v4029
  %v5970 = vpack.i.b16 %v4224, %v4223
  %v5971 = vpack.i.b16 %v4030, %v4225
  %v5972 = vpack.i.b16 %v4129, %v4128
  %v5973 = vpack.i.b16 %v4226, %v4130
  %v5974 = vpack.i.b16 %v4228, %v4227
  %v5975 = vcombine.low %v4985, %v5969
  %v5976 = vcombine.low %v5549, %v5970
  %v5977 = vcombine.low %v5971, %v4989
  %v5978 = vcombine.low %v5972, %v5973
  %v5980 = vunpack.c.l.s4 1966171168
  %v5981 = vunpack.c.0.s8 %v5980
  %v5982 = vlaneseq
  %v5983 = vshrl.u32 %v5982, 7
  %v5984 = vsub.s32 %v5981, %v5983
  %v5985 = vrot.slane %v5975, %v5984
  %v5987 = vunpack.c.l.s4 1966171168
  %v5988 = vunpack.c.0.s8 %v5987
  %v5989 = vlaneseq
  %v5990 = vshrl.u32 %v5989, 7
  %v5991 = vsub.s32 %v5988, %v5990
  %v5992 = vrot.slane %v5976, %v5991
  %v5994 = vunpack.c.l.s4 1966171168
  %v5995 = vunpack.c.0.s8 %v5994
  %v5996 = vlaneseq
  %v5997 = vshrl.u32 %v5996, 7
  %v5998 = vsub.s32 %v5995, %v5997
  %v5999 = vrot.slane %v5977, %v5998
  %v6001 = vunpack.c.l.s4 1966171168
  %v6002 = vunpack.c.0.s8 %v6001
  %v6003 = vlaneseq
  %v6004 = vshrl.u32 %v6003, 7
  %v6005 = vsub.s32 %v6002, %v6004
  %v6006 = vrot.slane %v5978, %v6005
  %v6007 = vcombine.low %v5985, %v5992
  %v6008 = vcombine.low %v5999, %v6006
  %v6010 = vunpack.c.l.s4 1966171168
  %v6011 = vunpack.c.0.s8 %v6010
  %v6012 = vlaneseq
  %v6013 = vshrl.u32 %v6012, 7
  %v6014 = vsub.s32 %v6011, %v6013
  %v6015 = vrot.slane %v6007, %v6014
  %v6017 = vunpack.c.l.s4 1966171168
  %v6018 = vunpack.c.0.s8 %v6017
  %v6019 = vlaneseq
  %v6020 = vshrl.u32 %v6019, 7
  %v6021 = vsub.s32 %v6018, %v6020
  %v6022 = vrot.slane %v6008, %v6021
  %v6023 = vcombine.low %v6015, %v6022
  %v6025 = vunpack.c.l.s4 1966171168
  %v6026 = vunpack.c.0.s8 %v6025
  %v6027 = vlaneseq
  %v6028 = vshrl.u32 %v6027, 7
  %v6029 = vsub.s32 %v6026, %v6028
  %v6030 = vrot.slane %v5974, %v6029
  %v6032 = vunpack.c.l.s4 1966171168
  %v6033 = vunpack.c.0.s8 %v6032
  %v6034 = vlaneseq
  %v6035 = vshrl.u32 %v6034, 7
  %v6036 = vsub.s32 %v6033, %v6035
  %v6037 = vrot.slane %v6030, %v6036
  %v6040 = vpack.i.b16 %v4126, %v4033
  %v6041 = vpack.i.b16 %v4225, %v4224
  %v6042 = vpack.i.b16 %v4031, %v4229
  %v6043 = vpack.i.b16 %v4227, %v4132
  %v6044 = vpack.i.b16 %v4230, %v4228
  %v6045 = vcombine.low %v5056, %v6040
  %v6046 = vcombine.low %v5619, %v6041
  %v6047 = vcombine.low %v6042, %v5059
  %v6048 = vcombine.low %v5482, %v6043
  %v6050 = vunpack.c.l.s4 1966171168
  %v6051 = vunpack.c.0.s8 %v6050
  %v6052 = vlaneseq
  %v6053 = vshrl.u32 %v6052, 7
  %v6054 = vsub.s32 %v6051, %v6053
  %v6055 = vrot.slane %v6045, %v6054
  %v6057 = vunpack.c.l.s4 1966171168
  %v6058 = vunpack.c.0.s8 %v6057
  %v6059 = vlaneseq
  %v6060 = vshrl.u32 %v6059, 7
  %v6061 = vsub.s32 %v6058, %v6060
  %v6062 = vrot.slane %v6046, %v6061
  %v6064 = vunpack.c.l.s4 1966171168
  %v6065 = vunpack.c.0.s8 %v6064
  %v6066 = vlaneseq
  %v6067 = vshrl.u32 %v6066, 7
  %v6068 = vsub.s32 %v6065, %v6067
  %v6069 = vrot.slane %v6047, %v6068
  %v6071 = vunpack.c.l.s4 1966171168
  %v6072 = vunpack.c.0.s8 %v6071
  %v6073 = vlaneseq
  %v6074 = vshrl.u32 %v6073, 7
  %v6075 = vsub.s32 %v6072, %v6074
  %v6076 = vrot.slane %v6048, %v6075
  %v6077 = vcombine.low %v6055, %v6062
  %v6078 = vcombine.low %v6069, %v6076
  %v6080 = vunpack.c.l.s4 1966171168
  %v6081 = vunpack.c.0.s8 %v6080
  %v6082 = vlaneseq
  %v6083 = vshrl.u32 %v6082, 7
  %v6084 = vsub.s32 %v6081, %v6083
  %v6085 = vrot.slane %v6077, %v6084
  %v6087 = vunpack.c.l.s4 1966171168
  %v6088 = vunpack.c.0.s8 %v6087
  %v6089 = vlaneseq
  %v6090 = vshrl.u32 %v6089, 7
  %v6091 = vsub.s32 %v6088, %v6090
  %v6092 = vrot.slane %v6078, %v6091
  %v6093 = vcombine.low %v6085, %v6092
  %v6095 = vunpack.c.l.s4 1966171168
  %v6096 = vunpack.c.0.s8 %v6095
  %v6097 = vlaneseq
  %v6098 = vshrl.u32 %v6097, 7
  %v6099 = vsub.s32 %v6096, %v6098
  %v6100 = vrot.slane %v6044, %v6099
  %v6102 = vunpack.c.l.s4 1966171168
  %v6103 = vunpack.c.0.s8 %v6102
  %v6104 = vlaneseq
  %v6105 = vshrl.u32 %v6104, 7
  %v6106 = vsub.s32 %v6103, %v6105
  %v6107 = vrot.slane %v6100, %v6106
  %v6110 = vpack.i.b16 %v4127, %v4037
  %v6111 = vpack.i.b16 %v4229, %v4225
  %v6112 = vpack.i.b16 %v4032, %v4233
  %v6113 = vpack.i.b16 %v4228, %v4136
  %v6114 = vpack.i.b16 %v4234, %v4230
  %v6115 = vcombine.low %v5126, %v6110
  %v6116 = vcombine.low %v5689, %v6111
  %v6117 = vcombine.low %v6112, %v5129
  %v6118 = vcombine.low %v5552, %v6113
  %v6120 = vunpack.c.l.s4 1966171168
  %v6121 = vunpack.c.0.s8 %v6120
  %v6122 = vlaneseq
  %v6123 = vshrl.u32 %v6122, 7
  %v6124 = vsub.s32 %v6121, %v6123
  %v6125 = vrot.slane %v6115, %v6124
  %v6127 = vunpack.c.l.s4 1966171168
  %v6128 = vunpack.c.0.s8 %v6127
  %v6129 = vlaneseq
  %v6130 = vshrl.u32 %v6129, 7
  %v6131 = vsub.s32 %v6128, %v6130
  %v6132 = vrot.slane %v6116, %v6131
  %v6134 = vunpack.c.l.s4 1966171168
  %v6135 = vunpack.c.0.s8 %v6134
  %v6136 = vlaneseq
  %v6137 = vshrl.u32 %v6136, 7
  %v6138 = vsub.s32 %v6135, %v6137
  %v6139 = vrot.slane %v6117, %v6138
  %v6141 = vunpack.c.l.s4 1966171168
  %v6142 = vunpack.c.0.s8 %v6141
  %v6143 = vlaneseq
  %v6144 = vshrl.u32 %v6143, 7
  %v6145 = vsub.s32 %v6142, %v6144
  %v6146 = vrot.slane %v6118, %v6145
  %v6147 = vcombine.low %v6125, %v6132
  %v6148 = vcombine.low %v6139, %v6146
  %v6150 = vunpack.c.l.s4 1966171168
  %v6151 = vunpack.c.0.s8 %v6150
  %v6152 = vlaneseq
  %v6153 = vshrl.u32 %v6152, 7
  %v6154 = vsub.s32 %v6151, %v6153
  %v6155 = vrot.slane %v6147, %v6154
  %v6157 = vunpack.c.l.s4 1966171168
  %v6158 = vunpack.c.0.s8 %v6157
  %v6159 = vlaneseq
  %v6160 = vshrl.u32 %v6159, 7
  %v6161 = vsub.s32 %v6158, %v6160
  %v6162 = vrot.slane %v6148, %v6161
  %v6163 = vcombine.low %v6155, %v6162
  %v6165 = vunpack.c.l.s4 1966171168
  %v6166 = vunpack.c.0.s8 %v6165
  %v6167 = vlaneseq
  %v6168 = vshrl.u32 %v6167, 7
  %v6169 = vsub.s32 %v6166, %v6168
  %v6170 = vrot.slane %v6114, %v6169
  %v6172 = vunpack.c.l.s4 1966171168
  %v6173 = vunpack.c.0.s8 %v6172
  %v6174 = vlaneseq
  %v6175 = vshrl.u32 %v6174, 7
  %v6176 = vsub.s32 %v6173, %v6175
  %v6177 = vrot.slane %v6170, %v6176
  %v6180 = vpack.i.b16 %v4131, %v4039
  %v6181 = vpack.i.b16 %v4233, %v4229
  %v6182 = vpack.i.b16 %v4034, %v4235
  %v6183 = vpack.i.b16 %v4230, %v4138
  %v6184 = vpack.i.b16 %v4236, %v4234
  %v6185 = vcombine.low %v5196, %v6180
  %v6186 = vcombine.low %v5759, %v6181
  %v6187 = vcombine.low %v6182, %v5199
  %v6188 = vcombine.low %v5622, %v6183
  %v6190 = vunpack.c.l.s4 1966171168
  %v6191 = vunpack.c.0.s8 %v6190
  %v6192 = vlaneseq
  %v6193 = vshrl.u32 %v6192, 7
  %v6194 = vsub.s32 %v6191, %v6193
  %v6195 = vrot.slane %v6185, %v6194
  %v6197 = vunpack.c.l.s4 1966171168
  %v6198 = vunpack.c.0.s8 %v6197
  %v6199 = vlaneseq
  %v6200 = vshrl.u32 %v6199, 7
  %v6201 = vsub.s32 %v6198, %v6200
  %v6202 = vrot.slane %v6186, %v6201
  %v6204 = vunpack.c.l.s4 1966171168
  %v6205 = vunpack.c.0.s8 %v6204
  %v6206 = vlaneseq
  %v6207 = vshrl.u32 %v6206, 7
  %v6208 = vsub.s32 %v6205, %v6207
  %v6209 = vrot.slane %v6187, %v6208
  %v6211 = vunpack.c.l.s4 1966171168
  %v6212 = vunpack.c.0.s8 %v6211
  %v6213 = vlaneseq
  %v6214 = vshrl.u32 %v6213, 7
  %v6215 = vsub.s32 %v6212, %v6214
  %v6216 = vrot.slane %v6188, %v6215
  %v6217 = vcombine.low %v6195, %v6202
  %v6218 = vcombine.low %v6209, %v6216
  %v6220 = vunpack.c.l.s4 1966171168
  %v6221 = vunpack.c.0.s8 %v6220
  %v6222 = vlaneseq
  %v6223 = vshrl.u32 %v6222, 7
  %v6224 = vsub.s32 %v6221, %v6223
  %v6225 = vrot.slane %v6217, %v6224
  %v6227 = vunpack.c.l.s4 1966171168
  %v6228 = vunpack.c.0.s8 %v6227
  %v6229 = vlaneseq
  %v6230 = vshrl.u32 %v6229, 7
  %v6231 = vsub.s32 %v6228, %v6230
  %v6232 = vrot.slane %v6218, %v6231
  %v6233 = vcombine.low %v6225, %v6232
  %v6235 = vunpack.c.l.s4 1966171168
  %v6236 = vunpack.c.0.s8 %v6235
  %v6237 = vlaneseq
  %v6238 = vshrl.u32 %v6237, 7
  %v6239 = vsub.s32 %v6236, %v6238
  %v6240 = vrot.slane %v6184, %v6239
  %v6242 = vunpack.c.l.s4 1966171168
  %v6243 = vunpack.c.0.s8 %v6242
  %v6244 = vlaneseq
  %v6245 = vshrl.u32 %v6244, 7
  %v6246 = vsub.s32 %v6243, %v6245
  %v6247 = vrot.slane %v6240, %v6246
  %v6250 = vpack.i.b16 %v4135, %v4043
  %v6251 = vpack.i.b16 %v4235, %v4233
  %v6252 = vpack.i.b16 %v4038, %v4239
  %v6253 = vpack.i.b16 %v4234, %v4142
  %v6254 = vpack.i.b16 %v4240, %v4236
  %v6255 = vcombine.low %v5266, %v6250
  %v6256 = vcombine.low %v5829, %v6251
  %v6257 = vcombine.low %v6252, %v5269
  %v6258 = vcombine.low %v5692, %v6253
  %v6260 = vunpack.c.l.s4 1966171168
  %v6261 = vunpack.c.0.s8 %v6260
  %v6262 = vlaneseq
  %v6263 = vshrl.u32 %v6262, 7
  %v6264 = vsub.s32 %v6261, %v6263
  %v6265 = vrot.slane %v6255, %v6264
  %v6267 = vunpack.c.l.s4 1966171168
  %v6268 = vunpack.c.0.s8 %v6267
  %v6269 = vlaneseq
  %v6270 = vshrl.u32 %v6269, 7
  %v6271 = vsub.s32 %v6268, %v6270
  %v6272 = vrot.slane %v6256, %v6271
  %v6274 = vunpack.c.l.s4 1966171168
  %v6275 = vunpack.c.0.s8 %v6274
  %v6276 = vlaneseq
  %v6277 = vshrl.u32 %v6276, 7
  %v6278 = vsub.s32 %v6275, %v6277
  %v6279 = vrot.slane %v6257, %v6278
  %v6281 = vunpack.c.l.s4 1966171168
  %v6282 = vunpack.c.0.s8 %v6281
  %v6283 = vlaneseq
  %v6284 = vshrl.u32 %v6283, 7
  %v6285 = vsub.s32 %v6282, %v6284
  %v6286 = vrot.slane %v6258, %v6285
  %v6287 = vcombine.low %v6265, %v6272
  %v6288 = vcombine.low %v6279, %v6286
  %v6290 = vunpack.c.l.s4 1966171168
  %v6291 = vunpack.c.0.s8 %v6290
  %v6292 = vlaneseq
  %v6293 = vshrl.u32 %v6292, 7
  %v6294 = vsub.s32 %v6291, %v6293
  %v6295 = vrot.slane %v6287, %v6294
  %v6297 = vunpack.c.l.s4 1966171168
  %v6298 = vunpack.c.0.s8 %v6297
  %v6299 = vlaneseq
  %v6300 = vshrl.u32 %v6299, 7
  %v6301 = vsub.s32 %v6298, %v6300
  %v6302 = vrot.slane %v6288, %v6301
  %v6303 = vcombine.low %v6295, %v6302
  %v6305 = vunpack.c.l.s4 1966171168
  %v6306 = vunpack.c.0.s8 %v6305
  %v6307 = vlaneseq
  %v6308 = vshrl.u32 %v6307, 7
  %v6309 = vsub.s32 %v6306, %v6308
  %v6310 = vrot.slane %v6254, %v6309
  %v6312 = vunpack.c.l.s4 1966171168
  %v6313 = vunpack.c.0.s8 %v6312
  %v6314 = vlaneseq
  %v6315 = vshrl.u32 %v6314, 7
  %v6316 = vsub.s32 %v6313, %v6315
  %v6317 = vrot.slane %v6310, %v6316
  %v6320 = vpack.i.b16 %v4137, %v4045
  %v6321 = vpack.i.b16 %v4239, %v4235
  %v6322 = vpack.i.b16 %v4040, %v4241
  %v6323 = vpack.i.b16 %v4236, %v4144
  %v6324 = vpack.i.b16 %v4242, %v4240
  %v6325 = vcombine.low %v5336, %v6320
  %v6326 = vcombine.low %v5900, %v6321
  %v6327 = vcombine.low %v6322, %v5339
  %v6328 = vcombine.low %v5762, %v6323
  %v6330 = vunpack.c.l.s4 1966171168
  %v6331 = vunpack.c.0.s8 %v6330
  %v6332 = vlaneseq
  %v6333 = vshrl.u32 %v6332, 7
  %v6334 = vsub.s32 %v6331, %v6333
  %v6335 = vrot.slane %v6325, %v6334
  %v6337 = vunpack.c.l.s4 1966171168
  %v6338 = vunpack.c.0.s8 %v6337
  %v6339 = vlaneseq
  %v6340 = vshrl.u32 %v6339, 7
  %v6341 = vsub.s32 %v6338, %v6340
  %v6342 = vrot.slane %v6326, %v6341
  %v6344 = vunpack.c.l.s4 1966171168
  %v6345 = vunpack.c.0.s8 %v6344
  %v6346 = vlaneseq
  %v6347 = vshrl.u32 %v6346, 7
  %v6348 = vsub.s32 %v6345, %v6347
  %v6349 = vrot.slane %v6327, %v6348
  %v6351 = vunpack.c.l.s4 1966171168
  %v6352 = vunpack.c.0.s8 %v6351
  %v6353 = vlaneseq
  %v6354 = vshrl.u32 %v6353, 7
  %v6355 = vsub.s32 %v6352, %v6354
  %v6356 = vrot.slane %v6328, %v6355
  %v6357 = vcombine.low %v6335, %v6342
  %v6358 = vcombine.low %v6349, %v6356
  %v6360 = vunpack.c.l.s4 1966171168
  %v6361 = vunpack.c.0.s8 %v6360
  %v6362 = vlaneseq
  %v6363 = vshrl.u32 %v6362, 7
  %v6364 = vsub.s32 %v6361, %v6363
  %v6365 = vrot.slane %v6357, %v6364
  %v6367 = vunpack.c.l.s4 1966171168
  %v6368 = vunpack.c.0.s8 %v6367
  %v6369 = vlaneseq
  %v6370 = vshrl.u32 %v6369, 7
  %v6371 = vsub.s32 %v6368, %v6370
  %v6372 = vrot.slane %v6358, %v6371
  %v6373 = vcombine.low %v6365, %v6372
  %v6375 = vunpack.c.l.s4 1966171168
  %v6376 = vunpack.c.0.s8 %v6375
  %v6377 = vlaneseq
  %v6378 = vshrl.u32 %v6377, 7
  %v6379 = vsub.s32 %v6376, %v6378
  %v6380 = vrot.slane %v6324, %v6379
  %v6382 = vunpack.c.l.s4 1966171168
  %v6383 = vunpack.c.0.s8 %v6382
  %v6384 = vlaneseq
  %v6385 = vshrl.u32 %v6384, 7
  %v6386 = vsub.s32 %v6383, %v6385
  %v6387 = vrot.slane %v6380, %v6386
  %v6390 = vpack.i.b16 %v4141, %v4077
  %v6391 = vpack.i.b16 %v4175, %v4143
  %v6392 = vpack.i.b16 %v4241, %v4239
  %v6393 = vpack.i.b16 %v4044, %v4273
  %v6394 = vpack.i.b16 %v4240, %v4176
  %v6395 = vpack.i.b16 %v4274, %v4242
  %v6396 = vcombine.low %v5407, %v6390
  %v6397 = vcombine.low %v6391, %v6392
  %v6398 = vcombine.low %v6393, %v5411
  %v6399 = vcombine.low %v5832, %v6394
  %v6401 = vunpack.c.l.s4 1966171168
  %v6402 = vunpack.c.0.s8 %v6401
  %v6403 = vlaneseq
  %v6404 = vshrl.u32 %v6403, 7
  %v6405 = vsub.s32 %v6402, %v6404
  %v6406 = vrot.slane %v6396, %v6405
  %v6408 = vunpack.c.l.s4 1966171168
  %v6409 = vunpack.c.0.s8 %v6408
  %v6410 = vlaneseq
  %v6411 = vshrl.u32 %v6410, 7
  %v6412 = vsub.s32 %v6409, %v6411
  %v6413 = vrot.slane %v6397, %v6412
  %v6415 = vunpack.c.l.s4 1966171168
  %v6416 = vunpack.c.0.s8 %v6415
  %v6417 = vlaneseq
  %v6418 = vshrl.u32 %v6417, 7
  %v6419 = vsub.s32 %v6416, %v6418
  %v6420 = vrot.slane %v6398, %v6419
  %v6422 = vunpack.c.l.s4 1966171168
  %v6423 = vunpack.c.0.s8 %v6422
  %v6424 = vlaneseq
  %v6425 = vshrl.u32 %v6424, 7
  %v6426 = vsub.s32 %v6423, %v6425
  %v6427 = vrot.slane %v6399, %v6426
  %v6428 = vcombine.low %v6406, %v6413
  %v6429 = vcombine.low %v6420, %v6427
  %v6431 = vunpack.c.l.s4 1966171168
  %v6432 = vunpack.c.0.s8 %v6431
  %v6433 = vlaneseq
  %v6434 = vshrl.u32 %v6433, 7
  %v6435 = vsub.s32 %v6432, %v6434
  %v6436 = vrot.slane %v6428, %v6435
  %v6438 = vunpack.c.l.s4 1966171168
  %v6439 = vunpack.c.0.s8 %v6438
  %v6440 = vlaneseq
  %v6441 = vshrl.u32 %v6440, 7
  %v6442 = vsub.s32 %v6439, %v6441
  %v6443 = vrot.slane %v6429, %v6442
  %v6444 = vcombine.low %v6436, %v6443
  %v6446 = vunpack.c.l.s4 1966171168
  %v6447 = vunpack.c.0.s8 %v6446
  %v6448 = vlaneseq
  %v6449 = vshrl.u32 %v6448, 7
  %v6450 = vsub.s32 %v6447, %v6449
  %v6451 = vrot.slane %v6395, %v6450
  %v6453 = vunpack.c.l.s4 1966171168
  %v6454 = vunpack.c.0.s8 %v6453
  %v6455 = vlaneseq
  %v6456 = vshrl.u32 %v6455, 7
  %v6457 = vsub.s32 %v6454, %v6456
  %v6458 = vrot.slane %v6451, %v6457
  %v6461 = vpack.i.b16 %v4223, %v4127
  %v6462 = vpack.i.b16 %v4322, %v4321
  %v6463 = vpack.i.b16 %v4128, %v4323
  %v6464 = vpack.i.b16 %v4227, %v4226
  %v6465 = vpack.i.b16 %v4324, %v4228
  %v6466 = vpack.i.b16 %v4326, %v4325
  %v6467 = vcombine.low %v5478, %v6461
  %v6468 = vcombine.low %v6041, %v6462
  %v6469 = vcombine.low %v6463, %v5482
  %v6470 = vcombine.low %v6464, %v6465
  %v6472 = vunpack.c.l.s4 1966171168
  %v6473 = vunpack.c.0.s8 %v6472
  %v6474 = vlaneseq
  %v6475 = vshrl.u32 %v6474, 7
  %v6476 = vsub.s32 %v6473, %v6475
  %v6477 = vrot.slane %v6467, %v6476
  %v6479 = vunpack.c.l.s4 1966171168
  %v6480 = vunpack.c.0.s8 %v6479
  %v6481 = vlaneseq
  %v6482 = vshrl.u32 %v6481, 7
  %v6483 = vsub.s32 %v6480, %v6482
  %v6484 = vrot.slane %v6468, %v6483
  %v6486 = vunpack.c.l.s4 1966171168
  %v6487 = vunpack.c.0.s8 %v6486
  %v6488 = vlaneseq
  %v6489 = vshrl.u32 %v6488, 7
  %v6490 = vsub.s32 %v6487, %v6489
  %v6491 = vrot.slane %v6469, %v6490
  %v6493 = vunpack.c.l.s4 1966171168
  %v6494 = vunpack.c.0.s8 %v6493
  %v6495 = vlaneseq
  %v6496 = vshrl.u32 %v6495, 7
  %v6497 = vsub.s32 %v6494, %v6496
  %v6498 = vrot.slane %v6470, %v6497
  %v6499 = vcombine.low %v6477, %v6484
  %v6500 = vcombine.low %v6491, %v6498
  %v6502 = vunpack.c.l.s4 1966171168
  %v6503 = vunpack.c.0.s8 %v6502
  %v6504 = vlaneseq
  %v6505 = vshrl.u32 %v6504, 7
  %v6506 = vsub.s32 %v6503, %v6505
  %v6507 = vrot.slane %v6499, %v6506
  %v6509 = vunpack.c.l.s4 1966171168
  %v6510 = vunpack.c.0.s8 %v6509
  %v6511 = vlaneseq
  %v6512 = vshrl.u32 %v6511, 7
  %v6513 = vsub.s32 %v6510, %v6512
  %v6514 = vrot.slane %v6500, %v6513
  %v6515 = vcombine.low %v6507, %v6514
  %v6517 = vunpack.c.l.s4 1966171168
  %v6518 = vunpack.c.0.s8 %v6517
  %v6519 = vlaneseq
  %v6520 = vshrl.u32 %v6519, 7
  %v6521 = vsub.s32 %v6518, %v6520
  %v6522 = vrot.slane %v6466, %v6521
  %v6524 = vunpack.c.l.s4 1966171168
  %v6525 = vunpack.c.0.s8 %v6524
  %v6526 = vlaneseq
  %v6527 = vshrl.u32 %v6526, 7
  %v6528 = vsub.s32 %v6525, %v6527
  %v6529 = vrot.slane %v6522, %v6528
  %v6532 = vpack.i.b16 %v4224, %v4131
  %v6533 = vpack.i.b16 %v4323, %v4322
  %v6534 = vpack.i.b16 %v4129, %v4327
  %v6535 = vpack.i.b16 %v4325, %v4230
  %v6536 = vpack.i.b16 %v4328, %v4326
  %v6537 = vcombine.low %v5549, %v6532
  %v6538 = vcombine.low %v6111, %v6533
  %v6539 = vcombine.low %v6534, %v5552
  %v6540 = vcombine.low %v5974, %v6535
  %v6542 = vunpack.c.l.s4 1966171168
  %v6543 = vunpack.c.0.s8 %v6542
  %v6544 = vlaneseq
  %v6545 = vshrl.u32 %v6544, 7
  %v6546 = vsub.s32 %v6543, %v6545
  %v6547 = vrot.slane %v6537, %v6546
  %v6549 = vunpack.c.l.s4 1966171168
  %v6550 = vunpack.c.0.s8 %v6549
  %v6551 = vlaneseq
  %v6552 = vshrl.u32 %v6551, 7
  %v6553 = vsub.s32 %v6550, %v6552
  %v6554 = vrot.slane %v6538, %v6553
  %v6556 = vunpack.c.l.s4 1966171168
  %v6557 = vunpack.c.0.s8 %v6556
  %v6558 = vlaneseq
  %v6559 = vshrl.u32 %v6558, 7
  %v6560 = vsub.s32 %v6557, %v6559
  %v6561 = vrot.slane %v6539, %v6560
  %v6563 = vunpack.c.l.s4 1966171168
  %v6564 = vunpack.c.0.s8 %v6563
  %v6565 = vlaneseq
  %v6566 = vshrl.u32 %v6565, 7
  %v6567 = vsub.s32 %v6564, %v6566
  %v6568 = vrot.slane %v6540, %v6567
  %v6569 = vcombine.low %v6547, %v6554
  %v6570 = vcombine.low %v6561, %v6568
  %v6572 = vunpack.c.l.s4 1966171168
  %v6573 = vunpack.c.0.s8 %v6572
  %v6574 = vlaneseq
  %v6575 = vshrl.u32 %v6574, 7
  %v6576 = vsub.s32 %v6573, %v6575
  %v6577 = vrot.slane %v6569, %v6576
  %v6579 = vunpack.c.l.s4 1966171168
  %v6580 = vunpack.c.0.s8 %v6579
  %v6581 = vlaneseq
  %v6582 = vshrl.u32 %v6581, 7
  %v6583 = vsub.s32 %v6580, %v6582
  %v6584 = vrot.slane %v6570, %v6583
  %v6585 = vcombine.low %v6577, %v6584
  %v6587 = vunpack.c.l.s4 1966171168
  %v6588 = vunpack.c.0.s8 %v6587
  %v6589 = vlaneseq
  %v6590 = vshrl.u32 %v6589, 7
  %v6591 = vsub.s32 %v6588, %v6590
  %v6592 = vrot.slane %v6536, %v6591
  %v6594 = vunpack.c.l.s4 1966171168
  %v6595 = vunpack.c.0.s8 %v6594
  %v6596 = vlaneseq
  %v6597 = vshrl.u32 %v6596, 7
  %v6598 = vsub.s32 %v6595, %v6597
  %v6599 = vrot.slane %v6592, %v6598
  %v6602 = vpack.i.b16 %v4225, %v4135
  %v6603 = vpack.i.b16 %v4327, %v4323
  %v6604 = vpack.i.b16 %v4130, %v4331
  %v6605 = vpack.i.b16 %v4326, %v4234
  %v6606 = vpack.i.b16 %v4332, %v4328
  %v6607 = vcombine.low %v5619, %v6602
  %v6608 = vcombine.low %v6181, %v6603
  %v6609 = vcombine.low %v6604, %v5622
  %v6610 = vcombine.low %v6044, %v6605
  %v6612 = vunpack.c.l.s4 1966171168
  %v6613 = vunpack.c.0.s8 %v6612
  %v6614 = vlaneseq
  %v6615 = vshrl.u32 %v6614, 7
  %v6616 = vsub.s32 %v6613, %v6615
  %v6617 = vrot.slane %v6607, %v6616
  %v6619 = vunpack.c.l.s4 1966171168
  %v6620 = vunpack.c.0.s8 %v6619
  %v6621 = vlaneseq
  %v6622 = vshrl.u32 %v6621, 7
  %v6623 = vsub.s32 %v6620, %v6622
  %v6624 = vrot.slane %v6608, %v6623
  %v6626 = vunpack.c.l.s4 1966171168
  %v6627 = vunpack.c.0.s8 %v6626
  %v6628 = vlaneseq
  %v6629 = vshrl.u32 %v6628, 7
  %v6630 = vsub.s32 %v6627, %v6629
  %v6631 = vrot.slane %v6609, %v6630
  %v6633 = vunpack.c.l.s4 1966171168
  %v6634 = vunpack.c.0.s8 %v6633
  %v6635 = vlaneseq
  %v6636 = vshrl.u32 %v6635, 7
  %v6637 = vsub.s32 %v6634, %v6636
  %v6638 = vrot.slane %v6610, %v6637
  %v6639 = vcombine.low %v6617, %v6624
  %v6640 = vcombine.low %v6631, %v6638
  %v6642 = vunpack.c.l.s4 1966171168
  %v6643 = vunpack.c.0.s8 %v6642
  %v6644 = vlaneseq
  %v6645 = vshrl.u32 %v6644, 7
  %v6646 = vsub.s32 %v6643, %v6645
  %v6647 = vrot.slane %v6639, %v6646
  %v6649 = vunpack.c.l.s4 1966171168
  %v6650 = vunpack.c.0.s8 %v6649
  %v6651 = vlaneseq
  %v6652 = vshrl.u32 %v6651, 7
  %v6653 = vsub.s32 %v6650, %v6652
  %v6654 = vrot.slane %v6640, %v6653
  %v6655 = vcombine.low %v6647, %v6654
  %v6657 = vunpack.c.l.s4 1966171168
  %v6658 = vunpack.c.0.s8 %v6657
  %v6659 = vlaneseq
  %v6660 = vshrl.u32 %v6659, 7
  %v6661 = vsub.s32 %v6658, %v6660
  %v6662 = vrot.slane %v6606, %v6661
  %v6664 = vunpack.c.l.s4 1966171168
  %v6665 = vunpack.c.0.s8 %v6664
  %v6666 = vlaneseq
  %v6667 = vshrl.u32 %v6666, 7
  %v6668 = vsub.s32 %v6665, %v6667
  %v6669 = vrot.slane %v6662, %v6668
  %v6672 = vpack.i.b16 %v4229, %v4137
  %v6673 = vpack.i.b16 %v4331, %v4327
  %v6674 = vpack.i.b16 %v4132, %v4333
  %v6675 = vpack.i.b16 %v4328, %v4236
  %v6676 = vpack.i.b16 %v4334, %v4332
  %v6677 = vcombine.low %v5689, %v6672
  %v6678 = vcombine.low %v6251, %v6673
  %v6679 = vcombine.low %v6674, %v5692
  %v6680 = vcombine.low %v6114, %v6675
  %v6682 = vunpack.c.l.s4 1966171168
  %v6683 = vunpack.c.0.s8 %v6682
  %v6684 = vlaneseq
  %v6685 = vshrl.u32 %v6684, 7
  %v6686 = vsub.s32 %v6683, %v6685
  %v6687 = vrot.slane %v6677, %v6686
  %v6689 = vunpack.c.l.s4 1966171168
  %v6690 = vunpack.c.0.s8 %v6689
  %v6691 = vlaneseq
  %v6692 = vshrl.u32 %v6691, 7
  %v6693 = vsub.s32 %v6690, %v6692
  %v6694 = vrot.slane %v6678, %v6693
  %v6696 = vunpack.c.l.s4 1966171168
  %v6697 = vunpack.c.0.s8 %v6696
  %v6698 = vlaneseq
  %v6699 = vshrl.u32 %v6698, 7
  %v6700 = vsub.s32 %v6697, %v6699
  %v6701 = vrot.slane %v6679, %v6700
  %v6703 = vunpack.c.l.s4 1966171168
  %v6704 = vunpack.c.0.s8 %v6703
  %v6705 = vlaneseq
  %v6706 = vshrl.u32 %v6705, 7
  %v6707 = vsub.s32 %v6704, %v6706
  %v6708 = vrot.slane %v6680, %v6707
  %v6709 = vcombine.low %v6687, %v6694
  %v6710 = vcombine.low %v6701, %v6708
  %v6712 = vunpack.c.l.s4 1966171168
  %v6713 = vunpack.c.0.s8 %v6712
  %v6714 = vlaneseq
  %v6715 = vshrl.u32 %v6714, 7
  %v6716 = vsub.s32 %v6713, %v6715
  %v6717 = vrot.slane %v6709, %v6716
  %v6719 = vunpack.c.l.s4 1966171168
  %v6720 = vunpack.c.0.s8 %v6719
  %v6721 = vlaneseq
  %v6722 = vshrl.u32 %v6721, 7
  %v6723 = vsub.s32 %v6720, %v6722
  %v6724 = vrot.slane %v6710, %v6723
  %v6725 = vcombine.low %v6717, %v6724
  %v6727 = vunpack.c.l.s4 1966171168
  %v6728 = vunpack.c.0.s8 %v6727
  %v6729 = vlaneseq
  %v6730 = vshrl.u32 %v6729, 7
  %v6731 = vsub.s32 %v6728, %v6730
  %v6732 = vrot.slane %v6676, %v6731
  %v6734 = vunpack.c.l.s4 1966171168
  %v6735 = vunpack.c.0.s8 %v6734
  %v6736 = vlaneseq
  %v6737 = vshrl.u32 %v6736, 7
  %v6738 = vsub.s32 %v6735, %v6737
  %v6739 = vrot.slane %v6732, %v6738
  %v6742 = vpack.i.b16 %v4233, %v4141
  %v6743 = vpack.i.b16 %v4333, %v4331
  %v6744 = vpack.i.b16 %v4136, %v4337
  %v6745 = vpack.i.b16 %v4332, %v4240
  %v6746 = vpack.i.b16 %v4338, %v4334
  %v6747 = vcombine.low %v5759, %v6742
  %v6748 = vcombine.low %v6321, %v6743
  %v6749 = vcombine.low %v6744, %v5762
  %v6750 = vcombine.low %v6184, %v6745
  %v6752 = vunpack.c.l.s4 1966171168
  %v6753 = vunpack.c.0.s8 %v6752
  %v6754 = vlaneseq
  %v6755 = vshrl.u32 %v6754, 7
  %v6756 = vsub.s32 %v6753, %v6755
  %v6757 = vrot.slane %v6747, %v6756
  %v6759 = vunpack.c.l.s4 1966171168
  %v6760 = vunpack.c.0.s8 %v6759
  %v6761 = vlaneseq
  %v6762 = vshrl.u32 %v6761, 7
  %v6763 = vsub.s32 %v6760, %v6762
  %v6764 = vrot.slane %v6748, %v6763
  %v6766 = vunpack.c.l.s4 1966171168
  %v6767 = vunpack.c.0.s8 %v6766
  %v6768 = vlaneseq
  %v6769 = vshrl.u32 %v6768, 7
  %v6770 = vsub.s32 %v6767, %v6769
  %v6771 = vrot.slane %v6749, %v6770
  %v6773 = vunpack.c.l.s4 1966171168
  %v6774 = vunpack.c.0.s8 %v6773
  %v6775 = vlaneseq
  %v6776 = vshrl.u32 %v6775, 7
  %v6777 = vsub.s32 %v6774, %v6776
  %v6778 = vrot.slane %v6750, %v6777
  %v6779 = vcombine.low %v6757, %v6764
  %v6780 = vcombine.low %v6771, %v6778
  %v6782 = vunpack.c.l.s4 1966171168
  %v6783 = vunpack.c.0.s8 %v6782
  %v6784 = vlaneseq
  %v6785 = vshrl.u32 %v6784, 7
  %v6786 = vsub.s32 %v6783, %v6785
  %v6787 = vrot.slane %v6779, %v6786
  %v6789 = vunpack.c.l.s4 1966171168
  %v6790 = vunpack.c.0.s8 %v6789
  %v6791 = vlaneseq
  %v6792 = vshrl.u32 %v6791, 7
  %v6793 = vsub.s32 %v6790, %v6792
  %v6794 = vrot.slane %v6780, %v6793
  %v6795 = vcombine.low %v6787, %v6794
  %v6797 = vunpack.c.l.s4 1966171168
  %v6798 = vunpack.c.0.s8 %v6797
  %v6799 = vlaneseq
  %v6800 = vshrl.u32 %v6799, 7
  %v6801 = vsub.s32 %v6798, %v6800
  %v6802 = vrot.slane %v6746, %v6801
  %v6804 = vunpack.c.l.s4 1966171168
  %v6805 = vunpack.c.0.s8 %v6804
  %v6806 = vlaneseq
  %v6807 = vshrl.u32 %v6806, 7
  %v6808 = vsub.s32 %v6805, %v6807
  %v6809 = vrot.slane %v6802, %v6808
  %v6812 = vpack.i.b16 %v4235, %v4143
  %v6813 = vpack.i.b16 %v4337, %v4333
  %v6814 = vpack.i.b16 %v4138, %v4339
  %v6815 = vpack.i.b16 %v4334, %v4242
  %v6816 = vpack.i.b16 %v4340, %v4338
  %v6817 = vcombine.low %v5829, %v6812
  %v6818 = vcombine.low %v6392, %v6813
  %v6819 = vcombine.low %v6814, %v5832
  %v6820 = vcombine.low %v6254, %v6815
  %v6822 = vunpack.c.l.s4 1966171168
  %v6823 = vunpack.c.0.s8 %v6822
  %v6824 = vlaneseq
  %v6825 = vshrl.u32 %v6824, 7
  %v6826 = vsub.s32 %v6823, %v6825
  %v6827 = vrot.slane %v6817, %v6826
  %v6829 = vunpack.c.l.s4 1966171168
  %v6830 = vunpack.c.0.s8 %v6829
  %v6831 = vlaneseq
  %v6832 = vshrl.u32 %v6831, 7
  %v6833 = vsub.s32 %v6830, %v6832
  %v6834 = vrot.slane %v6818, %v6833
  %v6836 = vunpack.c.l.s4 1966171168
  %v6837 = vunpack.c.0.s8 %v6836
  %v6838 = vlaneseq
  %v6839 = vshrl.u32 %v6838, 7
  %v6840 = vsub.s32 %v6837, %v6839
  %v6841 = vrot.slane %v6819, %v6840
  %v6843 = vunpack.c.l.s4 1966171168
  %v6844 = vunpack.c.0.s8 %v6843
  %v6845 = vlaneseq
  %v6846 = vshrl.u32 %v6845, 7
  %v6847 = vsub.s32 %v6844, %v6846
  %v6848 = vrot.slane %v6820, %v6847
  %v6849 = vcombine.low %v6827, %v6834
  %v6850 = vcombine.low %v6841, %v6848
  %v6852 = vunpack.c.l.s4 1966171168
  %v6853 = vunpack.c.0.s8 %v6852
  %v6854 = vlaneseq
  %v6855 = vshrl.u32 %v6854, 7
  %v6856 = vsub.s32 %v6853, %v6855
  %v6857 = vrot.slane %v6849, %v6856
  %v6859 = vunpack.c.l.s4 1966171168
  %v6860 = vunpack.c.0.s8 %v6859
  %v6861 = vlaneseq
  %v6862 = vshrl.u32 %v6861, 7
  %v6863 = vsub.s32 %v6860, %v6862
  %v6864 = vrot.slane %v6850, %v6863
  %v6865 = vcombine.low %v6857, %v6864
  %v6867 = vunpack.c.l.s4 1966171168
  %v6868 = vunpack.c.0.s8 %v6867
  %v6869 = vlaneseq
  %v6870 = vshrl.u32 %v6869, 7
  %v6871 = vsub.s32 %v6868, %v6870
  %v6872 = vrot.slane %v6816, %v6871
  %v6874 = vunpack.c.l.s4 1966171168
  %v6875 = vunpack.c.0.s8 %v6874
  %v6876 = vlaneseq
  %v6877 = vshrl.u32 %v6876, 7
  %v6878 = vsub.s32 %v6875, %v6877
  %v6879 = vrot.slane %v6872, %v6878
  %v6882 = vpack.i.b16 %v4239, %v4175
  %v6883 = vpack.i.b16 %v4273, %v4241
  %v6884 = vpack.i.b16 %v4339, %v4337
  %v6885 = vpack.i.b16 %v4142, %v4371
  %v6886 = vpack.i.b16 %v4338, %v4274
  %v6887 = vpack.i.b16 %v4372, %v4340
  %v6888 = vcombine.low %v5900, %v6882
  %v6889 = vcombine.low %v6883, %v6884
  %v6890 = vcombine.low %v6885, %v5903
  %v6891 = vcombine.low %v6324, %v6886
  %v6893 = vunpack.c.l.s4 1966171168
  %v6894 = vunpack.c.0.s8 %v6893
  %v6895 = vlaneseq
  %v6896 = vshrl.u32 %v6895, 7
  %v6897 = vsub.s32 %v6894, %v6896
  %v6898 = vrot.slane %v6888, %v6897
  %v6900 = vunpack.c.l.s4 1966171168
  %v6901 = vunpack.c.0.s8 %v6900
  %v6902 = vlaneseq
  %v6903 = vshrl.u32 %v6902, 7
  %v6904 = vsub.s32 %v6901, %v6903
  %v6905 = vrot.slane %v6889, %v6904
  %v6907 = vunpack.c.l.s4 1966171168
  %v6908 = vunpack.c.0.s8 %v6907
  %v6909 = vlaneseq
  %v6910 = vshrl.u32 %v6909, 7
  %v6911 = vsub.s32 %v6908, %v6910
  %v6912 = vrot.slane %v6890, %v6911
  %v6914 = vunpack.c.l.s4 1966171168
  %v6915 = vunpack.c.0.s8 %v6914
  %v6916 = vlaneseq
  %v6917 = vshrl.u32 %v6916, 7
  %v6918 = vsub.s32 %v6915, %v6917
  %v6919 = vrot.slane %v6891, %v6918
  %v6920 = vcombine.low %v6898, %v6905
  %v6921 = vcombine.low %v6912, %v6919
  %v6923 = vunpack.c.l.s4 1966171168
  %v6924 = vunpack.c.0.s8 %v6923
  %v6925 = vlaneseq
  %v6926 = vshrl.u32 %v6925, 7
  %v6927 = vsub.s32 %v6924, %v6926
  %v6928 = vrot.slane %v6920, %v6927
  %v6930 = vunpack.c.l.s4 1966171168
  %v6931 = vunpack.c.0.s8 %v6930
  %v6932 = vlaneseq
  %v6933 = vshrl.u32 %v6932, 7
  %v6934 = vsub.s32 %v6931, %v6933
  %v6935 = vrot.slane %v6921, %v6934
  %v6936 = vcombine.low %v6928, %v6935
  %v6938 = vunpack.c.l.s4 1966171168
  %v6939 = vunpack.c.0.s8 %v6938
  %v6940 = vlaneseq
  %v6941 = vshrl.u32 %v6940, 7
  %v6942 = vsub.s32 %v6939, %v6941
  %v6943 = vrot.slane %v6887, %v6942
  %v6945 = vunpack.c.l.s4 1966171168
  %v6946 = vunpack.c.0.s8 %v6945
  %v6947 = vlaneseq
  %v6948 = vshrl.u32 %v6947, 7
  %v6949 = vsub.s32 %v6946, %v6948
  %v6950 = vrot.slane %v6943, %v6949
  %v6953 = vpack.i.b16 %v4321, %v4225
  %v6954 = vpack.i.b16 %v4420, %v4419
  %v6955 = vpack.i.b16 %v4226, %v4421
  %v6956 = vpack.i.b16 %v4325, %v4324
  %v6957 = vpack.i.b16 %v4422, %v4326
  %v6958 = vpack.i.b16 %v4424, %v4423
  %v6959 = vcombine.low %v5970, %v6953
  %v6960 = vcombine.low %v6533, %v6954
  %v6961 = vcombine.low %v6955, %v5974
  %v6962 = vcombine.low %v6956, %v6957
  %v6964 = vunpack.c.l.s4 1966171168
  %v6965 = vunpack.c.0.s8 %v6964
  %v6966 = vlaneseq
  %v6967 = vshrl.u32 %v6966, 7
  %v6968 = vsub.s32 %v6965, %v6967
  %v6969 = vrot.slane %v6959, %v6968
  %v6971 = vunpack.c.l.s4 1966171168
  %v6972 = vunpack.c.0.s8 %v6971
  %v6973 = vlaneseq
  %v6974 = vshrl.u32 %v6973, 7
  %v6975 = vsub.s32 %v6972, %v6974
  %v6976 = vrot.slane %v6960, %v6975
  %v6978 = vunpack.c.l.s4 1966171168
  %v6979 = vunpack.c.0.s8 %v6978
  %v6980 = vlaneseq
  %v6981 = vshrl.u32 %v6980, 7
  %v6982 = vsub.s32 %v6979, %v6981
  %v6983 = vrot.slane %v6961, %v6982
  %v6985 = vunpack.c.l.s4 1966171168
  %v6986 = vunpack.c.0.s8 %v6985
  %v6987 = vlaneseq
  %v6988 = vshrl.u32 %v6987, 7
  %v6989 = vsub.s32 %v6986, %v6988
  %v6990 = vrot.slane %v6962, %v6989
  %v6991 = vcombine.low %v6969, %v6976
  %v6992 = vcombine.low %v6983, %v6990
  %v6994 = vunpack.c.l.s4 1966171168
  %v6995 = vunpack.c.0.s8 %v6994
  %v6996 = vlaneseq
  %v6997 = vshrl.u32 %v6996, 7
  %v6998 = vsub.s32 %v6995, %v6997
  %v6999 = vrot.slane %v6991, %v6998
  %v7001 = vunpack.c.l.s4 1966171168
  %v7002 = vunpack.c.0.s8 %v7001
  %v7003 = vlaneseq
  %v7004 = vshrl.u32 %v7003, 7
  %v7005 = vsub.s32 %v7002, %v7004
  %v7006 = vrot.slane %v6992, %v7005
  %v7007 = vcombine.low %v6999, %v7006
  %v7009 = vunpack.c.l.s4 1966171168
  %v7010 = vunpack.c.0.s8 %v7009
  %v7011 = vlaneseq
  %v7012 = vshrl.u32 %v7011, 7
  %v7013 = vsub.s32 %v7010, %v7012
  %v7014 = vrot.slane %v6958, %v7013
  %v7016 = vunpack.c.l.s4 1966171168
  %v7017 = vunpack.c.0.s8 %v7016
  %v7018 = vlaneseq
  %v7019 = vshrl.u32 %v7018, 7
  %v7020 = vsub.s32 %v7017, %v7019
  %v7021 = vrot.slane %v7014, %v7020
  %v7024 = vpack.i.b16 %v4322, %v4229
  %v7025 = vpack.i.b16 %v4421, %v4420
  %v7026 = vpack.i.b16 %v4227, %v4425
  %v7027 = vpack.i.b16 %v4423, %v4328
  %v7028 = vpack.i.b16 %v4426, %v4424
  %v7029 = vcombine.low %v6041, %v7024
  %v7030 = vcombine.low %v6603, %v7025
  %v7031 = vcombine.low %v7026, %v6044
  %v7032 = vcombine.low %v6466, %v7027
  %v7034 = vunpack.c.l.s4 1966171168
  %v7035 = vunpack.c.0.s8 %v7034
  %v7036 = vlaneseq
  %v7037 = vshrl.u32 %v7036, 7
  %v7038 = vsub.s32 %v7035, %v7037
  %v7039 = vrot.slane %v7029, %v7038
  %v7041 = vunpack.c.l.s4 1966171168
  %v7042 = vunpack.c.0.s8 %v7041
  %v7043 = vlaneseq
  %v7044 = vshrl.u32 %v7043, 7
  %v7045 = vsub.s32 %v7042, %v7044
  %v7046 = vrot.slane %v7030, %v7045
  %v7048 = vunpack.c.l.s4 1966171168
  %v7049 = vunpack.c.0.s8 %v7048
  %v7050 = vlaneseq
  %v7051 = vshrl.u32 %v7050, 7
  %v7052 = vsub.s32 %v7049, %v7051
  %v7053 = vrot.slane %v7031, %v7052
  %v7055 = vunpack.c.l.s4 1966171168
  %v7056 = vunpack.c.0.s8 %v7055
  %v7057 = vlaneseq
  %v7058 = vshrl.u32 %v7057, 7
  %v7059 = vsub.s32 %v7056, %v7058
  %v7060 = vrot.slane %v7032, %v7059
  %v7061 = vcombine.low %v7039, %v7046
  %v7062 = vcombine.low %v7053, %v7060
  %v7064 = vunpack.c.l.s4 1966171168
  %v7065 = vunpack.c.0.s8 %v7064
  %v7066 = vlaneseq
  %v7067 = vshrl.u32 %v7066, 7
  %v7068 = vsub.s32 %v7065, %v7067
  %v7069 = vrot.slane %v7061, %v7068
  %v7071 = vunpack.c.l.s4 1966171168
  %v7072 = vunpack.c.0.s8 %v7071
  %v7073 = vlaneseq
  %v7074 = vshrl.u32 %v7073, 7
  %v7075 = vsub.s32 %v7072, %v7074
  %v7076 = vrot.slane %v7062, %v7075
  %v7077 = vcombine.low %v7069, %v7076
  %v7079 = vunpack.c.l.s4 1966171168
  %v7080 = vunpack.c.0.s8 %v7079
  %v7081 = vlaneseq
  %v7082 = vshrl.u32 %v7081, 7
  %v7083 = vsub.s32 %v7080, %v7082
  %v7084 = vrot.slane %v7028, %v7083
  %v7086 = vunpack.c.l.s4 1966171168
  %v7087 = vunpack.c.0.s8 %v7086
  %v7088 = vlaneseq
  %v7089 = vshrl.u32 %v7088, 7
  %v7090 = vsub.s32 %v7087, %v7089
  %v7091 = vrot.slane %v7084, %v7090
  %v7094 = vpack.i.b16 %v4323, %v4233
  %v7095 = vpack.i.b16 %v4425, %v4421
  %v7096 = vpack.i.b16 %v4228, %v4429
  %v7097 = vpack.i.b16 %v4424, %v4332
  %v7098 = vpack.i.b16 %v4430, %v4426
  %v7099 = vcombine.low %v6111, %v7094
  %v7100 = vcombine.low %v6673, %v7095
  %v7101 = vcombine.low %v7096, %v6114
  %v7102 = vcombine.low %v6536, %v7097
  %v7104 = vunpack.c.l.s4 1966171168
  %v7105 = vunpack.c.0.s8 %v7104
  %v7106 = vlaneseq
  %v7107 = vshrl.u32 %v7106, 7
  %v7108 = vsub.s32 %v7105, %v7107
  %v7109 = vrot.slane %v7099, %v7108
  %v7111 = vunpack.c.l.s4 1966171168
  %v7112 = vunpack.c.0.s8 %v7111
  %v7113 = vlaneseq
  %v7114 = vshrl.u32 %v7113, 7
  %v7115 = vsub.s32 %v7112, %v7114
  %v7116 = vrot.slane %v7100, %v7115
  %v7118 = vunpack.c.l.s4 1966171168
  %v7119 = vunpack.c.0.s8 %v7118
  %v7120 = vlaneseq
  %v7121 = vshrl.u32 %v7120, 7
  %v7122 = vsub.s32 %v7119, %v7121
  %v7123 = vrot.slane %v7101, %v7122
  %v7125 = vunpack.c.l.s4 1966171168
  %v7126 = vunpack.c.0.s8 %v7125
  %v7127 = vlaneseq
  %v7128 = vshrl.u32 %v7127, 7
  %v7129 = vsub.s32 %v7126, %v7128
  %v7130 = vrot.slane %v7102, %v7129
  %v7131 = vcombine.low %v7109, %v7116
  %v7132 = vcombine.low %v7123, %v7130
  %v7134 = vunpack.c.l.s4 1966171168
  %v7135 = vunpack.c.0.s8 %v7134
  %v7136 = vlaneseq
  %v7137 = vshrl.u32 %v7136, 7
  %v7138 = vsub.s32 %v7135, %v7137
  %v7139 = vrot.slane %v7131, %v7138
  %v7141 = vunpack.c.l.s4 1966171168
  %v7142 = vunpack.c.0.s8 %v7141
  %v7143 = vlaneseq
  %v7144 = vshrl.u32 %v7143, 7
  %v7145 = vsub.s32 %v7142, %v7144
  %v7146 = vrot.slane %v7132, %v7145
  %v7147 = vcombine.low %v7139, %v7146
  %v7149 = vunpack.c.l.s4 1966171168
  %v7150 = vunpack.c.0.s8 %v7149
  %v7151 = vlaneseq
  %v7152 = vshrl.u32 %v7151, 7
  %v7153 = vsub.s32 %v7150, %v7152
  %v7154 = vrot.slane %v7098, %v7153
  %v7156 = vunpack.c.l.s4 1966171168
  %v7157 = vunpack.c.0.s8 %v7156
  %v7158 = vlaneseq
  %v7159 = vshrl.u32 %v7158, 7
  %v7160 = vsub.s32 %v7157, %v7159
  %v7161 = vrot.slane %v7154, %v7160
  %v7164 = vpack.i.b16 %v4327, %v4235
  %v7165 = vpack.i.b16 %v4429, %v4425
  %v7166 = vpack.i.b16 %v4230, %v4431
  %v7167 = vpack.i.b16 %v4426, %v4334
  %v7168 = vpack.i.b16 %v4432, %v4430
  %v7169 = vcombine.low %v6181, %v7164
  %v7170 = vcombine.low %v6743, %v7165
  %v7171 = vcombine.low %v7166, %v6184
  %v7172 = vcombine.low %v6606, %v7167
  %v7174 = vunpack.c.l.s4 1966171168
  %v7175 = vunpack.c.0.s8 %v7174
  %v7176 = vlaneseq
  %v7177 = vshrl.u32 %v7176, 7
  %v7178 = vsub.s32 %v7175, %v7177
  %v7179 = vrot.slane %v7169, %v7178
  %v7181 = vunpack.c.l.s4 1966171168
  %v7182 = vunpack.c.0.s8 %v7181
  %v7183 = vlaneseq
  %v7184 = vshrl.u32 %v7183, 7
  %v7185 = vsub.s32 %v7182, %v7184
  %v7186 = vrot.slane %v7170, %v7185
  %v7188 = vunpack.c.l.s4 1966171168
  %v7189 = vunpack.c.0.s8 %v7188
  %v7190 = vlaneseq
  %v7191 = vshrl.u32 %v7190, 7
  %v7192 = vsub.s32 %v7189, %v7191
  %v7193 = vrot.slane %v7171, %v7192
  %v7195 = vunpack.c.l.s4 1966171168
  %v7196 = vunpack.c.0.s8 %v7195
  %v7197 = vlaneseq
  %v7198 = vshrl.u32 %v7197, 7
  %v7199 = vsub.s32 %v7196, %v7198
  %v7200 = vrot.slane %v7172, %v7199
  %v7201 = vcombine.low %v7179, %v7186
  %v7202 = vcombine.low %v7193, %v7200
  %v7204 = vunpack.c.l.s4 1966171168
  %v7205 = vunpack.c.0.s8 %v7204
  %v7206 = vlaneseq
  %v7207 = vshrl.u32 %v7206, 7
  %v7208 = vsub.s32 %v7205, %v7207
  %v7209 = vrot.slane %v7201, %v7208
  %v7211 = vunpack.c.l.s4 1966171168
  %v7212 = vunpack.c.0.s8 %v7211
  %v7213 = vlaneseq
  %v7214 = vshrl.u32 %v7213, 7
  %v7215 = vsub.s32 %v7212, %v7214
  %v7216 = vrot.slane %v7202, %v7215
  %v7217 = vcombine.low %v7209, %v7216
  %v7219 = vunpack.c.l.s4 1966171168
  %v7220 = vunpack.c.0.s8 %v7219
  %v7221 = vlaneseq
  %v7222 = vshrl.u32 %v7221, 7
  %v7223 = vsub.s32 %v7220, %v7222
  %v7224 = vrot.slane %v7168, %v7223
  %v7226 = vunpack.c.l.s4 1966171168
  %v7227 = vunpack.c.0.s8 %v7226
  %v7228 = vlaneseq
  %v7229 = vshrl.u32 %v7228, 7
  %v7230 = vsub.s32 %v7227, %v7229
  %v7231 = vrot.slane %v7224, %v7230
  %v7234 = vpack.i.b16 %v4331, %v4239
  %v7235 = vpack.i.b16 %v4431, %v4429
  %v7236 = vpack.i.b16 %v4234, %v4435
  %v7237 = vpack.i.b16 %v4430, %v4338
  %v7238 = vpack.i.b16 %v4436, %v4432
  %v7239 = vcombine.low %v6251, %v7234
  %v7240 = vcombine.low %v6813, %v7235
  %v7241 = vcombine.low %v7236, %v6254
  %v7242 = vcombine.low %v6676, %v7237
  %v7244 = vunpack.c.l.s4 1966171168
  %v7245 = vunpack.c.0.s8 %v7244
  %v7246 = vlaneseq
  %v7247 = vshrl.u32 %v7246, 7
  %v7248 = vsub.s32 %v7245, %v7247
  %v7249 = vrot.slane %v7239, %v7248
  %v7251 = vunpack.c.l.s4 1966171168
  %v7252 = vunpack.c.0.s8 %v7251
  %v7253 = vlaneseq
  %v7254 = vshrl.u32 %v7253, 7
  %v7255 = vsub.s32 %v7252, %v7254
  %v7256 = vrot.slane %v7240, %v7255
  %v7258 = vunpack.c.l.s4 1966171168
  %v7259 = vunpack.c.0.s8 %v7258
  %v7260 = vlaneseq
  %v7261 = vshrl.u32 %v7260, 7
  %v7262 = vsub.s32 %v7259, %v7261
  %v7263 = vrot.slane %v7241, %v7262
  %v7265 = vunpack.c.l.s4 1966171168
  %v7266 = vunpack.c.0.s8 %v7265
  %v7267 = vlaneseq
  %v7268 = vshrl.u32 %v7267, 7
  %v7269 = vsub.s32 %v7266, %v7268
  %v7270 = vrot.slane %v7242, %v7269
  %v7271 = vcombine.low %v7249, %v7256
  %v7272 = vcombine.low %v7263, %v7270
  %v7274 = vunpack.c.l.s4 1966171168
  %v7275 = vunpack.c.0.s8 %v7274
  %v7276 = vlaneseq
  %v7277 = vshrl.u32 %v7276, 7
  %v7278 = vsub.s32 %v7275, %v7277
  %v7279 = vrot.slane %v7271, %v7278
  %v7281 = vunpack.c.l.s4 1966171168
  %v7282 = vunpack.c.0.s8 %v7281
  %v7283 = vlaneseq
  %v7284 = vshrl.u32 %v7283, 7
  %v7285 = vsub.s32 %v7282, %v7284
  %v7286 = vrot.slane %v7272, %v7285
  %v7287 = vcombine.low %v7279, %v7286
  %v7289 = vunpack.c.l.s4 1966171168
  %v7290 = vunpack.c.0.s8 %v7289
  %v7291 = vlaneseq
  %v7292 = vshrl.u32 %v7291, 7
  %v7293 = vsub.s32 %v7290, %v7292
  %v7294 = vrot.slane %v7238, %v7293
  %v7296 = vunpack.c.l.s4 1966171168
  %v7297 = vunpack.c.0.s8 %v7296
  %v7298 = vlaneseq
  %v7299 = vshrl.u32 %v7298, 7
  %v7300 = vsub.s32 %v7297, %v7299
  %v7301 = vrot.slane %v7294, %v7300
  %v7304 = vpack.i.b16 %v4333, %v4241
  %v7305 = vpack.i.b16 %v4435, %v4431
  %v7306 = vpack.i.b16 %v4236, %v4437
  %v7307 = vpack.i.b16 %v4432, %v4340
  %v7308 = vpack.i.b16 %v4438, %v4436
  %v7309 = vcombine.low %v6321, %v7304
  %v7310 = vcombine.low %v6884, %v7305
  %v7311 = vcombine.low %v7306, %v6324
  %v7312 = vcombine.low %v6746, %v7307
  %v7314 = vunpack.c.l.s4 1966171168
  %v7315 = vunpack.c.0.s8 %v7314
  %v7316 = vlaneseq
  %v7317 = vshrl.u32 %v7316, 7
  %v7318 = vsub.s32 %v7315, %v7317
  %v7319 = vrot.slane %v7309, %v7318
  %v7321 = vunpack.c.l.s4 1966171168
  %v7322 = vunpack.c.0.s8 %v7321
  %v7323 = vlaneseq
  %v7324 = vshrl.u32 %v7323, 7
  %v7325 = vsub.s32 %v7322, %v7324
  %v7326 = vrot.slane %v7310, %v7325
  %v7328 = vunpack.c.l.s4 1966171168
  %v7329 = vunpack.c.0.s8 %v7328
  %v7330 = vlaneseq
  %v7331 = vshrl.u32 %v7330, 7
  %v7332 = vsub.s32 %v7329, %v7331
  %v7333 = vrot.slane %v7311, %v7332
  %v7335 = vunpack.c.l.s4 1966171168
  %v7336 = vunpack.c.0.s8 %v7335
  %v7337 = vlaneseq
  %v7338 = vshrl.u32 %v7337, 7
  %v7339 = vsub.s32 %v7336, %v7338
  %v7340 = vrot.slane %v7312, %v7339
  %v7341 = vcombine.low %v7319, %v7326
  %v7342 = vcombine.low %v7333, %v7340
  %v7344 = vunpack.c.l.s4 1966171168
  %v7345 = vunpack.c.0.s8 %v7344
  %v7346 = vlaneseq
  %v7347 = vshrl.u32 %v7346, 7
  %v7348 = vsub.s32 %v7345, %v7347
  %v7349 = vrot.slane %v7341, %v7348
  %v7351 = vunpack.c.l.s4 1966171168
  %v7352 = vunpack.c.0.s8 %v7351
  %v7353 = vlaneseq
  %v7354 = vshrl.u32 %v7353, 7
  %v7355 = vsub.s32 %v7352, %v7354
  %v7356 = vrot.slane %v7342, %v7355
  %v7357 = vcombine.low %v7349, %v7356
  %v7359 = vunpack.c.l.s4 1966171168
  %v7360 = vunpack.c.0.s8 %v7359
  %v7361 = vlaneseq
  %v7362 = vshrl.u32 %v7361, 7
  %v7363 = vsub.s32 %v7360, %v7362
  %v7364 = vrot.slane %v7308, %v7363
  %v7366 = vunpack.c.l.s4 1966171168
  %v7367 = vunpack.c.0.s8 %v7366
  %v7368 = vlaneseq
  %v7369 = vshrl.u32 %v7368, 7
  %v7370 = vsub.s32 %v7367, %v7369
  %v7371 = vrot.slane %v7364, %v7370
  %v7374 = vpack.i.b16 %v4337, %v4273
  %v7375 = vpack.i.b16 %v4371, %v4339
  %v7376 = vpack.i.b16 %v4437, %v4435
  %v7377 = vpack.i.b16 %v4240, %v4469
  %v7378 = vpack.i.b16 %v4436, %v4372
  %v7379 = vpack.i.b16 %v4470, %v4438
  %v7380 = vcombine.low %v6392, %v7374
  %v7381 = vcombine.low %v7375, %v7376
  %v7382 = vcombine.low %v7377, %v6395
  %v7383 = vcombine.low %v6816, %v7378
  %v7385 = vunpack.c.l.s4 1966171168
  %v7386 = vunpack.c.0.s8 %v7385
  %v7387 = vlaneseq
  %v7388 = vshrl.u32 %v7387, 7
  %v7389 = vsub.s32 %v7386, %v7388
  %v7390 = vrot.slane %v7380, %v7389
  %v7392 = vunpack.c.l.s4 1966171168
  %v7393 = vunpack.c.0.s8 %v7392
  %v7394 = vlaneseq
  %v7395 = vshrl.u32 %v7394, 7
  %v7396 = vsub.s32 %v7393, %v7395
  %v7397 = vrot.slane %v7381, %v7396
  %v7399 = vunpack.c.l.s4 1966171168
  %v7400 = vunpack.c.0.s8 %v7399
  %v7401 = vlaneseq
  %v7402 = vshrl.u32 %v7401, 7
  %v7403 = vsub.s32 %v7400, %v7402
  %v7404 = vrot.slane %v7382, %v7403
  %v7406 = vunpack.c.l.s4 1966171168
  %v7407 = vunpack.c.0.s8 %v7406
  %v7408 = vlaneseq
  %v7409 = vshrl.u32 %v7408, 7
  %v7410 = vsub.s32 %v7407, %v7409
  %v7411 = vrot.slane %v7383, %v7410
  %v7412 = vcombine.low %v7390, %v7397
  %v7413 = vcombine.low %v7404, %v7411
  %v7415 = vunpack.c.l.s4 1966171168
  %v7416 = vunpack.c.0.s8 %v7415
  %v7417 = vlaneseq
  %v7418 = vshrl.u32 %v7417, 7
  %v7419 = vsub.s32 %v7416, %v7418
  %v7420 = vrot.slane %v7412, %v7419
  %v7422 = vunpack.c.l.s4 1966171168
  %v7423 = vunpack.c.0.s8 %v7422
  %v7424 = vlaneseq
  %v7425 = vshrl.u32 %v7424, 7
  %v7426 = vsub.s32 %v7423, %v7425
  %v7427 = vrot.slane %v7413, %v7426
  %v7428 = vcombine.low %v7420, %v7427
  %v7430 = vunpack.c.l.s4 1966171168
  %v7431 = vunpack.c.0.s8 %v7430
  %v7432 = vlaneseq
  %v7433 = vshrl.u32 %v7432, 7
  %v7434 = vsub.s32 %v7431, %v7433
  %v7435 = vrot.slane %v7379, %v7434
  %v7437 = vunpack.c.l.s4 1966171168
  %v7438 = vunpack.c.0.s8 %v7437
  %v7439 = vlaneseq
  %v7440 = vshrl.u32 %v7439, 7
  %v7441 = vsub.s32 %v7438, %v7440
  %v7442 = vrot.slane %v7435, %v7441
  %v7445 = vpack.i.b16 %v4419, %v4323
  %v7446 = vpack.i.b16 %v4324, %v3853
  %v7447 = vpack.i.b16 %v4423, %v4422
  %v7448 = vpack.i.b16 %v3851, %v4424
  %v7449 = vcombine.low %v6462, %v7445
  %v7450 = vcombine.low %v7025, %v4471
  %v7451 = vcombine.low %v7446, %v6466
  %v7452 = vcombine.low %v7447, %v7448
  %v7454 = vunpack.c.l.s4 1966171168
  %v7455 = vunpack.c.0.s8 %v7454
  %v7456 = vlaneseq
  %v7457 = vshrl.u32 %v7456, 7
  %v7458 = vsub.s32 %v7455, %v7457
  %v7459 = vrot.slane %v7449, %v7458
  %v7461 = vunpack.c.l.s4 1966171168
  %v7462 = vunpack.c.0.s8 %v7461
  %v7463 = vlaneseq
  %v7464 = vshrl.u32 %v7463, 7
  %v7465 = vsub.s32 %v7462, %v7464
  %v7466 = vrot.slane %v7450, %v7465
  %v7468 = vunpack.c.l.s4 1966171168
  %v7469 = vunpack.c.0.s8 %v7468
  %v7470 = vlaneseq
  %v7471 = vshrl.u32 %v7470, 7
  %v7472 = vsub.s32 %v7469, %v7471
  %v7473 = vrot.slane %v7451, %v7472
  %v7475 = vunpack.c.l.s4 1966171168
  %v7476 = vunpack.c.0.s8 %v7475
  %v7477 = vlaneseq
  %v7478 = vshrl.u32 %v7477, 7
  %v7479 = vsub.s32 %v7476, %v7478
  %v7480 = vrot.slane %v7452, %v7479
  %v7481 = vcombine.low %v7459, %v7466
  %v7482 = vcombine.low %v7473, %v7480
  %v7484 = vunpack.c.l.s4 1966171168
  %v7485 = vunpack.c.0.s8 %v7484
  %v7486 = vlaneseq
  %v7487 = vshrl.u32 %v7486, 7
  %v7488 = vsub.s32 %v7485, %v7487
  %v7489 = vrot.slane %v7481, %v7488
  %v7491 = vunpack.c.l.s4 1966171168
  %v7492 = vunpack.c.0.s8 %v7491
  %v7493 = vlaneseq
  %v7494 = vshrl.u32 %v7493, 7
  %v7495 = vsub.s32 %v7492, %v7494
  %v7496 = vrot.slane %v7482, %v7495
  %v7497 = vcombine.low %v7489, %v7496
  %v7499 = vunpack.c.l.s4 1966171168
  %v7500 = vunpack.c.0.s8 %v7499
  %v7501 = vlaneseq
  %v7502 = vshrl.u32 %v7501, 7
  %v7503 = vsub.s32 %v7500, %v7502
  %v7504 = vrot.slane %v4476, %v7503
  %v7506 = vunpack.c.l.s4 1966171168
  %v7507 = vunpack.c.0.s8 %v7506
  %v7508 = vlaneseq
  %v7509 = vshrl.u32 %v7508, 7
  %v7510 = vsub.s32 %v7507, %v7509
  %v7511 = vrot.slane %v7504, %v7510
  %v7514 = vpack.i.b16 %v4420, %v4327
  %v7515 = vpack.i.b16 %v4325, %v3866
  %v7516 = vpack.i.b16 %v3852, %v4426
  %v7517 = vcombine.low %v6533, %v7514
  %v7518 = vcombine.low %v7095, %v4476
  %v7519 = vcombine.low %v7515, %v6536
  %v7520 = vcombine.low %v6958, %v7516
  %v7522 = vunpack.c.l.s4 1966171168
  %v7523 = vunpack.c.0.s8 %v7522
  %v7524 = vlaneseq
  %v7525 = vshrl.u32 %v7524, 7
  %v7526 = vsub.s32 %v7523, %v7525
  %v7527 = vrot.slane %v7517, %v7526
  %v7529 = vunpack.c.l.s4 1966171168
  %v7530 = vunpack.c.0.s8 %v7529
  %v7531 = vlaneseq
  %v7532 = vshrl.u32 %v7531, 7
  %v7533 = vsub.s32 %v7530, %v7532
  %v7534 = vrot.slane %v7518, %v7533
  %v7536 = vunpack.c.l.s4 1966171168
  %v7537 = vunpack.c.0.s8 %v7536
  %v7538 = vlaneseq
  %v7539 = vshrl.u32 %v7538, 7
  %v7540 = vsub.s32 %v7537, %v7539
  %v7541 = vrot.slane %v7519, %v7540
  %v7543 = vunpack.c.l.s4 1966171168
  %v7544 = vunpack.c.0.s8 %v7543
  %v7545 = vlaneseq
  %v7546 = vshrl.u32 %v7545, 7
  %v7547 = vsub.s32 %v7544, %v7546
  %v7548 = vrot.slane %v7520, %v7547
  %v7549 = vcombine.low %v7527, %v7534
  %v7550 = vcombine.low %v7541, %v7548
  %v7552 = vunpack.c.l.s4 1966171168
  %v7553 = vunpack.c.0.s8 %v7552
  %v7554 = vlaneseq
  %v7555 = vshrl.u32 %v7554, 7
  %v7556 = vsub.s32 %v7553, %v7555
  %v7557 = vrot.slane %v7549, %v7556
  %v7559 = vunpack.c.l.s4 1966171168
  %v7560 = vunpack.c.0.s8 %v7559
  %v7561 = vlaneseq
  %v7562 = vshrl.u32 %v7561, 7
  %v7563 = vsub.s32 %v7560, %v7562
  %v7564 = vrot.slane %v7550, %v7563
  %v7565 = vcombine.low %v7557, %v7564
  %v7567 = vunpack.c.l.s4 1966171168
  %v7568 = vunpack.c.0.s8 %v7567
  %v7569 = vlaneseq
  %v7570 = vshrl.u32 %v7569, 7
  %v7571 = vsub.s32 %v7568, %v7570
  %v7572 = vrot.slane %v4549, %v7571
  %v7574 = vunpack.c.l.s4 1966171168
  %v7575 = vunpack.c.0.s8 %v7574
  %v7576 = vlaneseq
  %v7577 = vshrl.u32 %v7576, 7
  %v7578 = vsub.s32 %v7575, %v7577
  %v7579 = vrot.slane %v7572, %v7578
  %v7582 = vpack.i.b16 %v4421, %v4331
  %v7583 = vpack.i.b16 %v4326, %v3876
  %v7584 = vpack.i.b16 %v3853, %v4430
  %v7585 = vcombine.low %v6603, %v7582
  %v7586 = vcombine.low %v7165, %v4549
  %v7587 = vcombine.low %v7583, %v6606
  %v7588 = vcombine.low %v7028, %v7584
  %v7590 = vunpack.c.l.s4 1966171168
  %v7591 = vunpack.c.0.s8 %v7590
  %v7592 = vlaneseq
  %v7593 = vshrl.u32 %v7592, 7
  %v7594 = vsub.s32 %v7591, %v7593
  %v7595 = vrot.slane %v7585, %v7594
  %v7597 = vunpack.c.l.s4 1966171168
  %v7598 = vunpack.c.0.s8 %v7597
  %v7599 = vlaneseq
  %v7600 = vshrl.u32 %v7599, 7
  %v7601 = vsub.s32 %v7598, %v7600
  %v7602 = vrot.slane %v7586, %v7601
  %v7604 = vunpack.c.l.s4 1966171168
  %v7605 = vunpack.c.0.s8 %v7604
  %v7606 = vlaneseq
  %v7607 = vshrl.u32 %v7606, 7
  %v7608 = vsub.s32 %v7605, %v7607
  %v7609 = vrot.slane %v7587, %v7608
  %v7611 = vunpack.c.l.s4 1966171168
  %v7612 = vunpack.c.0.s8 %v7611
  %v7613 = vlaneseq
  %v7614 = vshrl.u32 %v7613, 7
  %v7615 = vsub.s32 %v7612, %v7614
  %v7616 = vrot.slane %v7588, %v7615
  %v7617 = vcombine.low %v7595, %v7602
  %v7618 = vcombine.low %v7609, %v7616
  %v7620 = vunpack.c.l.s4 1966171168
  %v7621 = vunpack.c.0.s8 %v7620
  %v7622 = vlaneseq
  %v7623 = vshrl.u32 %v7622, 7
  %v7624 = vsub.s32 %v7621, %v7623
  %v7625 = vrot.slane %v7617, %v7624
  %v7627 = vunpack.c.l.s4 1966171168
  %v7628 = vunpack.c.0.s8 %v7627
  %v7629 = vlaneseq
  %v7630 = vshrl.u32 %v7629, 7
  %v7631 = vsub.s32 %v7628, %v7630
  %v7632 = vrot.slane %v7618, %v7631
  %v7633 = vcombine.low %v7625, %v7632
  %v7635 = vunpack.c.l.s4 1966171168
  %v7636 = vunpack.c.0.s8 %v7635
  %v7637 = vlaneseq
  %v7638 = vshrl.u32 %v7637, 7
  %v7639 = vsub.s32 %v7636, %v7638
  %v7640 = vrot.slane %v4622, %v7639
  %v7642 = vunpack.c.l.s4 1966171168
  %v7643 = vunpack.c.0.s8 %v7642
  %v7644 = vlaneseq
  %v7645 = vshrl.u32 %v7644, 7
  %v7646 = vsub.s32 %v7643, %v7645
  %v7647 = vrot.slane %v7640, %v7646
  %v7650 = vpack.i.b16 %v4425, %v4333
  %v7651 = vpack.i.b16 %v4328, %v3881
  %v7652 = vpack.i.b16 %v3866, %v4432
  %v7653 = vcombine.low %v6673, %v7650
  %v7654 = vcombine.low %v7235, %v4622
  %v7655 = vcombine.low %v7651, %v6676
  %v7656 = vcombine.low %v7098, %v7652
  %v7658 = vunpack.c.l.s4 1966171168
  %v7659 = vunpack.c.0.s8 %v7658
  %v7660 = vlaneseq
  %v7661 = vshrl.u32 %v7660, 7
  %v7662 = vsub.s32 %v7659, %v7661
  %v7663 = vrot.slane %v7653, %v7662
  %v7665 = vunpack.c.l.s4 1966171168
  %v7666 = vunpack.c.0.s8 %v7665
  %v7667 = vlaneseq
  %v7668 = vshrl.u32 %v7667, 7
  %v7669 = vsub.s32 %v7666, %v7668
  %v7670 = vrot.slane %v7654, %v7669
  %v7672 = vunpack.c.l.s4 1966171168
  %v7673 = vunpack.c.0.s8 %v7672
  %v7674 = vlaneseq
  %v7675 = vshrl.u32 %v7674, 7
  %v7676 = vsub.s32 %v7673, %v7675
  %v7677 = vrot.slane %v7655, %v7676
  %v7679 = vunpack.c.l.s4 1966171168
  %v7680 = vunpack.c.0.s8 %v7679
  %v7681 = vlaneseq
  %v7682 = vshrl.u32 %v7681, 7
  %v7683 = vsub.s32 %v7680, %v7682
  %v7684 = vrot.slane %v7656, %v7683
  %v7685 = vcombine.low %v7663, %v7670
  %v7686 = vcombine.low %v7677, %v7684
  %v7688 = vunpack.c.l.s4 1966171168
  %v7689 = vunpack.c.0.s8 %v7688
  %v7690 = vlaneseq
  %v7691 = vshrl.u32 %v7690, 7
  %v7692 = vsub.s32 %v7689, %v7691
  %v7693 = vrot.slane %v7685, %v7692
  %v7695 = vunpack.c.l.s4 1966171168
  %v7696 = vunpack.c.0.s8 %v7695
  %v7697 = vlaneseq
  %v7698 = vshrl.u32 %v7697, 7
  %v7699 = vsub.s32 %v7696, %v7698
  %v7700 = vrot.slane %v7686, %v7699
  %v7701 = vcombine.low %v7693, %v7700
  %v7703 = vunpack.c.l.s4 1966171168
  %v7704 = vunpack.c.0.s8 %v7703
  %v7705 = vlaneseq
  %v7706 = vshrl.u32 %v7705, 7
  %v7707 = vsub.s32 %v7704, %v7706
  %v7708 = vrot.slane %v4695, %v7707
  %v7710 = vunpack.c.l.s4 1966171168
  %v7711 = vunpack.c.0.s8 %v7710
  %v7712 = vlaneseq
  %v7713 = vshrl.u32 %v7712, 7
  %v7714 = vsub.s32 %v7711, %v7713
  %v7715 = vrot.slane %v7708, %v7714
  %v7718 = vpack.i.b16 %v4429, %v4337
  %v7719 = vpack.i.b16 %v4332, %v3891
  %v7720 = vpack.i.b16 %v3876, %v4436
  %v7721 = vcombine.low %v6743, %v7718
  %v7722 = vcombine.low %v7305, %v4695
  %v7723 = vcombine.low %v7719, %v6746
  %v7724 = vcombine.low %v7168, %v7720
  %v7726 = vunpack.c.l.s4 1966171168
  %v7727 = vunpack.c.0.s8 %v7726
  %v7728 = vlaneseq
  %v7729 = vshrl.u32 %v7728, 7
  %v7730 = vsub.s32 %v7727, %v7729
  %v7731 = vrot.slane %v7721, %v7730
  %v7733 = vunpack.c.l.s4 1966171168
  %v7734 = vunpack.c.0.s8 %v7733
  %v7735 = vlaneseq
  %v7736 = vshrl.u32 %v7735, 7
  %v7737 = vsub.s32 %v7734, %v7736
  %v7738 = vrot.slane %v7722, %v7737
  %v7740 = vunpack.c.l.s4 1966171168
  %v7741 = vunpack.c.0.s8 %v7740
  %v7742 = vlaneseq
  %v7743 = vshrl.u32 %v7742, 7
  %v7744 = vsub.s32 %v7741, %v7743
  %v7745 = vrot.slane %v7723, %v7744
  %v7747 = vunpack.c.l.s4 1966171168
  %v7748 = vunpack.c.0.s8 %v7747
  %v7749 = vlaneseq
  %v7750 = vshrl.u32 %v7749, 7
  %v7751 = vsub.s32 %v7748, %v7750
  %v7752 = vrot.slane %v7724, %v7751
  %v7753 = vcombine.low %v7731, %v7738
  %v7754 = vcombine.low %v7745, %v7752
  %v7756 = vunpack.c.l.s4 1966171168
  %v7757 = vunpack.c.0.s8 %v7756
  %v7758 = vlaneseq
  %v7759 = vshrl.u32 %v7758, 7
  %v7760 = vsub.s32 %v7757, %v7759
  %v7761 = vrot.slane %v7753, %v7760
  %v7763 = vunpack.c.l.s4 1966171168
  %v7764 = vunpack.c.0.s8 %v7763
  %v7765 = vlaneseq
  %v7766 = vshrl.u32 %v7765, 7
  %v7767 = vsub.s32 %v7764, %v7766
  %v7768 = vrot.slane %v7754, %v7767
  %v7769 = vcombine.low %v7761, %v7768
  %v7771 = vunpack.c.l.s4 1966171168
  %v7772 = vunpack.c.0.s8 %v7771
  %v7773 = vlaneseq
  %v7774 = vshrl.u32 %v7773, 7
  %v7775 = vsub.s32 %v7772, %v7774
  %v7776 = vrot.slane %v4768, %v7775
  %v7778 = vunpack.c.l.s4 1966171168
  %v7779 = vunpack.c.0.s8 %v7778
  %v7780 = vlaneseq
  %v7781 = vshrl.u32 %v7780, 7
  %v7782 = vsub.s32 %v7779, %v7781
  %v7783 = vrot.slane %v7776, %v7782
  %v7786 = vpack.i.b16 %v4431, %v4339
  %v7787 = vpack.i.b16 %v4334, %v3896
  %v7788 = vpack.i.b16 %v3881, %v4438
  %v7789 = vcombine.low %v6813, %v7786
  %v7790 = vcombine.low %v7376, %v4768
  %v7791 = vcombine.low %v7787, %v6816
  %v7792 = vcombine.low %v7238, %v7788
  %v7794 = vunpack.c.l.s4 1966171168
  %v7795 = vunpack.c.0.s8 %v7794
  %v7796 = vlaneseq
  %v7797 = vshrl.u32 %v7796, 7
  %v7798 = vsub.s32 %v7795, %v7797
  %v7799 = vrot.slane %v7789, %v7798
  %v7801 = vunpack.c.l.s4 1966171168
  %v7802 = vunpack.c.0.s8 %v7801
  %v7803 = vlaneseq
  %v7804 = vshrl.u32 %v7803, 7
  %v7805 = vsub.s32 %v7802, %v7804
  %v7806 = vrot.slane %v7790, %v7805
  %v7808 = vunpack.c.l.s4 1966171168
  %v7809 = vunpack.c.0.s8 %v7808
  %v7810 = vlaneseq
  %v7811 = vshrl.u32 %v7810, 7
  %v7812 = vsub.s32 %v7809, %v7811
  %v7813 = vrot.slane %v7791, %v7812
  %v7815 = vunpack.c.l.s4 1966171168
  %v7816 = vunpack.c.0.s8 %v7815
  %v7817 = vlaneseq
  %v7818 = vshrl.u32 %v7817, 7
  %v7819 = vsub.s32 %v7816, %v7818
  %v7820 = vrot.slane %v7792, %v7819
  %v7821 = vcombine.low %v7799, %v7806
  %v7822 = vcombine.low %v7813, %v7820
  %v7824 = vunpack.c.l.s4 1966171168
  %v7825 = vunpack.c.0.s8 %v7824
  %v7826 = vlaneseq
  %v7827 = vshrl.u32 %v7826, 7
  %v7828 = vsub.s32 %v7825, %v7827
  %v7829 = vrot.slane %v7821, %v7828
  %v7831 = vunpack.c.l.s4 1966171168
  %v7832 = vunpack.c.0.s8 %v7831
  %v7833 = vlaneseq
  %v7834 = vshrl.u32 %v7833, 7
  %v7835 = vsub.s32 %v7832, %v7834
  %v7836 = vrot.slane %v7822, %v7835
  %v7837 = vcombine.low %v7829, %v7836
  %v7839 = vunpack.c.l.s4 1966171168
  %v7840 = vunpack.c.0.s8 %v7839
  %v7841 = vlaneseq
  %v7842 = vshrl.u32 %v7841, 7
  %v7843 = vsub.s32 %v7840, %v7842
  %v7844 = vrot.slane %v4841, %v7843
  %v7846 = vunpack.c.l.s4 1966171168
  %v7847 = vunpack.c.0.s8 %v7846
  %v7848 = vlaneseq
  %v7849 = vshrl.u32 %v7848, 7
  %v7850 = vsub.s32 %v7847, %v7849
  %v7851 = vrot.slane %v7844, %v7850
  %v7854 = vpack.i.b16 %v4435, %v4371
  %v7855 = vpack.i.b16 %v4469, %v4437
  %v7856 = vpack.i.b16 %v4338, %v3976
  %v7857 = vpack.i.b16 %v3891, %v4470
  %v7858 = vcombine.low %v6884, %v7854
  %v7859 = vcombine.low %v7855, %v4841
  %v7860 = vcombine.low %v7856, %v6887
  %v7861 = vcombine.low %v7308, %v7857
  %v7863 = vunpack.c.l.s4 1966171168
  %v7864 = vunpack.c.0.s8 %v7863
  %v7865 = vlaneseq
  %v7866 = vshrl.u32 %v7865, 7
  %v7867 = vsub.s32 %v7864, %v7866
  %v7868 = vrot.slane %v7858, %v7867
  %v7870 = vunpack.c.l.s4 1966171168
  %v7871 = vunpack.c.0.s8 %v7870
  %v7872 = vlaneseq
  %v7873 = vshrl.u32 %v7872, 7
  %v7874 = vsub.s32 %v7871, %v7873
  %v7875 = vrot.slane %v7859, %v7874
  %v7877 = vunpack.c.l.s4 1966171168
  %v7878 = vunpack.c.0.s8 %v7877
  %v7879 = vlaneseq
  %v7880 = vshrl.u32 %v7879, 7
  %v7881 = vsub.s32 %v7878, %v7880
  %v7882 = vrot.slane %v7860, %v7881
  %v7884 = vunpack.c.l.s4 1966171168
  %v7885 = vunpack.c.0.s8 %v7884
  %v7886 = vlaneseq
  %v7887 = vshrl.u32 %v7886, 7
  %v7888 = vsub.s32 %v7885, %v7887
  %v7889 = vrot.slane %v7861, %v7888
  %v7890 = vcombine.low %v7868, %v7875
  %v7891 = vcombine.low %v7882, %v7889
  %v7893 = vunpack.c.l.s4 1966171168
  %v7894 = vunpack.c.0.s8 %v7893
  %v7895 = vlaneseq
  %v7896 = vshrl.u32 %v7895, 7
  %v7897 = vsub.s32 %v7894, %v7896
  %v7898 = vrot.slane %v7890, %v7897
  %v7900 = vunpack.c.l.s4 1966171168
  %v7901 = vunpack.c.0.s8 %v7900
  %v7902 = vlaneseq
  %v7903 = vshrl.u32 %v7902, 7
  %v7904 = vsub.s32 %v7901, %v7903
  %v7905 = vrot.slane %v7891, %v7904
  %v7906 = vcombine.low %v7898, %v7905
  %v7908 = vunpack.c.l.s4 1966171168
  %v7909 = vunpack.c.0.s8 %v7908
  %v7910 = vlaneseq
  %v7911 = vshrl.u32 %v7910, 7
  %v7912 = vsub.s32 %v7909, %v7911
  %v7913 = vrot.slane %v4914, %v7912
  %v7915 = vunpack.c.l.s4 1966171168
  %v7916 = vunpack.c.0.s8 %v7915
  %v7917 = vlaneseq
  %v7918 = vshrl.u32 %v7917, 7
  %v7919 = vsub.s32 %v7916, %v7918
  %v7920 = vrot.slane %v7913, %v7919
  %v7923 = vld [vmem:[%s2] sm:$0xf]
  %v7924 = vld [vmem:[%s2 + $0x4] sm:$0xf]
  %v7925 = vld [vmem:[%s2 + $0x8] sm:$0xf]
  %v7926 = vld [vmem:[%s2 + $0xc] sm:$0xf]
  %v7927 = vld [vmem:[%s2 + $0x10] sm:$0xf]
  %v7928 = vld [vmem:[%s2 + $0x14] sm:$0xf]
  %v7929 = vld [vmem:[%s2 + $0x18] sm:$0xf]
  %v7930 = vld [vmem:[%s2 + $0x1c] sm:$0xf]
  %v7931 = vld [vmem:[%s2 + $0x20] sm:$0xf]
  %v7932 = vld [vmem:[%s2 + $0x24] sm:$0xf]
  %v7933 = vld [vmem:[%s2 + $0x28] sm:$0xf]
  %v7934 = vld [vmem:[%s2 + $0x2c] sm:$0xf]
  %v7935 = vld [vmem:[%s2 + $0x30] sm:$0xf]
  %v7936 = vld [vmem:[%s2 + $0x34] sm:$0xf]
  %v7937 = vld [vmem:[%s2 + $0x38] sm:$0xf]
  %v7938 = vld [vmem:[%s2 + $0x3c] sm:$0xf]
  %v7939 = vld [vmem:[%s2 + $0x40] sm:$0xf]
  %v7940 = vld [vmem:[%s2 + $0x44] sm:$0xf]
  %v7941 = vld [vmem:[%s2 + $0x48] sm:$0xf]
  %v7942 = vld [vmem:[%s2 + $0x4c] sm:$0xf]
  %v7943 = vld [vmem:[%s2 + $0x50] sm:$0xf]
  %v7944 = vld [vmem:[%s2 + $0x54] sm:$0xf]
  %v7945 = vld [vmem:[%s2 + $0x58] sm:$0xf]
  %v7946 = vld [vmem:[%s2 + $0x5c] sm:$0xf]
  %v7947 = vld [vmem:[%s2 + $0x60] sm:$0xf]
  %v7948 = vld [vmem:[%s2 + $0x64] sm:$0xf]
  %v7949 = vld [vmem:[%s2 + $0x68] sm:$0xf]
  %v7950 = vld [vmem:[%s2 + $0x6c] sm:$0xf]
  %v7951 = vld [vmem:[%s2 + $0x70] sm:$0xf]
  %v7952 = vld [vmem:[%s2 + $0x74] sm:$0xf]
  %v7953 = vld [vmem:[%s2 + $0x78] sm:$0xf]
  %v7954 = vld [vmem:[%s2 + $0x7c] sm:$0xf]
  %v7955 = vld [vmem:[%s2 + $0x80] sm:$0xf]
  %v7956 = vld [vmem:[%s2 + $0x84] sm:$0xf]
  %v7957 = vld [vmem:[%s2 + $0x88] sm:$0xf]
  %v7958 = vld [vmem:[%s2 + $0x8c] sm:$0xf]
  %v7959 = vld [vmem:[%s2 + $0x90] sm:$0xf]
  %v7960 = vld [vmem:[%s2 + $0x94] sm:$0xf]
  %v7961 = vld [vmem:[%s2 + $0x98] sm:$0xf]
  %v7962 = vld [vmem:[%s2 + $0x9c] sm:$0xf]
  %v7963 = vld [vmem:[%s2 + $0xa0] sm:$0xf]
  %v7964 = vld [vmem:[%s2 + $0xa4] sm:$0xf]
  %v7965 = vld [vmem:[%s2 + $0xa8] sm:$0xf]
  %v7966 = vld [vmem:[%s2 + $0xac] sm:$0xf]
  %v7967 = vld [vmem:[%s2 + $0xb0] sm:$0xf]
  %v7968 = vld [vmem:[%s2 + $0xb4] sm:$0xf]
  %v7969 = vld [vmem:[%s2 + $0xb8] sm:$0xf]
  %v7970 = vld [vmem:[%s2 + $0xbc] sm:$0xf]
  %v7971 = vld [vmem:[%s2 + $0xc0] sm:$0xf]
  %v7972 = vld [vmem:[%s2 + $0xc4] sm:$0xf]
  %v7973 = vld [vmem:[%s2 + $0xc8] sm:$0xf]
  %v7974 = vld [vmem:[%s2 + $0xcc] sm:$0xf]
  %v7975 = vld [vmem:[%s2 + $0xd0] sm:$0xf]
  %v7976 = vld [vmem:[%s2 + $0xd4] sm:$0xf]
  %v7977 = vld [vmem:[%s2 + $0xd8] sm:$0xf]
  %v7978 = vld [vmem:[%s2 + $0xdc] sm:$0xf]
  %v7979 = vld [vmem:[%s2 + $0xe0] sm:$0xf]
  %v7980 = vld [vmem:[%s2 + $0xe4] sm:$0xf]
  %v7981 = vld [vmem:[%s2 + $0xe8] sm:$0xf]
  %v7982 = vld [vmem:[%s2 + $0xec] sm:$0xf]
  %v7983 = vld [vmem:[%s2 + $0xf0] sm:$0xf]
  %v7984 = vld [vmem:[%s2 + $0xf4] sm:$0xf]
  %v7985 = vld [vmem:[%s2 + $0xf8] sm:$0xf]
  %v7986 = vld [vmem:[%s2 + $0xfc] sm:$0xf]
  %v7987 = vld [vmem:[%s2 + $0x100] sm:$0xf]
  %v7988 = vld [vmem:[%s2 + $0x104] sm:$0xf]
  %v7989 = vld [vmem:[%s2 + $0x108] sm:$0xf]
  %v7990 = vld [vmem:[%s2 + $0x10c] sm:$0xf]
  %v7991 = vld [vmem:[%s2 + $0x110] sm:$0xf]
  %v7992 = vld [vmem:[%s2 + $0x114] sm:$0xf]
  %v7993 = vld [vmem:[%s2 + $0x118] sm:$0xf]
  %v7994 = vld [vmem:[%s2 + $0x11c] sm:$0xf]
  %v7995 = vld [vmem:[%s2 + $0x120] sm:$0xf]
  %v7996 = vld [vmem:[%s2 + $0x124] sm:$0xf]
  %v7997 = vld [vmem:[%s2 + $0x128] sm:$0xf]
  %v7998 = vld [vmem:[%s2 + $0x12c] sm:$0xf]
  %v7999 = vld [vmem:[%s2 + $0x130] sm:$0xf]
  %v8000 = vld [vmem:[%s2 + $0x134] sm:$0xf]
  %v8001 = vld [vmem:[%s2 + $0x138] sm:$0xf]
  %v8002 = vld [vmem:[%s2 + $0x13c] sm:$0xf]
  %v8003 = vld [vmem:[%s2 + $0x140] sm:$0xf]
  %v8004 = vld [vmem:[%s2 + $0x144] sm:$0xf]
  %v8005 = vld [vmem:[%s2 + $0x148] sm:$0xf]
  %v8006 = vld [vmem:[%s2 + $0x14c] sm:$0xf]
  %v8007 = vld [vmem:[%s2 + $0x150] sm:$0xf]
  %v8008 = vld [vmem:[%s2 + $0x154] sm:$0xf]
  %v8009 = vld [vmem:[%s2 + $0x158] sm:$0xf]
  %v8010 = vld [vmem:[%s2 + $0x15c] sm:$0xf]
  %v8011 = vld [vmem:[%s2 + $0x160] sm:$0xf]
  %v8012 = vld [vmem:[%s2 + $0x164] sm:$0xf]
  %v8013 = vld [vmem:[%s2 + $0x168] sm:$0xf]
  %v8014 = vld [vmem:[%s2 + $0x16c] sm:$0xf]
  %v8015 = vld [vmem:[%s2 + $0x170] sm:$0xf]
  %v8016 = vld [vmem:[%s2 + $0x174] sm:$0xf]
  %v8017 = vld [vmem:[%s2 + $0x178] sm:$0xf]
  %v8018 = vld [vmem:[%s2 + $0x17c] sm:$0xf]
  %v8019 = vld [vmem:[%s2 + $0x180] sm:$0xf]
  %v8020 = vld [vmem:[%s2 + $0x184] sm:$0xf]
  %v8021 = vld [vmem:[%s2 + $0x188] sm:$0xf]
  %v8022 = vld [vmem:[%s2 + $0x18c] sm:$0xf]
  %v8023 = vld [vmem:[%s2 + $0x190] sm:$0xf]
  %v8024 = vld [vmem:[%s2 + $0x194] sm:$0xf]
  %v8025 = vld [vmem:[%s2 + $0x198] sm:$0xf]
  %v8026 = vld [vmem:[%s2 + $0x19c] sm:$0xf]
  %v8027 = vld [vmem:[%s2 + $0x1a0] sm:$0xf]
  %v8028 = vld [vmem:[%s2 + $0x1a4] sm:$0xf]
  %v8029 = vld [vmem:[%s2 + $0x1a8] sm:$0xf]
  %v8030 = vld [vmem:[%s2 + $0x1ac] sm:$0xf]
  %v8031 = vld [vmem:[%s2 + $0x1b0] sm:$0xf]
  %v8032 = vld [vmem:[%s2 + $0x1b4] sm:$0xf]
  %v8033 = vld [vmem:[%s2 + $0x1b8] sm:$0xf]
  %v8034 = vld [vmem:[%s2 + $0x1bc] sm:$0xf]
  %v8035 = vld [vmem:[%s2 + $0x1c0] sm:$0xf]
  %v8036 = vld [vmem:[%s2 + $0x1c4] sm:$0xf]
  %v8037 = vld [vmem:[%s2 + $0x1c8] sm:$0xf]
  %v8038 = vld [vmem:[%s2 + $0x1cc] sm:$0xf]
  %v8039 = vld [vmem:[%s2 + $0x1d0] sm:$0xf]
  %v8040 = vld [vmem:[%s2 + $0x1d4] sm:$0xf]
  %v8041 = vld [vmem:[%s2 + $0x1d8] sm:$0xf]
  %v8042 = vld [vmem:[%s2 + $0x1dc] sm:$0xf]
  %v8043 = vld [vmem:[%s2 + $0x1e0] sm:$0xf]
  %v8044 = vld [vmem:[%s2 + $0x1e4] sm:$0xf]
  %v8045 = vld [vmem:[%s2 + $0x1e8] sm:$0xf]
  %v8046 = vld [vmem:[%s2 + $0x1ec] sm:$0xf]
  %v8047 = vld [vmem:[%s2 + $0x1f0] sm:$0xf]
  %v8048 = vld [vmem:[%s2 + $0x1f4] sm:$0xf]
  %v8049 = vld [vmem:[%s2 + $0x1f8] sm:$0xf]
  %v8050 = vld [vmem:[%s2 + $0x1fc] sm:$0xf]
  %v8051 = vld [vmem:[%s2 + $0x200] sm:$0xf]
  %v8052 = vld [vmem:[%s2 + $0x204] sm:$0xf]
  %v8053 = vld [vmem:[%s2 + $0x208] sm:$0xf]
  %v8054 = vld [vmem:[%s2 + $0x20c] sm:$0xf]
  %v8055 = vld [vmem:[%s2 + $0x210] sm:$0xf]
  %v8056 = vld [vmem:[%s2 + $0x214] sm:$0xf]
  %v8057 = vld [vmem:[%s2 + $0x218] sm:$0xf]
  %v8058 = vld [vmem:[%s2 + $0x21c] sm:$0xf]
  %v8059 = vld [vmem:[%s2 + $0x220] sm:$0xf]
  %v8060 = vld [vmem:[%s2 + $0x224] sm:$0xf]
  %v8061 = vld [vmem:[%s2 + $0x228] sm:$0xf]
  %v8062 = vld [vmem:[%s2 + $0x22c] sm:$0xf]
  %v8063 = vld [vmem:[%s2 + $0x230] sm:$0xf]
  %v8064 = vld [vmem:[%s2 + $0x234] sm:$0xf]
  %v8065 = vld [vmem:[%s2 + $0x238] sm:$0xf]
  %v8066 = vld [vmem:[%s2 + $0x23c] sm:$0xf]
  %v8067 = vld [vmem:[%s2 + $0x240] sm:$0xf]
  %v8068 = vld [vmem:[%s2 + $0x244] sm:$0xf]
  %v8069 = vld [vmem:[%s2 + $0x248] sm:$0xf]
  %v8070 = vld [vmem:[%s2 + $0x24c] sm:$0xf]
  %v8071 = vld [vmem:[%s2 + $0x250] sm:$0xf]
  %v8072 = vld [vmem:[%s2 + $0x254] sm:$0xf]
  %v8073 = vld [vmem:[%s2 + $0x258] sm:$0xf]
  %v8074 = vld [vmem:[%s2 + $0x25c] sm:$0xf]
  %v8075 = vld [vmem:[%s2 + $0x260] sm:$0xf]
  %v8076 = vld [vmem:[%s2 + $0x264] sm:$0xf]
  %v8077 = vld [vmem:[%s2 + $0x268] sm:$0xf]
  %v8078 = vld [vmem:[%s2 + $0x26c] sm:$0xf]
  %v8079 = vld [vmem:[%s2 + $0x270] sm:$0xf]
  %v8080 = vld [vmem:[%s2 + $0x274] sm:$0xf]
  %v8081 = vld [vmem:[%s2 + $0x278] sm:$0xf]
  %v8082 = vld [vmem:[%s2 + $0x27c] sm:$0xf]
  %v8083 = vld [vmem:[%s2 + $0x280] sm:$0xf]
  %v8084 = vld [vmem:[%s2 + $0x284] sm:$0xf]
  %v8085 = vld [vmem:[%s2 + $0x288] sm:$0xf]
  %v8086 = vld [vmem:[%s2 + $0x28c] sm:$0xf]
  %v8087 = vld [vmem:[%s2 + $0x290] sm:$0xf]
  %v8088 = vld [vmem:[%s2 + $0x294] sm:$0xf]
  %v8089 = vld [vmem:[%s2 + $0x298] sm:$0xf]
  %v8090 = vld [vmem:[%s2 + $0x29c] sm:$0xf]
  %v8091 = vld [vmem:[%s2 + $0x2a0] sm:$0xf]
  %v8092 = vld [vmem:[%s2 + $0x2a4] sm:$0xf]
  %v8093 = vld [vmem:[%s2 + $0x2a8] sm:$0xf]
  %v8094 = vld [vmem:[%s2 + $0x2ac] sm:$0xf]
  %v8095 = vld [vmem:[%s2 + $0x2b0] sm:$0xf]
  %v8096 = vld [vmem:[%s2 + $0x2b4] sm:$0xf]
  %v8097 = vld [vmem:[%s2 + $0x2b8] sm:$0xf]
  %v8098 = vld [vmem:[%s2 + $0x2bc] sm:$0xf]
  %v8099 = vld [vmem:[%s2 + $0x2c0] sm:$0xf]
  %v8100 = vld [vmem:[%s2 + $0x2c4] sm:$0xf]
  %v8101 = vld [vmem:[%s2 + $0x2c8] sm:$0xf]
  %v8102 = vld [vmem:[%s2 + $0x2cc] sm:$0xf]
  %v8103 = vld [vmem:[%s2 + $0x2d0] sm:$0xf]
  %v8104 = vld [vmem:[%s2 + $0x2d4] sm:$0xf]
  %v8105 = vld [vmem:[%s2 + $0x2d8] sm:$0xf]
  %v8106 = vld [vmem:[%s2 + $0x2dc] sm:$0xf]
  %v8107 = vld [vmem:[%s2 + $0x2e0] sm:$0xf]
  %v8108 = vld [vmem:[%s2 + $0x2e4] sm:$0xf]
  %v8109 = vld [vmem:[%s2 + $0x2e8] sm:$0xf]
  %v8110 = vld [vmem:[%s2 + $0x2ec] sm:$0xf]
  %v8111 = vld [vmem:[%s2 + $0x2f0] sm:$0xf]
  %v8112 = vld [vmem:[%s2 + $0x2f4] sm:$0xf]
  %v8113 = vld [vmem:[%s2 + $0x2f8] sm:$0xf]
  %v8114 = vld [vmem:[%s2 + $0x2fc] sm:$0xf]
  %v8115 = vld [vmem:[%s2 + $0x300] sm:$0xf]
  %v8116 = vld [vmem:[%s2 + $0x304] sm:$0xf]
  %v8117 = vld [vmem:[%s2 + $0x308] sm:$0xf]
  %v8118 = vld [vmem:[%s2 + $0x30c] sm:$0xf]
  %v8119 = vld [vmem:[%s2 + $0x310] sm:$0xf]
  %v8120 = vld [vmem:[%s2 + $0x314] sm:$0xf]
  %v8121 = vld [vmem:[%s2 + $0x318] sm:$0xf]
  %v8122 = vld [vmem:[%s2 + $0x31c] sm:$0xf]
  %v8123 = vld [vmem:[%s2 + $0x320] sm:$0xf]
  %v8124 = vld [vmem:[%s2 + $0x324] sm:$0xf]
  %v8125 = vld [vmem:[%s2 + $0x328] sm:$0xf]
  %v8126 = vld [vmem:[%s2 + $0x32c] sm:$0xf]
  %v8127 = vld [vmem:[%s2 + $0x330] sm:$0xf]
  %v8128 = vld [vmem:[%s2 + $0x334] sm:$0xf]
  %v8129 = vld [vmem:[%s2 + $0x338] sm:$0xf]
  %v8130 = vld [vmem:[%s2 + $0x33c] sm:$0xf]
  %v8131 = vld [vmem:[%s2 + $0x340] sm:$0xf]
  %v8132 = vld [vmem:[%s2 + $0x344] sm:$0xf]
  %v8133 = vld [vmem:[%s2 + $0x348] sm:$0xf]
  %v8134 = vld [vmem:[%s2 + $0x34c] sm:$0xf]
  %v8135 = vld [vmem:[%s2 + $0x350] sm:$0xf]
  %v8136 = vld [vmem:[%s2 + $0x354] sm:$0xf]
  %v8137 = vld [vmem:[%s2 + $0x358] sm:$0xf]
  %v8138 = vld [vmem:[%s2 + $0x35c] sm:$0xf]
  %v8139 = vld [vmem:[%s2 + $0x360] sm:$0xf]
  %v8140 = vld [vmem:[%s2 + $0x364] sm:$0xf]
  %v8141 = vld [vmem:[%s2 + $0x368] sm:$0xf]
  %v8142 = vld [vmem:[%s2 + $0x36c] sm:$0xf]
  %v8143 = vld [vmem:[%s2 + $0x370] sm:$0xf]
  %v8144 = vld [vmem:[%s2 + $0x374] sm:$0xf]
  %v8145 = vld [vmem:[%s2 + $0x378] sm:$0xf]
  %v8146 = vld [vmem:[%s2 + $0x37c] sm:$0xf]
  %v8147 = vld [vmem:[%s2 + $0x380] sm:$0xf]
  %v8148 = vld [vmem:[%s2 + $0x384] sm:$0xf]
  %v8149 = vld [vmem:[%s2 + $0x388] sm:$0xf]
  %v8150 = vld [vmem:[%s2 + $0x38c] sm:$0xf]
  %v8151 = vld [vmem:[%s2 + $0x390] sm:$0xf]
  %v8152 = vld [vmem:[%s2 + $0x394] sm:$0xf]
  %v8153 = vld [vmem:[%s2 + $0x398] sm:$0xf]
  %v8154 = vld [vmem:[%s2 + $0x39c] sm:$0xf]
  %v8155 = vld [vmem:[%s2 + $0x3a0] sm:$0xf]
  %v8156 = vld [vmem:[%s2 + $0x3a4] sm:$0xf]
  %v8157 = vld [vmem:[%s2 + $0x3a8] sm:$0xf]
  %v8158 = vld [vmem:[%s2 + $0x3ac] sm:$0xf]
  %v8159 = vld [vmem:[%s2 + $0x3b0] sm:$0xf]
  %v8160 = vld [vmem:[%s2 + $0x3b4] sm:$0xf]
  %v8161 = vld [vmem:[%s2 + $0x3b8] sm:$0xf]
  %v8162 = vld [vmem:[%s2 + $0x3bc] sm:$0xf]
  %v8163 = vld [vmem:[%s2 + $0x3c0] sm:$0xf]
  %v8164 = vld [vmem:[%s2 + $0x3c4] sm:$0xf]
  %v8165 = vld [vmem:[%s2 + $0x3c8] sm:$0xf]
  %v8166 = vld [vmem:[%s2 + $0x3cc] sm:$0xf]
  %v8167 = vld [vmem:[%s2 + $0x3d0] sm:$0xf]
  %v8168 = vld [vmem:[%s2 + $0x3d4] sm:$0xf]
  %v8169 = vld [vmem:[%s2 + $0x3d8] sm:$0xf]
  %v8170 = vld [vmem:[%s2 + $0x3dc] sm:$0xf]
  %v8171 = vld [vmem:[%s2 + $0x3e0] sm:$0xf]
  %v8172 = vld [vmem:[%s2 + $0x3e4] sm:$0xf]
  %v8173 = vld [vmem:[%s2 + $0x3e8] sm:$0xf]
  %v8174 = vld [vmem:[%s2 + $0x3ec] sm:$0xf]
  %v8175 = vld [vmem:[%s2 + $0x3f0] sm:$0xf]
  %v8176 = vld [vmem:[%s2 + $0x3f4] sm:$0xf]
  %v8177 = vld [vmem:[%s2 + $0x3f8] sm:$0xf]
  %v8178 = vld [vmem:[%s2 + $0x3fc] sm:$0xf]
  %v8179 = vld [vmem:[%s2 + $0x400] sm:$0xf]
  %v8180 = vld [vmem:[%s2 + $0x404] sm:$0xf]
  %v8181 = vld [vmem:[%s2 + $0x408] sm:$0xf]
  %v8182 = vld [vmem:[%s2 + $0x40c] sm:$0xf]
  %v8183 = vld [vmem:[%s2 + $0x410] sm:$0xf]
  %v8184 = vld [vmem:[%s2 + $0x414] sm:$0xf]
  %v8185 = vld [vmem:[%s2 + $0x418] sm:$0xf]
  %v8186 = vld [vmem:[%s2 + $0x41c] sm:$0xf]
  %v8187 = vld [vmem:[%s2 + $0x420] sm:$0xf]
  %v8188 = vld [vmem:[%s2 + $0x424] sm:$0xf]
  %v8189 = vld [vmem:[%s2 + $0x428] sm:$0xf]
  %v8190 = vld [vmem:[%s2 + $0x42c] sm:$0xf]
  %v8191 = vld [vmem:[%s2 + $0x430] sm:$0xf]
  %v8192 = vld [vmem:[%s2 + $0x434] sm:$0xf]
  %v8193 = vld [vmem:[%s2 + $0x438] sm:$0xf]
  %v8194 = vld [vmem:[%s2 + $0x43c] sm:$0xf]
  %v8195 = vld [vmem:[%s2 + $0x440] sm:$0xf]
  %v8196 = vld [vmem:[%s2 + $0x444] sm:$0xf]
  %v8197 = vld [vmem:[%s2 + $0x448] sm:$0xf]
  %v8198 = vld [vmem:[%s2 + $0x44c] sm:$0xf]
  %v8199 = vld [vmem:[%s2 + $0x450] sm:$0xf]
  %v8200 = vld [vmem:[%s2 + $0x454] sm:$0xf]
  %v8201 = vld [vmem:[%s2 + $0x458] sm:$0xf]
  %v8202 = vld [vmem:[%s2 + $0x45c] sm:$0xf]
  %v8203 = vld [vmem:[%s2 + $0x460] sm:$0xf]
  %v8204 = vld [vmem:[%s2 + $0x464] sm:$0xf]
  %v8205 = vld [vmem:[%s2 + $0x468] sm:$0xf]
  %v8206 = vld [vmem:[%s2 + $0x46c] sm:$0xf]
  %v8207 = vld [vmem:[%s2 + $0x470] sm:$0xf]
  %v8208 = vld [vmem:[%s2 + $0x474] sm:$0xf]
  %v8209 = vld [vmem:[%s2 + $0x478] sm:$0xf]
  %v8210 = vld [vmem:[%s2 + $0x47c] sm:$0xf]
  %v8211 = vld [vmem:[%s2 + $0x480] sm:$0xf]
  %v8212 = vld [vmem:[%s2 + $0x484] sm:$0xf]
  %v8213 = vld [vmem:[%s2 + $0x488] sm:$0xf]
  %v8214 = vld [vmem:[%s2 + $0x48c] sm:$0xf]
  %v8215 = vld [vmem:[%s2 + $0x490] sm:$0xf]
  %v8216 = vld [vmem:[%s2 + $0x494] sm:$0xf]
  %v8217 = vld [vmem:[%s2 + $0x498] sm:$0xf]
  %v8218 = vld [vmem:[%s2 + $0x49c] sm:$0xf]
  %v8219 = vld [vmem:[%s2 + $0x4a0] sm:$0xf]
  %v8220 = vld [vmem:[%s2 + $0x4a4] sm:$0xf]
  %v8221 = vld [vmem:[%s2 + $0x4a8] sm:$0xf]
  %v8222 = vld [vmem:[%s2 + $0x4ac] sm:$0xf]
  %v8223 = vld [vmem:[%s2 + $0x4b0] sm:$0xf]
  %v8224 = vld [vmem:[%s2 + $0x4b4] sm:$0xf]
  %v8225 = vld [vmem:[%s2 + $0x4b8] sm:$0xf]
  %v8226 = vld [vmem:[%s2 + $0x4bc] sm:$0xf]
  %v8227 = vld [vmem:[%s2 + $0x4c0] sm:$0xf]
  %v8228 = vld [vmem:[%s2 + $0x4c4] sm:$0xf]
  %v8229 = vld [vmem:[%s2 + $0x4c8] sm:$0xf]
  %v8230 = vld [vmem:[%s2 + $0x4cc] sm:$0xf]
  %v8231 = vld [vmem:[%s2 + $0x4d0] sm:$0xf]
  %v8232 = vld [vmem:[%s2 + $0x4d4] sm:$0xf]
  %v8233 = vld [vmem:[%s2 + $0x4d8] sm:$0xf]
  %v8234 = vld [vmem:[%s2 + $0x4dc] sm:$0xf]
  %v8235 = vld [vmem:[%s2 + $0x4e0] sm:$0xf]
  %v8236 = vld [vmem:[%s2 + $0x4e4] sm:$0xf]
  %v8237 = vld [vmem:[%s2 + $0x4e8] sm:$0xf]
  %v8238 = vld [vmem:[%s2 + $0x4ec] sm:$0xf]
  %v8239 = vld [vmem:[%s2 + $0x4f0] sm:$0xf]
  %v8240 = vld [vmem:[%s2 + $0x4f4] sm:$0xf]
  %v8241 = vld [vmem:[%s2 + $0x4f8] sm:$0xf]
  %v8242 = vld [vmem:[%s2 + $0x4fc] sm:$0xf]
  %v8243 = vld [vmem:[%s2 + $0x500] sm:$0xf]
  %v8244 = vld [vmem:[%s2 + $0x504] sm:$0xf]
  %v8245 = vld [vmem:[%s2 + $0x508] sm:$0xf]
  %v8246 = vld [vmem:[%s2 + $0x50c] sm:$0xf]
  %v8247 = vld [vmem:[%s2 + $0x510] sm:$0xf]
  %v8248 = vld [vmem:[%s2 + $0x514] sm:$0xf]
  %v8249 = vld [vmem:[%s2 + $0x518] sm:$0xf]
  %v8250 = vld [vmem:[%s2 + $0x51c] sm:$0xf]
  %v8251 = vld [vmem:[%s2 + $0x520] sm:$0xf]
  %v8252 = vld [vmem:[%s2 + $0x524] sm:$0xf]
  %v8253 = vld [vmem:[%s2 + $0x528] sm:$0xf]
  %v8254 = vld [vmem:[%s2 + $0x52c] sm:$0xf]
  %v8255 = vld [vmem:[%s2 + $0x530] sm:$0xf]
  %v8256 = vld [vmem:[%s2 + $0x534] sm:$0xf]
  %v8257 = vld [vmem:[%s2 + $0x538] sm:$0xf]
  %v8258 = vld [vmem:[%s2 + $0x53c] sm:$0xf]
  %v8259 = vld [vmem:[%s2 + $0x540] sm:$0xf]
  %v8260 = vld [vmem:[%s2 + $0x544] sm:$0xf]
  %v8261 = vld [vmem:[%s2 + $0x548] sm:$0xf]
  %v8262 = vld [vmem:[%s2 + $0x54c] sm:$0xf]
  %v8263 = vld [vmem:[%s2 + $0x550] sm:$0xf]
  %v8264 = vld [vmem:[%s2 + $0x554] sm:$0xf]
  %v8265 = vld [vmem:[%s2 + $0x558] sm:$0xf]
  %v8266 = vld [vmem:[%s2 + $0x55c] sm:$0xf]
  %v8267 = vld [vmem:[%s2 + $0x560] sm:$0xf]
  %v8268 = vld [vmem:[%s2 + $0x564] sm:$0xf]
  %v8269 = vld [vmem:[%s2 + $0x568] sm:$0xf]
  %v8270 = vld [vmem:[%s2 + $0x56c] sm:$0xf]
  %v8271 = vld [vmem:[%s2 + $0x570] sm:$0xf]
  %v8272 = vld [vmem:[%s2 + $0x574] sm:$0xf]
  %v8273 = vld [vmem:[%s2 + $0x578] sm:$0xf]
  %v8274 = vld [vmem:[%s2 + $0x57c] sm:$0xf]
  %v8275 = vld [vmem:[%s2 + $0x580] sm:$0xf]
  %v8276 = vld [vmem:[%s2 + $0x584] sm:$0xf]
  %v8277 = vld [vmem:[%s2 + $0x588] sm:$0xf]
  %v8278 = vld [vmem:[%s2 + $0x58c] sm:$0xf]
  %v8279 = vld [vmem:[%s2 + $0x590] sm:$0xf]
  %v8280 = vld [vmem:[%s2 + $0x594] sm:$0xf]
  %v8281 = vld [vmem:[%s2 + $0x598] sm:$0xf]
  %v8282 = vld [vmem:[%s2 + $0x59c] sm:$0xf]
  %v8283 = vld [vmem:[%s2 + $0x5a0] sm:$0xf]
  %v8284 = vld [vmem:[%s2 + $0x5a4] sm:$0xf]
  %v8285 = vld [vmem:[%s2 + $0x5a8] sm:$0xf]
  %v8286 = vld [vmem:[%s2 + $0x5ac] sm:$0xf]
  %v8287 = vld [vmem:[%s2 + $0x5b0] sm:$0xf]
  %v8288 = vld [vmem:[%s2 + $0x5b4] sm:$0xf]
  %v8289 = vld [vmem:[%s2 + $0x5b8] sm:$0xf]
  %v8290 = vld [vmem:[%s2 + $0x5bc] sm:$0xf]
  %v8291 = vld [vmem:[%s2 + $0x5c0] sm:$0xf]
  %v8292 = vld [vmem:[%s2 + $0x5c4] sm:$0xf]
  %v8293 = vld [vmem:[%s2 + $0x5c8] sm:$0xf]
  %v8294 = vld [vmem:[%s2 + $0x5cc] sm:$0xf]
  %v8295 = vld [vmem:[%s2 + $0x5d0] sm:$0xf]
  %v8296 = vld [vmem:[%s2 + $0x5d4] sm:$0xf]
  %v8297 = vld [vmem:[%s2 + $0x5d8] sm:$0xf]
  %v8298 = vld [vmem:[%s2 + $0x5dc] sm:$0xf]
  %v8299 = vld [vmem:[%s2 + $0x5e0] sm:$0xf]
  %v8300 = vld [vmem:[%s2 + $0x5e4] sm:$0xf]
  %v8301 = vld [vmem:[%s2 + $0x5e8] sm:$0xf]
  %v8302 = vld [vmem:[%s2 + $0x5ec] sm:$0xf]
  %v8303 = vld [vmem:[%s2 + $0x5f0] sm:$0xf]
  %v8304 = vld [vmem:[%s2 + $0x5f4] sm:$0xf]
  %v8305 = vld [vmem:[%s2 + $0x5f8] sm:$0xf]
  %v8306 = vld [vmem:[%s2 + $0x5fc] sm:$0xf]
  %v8307 = vld [vmem:[%s2 + $0x600] sm:$0xf]
  %v8308 = vld [vmem:[%s2 + $0x604] sm:$0xf]
  %v8309 = vld [vmem:[%s2 + $0x608] sm:$0xf]
  %v8310 = vld [vmem:[%s2 + $0x60c] sm:$0xf]
  %v8311 = vld [vmem:[%s2 + $0x610] sm:$0xf]
  %v8312 = vld [vmem:[%s2 + $0x614] sm:$0xf]
  %v8313 = vld [vmem:[%s2 + $0x618] sm:$0xf]
  %v8314 = vld [vmem:[%s2 + $0x61c] sm:$0xf]
  %v8315 = vld [vmem:[%s2 + $0x620] sm:$0xf]
  %v8316 = vld [vmem:[%s2 + $0x624] sm:$0xf]
  %v8317 = vld [vmem:[%s2 + $0x628] sm:$0xf]
  %v8318 = vld [vmem:[%s2 + $0x62c] sm:$0xf]
  %v8319 = vld [vmem:[%s2 + $0x630] sm:$0xf]
  %v8320 = vld [vmem:[%s2 + $0x634] sm:$0xf]
  %v8321 = vld [vmem:[%s2 + $0x638] sm:$0xf]
  %v8322 = vld [vmem:[%s2 + $0x63c] sm:$0xf]
  %v8323 = vld [vmem:[%s2 + $0x640] sm:$0xf]
  %v8324 = vld [vmem:[%s2 + $0x644] sm:$0xf]
  %v8325 = vld [vmem:[%s2 + $0x648] sm:$0xf]
  %v8326 = vld [vmem:[%s2 + $0x64c] sm:$0xf]
  %v8327 = vld [vmem:[%s2 + $0x650] sm:$0xf]
  %v8328 = vld [vmem:[%s2 + $0x654] sm:$0xf]
  %v8329 = vld [vmem:[%s2 + $0x658] sm:$0xf]
  %v8330 = vld [vmem:[%s2 + $0x65c] sm:$0xf]
  %v8331 = vld [vmem:[%s2 + $0x660] sm:$0xf]
  %v8332 = vld [vmem:[%s2 + $0x664] sm:$0xf]
  %v8333 = vld [vmem:[%s2 + $0x668] sm:$0xf]
  %v8334 = vld [vmem:[%s2 + $0x66c] sm:$0xf]
  %v8335 = vld [vmem:[%s2 + $0x670] sm:$0xf]
  %v8336 = vld [vmem:[%s2 + $0x674] sm:$0xf]
  %v8337 = vld [vmem:[%s2 + $0x678] sm:$0xf]
  %v8338 = vld [vmem:[%s2 + $0x67c] sm:$0xf]
  %v8339 = vld [vmem:[%s2 + $0x680] sm:$0xf]
  %v8340 = vld [vmem:[%s2 + $0x684] sm:$0xf]
  %v8341 = vld [vmem:[%s2 + $0x688] sm:$0xf]
  %v8342 = vld [vmem:[%s2 + $0x68c] sm:$0xf]
  %v8343 = vld [vmem:[%s2 + $0x690] sm:$0xf]
  %v8344 = vld [vmem:[%s2 + $0x694] sm:$0xf]
  %v8345 = vld [vmem:[%s2 + $0x698] sm:$0xf]
  %v8346 = vld [vmem:[%s2 + $0x69c] sm:$0xf]
  %v8347 = vld [vmem:[%s2 + $0x6a0] sm:$0xf]
  %v8348 = vld [vmem:[%s2 + $0x6a4] sm:$0xf]
  %v8349 = vld [vmem:[%s2 + $0x6a8] sm:$0xf]
  %v8350 = vld [vmem:[%s2 + $0x6ac] sm:$0xf]
  %v8351 = vld [vmem:[%s2 + $0x6b0] sm:$0xf]
  %v8352 = vld [vmem:[%s2 + $0x6b4] sm:$0xf]
  %v8353 = vld [vmem:[%s2 + $0x6b8] sm:$0xf]
  %v8354 = vld [vmem:[%s2 + $0x6bc] sm:$0xf]
  %v8355 = vld [vmem:[%s2 + $0x6c0] sm:$0xf]
  %v8356 = vld [vmem:[%s2 + $0x6c4] sm:$0xf]
  %v8357 = vld [vmem:[%s2 + $0x6c8] sm:$0xf]
  %v8358 = vld [vmem:[%s2 + $0x6cc] sm:$0xf]
  %v8359 = vld [vmem:[%s2 + $0x6d0] sm:$0xf]
  %v8360 = vld [vmem:[%s2 + $0x6d4] sm:$0xf]
  %v8361 = vld [vmem:[%s2 + $0x6d8] sm:$0xf]
  %v8362 = vld [vmem:[%s2 + $0x6dc] sm:$0xf]
  %v8363 = vld [vmem:[%s2 + $0x6e0] sm:$0xf]
  %v8364 = vld [vmem:[%s2 + $0x6e4] sm:$0xf]
  %v8365 = vld [vmem:[%s2 + $0x6e8] sm:$0xf]
  %v8366 = vld [vmem:[%s2 + $0x6ec] sm:$0xf]
  %v8367 = vld [vmem:[%s2 + $0x6f0] sm:$0xf]
  %v8368 = vld [vmem:[%s2 + $0x6f4] sm:$0xf]
  %v8369 = vld [vmem:[%s2 + $0x6f8] sm:$0xf]
  %v8370 = vld [vmem:[%s2 + $0x6fc] sm:$0xf]
  %v8371 = vld [vmem:[%s2 + $0x700] sm:$0xf]
  %v8372 = vld [vmem:[%s2 + $0x704] sm:$0xf]
  %v8373 = vld [vmem:[%s2 + $0x708] sm:$0xf]
  %v8374 = vld [vmem:[%s2 + $0x70c] sm:$0xf]
  %v8375 = vld [vmem:[%s2 + $0x710] sm:$0xf]
  %v8376 = vld [vmem:[%s2 + $0x714] sm:$0xf]
  %v8377 = vld [vmem:[%s2 + $0x718] sm:$0xf]
  %v8378 = vld [vmem:[%s2 + $0x71c] sm:$0xf]
  %v8379 = vld [vmem:[%s2 + $0x720] sm:$0xf]
  %v8380 = vld [vmem:[%s2 + $0x724] sm:$0xf]
  %v8381 = vld [vmem:[%s2 + $0x728] sm:$0xf]
  %v8382 = vld [vmem:[%s2 + $0x72c] sm:$0xf]
  %v8383 = vld [vmem:[%s2 + $0x730] sm:$0xf]
  %v8384 = vld [vmem:[%s2 + $0x734] sm:$0xf]
  %v8385 = vld [vmem:[%s2 + $0x738] sm:$0xf]
  %v8386 = vld [vmem:[%s2 + $0x73c] sm:$0xf]
  %v8387 = vld [vmem:[%s2 + $0x740] sm:$0xf]
  %v8388 = vld [vmem:[%s2 + $0x744] sm:$0xf]
  %v8389 = vld [vmem:[%s2 + $0x748] sm:$0xf]
  %v8390 = vld [vmem:[%s2 + $0x74c] sm:$0xf]
  %v8391 = vld [vmem:[%s2 + $0x750] sm:$0xf]
  %v8392 = vld [vmem:[%s2 + $0x754] sm:$0xf]
  %v8393 = vld [vmem:[%s2 + $0x758] sm:$0xf]
  %v8394 = vld [vmem:[%s2 + $0x75c] sm:$0xf]
  %v8395 = vld [vmem:[%s2 + $0x760] sm:$0xf]
  %v8396 = vld [vmem:[%s2 + $0x764] sm:$0xf]
  %v8397 = vld [vmem:[%s2 + $0x768] sm:$0xf]
  %v8398 = vld [vmem:[%s2 + $0x76c] sm:$0xf]
  %v8399 = vld [vmem:[%s2 + $0x770] sm:$0xf]
  %v8400 = vld [vmem:[%s2 + $0x774] sm:$0xf]
  %v8401 = vld [vmem:[%s2 + $0x778] sm:$0xf]
  %v8402 = vld [vmem:[%s2 + $0x77c] sm:$0xf]
  %v8403 = vld [vmem:[%s2 + $0x780] sm:$0xf]
  %v8404 = vld [vmem:[%s2 + $0x784] sm:$0xf]
  %v8405 = vld [vmem:[%s2 + $0x788] sm:$0xf]
  %v8406 = vld [vmem:[%s2 + $0x78c] sm:$0xf]
  %v8407 = vld [vmem:[%s2 + $0x790] sm:$0xf]
  %v8408 = vld [vmem:[%s2 + $0x794] sm:$0xf]
  %v8409 = vld [vmem:[%s2 + $0x798] sm:$0xf]
  %v8410 = vld [vmem:[%s2 + $0x79c] sm:$0xf]
  %v8411 = vld [vmem:[%s2 + $0x7a0] sm:$0xf]
  %v8412 = vld [vmem:[%s2 + $0x7a4] sm:$0xf]
  %v8413 = vld [vmem:[%s2 + $0x7a8] sm:$0xf]
  %v8414 = vld [vmem:[%s2 + $0x7ac] sm:$0xf]
  %v8415 = vld [vmem:[%s2 + $0x7b0] sm:$0xf]
  %v8416 = vld [vmem:[%s2 + $0x7b4] sm:$0xf]
  %v8417 = vld [vmem:[%s2 + $0x7b8] sm:$0xf]
  %v8418 = vld [vmem:[%s2 + $0x7bc] sm:$0xf]
  %v8419 = vld [vmem:[%s2 + $0x7c0] sm:$0xf]
  %v8420 = vld [vmem:[%s2 + $0x7c4] sm:$0xf]
  %v8421 = vld [vmem:[%s2 + $0x7c8] sm:$0xf]
  %v8422 = vld [vmem:[%s2 + $0x7cc] sm:$0xf]
  %v8423 = vld [vmem:[%s2 + $0x7d0] sm:$0xf]
  %v8424 = vld [vmem:[%s2 + $0x7d4] sm:$0xf]
  %v8425 = vld [vmem:[%s2 + $0x7d8] sm:$0xf]
  %v8426 = vld [vmem:[%s2 + $0x7dc] sm:$0xf]
  %v8427 = vld [vmem:[%s2 + $0x7e0] sm:$0xf]
  %v8428 = vld [vmem:[%s2 + $0x7e4] sm:$0xf]
  %v8429 = vld [vmem:[%s2 + $0x7e8] sm:$0xf]
  %v8430 = vld [vmem:[%s2 + $0x7ec] sm:$0xf]
  %v8431 = vld [vmem:[%s2 + $0x7f0] sm:$0xf]
  %v8432 = vld [vmem:[%s2 + $0x7f4] sm:$0xf]
  %v8433 = vld [vmem:[%s2 + $0x7f8] sm:$0xf]
  %v8434 = vld [vmem:[%s2 + $0x7fc] sm:$0xf]
  %v8435 = vld [vmem:[%s2 + $0x800] sm:$0xf]
  %v8436 = vld [vmem:[%s2 + $0x804] sm:$0xf]
  %v8437 = vld [vmem:[%s2 + $0x808] sm:$0xf]
  %v8438 = vld [vmem:[%s2 + $0x80c] sm:$0xf]
  %v8439 = vld [vmem:[%s2 + $0x810] sm:$0xf]
  %v8440 = vld [vmem:[%s2 + $0x814] sm:$0xf]
  %v8441 = vld [vmem:[%s2 + $0x818] sm:$0xf]
  %v8442 = vld [vmem:[%s2 + $0x81c] sm:$0xf]
  %v8443 = vld [vmem:[%s2 + $0x820] sm:$0xf]
  %v8444 = vld [vmem:[%s2 + $0x824] sm:$0xf]
  %v8445 = vld [vmem:[%s2 + $0x828] sm:$0xf]
  %v8446 = vld [vmem:[%s2 + $0x82c] sm:$0xf]
  %v8447 = vld [vmem:[%s2 + $0x830] sm:$0xf]
  %v8448 = vld [vmem:[%s2 + $0x834] sm:$0xf]
  %v8449 = vld [vmem:[%s2 + $0x838] sm:$0xf]
  %v8450 = vld [vmem:[%s2 + $0x83c] sm:$0xf]
  %v8451 = vld [vmem:[%s2 + $0x840] sm:$0xf]
  %v8452 = vld [vmem:[%s2 + $0x844] sm:$0xf]
  %v8453 = vld [vmem:[%s2 + $0x848] sm:$0xf]
  %v8454 = vld [vmem:[%s2 + $0x84c] sm:$0xf]
  %v8455 = vld [vmem:[%s2 + $0x850] sm:$0xf]
  %v8456 = vld [vmem:[%s2 + $0x854] sm:$0xf]
  %v8457 = vld [vmem:[%s2 + $0x858] sm:$0xf]
  %v8458 = vld [vmem:[%s2 + $0x85c] sm:$0xf]
  %v8459 = vld [vmem:[%s2 + $0x860] sm:$0xf]
  %v8460 = vld [vmem:[%s2 + $0x864] sm:$0xf]
  %v8461 = vld [vmem:[%s2 + $0x868] sm:$0xf]
  %v8462 = vld [vmem:[%s2 + $0x86c] sm:$0xf]
  %v8463 = vld [vmem:[%s2 + $0x870] sm:$0xf]
  %v8464 = vld [vmem:[%s2 + $0x874] sm:$0xf]
  %v8465 = vld [vmem:[%s2 + $0x878] sm:$0xf]
  %v8466 = vld [vmem:[%s2 + $0x87c] sm:$0xf]
  %v8467 = vld [vmem:[%s2 + $0x880] sm:$0xf]
  %v8468 = vld [vmem:[%s2 + $0x884] sm:$0xf]
  %v8469 = vld [vmem:[%s2 + $0x888] sm:$0xf]
  %v8470 = vld [vmem:[%s2 + $0x88c] sm:$0xf]
  %v8471 = vld [vmem:[%s2 + $0x890] sm:$0xf]
  %v8472 = vld [vmem:[%s2 + $0x894] sm:$0xf]
  %v8473 = vld [vmem:[%s2 + $0x898] sm:$0xf]
  %v8474 = vld [vmem:[%s2 + $0x89c] sm:$0xf]
  %v8475 = vld [vmem:[%s2 + $0x8a0] sm:$0xf]
  %v8476 = vld [vmem:[%s2 + $0x8a4] sm:$0xf]
  %v8477 = vld [vmem:[%s2 + $0x8a8] sm:$0xf]
  %v8478 = vld [vmem:[%s2 + $0x8ac] sm:$0xf]
  %v8479 = vld [vmem:[%s2 + $0x8b0] sm:$0xf]
  %v8480 = vld [vmem:[%s2 + $0x8b4] sm:$0xf]
  %v8481 = vld [vmem:[%s2 + $0x8b8] sm:$0xf]
  %v8482 = vld [vmem:[%s2 + $0x8bc] sm:$0xf]
  %v8483 = vld [vmem:[%s2 + $0x8c0] sm:$0xf]
  %v8484 = vld [vmem:[%s2 + $0x8c4] sm:$0xf]
  %v8485 = vld [vmem:[%s2 + $0x8c8] sm:$0xf]
  %v8486 = vld [vmem:[%s2 + $0x8cc] sm:$0xf]
  %v8487 = vld [vmem:[%s2 + $0x8d0] sm:$0xf]
  %v8488 = vld [vmem:[%s2 + $0x8d4] sm:$0xf]
  %v8489 = vld [vmem:[%s2 + $0x8d8] sm:$0xf]
  %v8490 = vld [vmem:[%s2 + $0x8dc] sm:$0xf]
  %v8491 = vld [vmem:[%s2 + $0x8e0] sm:$0xf]
  %v8492 = vld [vmem:[%s2 + $0x8e4] sm:$0xf]
  %v8493 = vld [vmem:[%s2 + $0x8e8] sm:$0xf]
  %v8494 = vld [vmem:[%s2 + $0x8ec] sm:$0xf]
  %v8495 = vld [vmem:[%s2 + $0x8f0] sm:$0xf]
  %v8496 = vld [vmem:[%s2 + $0x8f4] sm:$0xf]
  %v8497 = vld [vmem:[%s2 + $0x8f8] sm:$0xf]
  %v8498 = vld [vmem:[%s2 + $0x8fc] sm:$0xf]
  %v8499 = vld [vmem:[%s2 + $0x900] sm:$0xf]
  %v8500 = vld [vmem:[%s2 + $0x904] sm:$0xf]
  %v8501 = vld [vmem:[%s2 + $0x908] sm:$0xf]
  %v8502 = vld [vmem:[%s2 + $0x90c] sm:$0xf]
  %v8503 = vld [vmem:[%s2 + $0x910] sm:$0xf]
  %v8504 = vld [vmem:[%s2 + $0x914] sm:$0xf]
  %v8505 = vld [vmem:[%s2 + $0x918] sm:$0xf]
  %v8506 = vld [vmem:[%s2 + $0x91c] sm:$0xf]
  %v8507 = vld [vmem:[%s2 + $0x920] sm:$0xf]
  %v8508 = vld [vmem:[%s2 + $0x924] sm:$0xf]
  %v8509 = vld [vmem:[%s2 + $0x928] sm:$0xf]
  %v8510 = vld [vmem:[%s2 + $0x92c] sm:$0xf]
  %v8511 = vld [vmem:[%s2 + $0x930] sm:$0xf]
  %v8512 = vld [vmem:[%s2 + $0x934] sm:$0xf]
  %v8513 = vld [vmem:[%s2 + $0x938] sm:$0xf]
  %v8514 = vld [vmem:[%s2 + $0x93c] sm:$0xf]
  %v8515 = vld [vmem:[%s2 + $0x940] sm:$0xf]
  %v8516 = vld [vmem:[%s2 + $0x944] sm:$0xf]
  %v8517 = vld [vmem:[%s2 + $0x948] sm:$0xf]
  %v8518 = vld [vmem:[%s2 + $0x94c] sm:$0xf]
  %v8519 = vld [vmem:[%s2 + $0x950] sm:$0xf]
  %v8520 = vld [vmem:[%s2 + $0x954] sm:$0xf]
  %v8521 = vld [vmem:[%s2 + $0x958] sm:$0xf]
  %v8522 = vld [vmem:[%s2 + $0x95c] sm:$0xf]
  %v8523 = vld [vmem:[%s2 + $0x960] sm:$0xf]
  %v8524 = vld [vmem:[%s2 + $0x964] sm:$0xf]
  %v8525 = vld [vmem:[%s2 + $0x968] sm:$0xf]
  %v8526 = vld [vmem:[%s2 + $0x96c] sm:$0xf]
  %v8527 = vld [vmem:[%s2 + $0x970] sm:$0xf]
  %v8528 = vld [vmem:[%s2 + $0x974] sm:$0xf]
  %v8529 = vld [vmem:[%s2 + $0x978] sm:$0xf]
  %v8530 = vld [vmem:[%s2 + $0x97c] sm:$0xf]
  %v8531 = vld [vmem:[%s2 + $0x980] sm:$0xf]
  %v8532 = vld [vmem:[%s2 + $0x984] sm:$0xf]
  %v8533 = vld [vmem:[%s2 + $0x988] sm:$0xf]
  %v8534 = vld [vmem:[%s2 + $0x98c] sm:$0xf]
  %v8535 = vld [vmem:[%s2 + $0x990] sm:$0xf]
  %v8536 = vld [vmem:[%s2 + $0x994] sm:$0xf]
  %v8537 = vld [vmem:[%s2 + $0x998] sm:$0xf]
  %v8538 = vld [vmem:[%s2 + $0x99c] sm:$0xf]
  %v8539 = vld [vmem:[%s2 + $0x9a0] sm:$0xf]
  %v8540 = vld [vmem:[%s2 + $0x9a4] sm:$0xf]
  %v8541 = vld [vmem:[%s2 + $0x9a8] sm:$0xf]
  %v8542 = vld [vmem:[%s2 + $0x9ac] sm:$0xf]
  %v8543 = vld [vmem:[%s2 + $0x9b0] sm:$0xf]
  %v8544 = vld [vmem:[%s2 + $0x9b4] sm:$0xf]
  %v8545 = vld [vmem:[%s2 + $0x9b8] sm:$0xf]
  %v8546 = vld [vmem:[%s2 + $0x9bc] sm:$0xf]
  %v8547 = vld [vmem:[%s2 + $0x9c0] sm:$0xf]
  %v8548 = vld [vmem:[%s2 + $0x9c4] sm:$0xf]
  %v8549 = vld [vmem:[%s2 + $0x9c8] sm:$0xf]
  %v8550 = vld [vmem:[%s2 + $0x9cc] sm:$0xf]
  %v8551 = vld [vmem:[%s2 + $0x9d0] sm:$0xf]
  %v8552 = vld [vmem:[%s2 + $0x9d4] sm:$0xf]
  %v8553 = vld [vmem:[%s2 + $0x9d8] sm:$0xf]
  %v8554 = vld [vmem:[%s2 + $0x9dc] sm:$0xf]
  %v8555 = vld [vmem:[%s2 + $0x9e0] sm:$0xf]
  %v8556 = vld [vmem:[%s2 + $0x9e4] sm:$0xf]
  %v8557 = vld [vmem:[%s2 + $0x9e8] sm:$0xf]
  %v8558 = vld [vmem:[%s2 + $0x9ec] sm:$0xf]
  %v8559 = vld [vmem:[%s2 + $0x9f0] sm:$0xf]
  %v8560 = vld [vmem:[%s2 + $0x9f4] sm:$0xf]
  %v8561 = vld [vmem:[%s2 + $0x9f8] sm:$0xf]
  %v8562 = vld [vmem:[%s2 + $0x9fc] sm:$0xf]
  %v8563 = vld [vmem:[%s2 + $0xa00] sm:$0xf]
  %v8564 = vld [vmem:[%s2 + $0xa04] sm:$0xf]
  %v8565 = vld [vmem:[%s2 + $0xa08] sm:$0xf]
  %v8566 = vld [vmem:[%s2 + $0xa0c] sm:$0xf]
  %v8567 = vld [vmem:[%s2 + $0xa10] sm:$0xf]
  %v8568 = vld [vmem:[%s2 + $0xa14] sm:$0xf]
  %v8569 = vld [vmem:[%s2 + $0xa18] sm:$0xf]
  %v8570 = vld [vmem:[%s2 + $0xa1c] sm:$0xf]
  %v8571 = vld [vmem:[%s2 + $0xa20] sm:$0xf]
  %v8572 = vld [vmem:[%s2 + $0xa24] sm:$0xf]
  %v8573 = vld [vmem:[%s2 + $0xa28] sm:$0xf]
  %v8574 = vld [vmem:[%s2 + $0xa2c] sm:$0xf]
  %v8575 = vld [vmem:[%s2 + $0xa30] sm:$0xf]
  %v8576 = vld [vmem:[%s2 + $0xa34] sm:$0xf]
  %v8577 = vld [vmem:[%s2 + $0xa38] sm:$0xf]
  %v8578 = vld [vmem:[%s2 + $0xa3c] sm:$0xf]
  %v8579 = vld [vmem:[%s2 + $0xa40] sm:$0xf]
  %v8580 = vld [vmem:[%s2 + $0xa44] sm:$0xf]
  %v8581 = vld [vmem:[%s2 + $0xa48] sm:$0xf]
  %v8582 = vld [vmem:[%s2 + $0xa4c] sm:$0xf]
  %v8583 = vld [vmem:[%s2 + $0xa50] sm:$0xf]
  %v8584 = vld [vmem:[%s2 + $0xa54] sm:$0xf]
  %v8585 = vld [vmem:[%s2 + $0xa58] sm:$0xf]
  %v8586 = vld [vmem:[%s2 + $0xa5c] sm:$0xf]
  %v8587 = vld [vmem:[%s2 + $0xa60] sm:$0xf]
  %v8588 = vld [vmem:[%s2 + $0xa64] sm:$0xf]
  %v8589 = vld [vmem:[%s2 + $0xa68] sm:$0xf]
  %v8590 = vld [vmem:[%s2 + $0xa6c] sm:$0xf]
  %v8591 = vld [vmem:[%s2 + $0xa70] sm:$0xf]
  %v8592 = vld [vmem:[%s2 + $0xa74] sm:$0xf]
  %v8593 = vld [vmem:[%s2 + $0xa78] sm:$0xf]
  %v8594 = vld [vmem:[%s2 + $0xa7c] sm:$0xf]
  %v8595 = vld [vmem:[%s2 + $0xa80] sm:$0xf]
  %v8596 = vld [vmem:[%s2 + $0xa84] sm:$0xf]
  %v8597 = vld [vmem:[%s2 + $0xa88] sm:$0xf]
  %v8598 = vld [vmem:[%s2 + $0xa8c] sm:$0xf]
  %v8599 = vld [vmem:[%s2 + $0xa90] sm:$0xf]
  %v8600 = vld [vmem:[%s2 + $0xa94] sm:$0xf]
  %v8601 = vld [vmem:[%s2 + $0xa98] sm:$0xf]
  %v8602 = vld [vmem:[%s2 + $0xa9c] sm:$0xf]
  %v8603 = vld [vmem:[%s2 + $0xaa0] sm:$0xf]
  %v8604 = vld [vmem:[%s2 + $0xaa4] sm:$0xf]
  %v8605 = vld [vmem:[%s2 + $0xaa8] sm:$0xf]
  %v8606 = vld [vmem:[%s2 + $0xaac] sm:$0xf]
  %v8607 = vld [vmem:[%s2 + $0xab0] sm:$0xf]
  %v8608 = vld [vmem:[%s2 + $0xab4] sm:$0xf]
  %v8609 = vld [vmem:[%s2 + $0xab8] sm:$0xf]
  %v8610 = vld [vmem:[%s2 + $0xabc] sm:$0xf]
  %v8611 = vld [vmem:[%s2 + $0xac0] sm:$0xf]
  %v8612 = vld [vmem:[%s2 + $0xac4] sm:$0xf]
  %v8613 = vld [vmem:[%s2 + $0xac8] sm:$0xf]
  %v8614 = vld [vmem:[%s2 + $0xacc] sm:$0xf]
  %v8615 = vld [vmem:[%s2 + $0xad0] sm:$0xf]
  %v8616 = vld [vmem:[%s2 + $0xad4] sm:$0xf]
  %v8617 = vld [vmem:[%s2 + $0xad8] sm:$0xf]
  %v8618 = vld [vmem:[%s2 + $0xadc] sm:$0xf]
  %v8619 = vld [vmem:[%s2 + $0xae0] sm:$0xf]
  %v8620 = vld [vmem:[%s2 + $0xae4] sm:$0xf]
  %v8621 = vld [vmem:[%s2 + $0xae8] sm:$0xf]
  %v8622 = vld [vmem:[%s2 + $0xaec] sm:$0xf]
  %v8623 = vld [vmem:[%s2 + $0xaf0] sm:$0xf]
  %v8624 = vld [vmem:[%s2 + $0xaf4] sm:$0xf]
  %v8625 = vld [vmem:[%s2 + $0xaf8] sm:$0xf]
  %v8626 = vld [vmem:[%s2 + $0xafc] sm:$0xf]
  %v8627 = vld [vmem:[%s2 + $0xb00] sm:$0xf]
  %v8628 = vld [vmem:[%s2 + $0xb04] sm:$0xf]
  %v8629 = vld [vmem:[%s2 + $0xb08] sm:$0xf]
  %v8630 = vld [vmem:[%s2 + $0xb0c] sm:$0xf]
  %v8631 = vld [vmem:[%s2 + $0xb10] sm:$0xf]
  %v8632 = vld [vmem:[%s2 + $0xb14] sm:$0xf]
  %v8633 = vld [vmem:[%s2 + $0xb18] sm:$0xf]
  %v8634 = vld [vmem:[%s2 + $0xb1c] sm:$0xf]
  %v8635 = vld [vmem:[%s2 + $0xb20] sm:$0xf]
  %v8636 = vld [vmem:[%s2 + $0xb24] sm:$0xf]
  %v8637 = vld [vmem:[%s2 + $0xb28] sm:$0xf]
  %v8638 = vld [vmem:[%s2 + $0xb2c] sm:$0xf]
  %v8639 = vld [vmem:[%s2 + $0xb30] sm:$0xf]
  %v8640 = vld [vmem:[%s2 + $0xb34] sm:$0xf]
  %v8641 = vld [vmem:[%s2 + $0xb38] sm:$0xf]
  %v8642 = vld [vmem:[%s2 + $0xb3c] sm:$0xf]
  %v8643 = vld [vmem:[%s2 + $0xb40] sm:$0xf]
  %v8644 = vld [vmem:[%s2 + $0xb44] sm:$0xf]
  %v8645 = vld [vmem:[%s2 + $0xb48] sm:$0xf]
  %v8646 = vld [vmem:[%s2 + $0xb4c] sm:$0xf]
  %v8647 = vld [vmem:[%s2 + $0xb50] sm:$0xf]
  %v8648 = vld [vmem:[%s2 + $0xb54] sm:$0xf]
  %v8649 = vld [vmem:[%s2 + $0xb58] sm:$0xf]
  %v8650 = vld [vmem:[%s2 + $0xb5c] sm:$0xf]
  %v8651 = vld [vmem:[%s2 + $0xb60] sm:$0xf]
  %v8652 = vld [vmem:[%s2 + $0xb64] sm:$0xf]
  %v8653 = vld [vmem:[%s2 + $0xb68] sm:$0xf]
  %v8654 = vld [vmem:[%s2 + $0xb6c] sm:$0xf]
  %v8655 = vld [vmem:[%s2 + $0xb70] sm:$0xf]
  %v8656 = vld [vmem:[%s2 + $0xb74] sm:$0xf]
  %v8657 = vld [vmem:[%s2 + $0xb78] sm:$0xf]
  %v8658 = vld [vmem:[%s2 + $0xb7c] sm:$0xf]
  %v8659 = vld [vmem:[%s2 + $0xb80] sm:$0xf]
  %v8660 = vld [vmem:[%s2 + $0xb84] sm:$0xf]
  %v8661 = vld [vmem:[%s2 + $0xb88] sm:$0xf]
  %v8662 = vld [vmem:[%s2 + $0xb8c] sm:$0xf]
  %v8663 = vld [vmem:[%s2 + $0xb90] sm:$0xf]
  %v8664 = vld [vmem:[%s2 + $0xb94] sm:$0xf]
  %v8665 = vld [vmem:[%s2 + $0xb98] sm:$0xf]
  %v8666 = vld [vmem:[%s2 + $0xb9c] sm:$0xf]
  %v8667 = vld [vmem:[%s2 + $0xba0] sm:$0xf]
  %v8668 = vld [vmem:[%s2 + $0xba4] sm:$0xf]
  %v8669 = vld [vmem:[%s2 + $0xba8] sm:$0xf]
  %v8670 = vld [vmem:[%s2 + $0xbac] sm:$0xf]
  %v8671 = vld [vmem:[%s2 + $0xbb0] sm:$0xf]
  %v8672 = vld [vmem:[%s2 + $0xbb4] sm:$0xf]
  %v8673 = vld [vmem:[%s2 + $0xbb8] sm:$0xf]
  %v8674 = vld [vmem:[%s2 + $0xbbc] sm:$0xf]
  %v8675 = vld [vmem:[%s2 + $0xbc0] sm:$0xf]
  %v8676 = vld [vmem:[%s2 + $0xbc4] sm:$0xf]
  %v8677 = vld [vmem:[%s2 + $0xbc8] sm:$0xf]
  %v8678 = vld [vmem:[%s2 + $0xbcc] sm:$0xf]
  %v8679 = vld [vmem:[%s2 + $0xbd0] sm:$0xf]
  %v8680 = vld [vmem:[%s2 + $0xbd4] sm:$0xf]
  %v8681 = vld [vmem:[%s2 + $0xbd8] sm:$0xf]
  %v8682 = vld [vmem:[%s2 + $0xbdc] sm:$0xf]
  %v8683 = vld [vmem:[%s2 + $0xbe0] sm:$0xf]
  %v8684 = vld [vmem:[%s2 + $0xbe4] sm:$0xf]
  %v8685 = vld [vmem:[%s2 + $0xbe8] sm:$0xf]
  %v8686 = vld [vmem:[%s2 + $0xbec] sm:$0xf]
  %v8687 = vld [vmem:[%s2 + $0xbf0] sm:$0xf]
  %v8688 = vld [vmem:[%s2 + $0xbf4] sm:$0xf]
  %v8689 = vld [vmem:[%s2 + $0xbf8] sm:$0xf]
  %v8690 = vld [vmem:[%s2 + $0xbfc] sm:$0xf]
  %v8691 = vld [vmem:[%s2 + $0xc00] sm:$0xf]
  %v8692 = vld [vmem:[%s2 + $0xc04] sm:$0xf]
  %v8693 = vld [vmem:[%s2 + $0xc08] sm:$0xf]
  %v8694 = vld [vmem:[%s2 + $0xc0c] sm:$0xf]
  %v8695 = vld [vmem:[%s2 + $0xc10] sm:$0xf]
  %v8696 = vld [vmem:[%s2 + $0xc14] sm:$0xf]
  %v8697 = vld [vmem:[%s2 + $0xc18] sm:$0xf]
  %v8698 = vld [vmem:[%s2 + $0xc1c] sm:$0xf]
  %v8699 = vld [vmem:[%s2 + $0xc20] sm:$0xf]
  %v8700 = vld [vmem:[%s2 + $0xc24] sm:$0xf]
  %v8701 = vld [vmem:[%s2 + $0xc28] sm:$0xf]
  %v8702 = vld [vmem:[%s2 + $0xc2c] sm:$0xf]
  %v8703 = vld [vmem:[%s2 + $0xc30] sm:$0xf]
  %v8704 = vld [vmem:[%s2 + $0xc34] sm:$0xf]
  %v8705 = vld [vmem:[%s2 + $0xc38] sm:$0xf]
  %v8706 = vld [vmem:[%s2 + $0xc3c] sm:$0xf]
  %v9491 = vunpack.c.l.b16 %v7923
  %v9492 = vunpack.c.l.b16 %v7924
  %v9493 = vunpack.c.l.b16 %v7925
  %v9494 = vunpack.c.l.b16 %v7926
  %v9495 = vunpack.c.l.b16 %v7927
  %v9496 = vunpack.c.l.b16 %v7928
  %v9497 = vunpack.c.l.b16 %v7929
  %v9498 = vunpack.c.l.b16 %v7930
  %v9499 = vunpack.c.l.b16 %v7931
  %v9500 = vunpack.c.l.b16 %v7932
  %v9501 = vunpack.c.l.b16 %v7933
  %v9502 = vunpack.c.l.b16 %v7934
  %v9503 = vunpack.c.l.b16 %v7935
  %v9504 = vunpack.c.l.b16 %v7936
  %v9505 = vunpack.c.l.b16 %v7937
  %v9506 = vunpack.c.l.b16 %v7938
  %v9507 = vunpack.c.l.b16 %v7939
  %v9508 = vunpack.c.l.b16 %v7940
  %v9509 = vunpack.c.l.b16 %v7941
  %v9510 = vunpack.c.l.b16 %v7942
  %v9511 = vunpack.c.l.b16 %v7943
  %v9512 = vunpack.c.l.b16 %v7944
  %v9513 = vunpack.c.l.b16 %v7945
  %v9514 = vunpack.c.l.b16 %v7946
  %v9515 = vunpack.c.l.b16 %v7947
  %v9516 = vunpack.c.l.b16 %v7948
  %v9517 = vunpack.c.l.b16 %v7949
  %v9518 = vunpack.c.l.b16 %v7950
  %v9519 = vunpack.c.l.b16 %v7951
  %v9520 = vunpack.c.l.b16 %v7952
  %v9521 = vunpack.c.l.b16 %v7953
  %v9522 = vunpack.c.l.b16 %v7954
  %v9523 = vunpack.c.l.b16 %v7955
  %v9524 = vunpack.c.l.b16 %v7956
  %v9525 = vunpack.c.l.b16 %v7957
  %v9526 = vunpack.c.l.b16 %v7958
  %v9527 = vunpack.c.l.b16 %v7959
  %v9528 = vunpack.c.l.b16 %v7960
  %v9529 = vunpack.c.l.b16 %v7961
  %v9530 = vunpack.c.l.b16 %v7962
  %v9531 = vunpack.c.l.b16 %v7963
  %v9532 = vunpack.c.l.b16 %v7964
  %v9533 = vunpack.c.l.b16 %v7965
  %v9534 = vunpack.c.l.b16 %v7966
  %v9535 = vunpack.c.l.b16 %v7967
  %v9536 = vunpack.c.l.b16 %v7968
  %v9537 = vunpack.c.l.b16 %v7969
  %v9538 = vunpack.c.l.b16 %v7970
  %v9539 = vunpack.c.l.b16 %v7971
  %v9540 = vunpack.c.l.b16 %v7972
  %v9541 = vunpack.c.l.b16 %v7973
  %v9542 = vunpack.c.l.b16 %v7974
  %v9543 = vunpack.c.l.b16 %v7975
  %v9544 = vunpack.c.l.b16 %v7976
  %v9545 = vunpack.c.l.b16 %v7977
  %v9546 = vunpack.c.l.b16 %v7978
  %v9547 = vunpack.c.l.b16 %v7979
  %v9548 = vunpack.c.l.b16 %v7980
  %v9549 = vunpack.c.l.b16 %v7981
  %v9550 = vunpack.c.l.b16 %v7982
  %v9551 = vunpack.c.l.b16 %v7983
  %v9552 = vunpack.c.l.b16 %v7984
  %v9553 = vunpack.c.l.b16 %v7985
  %v9554 = vunpack.c.l.b16 %v7986
  %v9555 = vunpack.c.l.b16 %v7987
  %v9556 = vunpack.c.l.b16 %v7988
  %v9557 = vunpack.c.l.b16 %v7989
  %v9558 = vunpack.c.l.b16 %v7990
  %v9559 = vunpack.c.l.b16 %v7991
  %v9560 = vunpack.c.l.b16 %v7992
  %v9561 = vunpack.c.l.b16 %v7993
  %v9562 = vunpack.c.l.b16 %v7994
  %v9563 = vunpack.c.l.b16 %v7995
  %v9564 = vunpack.c.l.b16 %v7996
  %v9565 = vunpack.c.l.b16 %v7997
  %v9566 = vunpack.c.l.b16 %v7998
  %v9567 = vunpack.c.l.b16 %v7999
  %v9568 = vunpack.c.l.b16 %v8000
  %v9569 = vunpack.c.l.b16 %v8001
  %v9570 = vunpack.c.l.b16 %v8002
  %v9571 = vunpack.c.l.b16 %v8003
  %v9572 = vunpack.c.l.b16 %v8004
  %v9573 = vunpack.c.l.b16 %v8005
  %v9574 = vunpack.c.l.b16 %v8006
  %v9575 = vunpack.c.l.b16 %v8007
  %v9576 = vunpack.c.l.b16 %v8008
  %v9577 = vunpack.c.l.b16 %v8009
  %v9578 = vunpack.c.l.b16 %v8010
  %v9579 = vunpack.c.l.b16 %v8011
  %v9580 = vunpack.c.l.b16 %v8012
  %v9581 = vunpack.c.l.b16 %v8013
  %v9582 = vunpack.c.l.b16 %v8014
  %v9583 = vunpack.c.l.b16 %v8015
  %v9584 = vunpack.c.l.b16 %v8016
  %v9585 = vunpack.c.l.b16 %v8017
  %v9586 = vunpack.c.l.b16 %v8018
  %v9587 = vunpack.c.l.b16 %v8019
  %v9588 = vunpack.c.l.b16 %v8020
  %v9589 = vunpack.c.l.b16 %v8021
  %v9590 = vunpack.c.l.b16 %v8022
  %v9591 = vunpack.c.l.b16 %v8023
  %v9592 = vunpack.c.l.b16 %v8024
  %v9593 = vunpack.c.l.b16 %v8025
  %v9594 = vunpack.c.l.b16 %v8026
  %v9595 = vunpack.c.l.b16 %v8027
  %v9596 = vunpack.c.l.b16 %v8028
  %v9597 = vunpack.c.l.b16 %v8029
  %v9598 = vunpack.c.l.b16 %v8030
  %v9599 = vunpack.c.l.b16 %v8031
  %v9600 = vunpack.c.l.b16 %v8032
  %v9601 = vunpack.c.l.b16 %v8033
  %v9602 = vunpack.c.l.b16 %v8034
  %v9603 = vunpack.c.l.b16 %v8035
  %v9604 = vunpack.c.l.b16 %v8036
  %v9605 = vunpack.c.l.b16 %v8037
  %v9606 = vunpack.c.l.b16 %v8038
  %v9607 = vunpack.c.l.b16 %v8039
  %v9608 = vunpack.c.l.b16 %v8040
  %v9609 = vunpack.c.l.b16 %v8041
  %v9610 = vunpack.c.l.b16 %v8042
  %v9611 = vunpack.c.l.b16 %v8043
  %v9612 = vunpack.c.l.b16 %v8044
  %v9613 = vunpack.c.l.b16 %v8045
  %v9614 = vunpack.c.l.b16 %v8046
  %v9615 = vunpack.c.l.b16 %v8047
  %v9616 = vunpack.c.l.b16 %v8048
  %v9617 = vunpack.c.l.b16 %v8049
  %v9618 = vunpack.c.l.b16 %v8050
  %v9619 = vunpack.c.l.b16 %v8051
  %v9620 = vunpack.c.l.b16 %v8052
  %v9621 = vunpack.c.l.b16 %v8053
  %v9622 = vunpack.c.l.b16 %v8054
  %v9623 = vunpack.c.l.b16 %v8055
  %v9624 = vunpack.c.l.b16 %v8056
  %v9625 = vunpack.c.l.b16 %v8057
  %v9626 = vunpack.c.l.b16 %v8058
  %v9627 = vunpack.c.l.b16 %v8059
  %v9628 = vunpack.c.l.b16 %v8060
  %v9629 = vunpack.c.l.b16 %v8061
  %v9630 = vunpack.c.l.b16 %v8062
  %v9631 = vunpack.c.l.b16 %v8063
  %v9632 = vunpack.c.l.b16 %v8064
  %v9633 = vunpack.c.l.b16 %v8065
  %v9634 = vunpack.c.l.b16 %v8066
  %v9635 = vunpack.c.l.b16 %v8067
  %v9636 = vunpack.c.l.b16 %v8068
  %v9637 = vunpack.c.l.b16 %v8069
  %v9638 = vunpack.c.l.b16 %v8070
  %v9639 = vunpack.c.l.b16 %v8071
  %v9640 = vunpack.c.l.b16 %v8072
  %v9641 = vunpack.c.l.b16 %v8073
  %v9642 = vunpack.c.l.b16 %v8074
  %v9643 = vunpack.c.l.b16 %v8075
  %v9644 = vunpack.c.l.b16 %v8076
  %v9645 = vunpack.c.l.b16 %v8077
  %v9646 = vunpack.c.l.b16 %v8078
  %v9647 = vunpack.c.l.b16 %v8079
  %v9648 = vunpack.c.l.b16 %v8080
  %v9649 = vunpack.c.l.b16 %v8081
  %v9650 = vunpack.c.l.b16 %v8082
  %v9651 = vunpack.c.l.b16 %v8083
  %v9652 = vunpack.c.l.b16 %v8084
  %v9653 = vunpack.c.l.b16 %v8085
  %v9654 = vunpack.c.l.b16 %v8086
  %v9655 = vunpack.c.l.b16 %v8087
  %v9656 = vunpack.c.l.b16 %v8088
  %v9657 = vunpack.c.l.b16 %v8089
  %v9658 = vunpack.c.l.b16 %v8090
  %v9659 = vunpack.c.l.b16 %v8091
  %v9660 = vunpack.c.l.b16 %v8092
  %v9661 = vunpack.c.l.b16 %v8093
  %v9662 = vunpack.c.l.b16 %v8094
  %v9663 = vunpack.c.l.b16 %v8095
  %v9664 = vunpack.c.l.b16 %v8096
  %v9665 = vunpack.c.l.b16 %v8097
  %v9666 = vunpack.c.l.b16 %v8098
  %v9667 = vunpack.c.l.b16 %v8099
  %v9668 = vunpack.c.l.b16 %v8100
  %v9669 = vunpack.c.l.b16 %v8101
  %v9670 = vunpack.c.l.b16 %v8102
  %v9671 = vunpack.c.l.b16 %v8103
  %v9672 = vunpack.c.l.b16 %v8104
  %v9673 = vunpack.c.l.b16 %v8105
  %v9674 = vunpack.c.l.b16 %v8106
  %v9675 = vunpack.c.l.b16 %v8107
  %v9676 = vunpack.c.l.b16 %v8108
  %v9677 = vunpack.c.l.b16 %v8109
  %v9678 = vunpack.c.l.b16 %v8110
  %v9679 = vunpack.c.l.b16 %v8111
  %v9680 = vunpack.c.l.b16 %v8112
  %v9681 = vunpack.c.l.b16 %v8113
  %v9682 = vunpack.c.l.b16 %v8114
  %v9683 = vunpack.c.l.b16 %v8115
  %v9684 = vunpack.c.l.b16 %v8116
  %v9685 = vunpack.c.l.b16 %v8117
  %v9686 = vunpack.c.l.b16 %v8118
  %v9687 = vunpack.c.l.b16 %v8119
  %v9688 = vunpack.c.l.b16 %v8120
  %v9689 = vunpack.c.l.b16 %v8121
  %v9690 = vunpack.c.l.b16 %v8122
  %v9691 = vunpack.c.l.b16 %v8123
  %v9692 = vunpack.c.l.b16 %v8124
  %v9693 = vunpack.c.l.b16 %v8125
  %v9694 = vunpack.c.l.b16 %v8126
  %v9695 = vunpack.c.l.b16 %v8127
  %v9696 = vunpack.c.l.b16 %v8128
  %v9697 = vunpack.c.l.b16 %v8129
  %v9698 = vunpack.c.l.b16 %v8130
  %v9699 = vunpack.c.l.b16 %v8131
  %v9700 = vunpack.c.l.b16 %v8132
  %v9701 = vunpack.c.l.b16 %v8133
  %v9702 = vunpack.c.l.b16 %v8134
  %v9703 = vunpack.c.l.b16 %v8135
  %v9704 = vunpack.c.l.b16 %v8136
  %v9705 = vunpack.c.l.b16 %v8137
  %v9706 = vunpack.c.l.b16 %v8138
  %v9707 = vunpack.c.l.b16 %v8139
  %v9708 = vunpack.c.l.b16 %v8140
  %v9709 = vunpack.c.l.b16 %v8141
  %v9710 = vunpack.c.l.b16 %v8142
  %v9711 = vunpack.c.l.b16 %v8143
  %v9712 = vunpack.c.l.b16 %v8144
  %v9713 = vunpack.c.l.b16 %v8145
  %v9714 = vunpack.c.l.b16 %v8146
  %v9715 = vunpack.c.l.b16 %v8147
  %v9716 = vunpack.c.l.b16 %v8148
  %v9717 = vunpack.c.l.b16 %v8149
  %v9718 = vunpack.c.l.b16 %v8150
  %v9719 = vunpack.c.l.b16 %v8151
  %v9720 = vunpack.c.l.b16 %v8152
  %v9721 = vunpack.c.l.b16 %v8153
  %v9722 = vunpack.c.l.b16 %v8154
  %v9723 = vunpack.c.l.b16 %v8155
  %v9724 = vunpack.c.l.b16 %v8156
  %v9725 = vunpack.c.l.b16 %v8157
  %v9726 = vunpack.c.l.b16 %v8158
  %v9727 = vunpack.c.l.b16 %v8159
  %v9728 = vunpack.c.l.b16 %v8160
  %v9729 = vunpack.c.l.b16 %v8161
  %v9730 = vunpack.c.l.b16 %v8162
  %v9731 = vunpack.c.l.b16 %v8163
  %v9732 = vunpack.c.l.b16 %v8164
  %v9733 = vunpack.c.l.b16 %v8165
  %v9734 = vunpack.c.l.b16 %v8166
  %v9735 = vunpack.c.l.b16 %v8167
  %v9736 = vunpack.c.l.b16 %v8168
  %v9737 = vunpack.c.l.b16 %v8169
  %v9738 = vunpack.c.l.b16 %v8170
  %v9739 = vunpack.c.l.b16 %v8171
  %v9740 = vunpack.c.l.b16 %v8172
  %v9741 = vunpack.c.l.b16 %v8173
  %v9742 = vunpack.c.l.b16 %v8174
  %v9743 = vunpack.c.l.b16 %v8175
  %v9744 = vunpack.c.l.b16 %v8176
  %v9745 = vunpack.c.l.b16 %v8177
  %v9746 = vunpack.c.l.b16 %v8178
  %v9747 = vunpack.c.l.b16 %v8179
  %v9748 = vunpack.c.l.b16 %v8180
  %v9749 = vunpack.c.l.b16 %v8181
  %v9750 = vunpack.c.l.b16 %v8182
  %v9751 = vunpack.c.l.b16 %v8183
  %v9752 = vunpack.c.l.b16 %v8184
  %v9753 = vunpack.c.l.b16 %v8185
  %v9754 = vunpack.c.l.b16 %v8186
  %v9755 = vunpack.c.l.b16 %v8187
  %v9756 = vunpack.c.l.b16 %v8188
  %v9757 = vunpack.c.l.b16 %v8189
  %v9758 = vunpack.c.l.b16 %v8190
  %v9759 = vunpack.c.l.b16 %v8191
  %v9760 = vunpack.c.l.b16 %v8192
  %v9761 = vunpack.c.l.b16 %v8193
  %v9762 = vunpack.c.l.b16 %v8194
  %v9763 = vunpack.c.l.b16 %v8195
  %v9764 = vunpack.c.l.b16 %v8196
  %v9765 = vunpack.c.l.b16 %v8197
  %v9766 = vunpack.c.l.b16 %v8198
  %v9767 = vunpack.c.l.b16 %v8199
  %v9768 = vunpack.c.l.b16 %v8200
  %v9769 = vunpack.c.l.b16 %v8201
  %v9770 = vunpack.c.l.b16 %v8202
  %v9771 = vunpack.c.l.b16 %v8203
  %v9772 = vunpack.c.l.b16 %v8204
  %v9773 = vunpack.c.l.b16 %v8205
  %v9774 = vunpack.c.l.b16 %v8206
  %v9775 = vunpack.c.l.b16 %v8207
  %v9776 = vunpack.c.l.b16 %v8208
  %v9777 = vunpack.c.l.b16 %v8209
  %v9778 = vunpack.c.l.b16 %v8210
  %v9779 = vunpack.c.l.b16 %v8211
  %v9780 = vunpack.c.l.b16 %v8212
  %v9781 = vunpack.c.l.b16 %v8213
  %v9782 = vunpack.c.l.b16 %v8214
  %v9783 = vunpack.c.l.b16 %v8215
  %v9784 = vunpack.c.l.b16 %v8216
  %v9785 = vunpack.c.l.b16 %v8217
  %v9786 = vunpack.c.l.b16 %v8218
  %v9787 = vunpack.c.l.b16 %v8219
  %v9788 = vunpack.c.l.b16 %v8220
  %v9789 = vunpack.c.l.b16 %v8221
  %v9790 = vunpack.c.l.b16 %v8222
  %v9791 = vunpack.c.l.b16 %v8223
  %v9792 = vunpack.c.l.b16 %v8224
  %v9793 = vunpack.c.l.b16 %v8225
  %v9794 = vunpack.c.l.b16 %v8226
  %v9795 = vunpack.c.l.b16 %v8227
  %v9796 = vunpack.c.l.b16 %v8228
  %v9797 = vunpack.c.l.b16 %v8229
  %v9798 = vunpack.c.l.b16 %v8230
  %v9799 = vunpack.c.l.b16 %v8231
  %v9800 = vunpack.c.l.b16 %v8232
  %v9801 = vunpack.c.l.b16 %v8233
  %v9802 = vunpack.c.l.b16 %v8234
  %v9803 = vunpack.c.l.b16 %v8235
  %v9804 = vunpack.c.l.b16 %v8236
  %v9805 = vunpack.c.l.b16 %v8237
  %v9806 = vunpack.c.l.b16 %v8238
  %v9807 = vunpack.c.l.b16 %v8239
  %v9808 = vunpack.c.l.b16 %v8240
  %v9809 = vunpack.c.l.b16 %v8241
  %v9810 = vunpack.c.l.b16 %v8242
  %v9811 = vunpack.c.l.b16 %v8243
  %v9812 = vunpack.c.l.b16 %v8244
  %v9813 = vunpack.c.l.b16 %v8245
  %v9814 = vunpack.c.l.b16 %v8246
  %v9815 = vunpack.c.l.b16 %v8247
  %v9816 = vunpack.c.l.b16 %v8248
  %v9817 = vunpack.c.l.b16 %v8249
  %v9818 = vunpack.c.l.b16 %v8250
  %v9819 = vunpack.c.l.b16 %v8251
  %v9820 = vunpack.c.l.b16 %v8252
  %v9821 = vunpack.c.l.b16 %v8253
  %v9822 = vunpack.c.l.b16 %v8254
  %v9823 = vunpack.c.l.b16 %v8255
  %v9824 = vunpack.c.l.b16 %v8256
  %v9825 = vunpack.c.l.b16 %v8257
  %v9826 = vunpack.c.l.b16 %v8258
  %v9827 = vunpack.c.l.b16 %v8259
  %v9828 = vunpack.c.l.b16 %v8260
  %v9829 = vunpack.c.l.b16 %v8261
  %v9830 = vunpack.c.l.b16 %v8262
  %v9831 = vunpack.c.l.b16 %v8263
  %v9832 = vunpack.c.l.b16 %v8264
  %v9833 = vunpack.c.l.b16 %v8265
  %v9834 = vunpack.c.l.b16 %v8266
  %v9835 = vunpack.c.l.b16 %v8267
  %v9836 = vunpack.c.l.b16 %v8268
  %v9837 = vunpack.c.l.b16 %v8269
  %v9838 = vunpack.c.l.b16 %v8270
  %v9839 = vunpack.c.l.b16 %v8271
  %v9840 = vunpack.c.l.b16 %v8272
  %v9841 = vunpack.c.l.b16 %v8273
  %v9842 = vunpack.c.l.b16 %v8274
  %v9843 = vunpack.c.l.b16 %v8275
  %v9844 = vunpack.c.l.b16 %v8276
  %v9845 = vunpack.c.l.b16 %v8277
  %v9846 = vunpack.c.l.b16 %v8278
  %v9847 = vunpack.c.l.b16 %v8279
  %v9848 = vunpack.c.l.b16 %v8280
  %v9849 = vunpack.c.l.b16 %v8281
  %v9850 = vunpack.c.l.b16 %v8282
  %v9851 = vunpack.c.l.b16 %v8283
  %v9852 = vunpack.c.l.b16 %v8284
  %v9853 = vunpack.c.l.b16 %v8285
  %v9854 = vunpack.c.l.b16 %v8286
  %v9855 = vunpack.c.l.b16 %v8287
  %v9856 = vunpack.c.l.b16 %v8288
  %v9857 = vunpack.c.l.b16 %v8289
  %v9858 = vunpack.c.l.b16 %v8290
  %v9859 = vunpack.c.l.b16 %v8291
  %v9860 = vunpack.c.l.b16 %v8292
  %v9861 = vunpack.c.l.b16 %v8293
  %v9862 = vunpack.c.l.b16 %v8294
  %v9863 = vunpack.c.l.b16 %v8295
  %v9864 = vunpack.c.l.b16 %v8296
  %v9865 = vunpack.c.l.b16 %v8297
  %v9866 = vunpack.c.l.b16 %v8298
  %v9867 = vunpack.c.l.b16 %v8299
  %v9868 = vunpack.c.l.b16 %v8300
  %v9869 = vunpack.c.l.b16 %v8301
  %v9870 = vunpack.c.l.b16 %v8302
  %v9871 = vunpack.c.l.b16 %v8303
  %v9872 = vunpack.c.l.b16 %v8304
  %v9873 = vunpack.c.l.b16 %v8305
  %v9874 = vunpack.c.l.b16 %v8306
  %v9875 = vunpack.c.l.b16 %v8307
  %v9876 = vunpack.c.l.b16 %v8308
  %v9877 = vunpack.c.l.b16 %v8309
  %v9878 = vunpack.c.l.b16 %v8310
  %v9879 = vunpack.c.l.b16 %v8311
  %v9880 = vunpack.c.l.b16 %v8312
  %v9881 = vunpack.c.l.b16 %v8313
  %v9882 = vunpack.c.l.b16 %v8314
  %v9883 = vunpack.c.l.b16 %v8315
  %v9884 = vunpack.c.l.b16 %v8316
  %v9885 = vunpack.c.l.b16 %v8317
  %v9886 = vunpack.c.l.b16 %v8318
  %v9887 = vunpack.c.l.b16 %v8319
  %v9888 = vunpack.c.l.b16 %v8320
  %v9889 = vunpack.c.l.b16 %v8321
  %v9890 = vunpack.c.l.b16 %v8322
  %v9891 = vunpack.c.l.b16 %v8323
  %v9892 = vunpack.c.l.b16 %v8324
  %v9893 = vunpack.c.l.b16 %v8325
  %v9894 = vunpack.c.l.b16 %v8326
  %v9895 = vunpack.c.l.b16 %v8327
  %v9896 = vunpack.c.l.b16 %v8328
  %v9897 = vunpack.c.l.b16 %v8329
  %v9898 = vunpack.c.l.b16 %v8330
  %v9899 = vunpack.c.l.b16 %v8331
  %v9900 = vunpack.c.l.b16 %v8332
  %v9901 = vunpack.c.l.b16 %v8333
  %v9902 = vunpack.c.l.b16 %v8334
  %v9903 = vunpack.c.l.b16 %v8335
  %v9904 = vunpack.c.l.b16 %v8336
  %v9905 = vunpack.c.l.b16 %v8337
  %v9906 = vunpack.c.l.b16 %v8338
  %v9907 = vunpack.c.l.b16 %v8339
  %v9908 = vunpack.c.l.b16 %v8340
  %v9909 = vunpack.c.l.b16 %v8341
  %v9910 = vunpack.c.l.b16 %v8342
  %v9911 = vunpack.c.l.b16 %v8343
  %v9912 = vunpack.c.l.b16 %v8344
  %v9913 = vunpack.c.l.b16 %v8345
  %v9914 = vunpack.c.l.b16 %v8346
  %v9915 = vunpack.c.l.b16 %v8347
  %v9916 = vunpack.c.l.b16 %v8348
  %v9917 = vunpack.c.l.b16 %v8349
  %v9918 = vunpack.c.l.b16 %v8350
  %v9919 = vunpack.c.l.b16 %v8351
  %v9920 = vunpack.c.l.b16 %v8352
  %v9921 = vunpack.c.l.b16 %v8353
  %v9922 = vunpack.c.l.b16 %v8354
  %v9923 = vunpack.c.l.b16 %v8355
  %v9924 = vunpack.c.l.b16 %v8356
  %v9925 = vunpack.c.l.b16 %v8357
  %v9926 = vunpack.c.l.b16 %v8358
  %v9927 = vunpack.c.l.b16 %v8359
  %v9928 = vunpack.c.l.b16 %v8360
  %v9929 = vunpack.c.l.b16 %v8361
  %v9930 = vunpack.c.l.b16 %v8362
  %v9931 = vunpack.c.l.b16 %v8363
  %v9932 = vunpack.c.l.b16 %v8364
  %v9933 = vunpack.c.l.b16 %v8365
  %v9934 = vunpack.c.l.b16 %v8366
  %v9935 = vunpack.c.l.b16 %v8367
  %v9936 = vunpack.c.l.b16 %v8368
  %v9937 = vunpack.c.l.b16 %v8369
  %v9938 = vunpack.c.l.b16 %v8370
  %v9939 = vunpack.c.l.b16 %v8371
  %v9940 = vunpack.c.l.b16 %v8372
  %v9941 = vunpack.c.l.b16 %v8373
  %v9942 = vunpack.c.l.b16 %v8374
  %v9943 = vunpack.c.l.b16 %v8375
  %v9944 = vunpack.c.l.b16 %v8376
  %v9945 = vunpack.c.l.b16 %v8377
  %v9946 = vunpack.c.l.b16 %v8378
  %v9947 = vunpack.c.l.b16 %v8379
  %v9948 = vunpack.c.l.b16 %v8380
  %v9949 = vunpack.c.l.b16 %v8381
  %v9950 = vunpack.c.l.b16 %v8382
  %v9951 = vunpack.c.l.b16 %v8383
  %v9952 = vunpack.c.l.b16 %v8384
  %v9953 = vunpack.c.l.b16 %v8385
  %v9954 = vunpack.c.l.b16 %v8386
  %v9955 = vunpack.c.l.b16 %v8387
  %v9956 = vunpack.c.l.b16 %v8388
  %v9957 = vunpack.c.l.b16 %v8389
  %v9958 = vunpack.c.l.b16 %v8390
  %v9959 = vunpack.c.l.b16 %v8391
  %v9960 = vunpack.c.l.b16 %v8392
  %v9961 = vunpack.c.l.b16 %v8393
  %v9962 = vunpack.c.l.b16 %v8394
  %v9963 = vunpack.c.l.b16 %v8395
  %v9964 = vunpack.c.l.b16 %v8396
  %v9965 = vunpack.c.l.b16 %v8397
  %v9966 = vunpack.c.l.b16 %v8398
  %v9967 = vunpack.c.l.b16 %v8399
  %v9968 = vunpack.c.l.b16 %v8400
  %v9969 = vunpack.c.l.b16 %v8401
  %v9970 = vunpack.c.l.b16 %v8402
  %v9971 = vunpack.c.l.b16 %v8403
  %v9972 = vunpack.c.l.b16 %v8404
  %v9973 = vunpack.c.l.b16 %v8405
  %v9974 = vunpack.c.l.b16 %v8406
  %v9975 = vunpack.c.l.b16 %v8407
  %v9976 = vunpack.c.l.b16 %v8408
  %v9977 = vunpack.c.l.b16 %v8409
  %v9978 = vunpack.c.l.b16 %v8410
  %v9979 = vunpack.c.l.b16 %v8411
  %v9980 = vunpack.c.l.b16 %v8412
  %v9981 = vunpack.c.l.b16 %v8413
  %v9982 = vunpack.c.l.b16 %v8414
  %v9983 = vunpack.c.l.b16 %v8415
  %v9984 = vunpack.c.l.b16 %v8416
  %v9985 = vunpack.c.l.b16 %v8417
  %v9986 = vunpack.c.l.b16 %v8418
  %v9987 = vunpack.c.l.b16 %v8419
  %v9988 = vunpack.c.l.b16 %v8420
  %v9989 = vunpack.c.l.b16 %v8421
  %v9990 = vunpack.c.l.b16 %v8422
  %v9991 = vunpack.c.l.b16 %v8423
  %v9992 = vunpack.c.l.b16 %v8424
  %v9993 = vunpack.c.l.b16 %v8425
  %v9994 = vunpack.c.l.b16 %v8426
  %v9995 = vunpack.c.l.b16 %v8427
  %v9996 = vunpack.c.l.b16 %v8428
  %v9997 = vunpack.c.l.b16 %v8429
  %v9998 = vunpack.c.l.b16 %v8430
  %v9999 = vunpack.c.l.b16 %v8431
  %v10000 = vunpack.c.l.b16 %v8432
  %v10001 = vunpack.c.l.b16 %v8433
  %v10002 = vunpack.c.l.b16 %v8434
  %v10003 = vunpack.c.l.b16 %v8435
  %v10004 = vunpack.c.l.b16 %v8436
  %v10005 = vunpack.c.l.b16 %v8437
  %v10006 = vunpack.c.l.b16 %v8438
  %v10007 = vunpack.c.l.b16 %v8439
  %v10008 = vunpack.c.l.b16 %v8440
  %v10009 = vunpack.c.l.b16 %v8441
  %v10010 = vunpack.c.l.b16 %v8442
  %v10011 = vunpack.c.l.b16 %v8443
  %v10012 = vunpack.c.l.b16 %v8444
  %v10013 = vunpack.c.l.b16 %v8445
  %v10014 = vunpack.c.l.b16 %v8446
  %v10015 = vunpack.c.l.b16 %v8447
  %v10016 = vunpack.c.l.b16 %v8448
  %v10017 = vunpack.c.l.b16 %v8449
  %v10018 = vunpack.c.l.b16 %v8450
  %v10019 = vunpack.c.l.b16 %v8451
  %v10020 = vunpack.c.l.b16 %v8452
  %v10021 = vunpack.c.l.b16 %v8453
  %v10022 = vunpack.c.l.b16 %v8454
  %v10023 = vunpack.c.l.b16 %v8455
  %v10024 = vunpack.c.l.b16 %v8456
  %v10025 = vunpack.c.l.b16 %v8457
  %v10026 = vunpack.c.l.b16 %v8458
  %v10027 = vunpack.c.l.b16 %v8459
  %v10028 = vunpack.c.l.b16 %v8460
  %v10029 = vunpack.c.l.b16 %v8461
  %v10030 = vunpack.c.l.b16 %v8462
  %v10031 = vunpack.c.l.b16 %v8463
  %v10032 = vunpack.c.l.b16 %v8464
  %v10033 = vunpack.c.l.b16 %v8465
  %v10034 = vunpack.c.l.b16 %v8466
  %v10035 = vunpack.c.l.b16 %v8467
  %v10036 = vunpack.c.l.b16 %v8468
  %v10037 = vunpack.c.l.b16 %v8469
  %v10038 = vunpack.c.l.b16 %v8470
  %v10039 = vunpack.c.l.b16 %v8471
  %v10040 = vunpack.c.l.b16 %v8472
  %v10041 = vunpack.c.l.b16 %v8473
  %v10042 = vunpack.c.l.b16 %v8474
  %v10043 = vunpack.c.l.b16 %v8475
  %v10044 = vunpack.c.l.b16 %v8476
  %v10045 = vunpack.c.l.b16 %v8477
  %v10046 = vunpack.c.l.b16 %v8478
  %v10047 = vunpack.c.l.b16 %v8479
  %v10048 = vunpack.c.l.b16 %v8480
  %v10049 = vunpack.c.l.b16 %v8481
  %v10050 = vunpack.c.l.b16 %v8482
  %v10051 = vunpack.c.l.b16 %v8483
  %v10052 = vunpack.c.l.b16 %v8484
  %v10053 = vunpack.c.l.b16 %v8485
  %v10054 = vunpack.c.l.b16 %v8486
  %v10055 = vunpack.c.l.b16 %v8487
  %v10056 = vunpack.c.l.b16 %v8488
  %v10057 = vunpack.c.l.b16 %v8489
  %v10058 = vunpack.c.l.b16 %v8490
  %v10059 = vunpack.c.l.b16 %v8491
  %v10060 = vunpack.c.l.b16 %v8492
  %v10061 = vunpack.c.l.b16 %v8493
  %v10062 = vunpack.c.l.b16 %v8494
  %v10063 = vunpack.c.l.b16 %v8495
  %v10064 = vunpack.c.l.b16 %v8496
  %v10065 = vunpack.c.l.b16 %v8497
  %v10066 = vunpack.c.l.b16 %v8498
  %v10067 = vunpack.c.l.b16 %v8499
  %v10068 = vunpack.c.l.b16 %v8500
  %v10069 = vunpack.c.l.b16 %v8501
  %v10070 = vunpack.c.l.b16 %v8502
  %v10071 = vunpack.c.l.b16 %v8503
  %v10072 = vunpack.c.l.b16 %v8504
  %v10073 = vunpack.c.l.b16 %v8505
  %v10074 = vunpack.c.l.b16 %v8506
  %v10075 = vunpack.c.l.b16 %v8507
  %v10076 = vunpack.c.l.b16 %v8508
  %v10077 = vunpack.c.l.b16 %v8509
  %v10078 = vunpack.c.l.b16 %v8510
  %v10079 = vunpack.c.l.b16 %v8511
  %v10080 = vunpack.c.l.b16 %v8512
  %v10081 = vunpack.c.l.b16 %v8513
  %v10082 = vunpack.c.l.b16 %v8514
  %v10083 = vunpack.c.l.b16 %v8515
  %v10084 = vunpack.c.l.b16 %v8516
  %v10085 = vunpack.c.l.b16 %v8517
  %v10086 = vunpack.c.l.b16 %v8518
  %v10087 = vunpack.c.l.b16 %v8519
  %v10088 = vunpack.c.l.b16 %v8520
  %v10089 = vunpack.c.l.b16 %v8521
  %v10090 = vunpack.c.l.b16 %v8522
  %v10091 = vunpack.c.l.b16 %v8523
  %v10092 = vunpack.c.l.b16 %v8524
  %v10093 = vunpack.c.l.b16 %v8525
  %v10094 = vunpack.c.l.b16 %v8526
  %v10095 = vunpack.c.l.b16 %v8527
  %v10096 = vunpack.c.l.b16 %v8528
  %v10097 = vunpack.c.l.b16 %v8529
  %v10098 = vunpack.c.l.b16 %v8530
  %v10099 = vunpack.c.l.b16 %v8531
  %v10100 = vunpack.c.l.b16 %v8532
  %v10101 = vunpack.c.l.b16 %v8533
  %v10102 = vunpack.c.l.b16 %v8534
  %v10103 = vunpack.c.l.b16 %v8535
  %v10104 = vunpack.c.l.b16 %v8536
  %v10105 = vunpack.c.l.b16 %v8537
  %v10106 = vunpack.c.l.b16 %v8538
  %v10107 = vunpack.c.l.b16 %v8539
  %v10108 = vunpack.c.l.b16 %v8540
  %v10109 = vunpack.c.l.b16 %v8541
  %v10110 = vunpack.c.l.b16 %v8542
  %v10111 = vunpack.c.l.b16 %v8543
  %v10112 = vunpack.c.l.b16 %v8544
  %v10113 = vunpack.c.l.b16 %v8545
  %v10114 = vunpack.c.l.b16 %v8546
  %v10115 = vunpack.c.l.b16 %v8547
  %v10116 = vunpack.c.l.b16 %v8548
  %v10117 = vunpack.c.l.b16 %v8549
  %v10118 = vunpack.c.l.b16 %v8550
  %v10119 = vunpack.c.l.b16 %v8551
  %v10120 = vunpack.c.l.b16 %v8552
  %v10121 = vunpack.c.l.b16 %v8553
  %v10122 = vunpack.c.l.b16 %v8554
  %v10123 = vunpack.c.l.b16 %v8555
  %v10124 = vunpack.c.l.b16 %v8556
  %v10125 = vunpack.c.l.b16 %v8557
  %v10126 = vunpack.c.l.b16 %v8558
  %v10127 = vunpack.c.l.b16 %v8559
  %v10128 = vunpack.c.l.b16 %v8560
  %v10129 = vunpack.c.l.b16 %v8561
  %v10130 = vunpack.c.l.b16 %v8562
  %v10131 = vunpack.c.l.b16 %v8563
  %v10132 = vunpack.c.l.b16 %v8564
  %v10133 = vunpack.c.l.b16 %v8565
  %v10134 = vunpack.c.l.b16 %v8566
  %v10135 = vunpack.c.l.b16 %v8567
  %v10136 = vunpack.c.l.b16 %v8568
  %v10137 = vunpack.c.l.b16 %v8569
  %v10138 = vunpack.c.l.b16 %v8570
  %v10139 = vunpack.c.l.b16 %v8571
  %v10140 = vunpack.c.l.b16 %v8572
  %v10141 = vunpack.c.l.b16 %v8573
  %v10142 = vunpack.c.l.b16 %v8574
  %v10143 = vunpack.c.l.b16 %v8575
  %v10144 = vunpack.c.l.b16 %v8576
  %v10145 = vunpack.c.l.b16 %v8577
  %v10146 = vunpack.c.l.b16 %v8578
  %v10147 = vunpack.c.l.b16 %v8579
  %v10148 = vunpack.c.l.b16 %v8580
  %v10149 = vunpack.c.l.b16 %v8581
  %v10150 = vunpack.c.l.b16 %v8582
  %v10151 = vunpack.c.l.b16 %v8583
  %v10152 = vunpack.c.l.b16 %v8584
  %v10153 = vunpack.c.l.b16 %v8585
  %v10154 = vunpack.c.l.b16 %v8586
  %v10155 = vunpack.c.l.b16 %v8587
  %v10156 = vunpack.c.l.b16 %v8588
  %v10157 = vunpack.c.l.b16 %v8589
  %v10158 = vunpack.c.l.b16 %v8590
  %v10159 = vunpack.c.l.b16 %v8591
  %v10160 = vunpack.c.l.b16 %v8592
  %v10161 = vunpack.c.l.b16 %v8593
  %v10162 = vunpack.c.l.b16 %v8594
  %v10163 = vunpack.c.l.b16 %v8595
  %v10164 = vunpack.c.l.b16 %v8596
  %v10165 = vunpack.c.l.b16 %v8597
  %v10166 = vunpack.c.l.b16 %v8598
  %v10167 = vunpack.c.l.b16 %v8599
  %v10168 = vunpack.c.l.b16 %v8600
  %v10169 = vunpack.c.l.b16 %v8601
  %v10170 = vunpack.c.l.b16 %v8602
  %v10171 = vunpack.c.l.b16 %v8603
  %v10172 = vunpack.c.l.b16 %v8604
  %v10173 = vunpack.c.l.b16 %v8605
  %v10174 = vunpack.c.l.b16 %v8606
  %v10175 = vunpack.c.l.b16 %v8607
  %v10176 = vunpack.c.l.b16 %v8608
  %v10177 = vunpack.c.l.b16 %v8609
  %v10178 = vunpack.c.l.b16 %v8610
  %v10179 = vunpack.c.l.b16 %v8611
  %v10180 = vunpack.c.l.b16 %v8612
  %v10181 = vunpack.c.l.b16 %v8613
  %v10182 = vunpack.c.l.b16 %v8614
  %v10183 = vunpack.c.l.b16 %v8615
  %v10184 = vunpack.c.l.b16 %v8616
  %v10185 = vunpack.c.l.b16 %v8617
  %v10186 = vunpack.c.l.b16 %v8618
  %v10187 = vunpack.c.l.b16 %v8619
  %v10188 = vunpack.c.l.b16 %v8620
  %v10189 = vunpack.c.l.b16 %v8621
  %v10190 = vunpack.c.l.b16 %v8622
  %v10191 = vunpack.c.l.b16 %v8623
  %v10192 = vunpack.c.l.b16 %v8624
  %v10193 = vunpack.c.l.b16 %v8625
  %v10194 = vunpack.c.l.b16 %v8626
  %v10195 = vunpack.c.l.b16 %v8627
  %v10196 = vunpack.c.l.b16 %v8628
  %v10197 = vunpack.c.l.b16 %v8629
  %v10198 = vunpack.c.l.b16 %v8630
  %v10199 = vunpack.c.l.b16 %v8631
  %v10200 = vunpack.c.l.b16 %v8632
  %v10201 = vunpack.c.l.b16 %v8633
  %v10202 = vunpack.c.l.b16 %v8634
  %v10203 = vunpack.c.l.b16 %v8635
  %v10204 = vunpack.c.l.b16 %v8636
  %v10205 = vunpack.c.l.b16 %v8637
  %v10206 = vunpack.c.l.b16 %v8638
  %v10207 = vunpack.c.l.b16 %v8639
  %v10208 = vunpack.c.l.b16 %v8640
  %v10209 = vunpack.c.l.b16 %v8641
  %v10210 = vunpack.c.l.b16 %v8642
  %v10211 = vunpack.c.l.b16 %v8643
  %v10212 = vunpack.c.l.b16 %v8644
  %v10213 = vunpack.c.l.b16 %v8645
  %v10214 = vunpack.c.l.b16 %v8646
  %v10215 = vunpack.c.l.b16 %v8647
  %v10216 = vunpack.c.l.b16 %v8648
  %v10217 = vunpack.c.l.b16 %v8649
  %v10218 = vunpack.c.l.b16 %v8650
  %v10219 = vunpack.c.l.b16 %v8651
  %v10220 = vunpack.c.l.b16 %v8652
  %v10221 = vunpack.c.l.b16 %v8653
  %v10222 = vunpack.c.l.b16 %v8654
  %v10223 = vunpack.c.l.b16 %v8655
  %v10224 = vunpack.c.l.b16 %v8656
  %v10225 = vunpack.c.l.b16 %v8657
  %v10226 = vunpack.c.l.b16 %v8658
  %v10227 = vunpack.c.l.b16 %v8659
  %v10228 = vunpack.c.l.b16 %v8660
  %v10229 = vunpack.c.l.b16 %v8661
  %v10230 = vunpack.c.l.b16 %v8662
  %v10231 = vunpack.c.l.b16 %v8663
  %v10232 = vunpack.c.l.b16 %v8664
  %v10233 = vunpack.c.l.b16 %v8665
  %v10234 = vunpack.c.l.b16 %v8666
  %v10235 = vunpack.c.l.b16 %v8667
  %v10236 = vunpack.c.l.b16 %v8668
  %v10237 = vunpack.c.l.b16 %v8669
  %v10238 = vunpack.c.l.b16 %v8670
  %v10239 = vunpack.c.l.b16 %v8671
  %v10240 = vunpack.c.l.b16 %v8672
  %v10241 = vunpack.c.l.b16 %v8673
  %v10242 = vunpack.c.l.b16 %v8674
  %v10243 = vunpack.c.l.b16 %v8675
  %v10244 = vunpack.c.l.b16 %v8676
  %v10245 = vunpack.c.l.b16 %v8677
  %v10246 = vunpack.c.l.b16 %v8678
  %v10247 = vunpack.c.l.b16 %v8679
  %v10248 = vunpack.c.l.b16 %v8680
  %v10249 = vunpack.c.l.b16 %v8681
  %v10250 = vunpack.c.l.b16 %v8682
  %v10251 = vunpack.c.l.b16 %v8683
  %v10252 = vunpack.c.l.b16 %v8684
  %v10253 = vunpack.c.l.b16 %v8685
  %v10254 = vunpack.c.l.b16 %v8686
  %v10255 = vunpack.c.l.b16 %v8687
  %v10256 = vunpack.c.l.b16 %v8688
  %v10257 = vunpack.c.l.b16 %v8689
  %v10258 = vunpack.c.l.b16 %v8690
  %v10259 = vunpack.c.l.b16 %v8691
  %v10260 = vunpack.c.l.b16 %v8692
  %v10261 = vunpack.c.l.b16 %v8693
  %v10262 = vunpack.c.l.b16 %v8694
  %v10263 = vunpack.c.l.b16 %v8695
  %v10264 = vunpack.c.l.b16 %v8696
  %v10265 = vunpack.c.l.b16 %v8697
  %v10266 = vunpack.c.l.b16 %v8698
  %v10267 = vunpack.c.l.b16 %v8699
  %v10268 = vunpack.c.l.b16 %v8700
  %v10269 = vunpack.c.l.b16 %v8701
  %v10270 = vunpack.c.l.b16 %v8702
  %v10271 = vunpack.c.l.b16 %v8703
  %v10272 = vunpack.c.l.b16 %v8704
  %v10273 = vunpack.c.l.b16 %v8705
  %v10274 = vunpack.c.l.b16 %v8706
  %v10275 = vpack.c.b16 %v9492, %v9491
  %v10276 = vpack.c.b16 %v9494, %v9493
  %v10277 = vpack.c.b16 %v9496, %v9495
  %v10278 = vpack.c.b16 %v9498, %v9497
  %v10279 = vpack.c.b16 %v9500, %v9499
  %v10280 = vpack.c.b16 %v9502, %v9501
  %v10281 = vpack.c.b16 %v9504, %v9503
  %v10282 = vpack.c.b16 %v9506, %v9505
  %v10283 = vpack.c.b16 %v9508, %v9507
  %v10284 = vpack.c.b16 %v9510, %v9509
  %v10285 = vpack.c.b16 %v9512, %v9511
  %v10286 = vpack.c.b16 %v9514, %v9513
  %v10287 = vpack.c.b16 %v9516, %v9515
  %v10288 = vpack.c.b16 %v9518, %v9517
  %v10289 = vpack.c.b16 %v9520, %v9519
  %v10290 = vpack.c.b16 %v9522, %v9521
  %v10291 = vpack.c.b16 %v9524, %v9523
  %v10292 = vpack.c.b16 %v9526, %v9525
  %v10293 = vpack.c.b16 %v9528, %v9527
  %v10294 = vpack.c.b16 %v9530, %v9529
  %v10295 = vpack.c.b16 %v9532, %v9531
  %v10296 = vpack.c.b16 %v9534, %v9533
  %v10297 = vpack.c.b16 %v9536, %v9535
  %v10298 = vpack.c.b16 %v9538, %v9537
  %v10299 = vpack.c.b16 %v9540, %v9539
  %v10300 = vpack.c.b16 %v9542, %v9541
  %v10301 = vpack.c.b16 %v9544, %v9543
  %v10302 = vpack.c.b16 %v9546, %v9545
  %v10303 = vpack.c.b16 %v9548, %v9547
  %v10304 = vpack.c.b16 %v9550, %v9549
  %v10305 = vpack.c.b16 %v9552, %v9551
  %v10306 = vpack.c.b16 %v9554, %v9553
  %v10307 = vpack.c.b16 %v9556, %v9555
  %v10308 = vpack.c.b16 %v9558, %v9557
  %v10309 = vpack.c.b16 %v9560, %v9559
  %v10310 = vpack.c.b16 %v9562, %v9561
  %v10311 = vpack.c.b16 %v9564, %v9563
  %v10312 = vpack.c.b16 %v9566, %v9565
  %v10313 = vpack.c.b16 %v9568, %v9567
  %v10314 = vpack.c.b16 %v9570, %v9569
  %v10315 = vpack.c.b16 %v9572, %v9571
  %v10316 = vpack.c.b16 %v9574, %v9573
  %v10317 = vpack.c.b16 %v9576, %v9575
  %v10318 = vpack.c.b16 %v9578, %v9577
  %v10319 = vpack.c.b16 %v9580, %v9579
  %v10320 = vpack.c.b16 %v9582, %v9581
  %v10321 = vpack.c.b16 %v9584, %v9583
  %v10322 = vpack.c.b16 %v9586, %v9585
  %v10323 = vpack.c.b16 %v9588, %v9587
  %v10324 = vpack.c.b16 %v9590, %v9589
  %v10325 = vpack.c.b16 %v9592, %v9591
  %v10326 = vpack.c.b16 %v9594, %v9593
  %v10327 = vpack.c.b16 %v9596, %v9595
  %v10328 = vpack.c.b16 %v9598, %v9597
  %v10329 = vpack.c.b16 %v9600, %v9599
  %v10330 = vpack.c.b16 %v9602, %v9601
  %v10331 = vpack.c.b16 %v9604, %v9603
  %v10332 = vpack.c.b16 %v9606, %v9605
  %v10333 = vpack.c.b16 %v9608, %v9607
  %v10334 = vpack.c.b16 %v9610, %v9609
  %v10335 = vpack.c.b16 %v9612, %v9611
  %v10336 = vpack.c.b16 %v9614, %v9613
  %v10337 = vpack.c.b16 %v9616, %v9615
  %v10338 = vpack.c.b16 %v9618, %v9617
  %v10339 = vpack.c.b16 %v9620, %v9619
  %v10340 = vpack.c.b16 %v9622, %v9621
  %v10341 = vpack.c.b16 %v9624, %v9623
  %v10342 = vpack.c.b16 %v9626, %v9625
  %v10343 = vpack.c.b16 %v9628, %v9627
  %v10344 = vpack.c.b16 %v9630, %v9629
  %v10345 = vpack.c.b16 %v9632, %v9631
  %v10346 = vpack.c.b16 %v9634, %v9633
  %v10347 = vpack.c.b16 %v9636, %v9635
  %v10348 = vpack.c.b16 %v9638, %v9637
  %v10349 = vpack.c.b16 %v9640, %v9639
  %v10350 = vpack.c.b16 %v9642, %v9641
  %v10351 = vpack.c.b16 %v9644, %v9643
  %v10352 = vpack.c.b16 %v9646, %v9645
  %v10353 = vpack.c.b16 %v9648, %v9647
  %v10354 = vpack.c.b16 %v9650, %v9649
  %v10355 = vpack.c.b16 %v9652, %v9651
  %v10356 = vpack.c.b16 %v9654, %v9653
  %v10357 = vpack.c.b16 %v9656, %v9655
  %v10358 = vpack.c.b16 %v9658, %v9657
  %v10359 = vpack.c.b16 %v9660, %v9659
  %v10360 = vpack.c.b16 %v9662, %v9661
  %v10361 = vpack.c.b16 %v9664, %v9663
  %v10362 = vpack.c.b16 %v9666, %v9665
  %v10363 = vpack.c.b16 %v9668, %v9667
  %v10364 = vpack.c.b16 %v9670, %v9669
  %v10365 = vpack.c.b16 %v9672, %v9671
  %v10366 = vpack.c.b16 %v9674, %v9673
  %v10367 = vpack.c.b16 %v9676, %v9675
  %v10368 = vpack.c.b16 %v9678, %v9677
  %v10369 = vpack.c.b16 %v9680, %v9679
  %v10370 = vpack.c.b16 %v9682, %v9681
  %v10371 = vpack.c.b16 %v9684, %v9683
  %v10372 = vpack.c.b16 %v9686, %v9685
  %v10373 = vpack.c.b16 %v9688, %v9687
  %v10374 = vpack.c.b16 %v9690, %v9689
  %v10375 = vpack.c.b16 %v9692, %v9691
  %v10376 = vpack.c.b16 %v9694, %v9693
  %v10377 = vpack.c.b16 %v9696, %v9695
  %v10378 = vpack.c.b16 %v9698, %v9697
  %v10379 = vpack.c.b16 %v9700, %v9699
  %v10380 = vpack.c.b16 %v9702, %v9701
  %v10381 = vpack.c.b16 %v9704, %v9703
  %v10382 = vpack.c.b16 %v9706, %v9705
  %v10383 = vpack.c.b16 %v9708, %v9707
  %v10384 = vpack.c.b16 %v9710, %v9709
  %v10385 = vpack.c.b16 %v9712, %v9711
  %v10386 = vpack.c.b16 %v9714, %v9713
  %v10387 = vpack.c.b16 %v9716, %v9715
  %v10388 = vpack.c.b16 %v9718, %v9717
  %v10389 = vpack.c.b16 %v9720, %v9719
  %v10390 = vpack.c.b16 %v9722, %v9721
  %v10391 = vpack.c.b16 %v9724, %v9723
  %v10392 = vpack.c.b16 %v9726, %v9725
  %v10393 = vpack.c.b16 %v9728, %v9727
  %v10394 = vpack.c.b16 %v9730, %v9729
  %v10395 = vpack.c.b16 %v9732, %v9731
  %v10396 = vpack.c.b16 %v9734, %v9733
  %v10397 = vpack.c.b16 %v9736, %v9735
  %v10398 = vpack.c.b16 %v9738, %v9737
  %v10399 = vpack.c.b16 %v9740, %v9739
  %v10400 = vpack.c.b16 %v9742, %v9741
  %v10401 = vpack.c.b16 %v9744, %v9743
  %v10402 = vpack.c.b16 %v9746, %v9745
  %v10403 = vpack.c.b16 %v9748, %v9747
  %v10404 = vpack.c.b16 %v9750, %v9749
  %v10405 = vpack.c.b16 %v9752, %v9751
  %v10406 = vpack.c.b16 %v9754, %v9753
  %v10407 = vpack.c.b16 %v9756, %v9755
  %v10408 = vpack.c.b16 %v9758, %v9757
  %v10409 = vpack.c.b16 %v9760, %v9759
  %v10410 = vpack.c.b16 %v9762, %v9761
  %v10411 = vpack.c.b16 %v9764, %v9763
  %v10412 = vpack.c.b16 %v9766, %v9765
  %v10413 = vpack.c.b16 %v9768, %v9767
  %v10414 = vpack.c.b16 %v9770, %v9769
  %v10415 = vpack.c.b16 %v9772, %v9771
  %v10416 = vpack.c.b16 %v9774, %v9773
  %v10417 = vpack.c.b16 %v9776, %v9775
  %v10418 = vpack.c.b16 %v9778, %v9777
  %v10419 = vpack.c.b16 %v9780, %v9779
  %v10420 = vpack.c.b16 %v9782, %v9781
  %v10421 = vpack.c.b16 %v9784, %v9783
  %v10422 = vpack.c.b16 %v9786, %v9785
  %v10423 = vpack.c.b16 %v9788, %v9787
  %v10424 = vpack.c.b16 %v9790, %v9789
  %v10425 = vpack.c.b16 %v9792, %v9791
  %v10426 = vpack.c.b16 %v9794, %v9793
  %v10427 = vpack.c.b16 %v9796, %v9795
  %v10428 = vpack.c.b16 %v9798, %v9797
  %v10429 = vpack.c.b16 %v9800, %v9799
  %v10430 = vpack.c.b16 %v9802, %v9801
  %v10431 = vpack.c.b16 %v9804, %v9803
  %v10432 = vpack.c.b16 %v9806, %v9805
  %v10433 = vpack.c.b16 %v9808, %v9807
  %v10434 = vpack.c.b16 %v9810, %v9809
  %v10435 = vpack.c.b16 %v9812, %v9811
  %v10436 = vpack.c.b16 %v9814, %v9813
  %v10437 = vpack.c.b16 %v9816, %v9815
  %v10438 = vpack.c.b16 %v9818, %v9817
  %v10439 = vpack.c.b16 %v9820, %v9819
  %v10440 = vpack.c.b16 %v9822, %v9821
  %v10441 = vpack.c.b16 %v9824, %v9823
  %v10442 = vpack.c.b16 %v9826, %v9825
  %v10443 = vpack.c.b16 %v9828, %v9827
  %v10444 = vpack.c.b16 %v9830, %v9829
  %v10445 = vpack.c.b16 %v9832, %v9831
  %v10446 = vpack.c.b16 %v9834, %v9833
  %v10447 = vpack.c.b16 %v9836, %v9835
  %v10448 = vpack.c.b16 %v9838, %v9837
  %v10449 = vpack.c.b16 %v9840, %v9839
  %v10450 = vpack.c.b16 %v9842, %v9841
  %v10451 = vpack.c.b16 %v9844, %v9843
  %v10452 = vpack.c.b16 %v9846, %v9845
  %v10453 = vpack.c.b16 %v9848, %v9847
  %v10454 = vpack.c.b16 %v9850, %v9849
  %v10455 = vpack.c.b16 %v9852, %v9851
  %v10456 = vpack.c.b16 %v9854, %v9853
  %v10457 = vpack.c.b16 %v9856, %v9855
  %v10458 = vpack.c.b16 %v9858, %v9857
  %v10459 = vpack.c.b16 %v9860, %v9859
  %v10460 = vpack.c.b16 %v9862, %v9861
  %v10461 = vpack.c.b16 %v9864, %v9863
  %v10462 = vpack.c.b16 %v9866, %v9865
  %v10463 = vpack.c.b16 %v9868, %v9867
  %v10464 = vpack.c.b16 %v9870, %v9869
  %v10465 = vpack.c.b16 %v9872, %v9871
  %v10466 = vpack.c.b16 %v9874, %v9873
  %v10467 = vpack.c.b16 %v9876, %v9875
  %v10468 = vpack.c.b16 %v9878, %v9877
  %v10469 = vpack.c.b16 %v9880, %v9879
  %v10470 = vpack.c.b16 %v9882, %v9881
  %v10471 = vpack.c.b16 %v9884, %v9883
  %v10472 = vpack.c.b16 %v9886, %v9885
  %v10473 = vpack.c.b16 %v9888, %v9887
  %v10474 = vpack.c.b16 %v9890, %v9889
  %v10475 = vpack.c.b16 %v9892, %v9891
  %v10476 = vpack.c.b16 %v9894, %v9893
  %v10477 = vpack.c.b16 %v9896, %v9895
  %v10478 = vpack.c.b16 %v9898, %v9897
  %v10479 = vpack.c.b16 %v9900, %v9899
  %v10480 = vpack.c.b16 %v9902, %v9901
  %v10481 = vpack.c.b16 %v9904, %v9903
  %v10482 = vpack.c.b16 %v9906, %v9905
  %v10483 = vpack.c.b16 %v9908, %v9907
  %v10484 = vpack.c.b16 %v9910, %v9909
  %v10485 = vpack.c.b16 %v9912, %v9911
  %v10486 = vpack.c.b16 %v9914, %v9913
  %v10487 = vpack.c.b16 %v9916, %v9915
  %v10488 = vpack.c.b16 %v9918, %v9917
  %v10489 = vpack.c.b16 %v9920, %v9919
  %v10490 = vpack.c.b16 %v9922, %v9921
  %v10491 = vpack.c.b16 %v9924, %v9923
  %v10492 = vpack.c.b16 %v9926, %v9925
  %v10493 = vpack.c.b16 %v9928, %v9927
  %v10494 = vpack.c.b16 %v9930, %v9929
  %v10495 = vpack.c.b16 %v9932, %v9931
  %v10496 = vpack.c.b16 %v9934, %v9933
  %v10497 = vpack.c.b16 %v9936, %v9935
  %v10498 = vpack.c.b16 %v9938, %v9937
  %v10499 = vpack.c.b16 %v9940, %v9939
  %v10500 = vpack.c.b16 %v9942, %v9941
  %v10501 = vpack.c.b16 %v9944, %v9943
  %v10502 = vpack.c.b16 %v9946, %v9945
  %v10503 = vpack.c.b16 %v9948, %v9947
  %v10504 = vpack.c.b16 %v9950, %v9949
  %v10505 = vpack.c.b16 %v9952, %v9951
  %v10506 = vpack.c.b16 %v9954, %v9953
  %v10507 = vpack.c.b16 %v9956, %v9955
  %v10508 = vpack.c.b16 %v9958, %v9957
  %v10509 = vpack.c.b16 %v9960, %v9959
  %v10510 = vpack.c.b16 %v9962, %v9961
  %v10511 = vpack.c.b16 %v9964, %v9963
  %v10512 = vpack.c.b16 %v9966, %v9965
  %v10513 = vpack.c.b16 %v9968, %v9967
  %v10514 = vpack.c.b16 %v9970, %v9969
  %v10515 = vpack.c.b16 %v9972, %v9971
  %v10516 = vpack.c.b16 %v9974, %v9973
  %v10517 = vpack.c.b16 %v9976, %v9975
  %v10518 = vpack.c.b16 %v9978, %v9977
  %v10519 = vpack.c.b16 %v9980, %v9979
  %v10520 = vpack.c.b16 %v9982, %v9981
  %v10521 = vpack.c.b16 %v9984, %v9983
  %v10522 = vpack.c.b16 %v9986, %v9985
  %v10523 = vpack.c.b16 %v9988, %v9987
  %v10524 = vpack.c.b16 %v9990, %v9989
  %v10525 = vpack.c.b16 %v9992, %v9991
  %v10526 = vpack.c.b16 %v9994, %v9993
  %v10527 = vpack.c.b16 %v9996, %v9995
  %v10528 = vpack.c.b16 %v9998, %v9997
  %v10529 = vpack.c.b16 %v10000, %v9999
  %v10530 = vpack.c.b16 %v10002, %v10001
  %v10531 = vpack.c.b16 %v10004, %v10003
  %v10532 = vpack.c.b16 %v10006, %v10005
  %v10533 = vpack.c.b16 %v10008, %v10007
  %v10534 = vpack.c.b16 %v10010, %v10009
  %v10535 = vpack.c.b16 %v10012, %v10011
  %v10536 = vpack.c.b16 %v10014, %v10013
  %v10537 = vpack.c.b16 %v10016, %v10015
  %v10538 = vpack.c.b16 %v10018, %v10017
  %v10539 = vpack.c.b16 %v10020, %v10019
  %v10540 = vpack.c.b16 %v10022, %v10021
  %v10541 = vpack.c.b16 %v10024, %v10023
  %v10542 = vpack.c.b16 %v10026, %v10025
  %v10543 = vpack.c.b16 %v10028, %v10027
  %v10544 = vpack.c.b16 %v10030, %v10029
  %v10545 = vpack.c.b16 %v10032, %v10031
  %v10546 = vpack.c.b16 %v10034, %v10033
  %v10547 = vpack.c.b16 %v10036, %v10035
  %v10548 = vpack.c.b16 %v10038, %v10037
  %v10549 = vpack.c.b16 %v10040, %v10039
  %v10550 = vpack.c.b16 %v10042, %v10041
  %v10551 = vpack.c.b16 %v10044, %v10043
  %v10552 = vpack.c.b16 %v10046, %v10045
  %v10553 = vpack.c.b16 %v10048, %v10047
  %v10554 = vpack.c.b16 %v10050, %v10049
  %v10555 = vpack.c.b16 %v10052, %v10051
  %v10556 = vpack.c.b16 %v10054, %v10053
  %v10557 = vpack.c.b16 %v10056, %v10055
  %v10558 = vpack.c.b16 %v10058, %v10057
  %v10559 = vpack.c.b16 %v10060, %v10059
  %v10560 = vpack.c.b16 %v10062, %v10061
  %v10561 = vpack.c.b16 %v10064, %v10063
  %v10562 = vpack.c.b16 %v10066, %v10065
  %v10563 = vpack.c.b16 %v10068, %v10067
  %v10564 = vpack.c.b16 %v10070, %v10069
  %v10565 = vpack.c.b16 %v10072, %v10071
  %v10566 = vpack.c.b16 %v10074, %v10073
  %v10567 = vpack.c.b16 %v10076, %v10075
  %v10568 = vpack.c.b16 %v10078, %v10077
  %v10569 = vpack.c.b16 %v10080, %v10079
  %v10570 = vpack.c.b16 %v10082, %v10081
  %v10571 = vpack.c.b16 %v10084, %v10083
  %v10572 = vpack.c.b16 %v10086, %v10085
  %v10573 = vpack.c.b16 %v10088, %v10087
  %v10574 = vpack.c.b16 %v10090, %v10089
  %v10575 = vpack.c.b16 %v10092, %v10091
  %v10576 = vpack.c.b16 %v10094, %v10093
  %v10577 = vpack.c.b16 %v10096, %v10095
  %v10578 = vpack.c.b16 %v10098, %v10097
  %v10579 = vpack.c.b16 %v10100, %v10099
  %v10580 = vpack.c.b16 %v10102, %v10101
  %v10581 = vpack.c.b16 %v10104, %v10103
  %v10582 = vpack.c.b16 %v10106, %v10105
  %v10583 = vpack.c.b16 %v10108, %v10107
  %v10584 = vpack.c.b16 %v10110, %v10109
  %v10585 = vpack.c.b16 %v10112, %v10111
  %v10586 = vpack.c.b16 %v10114, %v10113
  %v10587 = vpack.c.b16 %v10116, %v10115
  %v10588 = vpack.c.b16 %v10118, %v10117
  %v10589 = vpack.c.b16 %v10120, %v10119
  %v10590 = vpack.c.b16 %v10122, %v10121
  %v10591 = vpack.c.b16 %v10124, %v10123
  %v10592 = vpack.c.b16 %v10126, %v10125
  %v10593 = vpack.c.b16 %v10128, %v10127
  %v10594 = vpack.c.b16 %v10130, %v10129
  %v10595 = vpack.c.b16 %v10132, %v10131
  %v10596 = vpack.c.b16 %v10134, %v10133
  %v10597 = vpack.c.b16 %v10136, %v10135
  %v10598 = vpack.c.b16 %v10138, %v10137
  %v10599 = vpack.c.b16 %v10140, %v10139
  %v10600 = vpack.c.b16 %v10142, %v10141
  %v10601 = vpack.c.b16 %v10144, %v10143
  %v10602 = vpack.c.b16 %v10146, %v10145
  %v10603 = vpack.c.b16 %v10148, %v10147
  %v10604 = vpack.c.b16 %v10150, %v10149
  %v10605 = vpack.c.b16 %v10152, %v10151
  %v10606 = vpack.c.b16 %v10154, %v10153
  %v10607 = vpack.c.b16 %v10156, %v10155
  %v10608 = vpack.c.b16 %v10158, %v10157
  %v10609 = vpack.c.b16 %v10160, %v10159
  %v10610 = vpack.c.b16 %v10162, %v10161
  %v10611 = vpack.c.b16 %v10164, %v10163
  %v10612 = vpack.c.b16 %v10166, %v10165
  %v10613 = vpack.c.b16 %v10168, %v10167
  %v10614 = vpack.c.b16 %v10170, %v10169
  %v10615 = vpack.c.b16 %v10172, %v10171
  %v10616 = vpack.c.b16 %v10174, %v10173
  %v10617 = vpack.c.b16 %v10176, %v10175
  %v10618 = vpack.c.b16 %v10178, %v10177
  %v10619 = vpack.c.b16 %v10180, %v10179
  %v10620 = vpack.c.b16 %v10182, %v10181
  %v10621 = vpack.c.b16 %v10184, %v10183
  %v10622 = vpack.c.b16 %v10186, %v10185
  %v10623 = vpack.c.b16 %v10188, %v10187
  %v10624 = vpack.c.b16 %v10190, %v10189
  %v10625 = vpack.c.b16 %v10192, %v10191
  %v10626 = vpack.c.b16 %v10194, %v10193
  %v10627 = vpack.c.b16 %v10196, %v10195
  %v10628 = vpack.c.b16 %v10198, %v10197
  %v10629 = vpack.c.b16 %v10200, %v10199
  %v10630 = vpack.c.b16 %v10202, %v10201
  %v10631 = vpack.c.b16 %v10204, %v10203
  %v10632 = vpack.c.b16 %v10206, %v10205
  %v10633 = vpack.c.b16 %v10208, %v10207
  %v10634 = vpack.c.b16 %v10210, %v10209
  %v10635 = vpack.c.b16 %v10212, %v10211
  %v10636 = vpack.c.b16 %v10214, %v10213
  %v10637 = vpack.c.b16 %v10216, %v10215
  %v10638 = vpack.c.b16 %v10218, %v10217
  %v10639 = vpack.c.b16 %v10220, %v10219
  %v10640 = vpack.c.b16 %v10222, %v10221
  %v10641 = vpack.c.b16 %v10224, %v10223
  %v10642 = vpack.c.b16 %v10226, %v10225
  %v10643 = vpack.c.b16 %v10228, %v10227
  %v10644 = vpack.c.b16 %v10230, %v10229
  %v10645 = vpack.c.b16 %v10232, %v10231
  %v10646 = vpack.c.b16 %v10234, %v10233
  %v10647 = vpack.c.b16 %v10236, %v10235
  %v10648 = vpack.c.b16 %v10238, %v10237
  %v10649 = vpack.c.b16 %v10240, %v10239
  %v10650 = vpack.c.b16 %v10242, %v10241
  %v10651 = vpack.c.b16 %v10244, %v10243
  %v10652 = vpack.c.b16 %v10246, %v10245
  %v10653 = vpack.c.b16 %v10248, %v10247
  %v10654 = vpack.c.b16 %v10250, %v10249
  %v10655 = vpack.c.b16 %v10252, %v10251
  %v10656 = vpack.c.b16 %v10254, %v10253
  %v10657 = vpack.c.b16 %v10256, %v10255
  %v10658 = vpack.c.b16 %v10258, %v10257
  %v10659 = vpack.c.b16 %v10260, %v10259
  %v10660 = vpack.c.b16 %v10262, %v10261
  %v10661 = vpack.c.b16 %v10264, %v10263
  %v10662 = vpack.c.b16 %v10266, %v10265
  %v10663 = vpack.c.b16 %v10268, %v10267
  %v10664 = vpack.c.b16 %v10270, %v10269
  %v10665 = vpack.c.b16 %v10272, %v10271
  %v10666 = vpack.c.b16 %v10274, %v10273
  %11059 = vmatprep.subr.bf16.mxu0 0
  %11060 = vmatpush1.bf16.msra.mxu0 %v10275
  %11061 = vmatprep.subr.bf16.mxu0 0
  %11062 = vmatpush1.bf16.msra.mxu0 %v10276
  %11063 = vmatprep.subr.bf16.mxu0 0
  %11064 = vmatpush1.bf16.msra.mxu0 %v10277
  %11065 = vmatprep.subr.bf16.mxu0 0
  %11066 = vmatpush1.bf16.msra.mxu0 %v10278
  %11067 = vmatprep.subr.bf16.mxu0 0
  %11068 = vmatpush1.bf16.msra.mxu0 %v10279
  %11069 = vmatprep.subr.bf16.mxu0 0
  %11070 = vmatpush1.bf16.msra.mxu0 %v10280
  %11071 = vmatprep.subr.bf16.mxu0 0
  %11072 = vmatpush1.bf16.msra.mxu0 %v10281
  %11073 = vmatprep.subr.bf16.mxu0 0
  %11074 = vmatpush1.bf16.msra.mxu0 %v10282
  %11075 = vmatprep.subr.bf16.mxu0 0
  %11076 = vmatpush1.bf16.msra.mxu0 %v10283
  %11077 = vmatprep.subr.bf16.mxu0 0
  %11078 = vmatpush1.bf16.msra.mxu0 %v10284
  %11079 = vmatprep.subr.bf16.mxu0 0
  %11080 = vmatpush1.bf16.msra.mxu0 %v10285
  %11081 = vmatprep.subr.bf16.mxu0 0
  %11082 = vmatpush1.bf16.msra.mxu0 %v10286
  %11083 = vmatprep.subr.bf16.mxu0 0
  %11084 = vmatpush1.bf16.msra.mxu0 %v10287
  %11085 = vmatprep.subr.bf16.mxu0 0
  %11086 = vmatpush1.bf16.msra.mxu0 %v10288
  %11087 = vmatprep.subr.bf16.mxu0 0
  %11088 = vmatpush1.bf16.msra.mxu0 %v10289
  %11089 = vmatprep.subr.bf16.mxu0 0
  %11090 = vmatpush1.bf16.msra.mxu0 %v10290
  %11091 = vmatprep.mubr.bf16.mxu0 %v4601
  %11092 = vmatmul.mubr.bf16.gmra.mrb[0].mxu0 %v4528
  %v11093 = vpop.f32.mrb[0].mxu0
  %v11094 = vadd.f32 0.0, %v11093
  %v11095 = vpop.f32.mrb[0].mxu0
  %v11096 = vpop.f32.mrb[0].mxu0
  %v11097 = vadd.f32 0.0, %v11096
  %v11098 = vpop.f32.mrb[0].mxu0
  %11099 = vmatprep.mubr.bf16.mxu0 %v4615
  %11100 = vmatmul.mubr.bf16.gmra.mrb[0].mxu0 %v4542
  %v11101 = vpop.f32.mrb[0].mxu0
  %v11102 = vadd.f32 0.0, %v11101
  %v11103 = vpop.f32.mrb[0].mxu0
  %v11104 = vpop.f32.mrb[0].mxu0
  %v11105 = vpop.f32.mrb[0].mxu0
  %11106 = vdwg.mxu0
  %11107 = vmatprep.subr.bf16.mxu0 0
  %11108 = vmatpush1.bf16.msra.mxu0 %v10291
  %11109 = vmatprep.subr.bf16.mxu0 0
  %11110 = vmatpush1.bf16.msra.mxu0 %v10292
  %11111 = vmatprep.subr.bf16.mxu0 0
  %11112 = vmatpush1.bf16.msra.mxu0 %v10293
  %11113 = vmatprep.subr.bf16.mxu0 0
  %11114 = vmatpush1.bf16.msra.mxu0 %v10294
  %11115 = vmatprep.subr.bf16.mxu0 0
  %11116 = vmatpush1.bf16.msra.mxu0 %v10295
  %11117 = vmatprep.subr.bf16.mxu0 0
  %11118 = vmatpush1.bf16.msra.mxu0 %v10296
  %11119 = vmatprep.subr.bf16.mxu0 0
  %11120 = vmatpush1.bf16.msra.mxu0 %v10297
  %11121 = vmatprep.subr.bf16.mxu0 0
  %11122 = vmatpush1.bf16.msra.mxu0 %v10298
  %11123 = vmatprep.subr.bf16.mxu0 0
  %11124 = vmatpush1.bf16.msra.mxu0 %v10299
  %11125 = vmatprep.subr.bf16.mxu0 0
  %11126 = vmatpush1.bf16.msra.mxu0 %v10300
  %11127 = vmatprep.subr.bf16.mxu0 0
  %11128 = vmatpush1.bf16.msra.mxu0 %v10301
  %11129 = vmatprep.subr.bf16.mxu0 0
  %11130 = vmatpush1.bf16.msra.mxu0 %v10302
  %11131 = vmatprep.subr.bf16.mxu0 0
  %11132 = vmatpush1.bf16.msra.mxu0 %v10303
  %11133 = vmatprep.subr.bf16.mxu0 0
  %11134 = vmatpush1.bf16.msra.mxu0 %v10304
  %11135 = vmatprep.subr.bf16.mxu0 0
  %11136 = vmatpush1.bf16.msra.mxu0 %v10305
  %11137 = vmatprep.subr.bf16.mxu0 0
  %11138 = vmatpush1.bf16.msra.mxu0 %v10306
  %11139 = vmatprep.mubr.bf16.mxu0 %v4747
  %11140 = vmatmul.mubr.bf16.gmra.mrb[0].mxu0 %v4674
  %v11141 = vpop.f32.mrb[0].mxu0
  %v11142 = vadd.f32 %v11094, %v11141
  %v11143 = vpop.f32.mrb[0].mxu0
  %v11144 = vpop.f32.mrb[0].mxu0
  %v11145 = vadd.f32 %v11097, %v11144
  %v11146 = vpop.f32.mrb[0].mxu0
  %11147 = vmatprep.mubr.bf16.mxu0 %v4761
  %11148 = vmatmul.mubr.bf16.gmra.mrb[0].mxu0 %v4688
  %v11149 = vpop.f32.mrb[0].mxu0
  %v11150 = vadd.f32 %v11102, %v11149
  %v11151 = vpop.f32.mrb[0].mxu0
  %v11152 = vpop.f32.mrb[0].mxu0
  %v11153 = vpop.f32.mrb[0].mxu0
  %11154 = vdwg.mxu0
  %11155 = vmatprep.subr.bf16.mxu0 0
  %11156 = vmatpush1.bf16.msra.mxu0 %v10307
  %11157 = vmatprep.subr.bf16.mxu0 0
  %11158 = vmatpush1.bf16.msra.mxu0 %v10308
  %11159 = vmatprep.subr.bf16.mxu0 0
  %11160 = vmatpush1.bf16.msra.mxu0 %v10309
  %11161 = vmatprep.subr.bf16.mxu0 0
  %11162 = vmatpush1.bf16.msra.mxu0 %v10310
  %11163 = vmatprep.subr.bf16.mxu0 0
  %11164 = vmatpush1.bf16.msra.mxu0 %v10311
  %11165 = vmatprep.subr.bf16.mxu0 0
  %11166 = vmatpush1.bf16.msra.mxu0 %v10312
  %11167 = vmatprep.subr.bf16.mxu0 0
  %11168 = vmatpush1.bf16.msra.mxu0 %v10313
  %11169 = vmatprep.subr.bf16.mxu0 0
  %11170 = vmatpush1.bf16.msra.mxu0 %v10314
  %11171 = vmatprep.subr.bf16.mxu0 0
  %11172 = vmatpush1.bf16.msra.mxu0 %v10315
  %11173 = vmatprep.subr.bf16.mxu0 0
  %11174 = vmatpush1.bf16.msra.mxu0 %v10316
  %11175 = vmatprep.subr.bf16.mxu0 0
  %11176 = vmatpush1.bf16.msra.mxu0 %v10317
  %11177 = vmatprep.subr.bf16.mxu0 0
  %11178 = vmatpush1.bf16.msra.mxu0 %v10318
  %11179 = vmatprep.subr.bf16.mxu0 0
  %11180 = vmatpush1.bf16.msra.mxu0 %v10319
  %11181 = vmatprep.subr.bf16.mxu0 0
  %11182 = vmatpush1.bf16.msra.mxu0 %v10320
  %11183 = vmatprep.subr.bf16.mxu0 0
  %11184 = vmatpush1.bf16.msra.mxu0 %v10321
  %11185 = vmatprep.subr.bf16.mxu0 0
  %11186 = vmatpush1.bf16.msra.mxu0 %v10322
  %11187 = vmatprep.mubr.bf16.mxu0 %v4893
  %11188 = vmatmul.mubr.bf16.gmra.mrb[0].mxu0 %v4820
  %v11189 = vpop.f32.mrb[0].mxu0
  %v11190 = vadd.f32 %v11142, %v11189
  %v11191 = vpop.f32.mrb[0].mxu0
  %v11192 = vpop.f32.mrb[0].mxu0
  %v11193 = vadd.f32 %v11145, %v11192
  %v11194 = vpop.f32.mrb[0].mxu0
  %11195 = vmatprep.mubr.bf16.mxu0 %v4907
  %11196 = vmatmul.mubr.bf16.gmra.mrb[0].mxu0 %v4834
  %v11197 = vpop.f32.mrb[0].mxu0
  %v11198 = vadd.f32 %v11150, %v11197
  %v11199 = vpop.f32.mrb[0].mxu0
  %v11200 = vpop.f32.mrb[0].mxu0
  %v11201 = vpop.f32.mrb[0].mxu0
  %11202 = vdwg.mxu0
  %11203 = vmatprep.subr.bf16.mxu0 0
  %11204 = vmatpush1.bf16.msra.mxu0 %v10323
  %11205 = vmatprep.subr.bf16.mxu0 0
  %11206 = vmatpush1.bf16.msra.mxu0 %v10324
  %11207 = vmatprep.subr.bf16.mxu0 0
  %11208 = vmatpush1.bf16.msra.mxu0 %v10325
  %11209 = vmatprep.subr.bf16.mxu0 0
  %11210 = vmatpush1.bf16.msra.mxu0 %v10326
  %11211 = vmatprep.subr.bf16.mxu0 0
  %11212 = vmatpush1.bf16.msra.mxu0 %v10327
  %11213 = vmatprep.subr.bf16.mxu0 0
  %11214 = vmatpush1.bf16.msra.mxu0 %v10328
  %11215 = vmatprep.subr.bf16.mxu0 0
  %11216 = vmatpush1.bf16.msra.mxu0 %v10329
  %11217 = vmatprep.subr.bf16.mxu0 0
  %11218 = vmatpush1.bf16.msra.mxu0 %v10330
  %11219 = vmatprep.subr.bf16.mxu0 0
  %11220 = vmatpush1.bf16.msra.mxu0 %v10331
  %11221 = vmatprep.subr.bf16.mxu0 0
  %11222 = vmatpush1.bf16.msra.mxu0 %v10332
  %11223 = vmatprep.subr.bf16.mxu0 0
  %11224 = vmatpush1.bf16.msra.mxu0 %v10333
  %11225 = vmatprep.subr.bf16.mxu0 0
  %11226 = vmatpush1.bf16.msra.mxu0 %v10334
  %11227 = vmatprep.subr.bf16.mxu0 0
  %11228 = vmatpush1.bf16.msra.mxu0 %v10335
  %11229 = vmatprep.subr.bf16.mxu0 0
  %11230 = vmatpush1.bf16.msra.mxu0 %v10336
  %11231 = vmatprep.subr.bf16.mxu0 0
  %11232 = vmatpush1.bf16.msra.mxu0 %v10337
  %11233 = vmatprep.subr.bf16.mxu0 0
  %11234 = vmatpush1.bf16.msra.mxu0 %v10338
  %11235 = vmatprep.mubr.bf16.mxu0 %v5038
  %11236 = vmatmul.mubr.bf16.gmra.mrb[0].mxu0 %v4966
  %v11237 = vpop.f32.mrb[0].mxu0
  %v11238 = vadd.f32 %v11190, %v11237
  %v11239 = vpop.f32.mrb[0].mxu0
  %v11240 = vpop.f32.mrb[0].mxu0
  %v11241 = vadd.f32 %v11193, %v11240
  %v11242 = vpop.f32.mrb[0].mxu0
  %11243 = vmatprep.mubr.bf16.mxu0 %v5052
  %11244 = vmatmul.mubr.bf16.gmra.mrb[0].mxu0 %v4980
  %v11245 = vpop.f32.mrb[0].mxu0
  %v11246 = vadd.f32 %v11198, %v11245
  %v11247 = vpop.f32.mrb[0].mxu0
  %v11248 = vpop.f32.mrb[0].mxu0
  %v11249 = vpop.f32.mrb[0].mxu0
  %11250 = vdwg.mxu0
  %11251 = vmatprep.subr.bf16.mxu0 0
  %11252 = vmatpush1.bf16.msra.mxu0 %v10339
  %11253 = vmatprep.subr.bf16.mxu0 0
  %11254 = vmatpush1.bf16.msra.mxu0 %v10340
  %11255 = vmatprep.subr.bf16.mxu0 0
  %11256 = vmatpush1.bf16.msra.mxu0 %v10341
  %11257 = vmatprep.subr.bf16.mxu0 0
  %11258 = vmatpush1.bf16.msra.mxu0 %v10342
  %11259 = vmatprep.subr.bf16.mxu0 0
  %11260 = vmatpush1.bf16.msra.mxu0 %v10343
  %11261 = vmatprep.subr.bf16.mxu0 0
  %11262 = vmatpush1.bf16.msra.mxu0 %v10344
  %11263 = vmatprep.subr.bf16.mxu0 0
  %11264 = vmatpush1.bf16.msra.mxu0 %v10345
  %11265 = vmatprep.subr.bf16.mxu0 0
  %11266 = vmatpush1.bf16.msra.mxu0 %v10346
  %11267 = vmatprep.subr.bf16.mxu0 0
  %11268 = vmatpush1.bf16.msra.mxu0 %v10347
  %11269 = vmatprep.subr.bf16.mxu0 0
  %11270 = vmatpush1.bf16.msra.mxu0 %v10348
  %11271 = vmatprep.subr.bf16.mxu0 0
  %11272 = vmatpush1.bf16.msra.mxu0 %v10349
  %11273 = vmatprep.subr.bf16.mxu0 0
  %11274 = vmatpush1.bf16.msra.mxu0 %v10350
  %11275 = vmatprep.subr.bf16.mxu0 0
  %11276 = vmatpush1.bf16.msra.mxu0 %v10351
  %11277 = vmatprep.subr.bf16.mxu0 0
  %11278 = vmatpush1.bf16.msra.mxu0 %v10352
  %11279 = vmatprep.subr.bf16.mxu0 0
  %11280 = vmatpush1.bf16.msra.mxu0 %v10353
  %11281 = vmatprep.subr.bf16.mxu0 0
  %11282 = vmatpush1.bf16.msra.mxu0 %v10354
  %11283 = vmatprep.mubr.bf16.mxu0 %v5178
  %11284 = vmatmul.mubr.bf16.gmra.mrb[0].mxu0 %v5108
  %v11285 = vpop.f32.mrb[0].mxu0
  %v11286 = vadd.f32 %v11238, %v11285
  %v11287 = vpop.f32.mrb[0].mxu0
  %v11288 = vpop.f32.mrb[0].mxu0
  %v11289 = vadd.f32 %v11241, %v11288
  %v11290 = vpop.f32.mrb[0].mxu0
  %11291 = vmatprep.mubr.bf16.mxu0 %v5192
  %11292 = vmatmul.mubr.bf16.gmra.mrb[0].mxu0 %v5122
  %v11293 = vpop.f32.mrb[0].mxu0
  %v11294 = vadd.f32 %v11246, %v11293
  %v11295 = vpop.f32.mrb[0].mxu0
  %v11296 = vpop.f32.mrb[0].mxu0
  %v11297 = vpop.f32.mrb[0].mxu0
  %11298 = vdwg.mxu0
  %11299 = vmatprep.subr.bf16.mxu0 0
  %11300 = vmatpush1.bf16.msra.mxu0 %v10355
  %11301 = vmatprep.subr.bf16.mxu0 0
  %11302 = vmatpush1.bf16.msra.mxu0 %v10356
  %11303 = vmatprep.subr.bf16.mxu0 0
  %11304 = vmatpush1.bf16.msra.mxu0 %v10357
  %11305 = vmatprep.subr.bf16.mxu0 0
  %11306 = vmatpush1.bf16.msra.mxu0 %v10358
  %11307 = vmatprep.subr.bf16.mxu0 0
  %11308 = vmatpush1.bf16.msra.mxu0 %v10359
  %11309 = vmatprep.subr.bf16.mxu0 0
  %11310 = vmatpush1.bf16.msra.mxu0 %v10360
  %11311 = vmatprep.subr.bf16.mxu0 0
  %11312 = vmatpush1.bf16.msra.mxu0 %v10361
  %11313 = vmatprep.subr.bf16.mxu0 0
  %11314 = vmatpush1.bf16.msra.mxu0 %v10362
  %11315 = vmatprep.subr.bf16.mxu0 0
  %11316 = vmatpush1.bf16.msra.mxu0 %v10363
  %11317 = vmatprep.subr.bf16.mxu0 0
  %11318 = vmatpush1.bf16.msra.mxu0 %v10364
  %11319 = vmatprep.subr.bf16.mxu0 0
  %11320 = vmatpush1.bf16.msra.mxu0 %v10365
  %11321 = vmatprep.subr.bf16.mxu0 0
  %11322 = vmatpush1.bf16.msra.mxu0 %v10366
  %11323 = vmatprep.subr.bf16.mxu0 0
  %11324 = vmatpush1.bf16.msra.mxu0 %v10367
  %11325 = vmatprep.subr.bf16.mxu0 0
  %11326 = vmatpush1.bf16.msra.mxu0 %v10368
  %11327 = vmatprep.subr.bf16.mxu0 0
  %11328 = vmatpush1.bf16.msra.mxu0 %v10369
  %11329 = vmatprep.subr.bf16.mxu0 0
  %11330 = vmatpush1.bf16.msra.mxu0 %v10370
  %11331 = vmatprep.mubr.bf16.mxu0 %v5318
  %11332 = vmatmul.mubr.bf16.gmra.mrb[0].mxu0 %v5248
  %v11333 = vpop.f32.mrb[0].mxu0
  %v11334 = vadd.f32 %v11286, %v11333
  %v11335 = vpop.f32.mrb[0].mxu0
  %v11336 = vpop.f32.mrb[0].mxu0
  %v11337 = vadd.f32 %v11289, %v11336
  %v11338 = vpop.f32.mrb[0].mxu0
  %11339 = vmatprep.mubr.bf16.mxu0 %v5332
  %11340 = vmatmul.mubr.bf16.gmra.mrb[0].mxu0 %v5262
  %v11341 = vpop.f32.mrb[0].mxu0
  %v11342 = vadd.f32 %v11294, %v11341
  %v11343 = vpop.f32.mrb[0].mxu0
  %v11344 = vpop.f32.mrb[0].mxu0
  %v11345 = vpop.f32.mrb[0].mxu0
  %11346 = vdwg.mxu0
  %11347 = vmatprep.subr.bf16.mxu0 0
  %11348 = vmatpush1.bf16.msra.mxu0 %v10371
  %11349 = vmatprep.subr.bf16.mxu0 0
  %11350 = vmatpush1.bf16.msra.mxu0 %v10372
  %11351 = vmatprep.subr.bf16.mxu0 0
  %11352 = vmatpush1.bf16.msra.mxu0 %v10373
  %11353 = vmatprep.subr.bf16.mxu0 0
  %11354 = vmatpush1.bf16.msra.mxu0 %v10374
  %11355 = vmatprep.subr.bf16.mxu0 0
  %11356 = vmatpush1.bf16.msra.mxu0 %v10375
  %11357 = vmatprep.subr.bf16.mxu0 0
  %11358 = vmatpush1.bf16.msra.mxu0 %v10376
  %11359 = vmatprep.subr.bf16.mxu0 0
  %11360 = vmatpush1.bf16.msra.mxu0 %v10377
  %11361 = vmatprep.subr.bf16.mxu0 0
  %11362 = vmatpush1.bf16.msra.mxu0 %v10378
  %11363 = vmatprep.subr.bf16.mxu0 0
  %11364 = vmatpush1.bf16.msra.mxu0 %v10379
  %11365 = vmatprep.subr.bf16.mxu0 0
  %11366 = vmatpush1.bf16.msra.mxu0 %v10380
  %11367 = vmatprep.subr.bf16.mxu0 0
  %11368 = vmatpush1.bf16.msra.mxu0 %v10381
  %11369 = vmatprep.subr.bf16.mxu0 0
  %11370 = vmatpush1.bf16.msra.mxu0 %v10382
  %11371 = vmatprep.subr.bf16.mxu0 0
  %11372 = vmatpush1.bf16.msra.mxu0 %v10383
  %11373 = vmatprep.subr.bf16.mxu0 0
  %11374 = vmatpush1.bf16.msra.mxu0 %v10384
  %11375 = vmatprep.subr.bf16.mxu0 0
  %11376 = vmatpush1.bf16.msra.mxu0 %v10385
  %11377 = vmatprep.subr.bf16.mxu0 0
  %11378 = vmatpush1.bf16.msra.mxu0 %v10386
  %11379 = vmatprep.mubr.bf16.mxu0 %v5460
  %11380 = vmatmul.mubr.bf16.gmra.mrb[0].mxu0 %v5388
  %v11381 = vpop.f32.mrb[0].mxu0
  %v11382 = vadd.f32 %v11334, %v11381
  %v11383 = vpop.f32.mrb[0].mxu0
  %v11384 = vpop.f32.mrb[0].mxu0
  %v11385 = vadd.f32 %v11337, %v11384
  %v11386 = vpop.f32.mrb[0].mxu0
  %11387 = vmatprep.mubr.bf16.mxu0 %v5474
  %11388 = vmatmul.mubr.bf16.gmra.mrb[0].mxu0 %v5402
  %v11389 = vpop.f32.mrb[0].mxu0
  %v11390 = vadd.f32 %v11342, %v11389
  %v11391 = vpop.f32.mrb[0].mxu0
  %v11392 = vpop.f32.mrb[0].mxu0
  %v11393 = vpop.f32.mrb[0].mxu0
  %11394 = vdwg.mxu0
  %11395 = vmatprep.subr.bf16.mxu0 0
  %11396 = vmatpush1.bf16.msra.mxu0 %v10387
  %11397 = vmatprep.subr.bf16.mxu0 0
  %11398 = vmatpush1.bf16.msra.mxu0 %v10388
  %11399 = vmatprep.subr.bf16.mxu0 0
  %11400 = vmatpush1.bf16.msra.mxu0 %v10389
  %11401 = vmatprep.subr.bf16.mxu0 0
  %11402 = vmatpush1.bf16.msra.mxu0 %v10390
  %11403 = vmatprep.subr.bf16.mxu0 0
  %11404 = vmatpush1.bf16.msra.mxu0 %v10391
  %11405 = vmatprep.subr.bf16.mxu0 0
  %11406 = vmatpush1.bf16.msra.mxu0 %v10392
  %11407 = vmatprep.subr.bf16.mxu0 0
  %11408 = vmatpush1.bf16.msra.mxu0 %v10393
  %11409 = vmatprep.subr.bf16.mxu0 0
  %11410 = vmatpush1.bf16.msra.mxu0 %v10394
  %11411 = vmatprep.subr.bf16.mxu0 0
  %11412 = vmatpush1.bf16.msra.mxu0 %v10395
  %11413 = vmatprep.subr.bf16.mxu0 0
  %11414 = vmatpush1.bf16.msra.mxu0 %v10396
  %11415 = vmatprep.subr.bf16.mxu0 0
  %11416 = vmatpush1.bf16.msra.mxu0 %v10397
  %11417 = vmatprep.subr.bf16.mxu0 0
  %11418 = vmatpush1.bf16.msra.mxu0 %v10398
  %11419 = vmatprep.subr.bf16.mxu0 0
  %11420 = vmatpush1.bf16.msra.mxu0 %v10399
  %11421 = vmatprep.subr.bf16.mxu0 0
  %11422 = vmatpush1.bf16.msra.mxu0 %v10400
  %11423 = vmatprep.subr.bf16.mxu0 0
  %11424 = vmatpush1.bf16.msra.mxu0 %v10401
  %11425 = vmatprep.subr.bf16.mxu0 0
  %11426 = vmatpush1.bf16.msra.mxu0 %v10402
  %11427 = vmatprep.mubr.bf16.mxu0 %v5601
  %11428 = vmatmul.mubr.bf16.gmra.mrb[0].mxu0 %v5531
  %v11429 = vpop.f32.mrb[0].mxu0
  %v11430 = vadd.f32 %v11382, %v11429
  %v11431 = vpop.f32.mrb[0].mxu0
  %v11432 = vpop.f32.mrb[0].mxu0
  %v11433 = vadd.f32 %v11385, %v11432
  %v11434 = vpop.f32.mrb[0].mxu0
  %11435 = vmatprep.mubr.bf16.mxu0 %v5615
  %11436 = vmatmul.mubr.bf16.gmra.mrb[0].mxu0 %v5545
  %v11437 = vpop.f32.mrb[0].mxu0
  %v11438 = vadd.f32 %v11390, %v11437
  %v11439 = vpop.f32.mrb[0].mxu0
  %v11440 = vpop.f32.mrb[0].mxu0
  %v11441 = vpop.f32.mrb[0].mxu0
  %11442 = vdwg.mxu0
  %11443 = vmatprep.subr.bf16.mxu0 0
  %11444 = vmatpush1.bf16.msra.mxu0 %v10403
  %11445 = vmatprep.subr.bf16.mxu0 0
  %11446 = vmatpush1.bf16.msra.mxu0 %v10404
  %11447 = vmatprep.subr.bf16.mxu0 0
  %11448 = vmatpush1.bf16.msra.mxu0 %v10405
  %11449 = vmatprep.subr.bf16.mxu0 0
  %11450 = vmatpush1.bf16.msra.mxu0 %v10406
  %11451 = vmatprep.subr.bf16.mxu0 0
  %11452 = vmatpush1.bf16.msra.mxu0 %v10407
  %11453 = vmatprep.subr.bf16.mxu0 0
  %11454 = vmatpush1.bf16.msra.mxu0 %v10408
  %11455 = vmatprep.subr.bf16.mxu0 0
  %11456 = vmatpush1.bf16.msra.mxu0 %v10409
  %11457 = vmatprep.subr.bf16.mxu0 0
  %11458 = vmatpush1.bf16.msra.mxu0 %v10410
  %11459 = vmatprep.subr.bf16.mxu0 0
  %11460 = vmatpush1.bf16.msra.mxu0 %v10411
  %11461 = vmatprep.subr.bf16.mxu0 0
  %11462 = vmatpush1.bf16.msra.mxu0 %v10412
  %11463 = vmatprep.subr.bf16.mxu0 0
  %11464 = vmatpush1.bf16.msra.mxu0 %v10413
  %11465 = vmatprep.subr.bf16.mxu0 0
  %11466 = vmatpush1.bf16.msra.mxu0 %v10414
  %11467 = vmatprep.subr.bf16.mxu0 0
  %11468 = vmatpush1.bf16.msra.mxu0 %v10415
  %11469 = vmatprep.subr.bf16.mxu0 0
  %11470 = vmatpush1.bf16.msra.mxu0 %v10416
  %11471 = vmatprep.subr.bf16.mxu0 0
  %11472 = vmatpush1.bf16.msra.mxu0 %v10417
  %11473 = vmatprep.subr.bf16.mxu0 0
  %11474 = vmatpush1.bf16.msra.mxu0 %v10418
  %11475 = vmatprep.mubr.bf16.mxu0 %v5741
  %11476 = vmatmul.mubr.bf16.gmra.mrb[0].mxu0 %v5671
  %v11477 = vpop.f32.mrb[0].mxu0
  %v11478 = vadd.f32 %v11430, %v11477
  %v11479 = vpop.f32.mrb[0].mxu0
  %v11480 = vpop.f32.mrb[0].mxu0
  %v11481 = vadd.f32 %v11433, %v11480
  %v11482 = vpop.f32.mrb[0].mxu0
  %11483 = vmatprep.mubr.bf16.mxu0 %v5755
  %11484 = vmatmul.mubr.bf16.gmra.mrb[0].mxu0 %v5685
  %v11485 = vpop.f32.mrb[0].mxu0
  %v11486 = vadd.f32 %v11438, %v11485
  %v11487 = vpop.f32.mrb[0].mxu0
  %v11488 = vpop.f32.mrb[0].mxu0
  %v11489 = vpop.f32.mrb[0].mxu0
  %11490 = vdwg.mxu0
  %11491 = vmatprep.subr.bf16.mxu0 0
  %11492 = vmatpush1.bf16.msra.mxu0 %v10419
  %11493 = vmatprep.subr.bf16.mxu0 0
  %11494 = vmatpush1.bf16.msra.mxu0 %v10420
  %11495 = vmatprep.subr.bf16.mxu0 0
  %11496 = vmatpush1.bf16.msra.mxu0 %v10421
  %11497 = vmatprep.subr.bf16.mxu0 0
  %11498 = vmatpush1.bf16.msra.mxu0 %v10422
  %11499 = vmatprep.subr.bf16.mxu0 0
  %11500 = vmatpush1.bf16.msra.mxu0 %v10423
  %11501 = vmatprep.subr.bf16.mxu0 0
  %11502 = vmatpush1.bf16.msra.mxu0 %v10424
  %11503 = vmatprep.subr.bf16.mxu0 0
  %11504 = vmatpush1.bf16.msra.mxu0 %v10425
  %11505 = vmatprep.subr.bf16.mxu0 0
  %11506 = vmatpush1.bf16.msra.mxu0 %v10426
  %11507 = vmatprep.subr.bf16.mxu0 0
  %11508 = vmatpush1.bf16.msra.mxu0 %v10427
  %11509 = vmatprep.subr.bf16.mxu0 0
  %11510 = vmatpush1.bf16.msra.mxu0 %v10428
  %11511 = vmatprep.subr.bf16.mxu0 0
  %11512 = vmatpush1.bf16.msra.mxu0 %v10429
  %11513 = vmatprep.subr.bf16.mxu0 0
  %11514 = vmatpush1.bf16.msra.mxu0 %v10430
  %11515 = vmatprep.subr.bf16.mxu0 0
  %11516 = vmatpush1.bf16.msra.mxu0 %v10431
  %11517 = vmatprep.subr.bf16.mxu0 0
  %11518 = vmatpush1.bf16.msra.mxu0 %v10432
  %11519 = vmatprep.subr.bf16.mxu0 0
  %11520 = vmatpush1.bf16.msra.mxu0 %v10433
  %11521 = vmatprep.subr.bf16.mxu0 0
  %11522 = vmatpush1.bf16.msra.mxu0 %v10434
  %11523 = vmatprep.mubr.bf16.mxu0 %v5881
  %11524 = vmatmul.mubr.bf16.gmra.mrb[0].mxu0 %v5811
  %v11525 = vpop.f32.mrb[0].mxu0
  %v11526 = vadd.f32 %v11478, %v11525
  %v11527 = vpop.f32.mrb[0].mxu0
  %v11528 = vpop.f32.mrb[0].mxu0
  %v11529 = vadd.f32 %v11481, %v11528
  %v11530 = vpop.f32.mrb[0].mxu0
  %11531 = vmatprep.mubr.bf16.mxu0 %v5895
  %11532 = vmatmul.mubr.bf16.gmra.mrb[0].mxu0 %v5825
  %v11533 = vpop.f32.mrb[0].mxu0
  %v11534 = vadd.f32 %v11486, %v11533
  %v11535 = vpop.f32.mrb[0].mxu0
  %v11536 = vpop.f32.mrb[0].mxu0
  %v11537 = vpop.f32.mrb[0].mxu0
  %11538 = vdwg.mxu0
  %11539 = vmatprep.subr.bf16.mxu0 0
  %11540 = vmatpush1.bf16.msra.mxu0 %v10435
  %11541 = vmatprep.subr.bf16.mxu0 0
  %11542 = vmatpush1.bf16.msra.mxu0 %v10436
  %11543 = vmatprep.subr.bf16.mxu0 0
  %11544 = vmatpush1.bf16.msra.mxu0 %v10437
  %11545 = vmatprep.subr.bf16.mxu0 0
  %11546 = vmatpush1.bf16.msra.mxu0 %v10438
  %11547 = vmatprep.subr.bf16.mxu0 0
  %11548 = vmatpush1.bf16.msra.mxu0 %v10439
  %11549 = vmatprep.subr.bf16.mxu0 0
  %11550 = vmatpush1.bf16.msra.mxu0 %v10440
  %11551 = vmatprep.subr.bf16.mxu0 0
  %11552 = vmatpush1.bf16.msra.mxu0 %v10441
  %11553 = vmatprep.subr.bf16.mxu0 0
  %11554 = vmatpush1.bf16.msra.mxu0 %v10442
  %11555 = vmatprep.subr.bf16.mxu0 0
  %11556 = vmatpush1.bf16.msra.mxu0 %v10443
  %11557 = vmatprep.subr.bf16.mxu0 0
  %11558 = vmatpush1.bf16.msra.mxu0 %v10444
  %11559 = vmatprep.subr.bf16.mxu0 0
  %11560 = vmatpush1.bf16.msra.mxu0 %v10445
  %11561 = vmatprep.subr.bf16.mxu0 0
  %11562 = vmatpush1.bf16.msra.mxu0 %v10446
  %11563 = vmatprep.subr.bf16.mxu0 0
  %11564 = vmatpush1.bf16.msra.mxu0 %v10447
  %11565 = vmatprep.subr.bf16.mxu0 0
  %11566 = vmatpush1.bf16.msra.mxu0 %v10448
  %11567 = vmatprep.subr.bf16.mxu0 0
  %11568 = vmatpush1.bf16.msra.mxu0 %v10449
  %11569 = vmatprep.subr.bf16.mxu0 0
  %11570 = vmatpush1.bf16.msra.mxu0 %v10450
  %11571 = vmatprep.mubr.bf16.mxu0 %v6023
  %11572 = vmatmul.mubr.bf16.gmra.mrb[0].mxu0 %v5952
  %v11573 = vpop.f32.mrb[0].mxu0
  %v11574 = vadd.f32 %v11526, %v11573
  %v11575 = vpop.f32.mrb[0].mxu0
  %v11576 = vpop.f32.mrb[0].mxu0
  %v11577 = vadd.f32 %v11529, %v11576
  %v11578 = vpop.f32.mrb[0].mxu0
  %11579 = vmatprep.mubr.bf16.mxu0 %v6037
  %11580 = vmatmul.mubr.bf16.gmra.mrb[0].mxu0 %v5966
  %v11581 = vpop.f32.mrb[0].mxu0
  %v11582 = vadd.f32 %v11534, %v11581
  %v11583 = vpop.f32.mrb[0].mxu0
  %v11584 = vpop.f32.mrb[0].mxu0
  %v11585 = vpop.f32.mrb[0].mxu0
  %11586 = vdwg.mxu0
  %11587 = vmatprep.subr.bf16.mxu0 0
  %11588 = vmatpush1.bf16.msra.mxu0 %v10451
  %11589 = vmatprep.subr.bf16.mxu0 0
  %11590 = vmatpush1.bf16.msra.mxu0 %v10452
  %11591 = vmatprep.subr.bf16.mxu0 0
  %11592 = vmatpush1.bf16.msra.mxu0 %v10453
  %11593 = vmatprep.subr.bf16.mxu0 0
  %11594 = vmatpush1.bf16.msra.mxu0 %v10454
  %11595 = vmatprep.subr.bf16.mxu0 0
  %11596 = vmatpush1.bf16.msra.mxu0 %v10455
  %11597 = vmatprep.subr.bf16.mxu0 0
  %11598 = vmatpush1.bf16.msra.mxu0 %v10456
  %11599 = vmatprep.subr.bf16.mxu0 0
  %11600 = vmatpush1.bf16.msra.mxu0 %v10457
  %11601 = vmatprep.subr.bf16.mxu0 0
  %11602 = vmatpush1.bf16.msra.mxu0 %v10458
  %11603 = vmatprep.subr.bf16.mxu0 0
  %11604 = vmatpush1.bf16.msra.mxu0 %v10459
  %11605 = vmatprep.subr.bf16.mxu0 0
  %11606 = vmatpush1.bf16.msra.mxu0 %v10460
  %11607 = vmatprep.subr.bf16.mxu0 0
  %11608 = vmatpush1.bf16.msra.mxu0 %v10461
  %11609 = vmatprep.subr.bf16.mxu0 0
  %11610 = vmatpush1.bf16.msra.mxu0 %v10462
  %11611 = vmatprep.subr.bf16.mxu0 0
  %11612 = vmatpush1.bf16.msra.mxu0 %v10463
  %11613 = vmatprep.subr.bf16.mxu0 0
  %11614 = vmatpush1.bf16.msra.mxu0 %v10464
  %11615 = vmatprep.subr.bf16.mxu0 0
  %11616 = vmatpush1.bf16.msra.mxu0 %v10465
  %11617 = vmatprep.subr.bf16.mxu0 0
  %11618 = vmatpush1.bf16.msra.mxu0 %v10466
  %11619 = vmatprep.mubr.bf16.mxu0 %v6163
  %11620 = vmatmul.mubr.bf16.gmra.mrb[0].mxu0 %v6093
  %v11621 = vpop.f32.mrb[0].mxu0
  %v11622 = vadd.f32 %v11574, %v11621
  %v11623 = vpop.f32.mrb[0].mxu0
  %v11624 = vpop.f32.mrb[0].mxu0
  %v11625 = vadd.f32 %v11577, %v11624
  %v11626 = vpop.f32.mrb[0].mxu0
  %11627 = vmatprep.mubr.bf16.mxu0 %v6177
  %11628 = vmatmul.mubr.bf16.gmra.mrb[0].mxu0 %v6107
  %v11629 = vpop.f32.mrb[0].mxu0
  %v11630 = vadd.f32 %v11582, %v11629
  %v11631 = vpop.f32.mrb[0].mxu0
  %v11632 = vpop.f32.mrb[0].mxu0
  %v11633 = vpop.f32.mrb[0].mxu0
  %11634 = vdwg.mxu0
  %11635 = vmatprep.subr.bf16.mxu0 0
  %11636 = vmatpush1.bf16.msra.mxu0 %v10467
  %11637 = vmatprep.subr.bf16.mxu0 0
  %11638 = vmatpush1.bf16.msra.mxu0 %v10468
  %11639 = vmatprep.subr.bf16.mxu0 0
  %11640 = vmatpush1.bf16.msra.mxu0 %v10469
  %11641 = vmatprep.subr.bf16.mxu0 0
  %11642 = vmatpush1.bf16.msra.mxu0 %v10470
  %11643 = vmatprep.subr.bf16.mxu0 0
  %11644 = vmatpush1.bf16.msra.mxu0 %v10471
  %11645 = vmatprep.subr.bf16.mxu0 0
  %11646 = vmatpush1.bf16.msra.mxu0 %v10472
  %11647 = vmatprep.subr.bf16.mxu0 0
  %11648 = vmatpush1.bf16.msra.mxu0 %v10473
  %11649 = vmatprep.subr.bf16.mxu0 0
  %11650 = vmatpush1.bf16.msra.mxu0 %v10474
  %11651 = vmatprep.subr.bf16.mxu0 0
  %11652 = vmatpush1.bf16.msra.mxu0 %v10475
  %11653 = vmatprep.subr.bf16.mxu0 0
  %11654 = vmatpush1.bf16.msra.mxu0 %v10476
  %11655 = vmatprep.subr.bf16.mxu0 0
  %11656 = vmatpush1.bf16.msra.mxu0 %v10477
  %11657 = vmatprep.subr.bf16.mxu0 0
  %11658 = vmatpush1.bf16.msra.mxu0 %v10478
  %11659 = vmatprep.subr.bf16.mxu0 0
  %11660 = vmatpush1.bf16.msra.mxu0 %v10479
  %11661 = vmatprep.subr.bf16.mxu0 0
  %11662 = vmatpush1.bf16.msra.mxu0 %v10480
  %11663 = vmatprep.subr.bf16.mxu0 0
  %11664 = vmatpush1.bf16.msra.mxu0 %v10481
  %11665 = vmatprep.subr.bf16.mxu0 0
  %11666 = vmatpush1.bf16.msra.mxu0 %v10482
  %11667 = vmatprep.mubr.bf16.mxu0 %v6303
  %11668 = vmatmul.mubr.bf16.gmra.mrb[0].mxu0 %v6233
  %v11669 = vpop.f32.mrb[0].mxu0
  %v11670 = vadd.f32 %v11622, %v11669
  %v11671 = vpop.f32.mrb[0].mxu0
  %v11672 = vpop.f32.mrb[0].mxu0
  %v11673 = vadd.f32 %v11625, %v11672
  %v11674 = vpop.f32.mrb[0].mxu0
  %11675 = vmatprep.mubr.bf16.mxu0 %v6317
  %11676 = vmatmul.mubr.bf16.gmra.mrb[0].mxu0 %v6247
  %v11677 = vpop.f32.mrb[0].mxu0
  %v11678 = vadd.f32 %v11630, %v11677
  %v11679 = vpop.f32.mrb[0].mxu0
  %v11680 = vpop.f32.mrb[0].mxu0
  %v11681 = vpop.f32.mrb[0].mxu0
  %11682 = vdwg.mxu0
  %11683 = vmatprep.subr.bf16.mxu0 0
  %11684 = vmatpush1.bf16.msra.mxu0 %v10483
  %11685 = vmatprep.subr.bf16.mxu0 0
  %11686 = vmatpush1.bf16.msra.mxu0 %v10484
  %11687 = vmatprep.subr.bf16.mxu0 0
  %11688 = vmatpush1.bf16.msra.mxu0 %v10485
  %11689 = vmatprep.subr.bf16.mxu0 0
  %11690 = vmatpush1.bf16.msra.mxu0 %v10486
  %11691 = vmatprep.subr.bf16.mxu0 0
  %11692 = vmatpush1.bf16.msra.mxu0 %v10487
  %11693 = vmatprep.subr.bf16.mxu0 0
  %11694 = vmatpush1.bf16.msra.mxu0 %v10488
  %11695 = vmatprep.subr.bf16.mxu0 0
  %11696 = vmatpush1.bf16.msra.mxu0 %v10489
  %11697 = vmatprep.subr.bf16.mxu0 0
  %11698 = vmatpush1.bf16.msra.mxu0 %v10490
  %11699 = vmatprep.subr.bf16.mxu0 0
  %11700 = vmatpush1.bf16.msra.mxu0 %v10491
  %11701 = vmatprep.subr.bf16.mxu0 0
  %11702 = vmatpush1.bf16.msra.mxu0 %v10492
  %11703 = vmatprep.subr.bf16.mxu0 0
  %11704 = vmatpush1.bf16.msra.mxu0 %v10493
  %11705 = vmatprep.subr.bf16.mxu0 0
  %11706 = vmatpush1.bf16.msra.mxu0 %v10494
  %11707 = vmatprep.subr.bf16.mxu0 0
  %11708 = vmatpush1.bf16.msra.mxu0 %v10495
  %11709 = vmatprep.subr.bf16.mxu0 0
  %11710 = vmatpush1.bf16.msra.mxu0 %v10496
  %11711 = vmatprep.subr.bf16.mxu0 0
  %11712 = vmatpush1.bf16.msra.mxu0 %v10497
  %11713 = vmatprep.subr.bf16.mxu0 0
  %11714 = vmatpush1.bf16.msra.mxu0 %v10498
  %11715 = vmatprep.mubr.bf16.mxu0 %v6444
  %11716 = vmatmul.mubr.bf16.gmra.mrb[0].mxu0 %v6373
  %v11717 = vpop.f32.mrb[0].mxu0
  %v11718 = vadd.f32 %v11670, %v11717
  %v11719 = vpop.f32.mrb[0].mxu0
  %v11720 = vpop.f32.mrb[0].mxu0
  %v11721 = vadd.f32 %v11673, %v11720
  %v11722 = vpop.f32.mrb[0].mxu0
  %11723 = vmatprep.mubr.bf16.mxu0 %v6458
  %11724 = vmatmul.mubr.bf16.gmra.mrb[0].mxu0 %v6387
  %v11725 = vpop.f32.mrb[0].mxu0
  %v11726 = vadd.f32 %v11678, %v11725
  %v11727 = vpop.f32.mrb[0].mxu0
  %v11728 = vpop.f32.mrb[0].mxu0
  %v11729 = vpop.f32.mrb[0].mxu0
  %11730 = vdwg.mxu0
  %11731 = vmatprep.subr.bf16.mxu0 0
  %11732 = vmatpush1.bf16.msra.mxu0 %v10499
  %11733 = vmatprep.subr.bf16.mxu0 0
  %11734 = vmatpush1.bf16.msra.mxu0 %v10500
  %11735 = vmatprep.subr.bf16.mxu0 0
  %11736 = vmatpush1.bf16.msra.mxu0 %v10501
  %11737 = vmatprep.subr.bf16.mxu0 0
  %11738 = vmatpush1.bf16.msra.mxu0 %v10502
  %11739 = vmatprep.subr.bf16.mxu0 0
  %11740 = vmatpush1.bf16.msra.mxu0 %v10503
  %11741 = vmatprep.subr.bf16.mxu0 0
  %11742 = vmatpush1.bf16.msra.mxu0 %v10504
  %11743 = vmatprep.subr.bf16.mxu0 0
  %11744 = vmatpush1.bf16.msra.mxu0 %v10505
  %11745 = vmatprep.subr.bf16.mxu0 0
  %11746 = vmatpush1.bf16.msra.mxu0 %v10506
  %11747 = vmatprep.subr.bf16.mxu0 0
  %11748 = vmatpush1.bf16.msra.mxu0 %v10507
  %11749 = vmatprep.subr.bf16.mxu0 0
  %11750 = vmatpush1.bf16.msra.mxu0 %v10508
  %11751 = vmatprep.subr.bf16.mxu0 0
  %11752 = vmatpush1.bf16.msra.mxu0 %v10509
  %11753 = vmatprep.subr.bf16.mxu0 0
  %11754 = vmatpush1.bf16.msra.mxu0 %v10510
  %11755 = vmatprep.subr.bf16.mxu0 0
  %11756 = vmatpush1.bf16.msra.mxu0 %v10511
  %11757 = vmatprep.subr.bf16.mxu0 0
  %11758 = vmatpush1.bf16.msra.mxu0 %v10512
  %11759 = vmatprep.subr.bf16.mxu0 0
  %11760 = vmatpush1.bf16.msra.mxu0 %v10513
  %11761 = vmatprep.subr.bf16.mxu0 0
  %11762 = vmatpush1.bf16.msra.mxu0 %v10514
  %11763 = vmatprep.mubr.bf16.mxu0 %v6585
  %11764 = vmatmul.mubr.bf16.gmra.mrb[0].mxu0 %v6515
  %v11765 = vpop.f32.mrb[0].mxu0
  %v11766 = vadd.f32 %v11718, %v11765
  %v11767 = vpop.f32.mrb[0].mxu0
  %v11768 = vpop.f32.mrb[0].mxu0
  %v11769 = vadd.f32 %v11721, %v11768
  %v11770 = vpop.f32.mrb[0].mxu0
  %11771 = vmatprep.mubr.bf16.mxu0 %v6599
  %11772 = vmatmul.mubr.bf16.gmra.mrb[0].mxu0 %v6529
  %v11773 = vpop.f32.mrb[0].mxu0
  %v11774 = vadd.f32 %v11726, %v11773
  %v11775 = vpop.f32.mrb[0].mxu0
  %v11776 = vpop.f32.mrb[0].mxu0
  %v11777 = vpop.f32.mrb[0].mxu0
  %11778 = vdwg.mxu0
  %11779 = vmatprep.subr.bf16.mxu0 0
  %11780 = vmatpush1.bf16.msra.mxu0 %v10515
  %11781 = vmatprep.subr.bf16.mxu0 0
  %11782 = vmatpush1.bf16.msra.mxu0 %v10516
  %11783 = vmatprep.subr.bf16.mxu0 0
  %11784 = vmatpush1.bf16.msra.mxu0 %v10517
  %11785 = vmatprep.subr.bf16.mxu0 0
  %11786 = vmatpush1.bf16.msra.mxu0 %v10518
  %11787 = vmatprep.subr.bf16.mxu0 0
  %11788 = vmatpush1.bf16.msra.mxu0 %v10519
  %11789 = vmatprep.subr.bf16.mxu0 0
  %11790 = vmatpush1.bf16.msra.mxu0 %v10520
  %11791 = vmatprep.subr.bf16.mxu0 0
  %11792 = vmatpush1.bf16.msra.mxu0 %v10521
  %11793 = vmatprep.subr.bf16.mxu0 0
  %11794 = vmatpush1.bf16.msra.mxu0 %v10522
  %11795 = vmatprep.subr.bf16.mxu0 0
  %11796 = vmatpush1.bf16.msra.mxu0 %v10523
  %11797 = vmatprep.subr.bf16.mxu0 0
  %11798 = vmatpush1.bf16.msra.mxu0 %v10524
  %11799 = vmatprep.subr.bf16.mxu0 0
  %11800 = vmatpush1.bf16.msra.mxu0 %v10525
  %11801 = vmatprep.subr.bf16.mxu0 0
  %11802 = vmatpush1.bf16.msra.mxu0 %v10526
  %11803 = vmatprep.subr.bf16.mxu0 0
  %11804 = vmatpush1.bf16.msra.mxu0 %v10527
  %11805 = vmatprep.subr.bf16.mxu0 0
  %11806 = vmatpush1.bf16.msra.mxu0 %v10528
  %11807 = vmatprep.subr.bf16.mxu0 0
  %11808 = vmatpush1.bf16.msra.mxu0 %v10529
  %11809 = vmatprep.subr.bf16.mxu0 0
  %11810 = vmatpush1.bf16.msra.mxu0 %v10530
  %11811 = vmatprep.mubr.bf16.mxu0 %v6725
  %11812 = vmatmul.mubr.bf16.gmra.mrb[0].mxu0 %v6655
  %v11813 = vpop.f32.mrb[0].mxu0
  %v11814 = vadd.f32 %v11766, %v11813
  %v11815 = vpop.f32.mrb[0].mxu0
  %v11816 = vpop.f32.mrb[0].mxu0
  %v11817 = vadd.f32 %v11769, %v11816
  %v11818 = vpop.f32.mrb[0].mxu0
  %11819 = vmatprep.mubr.bf16.mxu0 %v6739
  %11820 = vmatmul.mubr.bf16.gmra.mrb[0].mxu0 %v6669
  %v11821 = vpop.f32.mrb[0].mxu0
  %v11822 = vadd.f32 %v11774, %v11821
  %v11823 = vpop.f32.mrb[0].mxu0
  %v11824 = vpop.f32.mrb[0].mxu0
  %v11825 = vpop.f32.mrb[0].mxu0
  %11826 = vdwg.mxu0
  %11827 = vmatprep.subr.bf16.mxu0 0
  %11828 = vmatpush1.bf16.msra.mxu0 %v10531
  %11829 = vmatprep.subr.bf16.mxu0 0
  %11830 = vmatpush1.bf16.msra.mxu0 %v10532
  %11831 = vmatprep.subr.bf16.mxu0 0
  %11832 = vmatpush1.bf16.msra.mxu0 %v10533
  %11833 = vmatprep.subr.bf16.mxu0 0
  %11834 = vmatpush1.bf16.msra.mxu0 %v10534
  %11835 = vmatprep.subr.bf16.mxu0 0
  %11836 = vmatpush1.bf16.msra.mxu0 %v10535
  %11837 = vmatprep.subr.bf16.mxu0 0
  %11838 = vmatpush1.bf16.msra.mxu0 %v10536
  %11839 = vmatprep.subr.bf16.mxu0 0
  %11840 = vmatpush1.bf16.msra.mxu0 %v10537
  %11841 = vmatprep.subr.bf16.mxu0 0
  %11842 = vmatpush1.bf16.msra.mxu0 %v10538
  %11843 = vmatprep.subr.bf16.mxu0 0
  %11844 = vmatpush1.bf16.msra.mxu0 %v10539
  %11845 = vmatprep.subr.bf16.mxu0 0
  %11846 = vmatpush1.bf16.msra.mxu0 %v10540
  %11847 = vmatprep.subr.bf16.mxu0 0
  %11848 = vmatpush1.bf16.msra.mxu0 %v10541
  %11849 = vmatprep.subr.bf16.mxu0 0
  %11850 = vmatpush1.bf16.msra.mxu0 %v10542
  %11851 = vmatprep.subr.bf16.mxu0 0
  %11852 = vmatpush1.bf16.msra.mxu0 %v10543
  %11853 = vmatprep.subr.bf16.mxu0 0
  %11854 = vmatpush1.bf16.msra.mxu0 %v10544
  %11855 = vmatprep.subr.bf16.mxu0 0
  %11856 = vmatpush1.bf16.msra.mxu0 %v10545
  %11857 = vmatprep.subr.bf16.mxu0 0
  %11858 = vmatpush1.bf16.msra.mxu0 %v10546
  %11859 = vmatprep.mubr.bf16.mxu0 %v6865
  %11860 = vmatmul.mubr.bf16.gmra.mrb[0].mxu0 %v6795
  %v11861 = vpop.f32.mrb[0].mxu0
  %v11862 = vadd.f32 %v11814, %v11861
  %v11863 = vpop.f32.mrb[0].mxu0
  %v11864 = vpop.f32.mrb[0].mxu0
  %v11865 = vadd.f32 %v11817, %v11864
  %v11866 = vpop.f32.mrb[0].mxu0
  %11867 = vmatprep.mubr.bf16.mxu0 %v6879
  %11868 = vmatmul.mubr.bf16.gmra.mrb[0].mxu0 %v6809
  %v11869 = vpop.f32.mrb[0].mxu0
  %v11870 = vadd.f32 %v11822, %v11869
  %v11871 = vpop.f32.mrb[0].mxu0
  %v11872 = vpop.f32.mrb[0].mxu0
  %v11873 = vpop.f32.mrb[0].mxu0
  %11874 = vdwg.mxu0
  %11875 = vmatprep.subr.bf16.mxu0 0
  %11876 = vmatpush1.bf16.msra.mxu0 %v10547
  %11877 = vmatprep.subr.bf16.mxu0 0
  %11878 = vmatpush1.bf16.msra.mxu0 %v10548
  %11879 = vmatprep.subr.bf16.mxu0 0
  %11880 = vmatpush1.bf16.msra.mxu0 %v10549
  %11881 = vmatprep.subr.bf16.mxu0 0
  %11882 = vmatpush1.bf16.msra.mxu0 %v10550
  %11883 = vmatprep.subr.bf16.mxu0 0
  %11884 = vmatpush1.bf16.msra.mxu0 %v10551
  %11885 = vmatprep.subr.bf16.mxu0 0
  %11886 = vmatpush1.bf16.msra.mxu0 %v10552
  %11887 = vmatprep.subr.bf16.mxu0 0
  %11888 = vmatpush1.bf16.msra.mxu0 %v10553
  %11889 = vmatprep.subr.bf16.mxu0 0
  %11890 = vmatpush1.bf16.msra.mxu0 %v10554
  %11891 = vmatprep.subr.bf16.mxu0 0
  %11892 = vmatpush1.bf16.msra.mxu0 %v10555
  %11893 = vmatprep.subr.bf16.mxu0 0
  %11894 = vmatpush1.bf16.msra.mxu0 %v10556
  %11895 = vmatprep.subr.bf16.mxu0 0
  %11896 = vmatpush1.bf16.msra.mxu0 %v10557
  %11897 = vmatprep.subr.bf16.mxu0 0
  %11898 = vmatpush1.bf16.msra.mxu0 %v10558
  %11899 = vmatprep.subr.bf16.mxu0 0
  %11900 = vmatpush1.bf16.msra.mxu0 %v10559
  %11901 = vmatprep.subr.bf16.mxu0 0
  %11902 = vmatpush1.bf16.msra.mxu0 %v10560
  %11903 = vmatprep.subr.bf16.mxu0 0
  %11904 = vmatpush1.bf16.msra.mxu0 %v10561
  %11905 = vmatprep.subr.bf16.mxu0 0
  %11906 = vmatpush1.bf16.msra.mxu0 %v10562
  %11907 = vmatprep.mubr.bf16.mxu0 %v7007
  %11908 = vmatmul.mubr.bf16.gmra.mrb[0].mxu0 %v6936
  %v11909 = vpop.f32.mrb[0].mxu0
  %v11910 = vadd.f32 %v11862, %v11909
  %v11911 = vpop.f32.mrb[0].mxu0
  %v11912 = vpop.f32.mrb[0].mxu0
  %v11913 = vadd.f32 %v11865, %v11912
  %v11914 = vpop.f32.mrb[0].mxu0
  %11915 = vmatprep.mubr.bf16.mxu0 %v7021
  %11916 = vmatmul.mubr.bf16.gmra.mrb[0].mxu0 %v6950
  %v11917 = vpop.f32.mrb[0].mxu0
  %v11918 = vadd.f32 %v11870, %v11917
  %v11919 = vpop.f32.mrb[0].mxu0
  %v11920 = vpop.f32.mrb[0].mxu0
  %v11921 = vpop.f32.mrb[0].mxu0
  %11922 = vdwg.mxu0
  %11923 = vmatprep.subr.bf16.mxu0 0
  %11924 = vmatpush1.bf16.msra.mxu0 %v10563
  %11925 = vmatprep.subr.bf16.mxu0 0
  %11926 = vmatpush1.bf16.msra.mxu0 %v10564
  %11927 = vmatprep.subr.bf16.mxu0 0
  %11928 = vmatpush1.bf16.msra.mxu0 %v10565
  %11929 = vmatprep.subr.bf16.mxu0 0
  %11930 = vmatpush1.bf16.msra.mxu0 %v10566
  %11931 = vmatprep.subr.bf16.mxu0 0
  %11932 = vmatpush1.bf16.msra.mxu0 %v10567
  %11933 = vmatprep.subr.bf16.mxu0 0
  %11934 = vmatpush1.bf16.msra.mxu0 %v10568
  %11935 = vmatprep.subr.bf16.mxu0 0
  %11936 = vmatpush1.bf16.msra.mxu0 %v10569
  %11937 = vmatprep.subr.bf16.mxu0 0
  %11938 = vmatpush1.bf16.msra.mxu0 %v10570
  %11939 = vmatprep.subr.bf16.mxu0 0
  %11940 = vmatpush1.bf16.msra.mxu0 %v10571
  %11941 = vmatprep.subr.bf16.mxu0 0
  %11942 = vmatpush1.bf16.msra.mxu0 %v10572
  %11943 = vmatprep.subr.bf16.mxu0 0
  %11944 = vmatpush1.bf16.msra.mxu0 %v10573
  %11945 = vmatprep.subr.bf16.mxu0 0
  %11946 = vmatpush1.bf16.msra.mxu0 %v10574
  %11947 = vmatprep.subr.bf16.mxu0 0
  %11948 = vmatpush1.bf16.msra.mxu0 %v10575
  %11949 = vmatprep.subr.bf16.mxu0 0
  %11950 = vmatpush1.bf16.msra.mxu0 %v10576
  %11951 = vmatprep.subr.bf16.mxu0 0
  %11952 = vmatpush1.bf16.msra.mxu0 %v10577
  %11953 = vmatprep.subr.bf16.mxu0 0
  %11954 = vmatpush1.bf16.msra.mxu0 %v10578
  %11955 = vmatprep.mubr.bf16.mxu0 %v7147
  %11956 = vmatmul.mubr.bf16.gmra.mrb[0].mxu0 %v7077
  %v11957 = vpop.f32.mrb[0].mxu0
  %v11958 = vadd.f32 %v11910, %v11957
  %v11959 = vpop.f32.mrb[0].mxu0
  %v11960 = vpop.f32.mrb[0].mxu0
  %v11961 = vadd.f32 %v11913, %v11960
  %v11962 = vpop.f32.mrb[0].mxu0
  %11963 = vmatprep.mubr.bf16.mxu0 %v7161
  %11964 = vmatmul.mubr.bf16.gmra.mrb[0].mxu0 %v7091
  %v11965 = vpop.f32.mrb[0].mxu0
  %v11966 = vadd.f32 %v11918, %v11965
  %v11967 = vpop.f32.mrb[0].mxu0
  %v11968 = vpop.f32.mrb[0].mxu0
  %v11969 = vpop.f32.mrb[0].mxu0
  %11970 = vdwg.mxu0
  %11971 = vmatprep.subr.bf16.mxu0 0
  %11972 = vmatpush1.bf16.msra.mxu0 %v10579
  %11973 = vmatprep.subr.bf16.mxu0 0
  %11974 = vmatpush1.bf16.msra.mxu0 %v10580
  %11975 = vmatprep.subr.bf16.mxu0 0
  %11976 = vmatpush1.bf16.msra.mxu0 %v10581
  %11977 = vmatprep.subr.bf16.mxu0 0
  %11978 = vmatpush1.bf16.msra.mxu0 %v10582
  %11979 = vmatprep.subr.bf16.mxu0 0
  %11980 = vmatpush1.bf16.msra.mxu0 %v10583
  %11981 = vmatprep.subr.bf16.mxu0 0
  %11982 = vmatpush1.bf16.msra.mxu0 %v10584
  %11983 = vmatprep.subr.bf16.mxu0 0
  %11984 = vmatpush1.bf16.msra.mxu0 %v10585
  %11985 = vmatprep.subr.bf16.mxu0 0
  %11986 = vmatpush1.bf16.msra.mxu0 %v10586
  %11987 = vmatprep.subr.bf16.mxu0 0
  %11988 = vmatpush1.bf16.msra.mxu0 %v10587
  %11989 = vmatprep.subr.bf16.mxu0 0
  %11990 = vmatpush1.bf16.msra.mxu0 %v10588
  %11991 = vmatprep.subr.bf16.mxu0 0
  %11992 = vmatpush1.bf16.msra.mxu0 %v10589
  %11993 = vmatprep.subr.bf16.mxu0 0
  %11994 = vmatpush1.bf16.msra.mxu0 %v10590
  %11995 = vmatprep.subr.bf16.mxu0 0
  %11996 = vmatpush1.bf16.msra.mxu0 %v10591
  %11997 = vmatprep.subr.bf16.mxu0 0
  %11998 = vmatpush1.bf16.msra.mxu0 %v10592
  %11999 = vmatprep.subr.bf16.mxu0 0
  %12000 = vmatpush1.bf16.msra.mxu0 %v10593
  %12001 = vmatprep.subr.bf16.mxu0 0
  %12002 = vmatpush1.bf16.msra.mxu0 %v10594
  %12003 = vmatprep.mubr.bf16.mxu0 %v7287
  %12004 = vmatmul.mubr.bf16.gmra.mrb[0].mxu0 %v7217
  %v12005 = vpop.f32.mrb[0].mxu0
  %v12006 = vadd.f32 %v11958, %v12005
  %v12007 = vpop.f32.mrb[0].mxu0
  %v12008 = vpop.f32.mrb[0].mxu0
  %v12009 = vadd.f32 %v11961, %v12008
  %v12010 = vpop.f32.mrb[0].mxu0
  %12011 = vmatprep.mubr.bf16.mxu0 %v7301
  %12012 = vmatmul.mubr.bf16.gmra.mrb[0].mxu0 %v7231
  %v12013 = vpop.f32.mrb[0].mxu0
  %v12014 = vadd.f32 %v11966, %v12013
  %v12015 = vpop.f32.mrb[0].mxu0
  %v12016 = vpop.f32.mrb[0].mxu0
  %v12017 = vpop.f32.mrb[0].mxu0
  %12018 = vdwg.mxu0
  %12019 = vmatprep.subr.bf16.mxu0 0
  %12020 = vmatpush1.bf16.msra.mxu0 %v10595
  %12021 = vmatprep.subr.bf16.mxu0 0
  %12022 = vmatpush1.bf16.msra.mxu0 %v10596
  %12023 = vmatprep.subr.bf16.mxu0 0
  %12024 = vmatpush1.bf16.msra.mxu0 %v10597
  %12025 = vmatprep.subr.bf16.mxu0 0
  %12026 = vmatpush1.bf16.msra.mxu0 %v10598
  %12027 = vmatprep.subr.bf16.mxu0 0
  %12028 = vmatpush1.bf16.msra.mxu0 %v10599
  %12029 = vmatprep.subr.bf16.mxu0 0
  %12030 = vmatpush1.bf16.msra.mxu0 %v10600
  %12031 = vmatprep.subr.bf16.mxu0 0
  %12032 = vmatpush1.bf16.msra.mxu0 %v10601
  %12033 = vmatprep.subr.bf16.mxu0 0
  %12034 = vmatpush1.bf16.msra.mxu0 %v10602
  %12035 = vmatprep.subr.bf16.mxu0 0
  %12036 = vmatpush1.bf16.msra.mxu0 %v10603
  %12037 = vmatprep.subr.bf16.mxu0 0
  %12038 = vmatpush1.bf16.msra.mxu0 %v10604
  %12039 = vmatprep.subr.bf16.mxu0 0
  %12040 = vmatpush1.bf16.msra.mxu0 %v10605
  %12041 = vmatprep.subr.bf16.mxu0 0
  %12042 = vmatpush1.bf16.msra.mxu0 %v10606
  %12043 = vmatprep.subr.bf16.mxu0 0
  %12044 = vmatpush1.bf16.msra.mxu0 %v10607
  %12045 = vmatprep.subr.bf16.mxu0 0
  %12046 = vmatpush1.bf16.msra.mxu0 %v10608
  %12047 = vmatprep.subr.bf16.mxu0 0
  %12048 = vmatpush1.bf16.msra.mxu0 %v10609
  %12049 = vmatprep.subr.bf16.mxu0 0
  %12050 = vmatpush1.bf16.msra.mxu0 %v10610
  %12051 = vmatprep.mubr.bf16.mxu0 %v7428
  %12052 = vmatmul.mubr.bf16.gmra.mrb[0].mxu0 %v7357
  %v12053 = vpop.f32.mrb[0].mxu0
  %v12054 = vadd.f32 %v12006, %v12053
  %v12055 = vpop.f32.mrb[0].mxu0
  %v12056 = vpop.f32.mrb[0].mxu0
  %v12057 = vadd.f32 %v12009, %v12056
  %v12058 = vpop.f32.mrb[0].mxu0
  %12059 = vmatprep.mubr.bf16.mxu0 %v7442
  %12060 = vmatmul.mubr.bf16.gmra.mrb[0].mxu0 %v7371
  %v12061 = vpop.f32.mrb[0].mxu0
  %v12062 = vadd.f32 %v12014, %v12061
  %v12063 = vpop.f32.mrb[0].mxu0
  %v12064 = vpop.f32.mrb[0].mxu0
  %v12065 = vpop.f32.mrb[0].mxu0
  %12066 = vdwg.mxu0
  %12067 = vmatprep.subr.bf16.mxu0 0
  %12068 = vmatpush1.bf16.msra.mxu0 %v10611
  %12069 = vmatprep.subr.bf16.mxu0 0
  %12070 = vmatpush1.bf16.msra.mxu0 %v10612
  %12071 = vmatprep.subr.bf16.mxu0 0
  %12072 = vmatpush1.bf16.msra.mxu0 %v10613
  %12073 = vmatprep.subr.bf16.mxu0 0
  %12074 = vmatpush1.bf16.msra.mxu0 %v10614
  %12075 = vmatprep.subr.bf16.mxu0 0
  %12076 = vmatpush1.bf16.msra.mxu0 %v10615
  %12077 = vmatprep.subr.bf16.mxu0 0
  %12078 = vmatpush1.bf16.msra.mxu0 %v10616
  %12079 = vmatprep.subr.bf16.mxu0 0
  %12080 = vmatpush1.bf16.msra.mxu0 %v10617
  %12081 = vmatprep.subr.bf16.mxu0 0
  %12082 = vmatpush1.bf16.msra.mxu0 %v10618
  %12083 = vmatprep.subr.bf16.mxu0 0
  %12084 = vmatpush1.bf16.msra.mxu0 %v10619
  %12085 = vmatprep.subr.bf16.mxu0 0
  %12086 = vmatpush1.bf16.msra.mxu0 %v10620
  %12087 = vmatprep.subr.bf16.mxu0 0
  %12088 = vmatpush1.bf16.msra.mxu0 %v10621
  %12089 = vmatprep.subr.bf16.mxu0 0
  %12090 = vmatpush1.bf16.msra.mxu0 %v10622
  %12091 = vmatprep.subr.bf16.mxu0 0
  %12092 = vmatpush1.bf16.msra.mxu0 %v10623
  %12093 = vmatprep.subr.bf16.mxu0 0
  %12094 = vmatpush1.bf16.msra.mxu0 %v10624
  %12095 = vmatprep.subr.bf16.mxu0 0
  %12096 = vmatpush1.bf16.msra.mxu0 %v10625
  %12097 = vmatprep.subr.bf16.mxu0 0
  %12098 = vmatpush1.bf16.msra.mxu0 %v10626
  %12099 = vmatprep.mubr.bf16.mxu0 %v7565
  %12100 = vmatmul.mubr.bf16.gmra.mrb[0].mxu0 %v7497
  %v12101 = vpop.f32.mrb[0].mxu0
  %v12102 = vadd.f32 %v12054, %v12101
  %v12103 = vpop.f32.mrb[0].mxu0
  %v12104 = vpop.f32.mrb[0].mxu0
  %v12105 = vadd.f32 %v12057, %v12104
  %v12106 = vpop.f32.mrb[0].mxu0
  %12107 = vmatprep.mubr.bf16.mxu0 %v7579
  %12108 = vmatmul.mubr.bf16.gmra.mrb[0].mxu0 %v7511
  %v12109 = vpop.f32.mrb[0].mxu0
  %v12110 = vadd.f32 %v12062, %v12109
  %v12111 = vpop.f32.mrb[0].mxu0
  %v12112 = vpop.f32.mrb[0].mxu0
  %v12113 = vpop.f32.mrb[0].mxu0
  %12114 = vdwg.mxu0
  %12115 = vmatprep.subr.bf16.mxu0 0
  %12116 = vmatpush1.bf16.msra.mxu0 %v10627
  %12117 = vmatprep.subr.bf16.mxu0 0
  %12118 = vmatpush1.bf16.msra.mxu0 %v10628
  %12119 = vmatprep.subr.bf16.mxu0 0
  %12120 = vmatpush1.bf16.msra.mxu0 %v10629
  %12121 = vmatprep.subr.bf16.mxu0 0
  %12122 = vmatpush1.bf16.msra.mxu0 %v10630
  %12123 = vmatprep.subr.bf16.mxu0 0
  %12124 = vmatpush1.bf16.msra.mxu0 %v10631
  %12125 = vmatprep.subr.bf16.mxu0 0
  %12126 = vmatpush1.bf16.msra.mxu0 %v10632
  %12127 = vmatprep.subr.bf16.mxu0 0
  %12128 = vmatpush1.bf16.msra.mxu0 %v10633
  %12129 = vmatprep.subr.bf16.mxu0 0
  %12130 = vmatpush1.bf16.msra.mxu0 %v10634
  %12131 = vmatprep.subr.bf16.mxu0 0
  %12132 = vmatpush1.bf16.msra.mxu0 %v10635
  %12133 = vmatprep.subr.bf16.mxu0 0
  %12134 = vmatpush1.bf16.msra.mxu0 %v10636
  %12135 = vmatprep.subr.bf16.mxu0 0
  %12136 = vmatpush1.bf16.msra.mxu0 %v10637
  %12137 = vmatprep.subr.bf16.mxu0 0
  %12138 = vmatpush1.bf16.msra.mxu0 %v10638
  %12139 = vmatprep.subr.bf16.mxu0 0
  %12140 = vmatpush1.bf16.msra.mxu0 %v10639
  %12141 = vmatprep.subr.bf16.mxu0 0
  %12142 = vmatpush1.bf16.msra.mxu0 %v10640
  %12143 = vmatprep.subr.bf16.mxu0 0
  %12144 = vmatpush1.bf16.msra.mxu0 %v10641
  %12145 = vmatprep.subr.bf16.mxu0 0
  %12146 = vmatpush1.bf16.msra.mxu0 %v10642
  %12147 = vmatprep.mubr.bf16.mxu0 %v7701
  %12148 = vmatmul.mubr.bf16.gmra.mrb[0].mxu0 %v7633
  %v12149 = vpop.f32.mrb[0].mxu0
  %v12150 = vadd.f32 %v12102, %v12149
  %v12151 = vpop.f32.mrb[0].mxu0
  %v12152 = vpop.f32.mrb[0].mxu0
  %v12153 = vadd.f32 %v12105, %v12152
  %v12154 = vpop.f32.mrb[0].mxu0
  %12155 = vmatprep.mubr.bf16.mxu0 %v7715
  %12156 = vmatmul.mubr.bf16.gmra.mrb[0].mxu0 %v7647
  %v12157 = vpop.f32.mrb[0].mxu0
  %v12158 = vadd.f32 %v12110, %v12157
  %v12159 = vpop.f32.mrb[0].mxu0
  %v12160 = vpop.f32.mrb[0].mxu0
  %v12161 = vpop.f32.mrb[0].mxu0
  %12162 = vdwg.mxu0
  %12163 = vmatprep.subr.bf16.mxu0 0
  %12164 = vmatpush1.bf16.msra.mxu0 %v10643
  %12165 = vmatprep.subr.bf16.mxu0 0
  %12166 = vmatpush1.bf16.msra.mxu0 %v10644
  %12167 = vmatprep.subr.bf16.mxu0 0
  %12168 = vmatpush1.bf16.msra.mxu0 %v10645
  %12169 = vmatprep.subr.bf16.mxu0 0
  %12170 = vmatpush1.bf16.msra.mxu0 %v10646
  %12171 = vmatprep.subr.bf16.mxu0 0
  %12172 = vmatpush1.bf16.msra.mxu0 %v10647
  %12173 = vmatprep.subr.bf16.mxu0 0
  %12174 = vmatpush1.bf16.msra.mxu0 %v10648
  %12175 = vmatprep.subr.bf16.mxu0 0
  %12176 = vmatpush1.bf16.msra.mxu0 %v10649
  %12177 = vmatprep.subr.bf16.mxu0 0
  %12178 = vmatpush1.bf16.msra.mxu0 %v10650
  %12179 = vmatprep.subr.bf16.mxu0 0
  %12180 = vmatpush1.bf16.msra.mxu0 %v10651
  %12181 = vmatprep.subr.bf16.mxu0 0
  %12182 = vmatpush1.bf16.msra.mxu0 %v10652
  %12183 = vmatprep.subr.bf16.mxu0 0
  %12184 = vmatpush1.bf16.msra.mxu0 %v10653
  %12185 = vmatprep.subr.bf16.mxu0 0
  %12186 = vmatpush1.bf16.msra.mxu0 %v10654
  %12187 = vmatprep.subr.bf16.mxu0 0
  %12188 = vmatpush1.bf16.msra.mxu0 %v10655
  %12189 = vmatprep.subr.bf16.mxu0 0
  %12190 = vmatpush1.bf16.msra.mxu0 %v10656
  %12191 = vmatprep.subr.bf16.mxu0 0
  %12192 = vmatpush1.bf16.msra.mxu0 %v10657
  %12193 = vmatprep.subr.bf16.mxu0 0
  %12194 = vmatpush1.bf16.msra.mxu0 %v10658
  %12195 = vmatprep.mubr.bf16.mxu0 %v7837
  %12196 = vmatmul.mubr.bf16.gmra.mrb[0].mxu0 %v7769
  %v12197 = vpop.f32.mrb[0].mxu0
  %v12198 = vadd.f32 %v12150, %v12197
  %v12199 = vpop.f32.mrb[0].mxu0
  %v12200 = vpop.f32.mrb[0].mxu0
  %v12201 = vadd.f32 %v12153, %v12200
  %v12202 = vpop.f32.mrb[0].mxu0
  %12203 = vmatprep.mubr.bf16.mxu0 %v7851
  %12204 = vmatmul.mubr.bf16.gmra.mrb[0].mxu0 %v7783
  %v12205 = vpop.f32.mrb[0].mxu0
  %v12206 = vadd.f32 %v12158, %v12205
  %v12207 = vpop.f32.mrb[0].mxu0
  %v12208 = vpop.f32.mrb[0].mxu0
  %v12209 = vpop.f32.mrb[0].mxu0
  %12210 = vdwg.mxu0
  %12211 = vmatprep.subr.bf16.mxu0 0
  %12212 = vmatpush1.bf16.msra.mxu0 %v10659
  %12213 = vmatprep.subr.bf16.mxu0 0
  %12214 = vmatpush1.bf16.msra.mxu0 %v10660
  %12215 = vmatprep.subr.bf16.mxu0 0
  %12216 = vmatpush1.bf16.msra.mxu0 %v10661
  %12217 = vmatprep.subr.bf16.mxu0 0
  %12218 = vmatpush1.bf16.msra.mxu0 %v10662
  %12219 = vmatprep.subr.bf16.mxu0 0
  %12220 = vmatpush1.bf16.msra.mxu0 %v10663
  %12221 = vmatprep.subr.bf16.mxu0 0
  %12222 = vmatpush1.bf16.msra.mxu0 %v10664
  %12223 = vmatprep.subr.bf16.mxu0 0
  %12224 = vmatpush1.bf16.msra.mxu0 %v10665
  %12225 = vmatprep.subr.bf16.mxu0 0
  %12226 = vmatpush1.bf16.msra.mxu0 %v10666
  %12227 = vmatprep.subr.bf16.mxu0 0
  %12228 = vmatpush1.bf16.msra.mxu0 0
  %12229 = vmatprep.subr.bf16.mxu0 0
  %12230 = vmatpush1.bf16.msra.mxu0 0
  %12231 = vmatprep.subr.bf16.mxu0 0
  %12232 = vmatpush1.bf16.msra.mxu0 0
  %12233 = vmatprep.subr.bf16.mxu0 0
  %12234 = vmatpush1.bf16.msra.mxu0 0
  %12235 = vmatprep.subr.bf16.mxu0 0
  %12236 = vmatpush1.bf16.msra.mxu0 0
  %12237 = vmatprep.subr.bf16.mxu0 0
  %12238 = vmatpush1.bf16.msra.mxu0 0
  %12239 = vmatprep.subr.bf16.mxu0 0
  %12240 = vmatpush1.bf16.msra.mxu0 0
  %12241 = vmatprep.subr.bf16.mxu0 0
  %12242 = vmatpush1.bf16.msra.mxu0 0
  %12243 = vmatprep.mubr.bf16.mxu0 0
  %12244 = vmatmul.mubr.bf16.gmra.mrb[0].mxu0 %v7906
  %v12245 = vpop.f32.mrb[0].mxu0
  %v12246 = vadd.f32 %v12198, %v12245
  %v12247 = vpop.f32.mrb[0].mxu0
  %v12248 = vpop.f32.mrb[0].mxu0
  %v12249 = vadd.f32 %v12201, %v12248
  %v12250 = vpop.f32.mrb[0].mxu0
  %12251 = vmatprep.mubr.bf16.mxu0 0
  %12252 = vmatmul.mubr.bf16.gmra.mrb[0].mxu0 %v7920
  %v12253 = vpop.f32.mrb[0].mxu0
  %v12254 = vadd.f32 %v12206, %v12253
  %v12255 = vpop.f32.mrb[0].mxu0
  %v12256 = vpop.f32.mrb[0].mxu0
  %v12257 = vpop.f32.mrb[0].mxu0
  %12258 = vdwg.mxu0
  %v12262 = vcombine.high %v12246, %v12246
  %v12264 = vunpack.c.l.s4 1966171168
  %v12265 = vunpack.c.0.s8 %v12264
  %v12266 = vlaneseq
  %v12267 = vshrl.u32 %v12266, 7
  %v12268 = vsub.s32 %v12265, %v12267
  %v12269 = vrot.slane %v12246, %v12268
  %v12271 = vunpack.c.l.s4 1966171168
  %v12272 = vunpack.c.0.s8 %v12271
  %v12273 = vlaneseq
  %v12274 = vshrl.u32 %v12273, 7
  %v12275 = vsub.s32 %v12272, %v12274
  %v12276 = vrot.slane %v12262, %v12275
  %v12277 = vcombine.high %v12269, %v12269
  %v12278 = vcombine.high %v12276, %v12276
  %v12280 = vunpack.c.l.s4 1966171168
  %v12281 = vunpack.c.0.s8 %v12280
  %v12282 = vlaneseq
  %v12283 = vshrl.u32 %v12282, 7
  %v12284 = vsub.s32 %v12281, %v12283
  %v12285 = vrot.slane %v12269, %v12284
  %v12287 = vunpack.c.l.s4 1966171168
  %v12288 = vunpack.c.0.s8 %v12287
  %v12289 = vlaneseq
  %v12290 = vshrl.u32 %v12289, 7
  %v12291 = vsub.s32 %v12288, %v12290
  %v12292 = vrot.slane %v12276, %v12291
  %v12294 = vunpack.c.l.s4 1966171168
  %v12295 = vunpack.c.0.s8 %v12294
  %v12296 = vlaneseq
  %v12297 = vshrl.u32 %v12296, 7
  %v12298 = vsub.s32 %v12295, %v12297
  %v12299 = vrot.slane %v12277, %v12298
  %v12301 = vunpack.c.l.s4 1966171168
  %v12302 = vunpack.c.0.s8 %v12301
  %v12303 = vlaneseq
  %v12304 = vshrl.u32 %v12303, 7
  %v12305 = vsub.s32 %v12302, %v12304
  %v12306 = vrot.slane %v12278, %v12305
  %v12307 = vcombine.high %v12285, %v12285
  %v12308 = vcombine.high %v12292, %v12292
  %v12309 = vcombine.high %v12299, %v12299
  %v12310 = vcombine.high %v12306, %v12306
  %v12311 = vcombine.high %v12249, %v12249
  %v12313 = vunpack.c.l.s4 1966171168
  %v12314 = vunpack.c.0.s8 %v12313
  %v12315 = vlaneseq
  %v12316 = vshrl.u32 %v12315, 7
  %v12317 = vsub.s32 %v12314, %v12316
  %v12318 = vrot.slane %v12249, %v12317
  %v12320 = vunpack.c.l.s4 1966171168
  %v12321 = vunpack.c.0.s8 %v12320
  %v12322 = vlaneseq
  %v12323 = vshrl.u32 %v12322, 7
  %v12324 = vsub.s32 %v12321, %v12323
  %v12325 = vrot.slane %v12311, %v12324
  %v12326 = vcombine.high %v12318, %v12318
  %v12327 = vcombine.high %v12325, %v12325
  %v12329 = vunpack.c.l.s4 1966171168
  %v12330 = vunpack.c.0.s8 %v12329
  %v12331 = vlaneseq
  %v12332 = vshrl.u32 %v12331, 7
  %v12333 = vsub.s32 %v12330, %v12332
  %v12334 = vrot.slane %v12318, %v12333
  %v12336 = vunpack.c.l.s4 1966171168
  %v12337 = vunpack.c.0.s8 %v12336
  %v12338 = vlaneseq
  %v12339 = vshrl.u32 %v12338, 7
  %v12340 = vsub.s32 %v12337, %v12339
  %v12341 = vrot.slane %v12325, %v12340
  %v12343 = vunpack.c.l.s4 1966171168
  %v12344 = vunpack.c.0.s8 %v12343
  %v12345 = vlaneseq
  %v12346 = vshrl.u32 %v12345, 7
  %v12347 = vsub.s32 %v12344, %v12346
  %v12348 = vrot.slane %v12326, %v12347
  %v12350 = vunpack.c.l.s4 1966171168
  %v12351 = vunpack.c.0.s8 %v12350
  %v12352 = vlaneseq
  %v12353 = vshrl.u32 %v12352, 7
  %v12354 = vsub.s32 %v12351, %v12353
  %v12355 = vrot.slane %v12327, %v12354
  %v12356 = vcombine.high %v12334, %v12334
  %v12357 = vcombine.high %v12341, %v12341
  %v12358 = vcombine.high %v12348, %v12348
  %v12359 = vcombine.high %v12355, %v12355
  %v12361 = vunpack.c.l.s4 1966171168
  %v12362 = vunpack.c.0.s8 %v12361
  %v12363 = vlaneseq
  %v12364 = vshrl.u32 %v12363, 7
  %v12365 = vsub.s32 %v12362, %v12364
  %v12366 = vrot.slane %v12254, %v12365
  %v12367 = vcombine.high %v12366, %v12366
  %v12369 = vunpack.c.l.s4 1966171168
  %v12370 = vunpack.c.0.s8 %v12369
  %v12371 = vlaneseq
  %v12372 = vshrl.u32 %v12371, 7
  %v12373 = vsub.s32 %v12370, %v12372
  %v12374 = vrot.slane %v12366, %v12373
  %v12376 = vunpack.c.l.s4 1966171168
  %v12377 = vunpack.c.0.s8 %v12376
  %v12378 = vlaneseq
  %v12379 = vshrl.u32 %v12378, 7
  %v12380 = vsub.s32 %v12377, %v12379
  %v12381 = vrot.slane %v12367, %v12380
  %v12382 = vcombine.low %v12285, %v12299
  %v12383 = vcombine.low %v12307, %v12309
  %v12384 = vcombine.low %v12292, %v12306
  %v12385 = vcombine.low %v12308, %v12310
  %v12387 = vunpack.c.l.s4 1966171168
  %v12388 = vunpack.c.0.s8 %v12387
  %v12389 = vlaneseq
  %v12390 = vshrl.u32 %v12389, 7
  %v12391 = vsub.s32 %v12388, %v12390
  %v12392 = vrot.slane %v12382, %v12391
  %v12394 = vunpack.c.l.s4 1966171168
  %v12395 = vunpack.c.0.s8 %v12394
  %v12396 = vlaneseq
  %v12397 = vshrl.u32 %v12396, 7
  %v12398 = vsub.s32 %v12395, %v12397
  %v12399 = vrot.slane %v12383, %v12398
  %v12401 = vunpack.c.l.s4 1966171168
  %v12402 = vunpack.c.0.s8 %v12401
  %v12403 = vlaneseq
  %v12404 = vshrl.u32 %v12403, 7
  %v12405 = vsub.s32 %v12402, %v12404
  %v12406 = vrot.slane %v12384, %v12405
  %v12408 = vunpack.c.l.s4 1966171168
  %v12409 = vunpack.c.0.s8 %v12408
  %v12410 = vlaneseq
  %v12411 = vshrl.u32 %v12410, 7
  %v12412 = vsub.s32 %v12409, %v12411
  %v12413 = vrot.slane %v12385, %v12412
  %v12414 = vcombine.low %v12392, %v12399
  %v12415 = vcombine.low %v12406, %v12413
  %v12417 = vunpack.c.l.s4 1966171168
  %v12418 = vunpack.c.0.s8 %v12417
  %v12419 = vlaneseq
  %v12420 = vshrl.u32 %v12419, 7
  %v12421 = vsub.s32 %v12418, %v12420
  %v12422 = vrot.slane %v12414, %v12421
  %v12424 = vunpack.c.l.s4 1966171168
  %v12425 = vunpack.c.0.s8 %v12424
  %v12426 = vlaneseq
  %v12427 = vshrl.u32 %v12426, 7
  %v12428 = vsub.s32 %v12425, %v12427
  %v12429 = vrot.slane %v12415, %v12428
  %v12430 = vcombine.low %v12422, %v12429
  %v12432 = vunpack.c.l.s4 1966171168
  %v12433 = vunpack.c.0.s8 %v12432
  %v12434 = vlaneseq
  %v12435 = vshrl.u32 %v12434, 7
  %v12436 = vsub.s32 %v12433, %v12435
  %v12437 = vrot.slane %v12334, %v12436
  %v12439 = vunpack.c.l.s4 1966171168
  %v12440 = vunpack.c.0.s8 %v12439
  %v12441 = vlaneseq
  %v12442 = vshrl.u32 %v12441, 7
  %v12443 = vsub.s32 %v12440, %v12442
  %v12444 = vrot.slane %v12437, %v12443
  %v12445 = vcombine.low %v12348, %v12356
  %v12446 = vcombine.low %v12358, %v12341
  %v12447 = vcombine.low %v12355, %v12357
  %v12448 = vcombine.low %v12359, %v12374
  %v12450 = vunpack.c.l.s4 1966171168
  %v12451 = vunpack.c.0.s8 %v12450
  %v12452 = vlaneseq
  %v12453 = vshrl.u32 %v12452, 7
  %v12454 = vsub.s32 %v12451, %v12453
  %v12455 = vrot.slane %v12445, %v12454
  %v12457 = vunpack.c.l.s4 1966171168
  %v12458 = vunpack.c.0.s8 %v12457
  %v12459 = vlaneseq
  %v12460 = vshrl.u32 %v12459, 7
  %v12461 = vsub.s32 %v12458, %v12460
  %v12462 = vrot.slane %v12446, %v12461
  %v12464 = vunpack.c.l.s4 1966171168
  %v12465 = vunpack.c.0.s8 %v12464
  %v12466 = vlaneseq
  %v12467 = vshrl.u32 %v12466, 7
  %v12468 = vsub.s32 %v12465, %v12467
  %v12469 = vrot.slane %v12447, %v12468
  %v12471 = vunpack.c.l.s4 1966171168
  %v12472 = vunpack.c.0.s8 %v12471
  %v12473 = vlaneseq
  %v12474 = vshrl.u32 %v12473, 7
  %v12475 = vsub.s32 %v12472, %v12474
  %v12476 = vrot.slane %v12448, %v12475
  %v12477 = vcombine.low %v12455, %v12462
  %v12478 = vcombine.low %v12469, %v12476
  %v12480 = vunpack.c.l.s4 1966171168
  %v12481 = vunpack.c.0.s8 %v12480
  %v12482 = vlaneseq
  %v12483 = vshrl.u32 %v12482, 7
  %v12484 = vsub.s32 %v12481, %v12483
  %v12485 = vrot.slane %v12477, %v12484
  %v12487 = vunpack.c.l.s4 1966171168
  %v12488 = vunpack.c.0.s8 %v12487
  %v12489 = vlaneseq
  %v12490 = vshrl.u32 %v12489, 7
  %v12491 = vsub.s32 %v12488, %v12490
  %v12492 = vrot.slane %v12478, %v12491
  %v12493 = vcombine.low %v12485, %v12492
  %v12495 = vunpack.c.l.s4 1966171168
  %v12496 = vunpack.c.0.s8 %v12495
  %v12497 = vlaneseq
  %v12498 = vshrl.u32 %v12497, 7
  %v12499 = vsub.s32 %v12496, %v12498
  %v12500 = vrot.slane %v12381, %v12499
  %v12502 = vunpack.c.l.s4 1966171168
  %v12503 = vunpack.c.0.s8 %v12502
  %v12504 = vlaneseq
  %v12505 = vshrl.u32 %v12504, 7
  %v12506 = vsub.s32 %v12503, %v12505
  %v12507 = vrot.slane %v12500, %v12506
  %12512 = vst [vmem:[%s4] sm:$0xff] %v12430
  %12513 = vst [vmem:[%s4 + $0x8] sm:$0x1] %v12444
  %12514 = vst [vmem:[%s4 + $0x10] sm:$0xff] %v12493
  %12515 = vst [vmem:[%s4 + $0x18] sm:$0x1] %v12507
  // Predicated region
  $region14: #{ctnn_forward.1} parent=0 // pred_check
    _
  $region15: #{ctnn_forward.1} parent=0 // pred_check_branch
    %12517 = sbr.rel (0) target = $region17
  $region16: #{ctnn_forward.1} parent=0 // pred_region
    _
  $region17: #{ctnn_forward.1} parent=0 // pred_fallthru
    _
  // Predicated region
  $region18: #{ctnn_forward.1} parent=0 // pred_check
    _
  $region19: #{ctnn_forward.1} parent=0 // pred_check_branch
    %12519 = sbr.rel (0) target = $region21
  $region20: #{ctnn_forward.1} parent=0 // pred_region
    _
  $region21: #{ctnn_forward.1} parent=0 // pred_fallthru
    _
  // Predicated region
  $region22: #{ctnn_forward.1} parent=0 // pred_check
    _
  $region23: #{ctnn_forward.1} parent=0 // pred_check_branch
    %12521 = sbr.rel (0) target = $region25
  $region24: #{ctnn_forward.1} parent=0 // pred_region
    _
  $region25: #{ctnn_forward.1} parent=0 // pred_fallthru
    _
  // Predicated region
  $region26: #{ctnn_forward.1} parent=0 // pred_check
    _
  $region27: #{ctnn_forward.1} parent=0 // pred_check_branch
    %12523 = sbr.rel (0) target = $region29
  $region28: #{ctnn_forward.1} parent=0 // pred_region
    _
  $region29: #{ctnn_forward.1} parent=0 // pred_fallthru
    _

</llo_original>
